<compile_context>
chip_gen: v7x
topology: tpu7x:2x2x1
jax: 0.10.0
libtpu: 0.0.40
codegen_flags: <defaults>
</compile_context>

<pallas_src>
import functools

import jax
import jax.numpy as jnp
from jax.experimental import pallas as pl
from jax.experimental.pallas import tpu as pltpu


# Safe on every generation: < v7x's 64 MiB physical VMEM, above the 16/32 MiB
# scoped defaults on v5e/v6e.
_VMEM_LIMIT = 48 * 1024 * 1024

_TM_EDGE = 256     # M-tile for EdgeConv (K copies of the tile live in VMEM)
_TM_DENSE = 512    # M-tile for the fused dense head
_TQ_PDIST = 256    # query-row tile for the pairwise-distance kernel


# ----------------------------------------------------------------------------
# Pallas kernels
# ----------------------------------------------------------------------------
def pdist_kernel(q_ref, k_ref, o_ref):
    """Per-(batch, query-tile) score 2*<qi,kj> - ||kj||^2.

    The per-query-row -||qi||^2 term is dropped: top_k along the last axis is
    invariant to a per-row constant, and this matrix is only used for top_k.
    q_ref: (1, TQ, C)  k_ref: (1, N, C)  o_ref: (1, TQ, N)   (all f32)
    """
    q = q_ref[0]                                   # (TQ, C)
    kk = k_ref[0]                                  # (N, C)
    inner = jax.lax.dot_general(                   # (TQ, N) = q @ kk^T (MXU)
        q, kk, (((1,), (1,)), ((), ())), preferred_element_type=jnp.float32)
    kk2 = kk * kk
    ones_row = jnp.ones((1, kk.shape[1]), jnp.float32)
    sq_t = jax.lax.dot_general(                    # (1, N) = ||kj||^2 via MXU
        ones_row, kk2, (((1,), (1,)), ((), ())), preferred_element_type=jnp.float32)
    o_ref[0] = 2.0 * inner - sq_t


def edgeconv_kernel(nbr_ref, ctr_ref, wn_ref, wd_ref, s_ref, b_ref, o_ref):
    """Fused EdgeConv block: 1x1 Conv2d + BN + LeakyReLU(0.2) + max over K.

    Uses the rewrite (nbr - ctr)@w_n + ctr@w_c = nbr@w_n + ctr@(w_c - w_n).
    nbr_ref: (K, TM, C)  bf16   gathered neighbor features
    ctr_ref: (TM, C)     bf16   center (per-point) features
    wn_ref : (C, Cout)   bf16   w[:C]
    wd_ref : (C, Cout)   bf16   w[C:] - w[:C]
    s_ref/b_ref: (1, Cout) f32  folded BN scale / shift
    o_ref  : (TM, Cout)  f32
    """
    K, TM, C = nbr_ref.shape
    s = s_ref[...]                                                   # (1, Cout)

    # k-invariant center contribution, pre-folded with the BN affine.
    ctr = jnp.dot(ctr_ref[...], wd_ref[...],
                  preferred_element_type=jnp.float32)                # (TM, Cout)
    cc = ctr * s + b_ref[...]                                        # (TM, Cout)

    # One tall MXU matmul over all K neighbors of the tile.
    nbr2d = nbr_ref[...].reshape(K * TM, C)
    z = jnp.dot(nbr2d, wn_ref[...],
                preferred_element_type=jnp.float32)                  # (K*TM, Cout)

    acc = None
    for j in range(K):                              # static, contiguous slices
        y = z[j * TM:(j + 1) * TM] * s + cc          # == s*(z_j + ctr) + b
        y = jnp.where(y >= 0.0, y, 0.2 * y)          # LeakyReLU(0.2)
        acc = y if acc is None else jnp.maximum(acc, y)
    o_ref[...] = acc


def fused_dense_kernel(x1_ref, x2_ref, x3_ref, x4_ref,
                       w5a_ref, w5b_ref, w5c_ref, w5d_ref, s5_ref, b5_ref,
                       wp1_ref, sp1_ref, bp1_ref, wp2_ref, bp2_ref, o_ref):
    """conv5 + point_project fused per M-tile; intermediates stay in VMEM.

    The torch.cat((x1,x2,x3,x4), dim=1) is replaced by splitting w5 into four
    input-channel groups and summing four matmuls.
    """
    bf = jnp.bfloat16
    # conv5: Conv1d(512, emb_dims) + BN + LeakyReLU(0.2)
    h = jnp.dot(x1_ref[...].astype(bf), w5a_ref[...], preferred_element_type=jnp.float32)
    h = h + jnp.dot(x2_ref[...].astype(bf), w5b_ref[...], preferred_element_type=jnp.float32)
    h = h + jnp.dot(x3_ref[...].astype(bf), w5c_ref[...], preferred_element_type=jnp.float32)
    h = h + jnp.dot(x4_ref[...].astype(bf), w5d_ref[...], preferred_element_type=jnp.float32)
    h = h * s5_ref[...] + b5_ref[...]
    h = jnp.where(h >= 0.0, h, 0.2 * h)
    # point_project[0..2]: Conv1d(emb_dims, 512, bias) + BN + ReLU
    h = jnp.dot(h.astype(bf), wp1_ref[...], preferred_element_type=jnp.float32)
    h = h * sp1_ref[...] + bp1_ref[...]
    h = jnp.maximum(h, 0.0)
    # point_project[3]: Conv1d(512, feature_dim, bias)
    h = jnp.dot(h.astype(bf), wp2_ref[...], preferred_element_type=jnp.float32)
    o_ref[...] = h + bp2_ref[...]


# ----------------------------------------------------------------------------
# Pallas wrappers
# ----------------------------------------------------------------------------
def pairwise_knn_scores(x, tq=_TQ_PDIST):
    """x: (B, N, C) f32 -> (B, N, N) scores whose per-row top_k == torch kNN."""
    B, N, C = x.shape
    tq = min(tq, N)
    return pl.pallas_call(
        pdist_kernel,
        out_shape=jax.ShapeDtypeStruct((B, N, N), jnp.float32),
        grid=(B, pl.cdiv(N, tq)),
        in_specs=[
            pl.BlockSpec((1, tq, C), lambda b, q: (b, q, 0)),   # query rows
            pl.BlockSpec((1, N, C), lambda b, q: (b, 0, 0)),    # full key set
        ],
        out_specs=pl.BlockSpec((1, tq, N), lambda b, q: (b, q, 0)),
        compiler_params=pltpu.CompilerParams(
            dimension_semantics=("parallel", "parallel"),
            vmem_limit_bytes=_VMEM_LIMIT),
    )(x, x)


def edge_conv(nbr, ctr, wn, wd, scale, shift, tm=_TM_EDGE):
    """nbr: (K, M, C) bf16, ctr: (M, C) bf16 -> (M, Cout) f32."""
    K, M, C = nbr.shape
    Cout = wn.shape[1]
    tm = min(tm, M)
    return pl.pallas_call(
        edgeconv_kernel,
        out_shape=jax.ShapeDtypeStruct((M, Cout), jnp.float32),
        grid=(pl.cdiv(M, tm),),
        in_specs=[
            pl.BlockSpec((K, tm, C), lambda i: (0, i, 0)),
            pl.BlockSpec((tm, C), lambda i: (i, 0)),
            pl.BlockSpec((C, Cout), lambda i: (0, 0)),   # resident weights
            pl.BlockSpec((C, Cout), lambda i: (0, 0)),
            pl.BlockSpec((1, Cout), lambda i: (0, 0)),
            pl.BlockSpec((1, Cout), lambda i: (0, 0)),
        ],
        out_specs=pl.BlockSpec((tm, Cout), lambda i: (i, 0)),
        compiler_params=pltpu.CompilerParams(
            dimension_semantics=("parallel",),
            vmem_limit_bytes=_VMEM_LIMIT),
    )(nbr, ctr, wn, wd, scale, shift)


def fused_point_head(x1, x2, x3, x4, p, tm=_TM_DENSE):
    """x1..x4: (M, 64/64/128/256) f32 -> (M, feature_dim) f32."""
    M = x1.shape[0]
    Dout = p["wp2"].shape[1]
    tm = min(tm, M)
    const = lambda i: (0, 0)
    return pl.pallas_call(
        fused_dense_kernel,
        out_shape=jax.ShapeDtypeStruct((M, Dout), jnp.float32),
        grid=(pl.cdiv(M, tm),),
        in_specs=[
            pl.BlockSpec((tm, x1.shape[1]), lambda i: (i, 0)),
            pl.BlockSpec((tm, x2.shape[1]), lambda i: (i, 0)),
            pl.BlockSpec((tm, x3.shape[1]), lambda i: (i, 0)),
            pl.BlockSpec((tm, x4.shape[1]), lambda i: (i, 0)),
            pl.BlockSpec(p["w5a"].shape, const),
            pl.BlockSpec(p["w5b"].shape, const),
            pl.BlockSpec(p["w5c"].shape, const),
            pl.BlockSpec(p["w5d"].shape, const),
            pl.BlockSpec(p["s5"].shape, const),
            pl.BlockSpec(p["b5"].shape, const),
            pl.BlockSpec(p["wp1"].shape, const),
            pl.BlockSpec(p["sp1"].shape, const),
            pl.BlockSpec(p["bp1"].shape, const),
            pl.BlockSpec(p["wp2"].shape, const),
            pl.BlockSpec(p["bp2"].shape, const),
        ],
        out_specs=pl.BlockSpec((tm, Dout), lambda i: (i, 0)),
        compiler_params=pltpu.CompilerParams(
            dimension_semantics=("parallel",),
            vmem_limit_bytes=_VMEM_LIMIT),
    )(x1, x2, x3, x4,
      p["w5a"], p["w5b"], p["w5c"], p["w5d"], p["s5"], p["b5"],
      p["wp1"], p["sp1"], p["bp1"], p["wp2"], p["bp2"])


# ----------------------------------------------------------------------------
# Graph feature: scores in Pallas, top_k + gather in plain JAX
# ----------------------------------------------------------------------------
def graph_feature(x, k):
    """x: (B, N, C) f32 -> (nbr (k, B*N, C) bf16, ctr (B*N, C) bf16)."""
    B, N, C = x.shape
    scores = pairwise_knn_scores(x)                     # (B, N, N) f32
    _, idx = jax.lax.top_k(scores, k)                   # (B, N, k) int32
    xb = x.astype(jnp.bfloat16)
    # Gather directly into the neighbor-leading layout (no HBM transpose).
    bidx = jnp.arange(B, dtype=idx.dtype)[None, :, None]   # (1, B, 1)
    idx_t = jnp.transpose(idx, (2, 0, 1))                  # (k, B, N)
    nbr = xb[bidx, idx_t]                                  # (k, B, N, C)
    return nbr.reshape(k, B * N, C), xb.reshape(B * N, C)


# ----------------------------------------------------------------------------
# Parameters (deterministic synthetic init; mirrors module __init__ shapes)
# ----------------------------------------------------------------------------
def init_params(key, emb_dims=1024, feature_dim=32):
    eps = 1e-5
    inv = 1.0 / jnp.sqrt(1.0 + eps)            # BN init: running_mean=0, var=1
    keys = jax.random.split(key, 32)
    ki = iter(keys)

    def w(shape):
        return 0.05 * jax.random.normal(next(ki), shape, jnp.float32)

    def bn(c):
        gamma = 1.0 + 0.1 * jax.random.normal(next(ki), (c,), jnp.float32)
        beta = 0.1 * jax.random.normal(next(ki), (c,), jnp.float32)
        return (gamma * inv).reshape(1, c), beta.reshape(1, c)

    p = {}

    def edge_params(name, cin, cout):
        # Full (2*cin, cout) 1x1 Conv2d weight, split per the concat rewrite:
        # wn = w[:cin] (applied to neighbors), wd = w[cin:] - w[:cin] (center).
        wfull = w((2 * cin, cout))
        p[name + "_wn"] = wfull[:cin].astype(jnp.bfloat16)
        p[name + "_wd"] = (wfull[cin:] - wfull[:cin]).astype(jnp.bfloat16)
        p[name + "_s"], p[name + "_b"] = bn(cout)

    edge_params("e1", 3, 64)
    edge_params("e2", 64, 64)
    edge_params("e3", 64, 128)
    edge_params("e4", 128, 256)

    # conv5: Conv1d(512, emb_dims, bias=False) + BN — split by input groups.
    w5 = w((512, emb_dims))
    p["w5a"] = w5[0:64].astype(jnp.bfloat16)
    p["w5b"] = w5[64:128].astype(jnp.bfloat16)
    p["w5c"] = w5[128:256].astype(jnp.bfloat16)
    p["w5d"] = w5[256:512].astype(jnp.bfloat16)
    p["s5"], p["b5"] = bn(emb_dims)

    # point_project: Conv1d(emb_dims, 512, bias) + BN + ReLU + Conv1d(512, fd, bias)
    p["wp1"] = w((emb_dims, 512)).astype(jnp.bfloat16)
    bias1 = 0.05 * jax.random.normal(next(ki), (512,), jnp.float32)
    sp1, shp1 = bn(512)
    p["sp1"] = sp1
    p["bp1"] = sp1 * bias1.reshape(1, -1) + shp1   # fold conv bias into BN shift
    p["wp2"] = w((512, feature_dim)).astype(jnp.bfloat16)
    p["bp2"] = (0.05 * jax.random.normal(next(ki), (feature_dim,), jnp.float32)
                ).reshape(1, -1)
    return p


# ----------------------------------------------------------------------------
# Full forward pass
# ----------------------------------------------------------------------------
def dgcnn_point_forward(x, params, *, k):
    """x: (B, 3, N) float32 (PyTorch NCW). Returns (B, feature_dim, N)."""
    B, _, N = x.shape
    xt = jnp.transpose(x, (0, 2, 1)).astype(jnp.float32)     # (B, N, 3)

    def block(feat, name):
        nbr, ctr = graph_feature(feat, k)
        out = edge_conv(nbr, ctr,
                        params[name + "_wn"], params[name + "_wd"],
                        params[name + "_s"], params[name + "_b"])
        return out.reshape(B, N, -1)                          # f32

    x1 = block(xt, "e1")     # (B, N, 64)
    x2 = block(x1, "e2")     # (B, N, 64)
    x3 = block(x2, "e3")     # (B, N, 128)
    x4 = block(x3, "e4")     # (B, N, 256)

    M = B * N
    h = fused_point_head(x1.reshape(M, -1), x2.reshape(M, -1),
                         x3.reshape(M, -1), x4.reshape(M, -1), params)
    out = h.reshape(B, N, -1)
    return jnp.transpose(out, (0, 2, 1))                      # (B, feature_dim, N)


# ----------------------------------------------------------------------------
if __name__ == "__main__":
    B, C_IN, N = 2, 3, 16
    K = 4
    EMB_DIMS = 1024        # point_project expects 1024 input channels
    FEATURE_DIM = 32

    key = jax.random.PRNGKey(0)
    k_x, k_p = jax.random.split(key)
    x = jax.random.normal(k_x, (B, C_IN, N), jnp.float32)
    params = init_params(k_p, emb_dims=EMB_DIMS, feature_dim=FEATURE_DIM)

    forward = jax.jit(functools.partial(dgcnn_point_forward, k=K))
    out = forward(x, params)
    out = jax.block_until_ready(out)
    assert out.shape == (B, FEATURE_DIM, N), out.shape
    assert bool(jnp.all(jnp.isfinite(out)))
    print("KERNEL_OK")
</pallas_src>

<mosaic_0001>
module attributes {stable_mosaic.version = 11 : i64} {
  func.func @pdist_kernel(%arg0: i32, %arg1: i32, %arg2: memref<1x16x3xf32, #tpu.memory_space<vmem>>, %arg3: memref<1x16x3xf32, #tpu.memory_space<vmem>>, %arg4: memref<1x16x16xf32, #tpu.memory_space<vmem>>) attributes {dimension_semantics = [#tpu.dimension_semantics<parallel>, #tpu.dimension_semantics<parallel>], iteration_bounds = array<i64: 2, 1>, scalar_prefetch = 0 : i64, scratch_operands = 0 : i64, tpu.core_type = #tpu.core_type<tc>, window_params = [{transform_indices = @transform_0, window_bounds = array<i64: 1, 16, 3>}, {transform_indices = @transform_1, window_bounds = array<i64: 1, 16, 3>}, {transform_indices = @transform_2, window_bounds = array<i64: 1, 16, 16>}]} {
    %c0 = arith.constant 0 : index
    %c0_0 = arith.constant 0 : index
    %c0_1 = arith.constant 0 : index
    %0 = vector.load %arg2[%c0, %c0_0, %c0_1] : memref<1x16x3xf32, #tpu.memory_space<vmem>>, vector<1x16x3xf32>
    %1 = vector.shape_cast %0 : vector<1x16x3xf32> to vector<16x3xf32>
    %c0_2 = arith.constant 0 : index
    %c0_3 = arith.constant 0 : index
    %c0_4 = arith.constant 0 : index
    %2 = vector.load %arg3[%c0_2, %c0_3, %c0_4] : memref<1x16x3xf32, #tpu.memory_space<vmem>>, vector<1x16x3xf32>
    %3 = vector.shape_cast %2 : vector<1x16x3xf32> to vector<16x3xf32>
    %cst = arith.constant dense<0.000000e+00> : vector<16x16xf32>
    %4 = tpu.matmul %1, %3, %cst {dimension_numbers = #tpu.dot_dimension_numbers<[1], [1], [0], [0], [0, 0, 1, 0], [], []>} : vector<16x3xf32>, vector<16x3xf32>, vector<16x16xf32> -> vector<16x16xf32>
    %5 = arith.mulf %3, %3 : vector<16x3xf32>
    %cst_5 = arith.constant 1.000000e+00 : f32
    %6 = vector.broadcast %cst_5 : f32 to vector<1x3xf32>
    %cst_6 = arith.constant dense<0.000000e+00> : vector<1x16xf32>
    %7 = tpu.matmul %6, %5, %cst_6 {dimension_numbers = #tpu.dot_dimension_numbers<[1], [1], [0], [0], [0, 0, 1, 0], [], []>} : vector<1x3xf32>, vector<16x3xf32>, vector<1x16xf32> -> vector<1x16xf32>
    %cst_7 = arith.constant 2.000000e+00 : f32
    %8 = vector.broadcast %cst_7 : f32 to vector<16x16xf32>
    %9 = arith.mulf %8, %4 : vector<16x16xf32>
    %10 = vector.broadcast %7 : vector<1x16xf32> to vector<16x16xf32>
    %11 = arith.subf %9, %10 : vector<16x16xf32>
    %c0_8 = arith.constant 0 : index
    %c0_9 = arith.constant 0 : index
    %c0_10 = arith.constant 0 : index
    %12 = vector.load %arg4[%c0_8, %c0_9, %c0_10] : memref<1x16x16xf32, #tpu.memory_space<vmem>>, vector<1x16x16xf32>
    %13 = vector.shape_cast %12 : vector<1x16x16xf32> to vector<16x16xf32>
    %14 = vector.shape_cast %11 : vector<16x16xf32> to vector<1x16x16xf32>
    tpu.vector_store %arg4[%c0_8, %c0_9, %c0_10], %14 {strides = array<i32>} : memref<1x16x16xf32, #tpu.memory_space<vmem>>, vector<1x16x16xf32>,
    return
  }
  func.func @transform_0(%arg0: i32, %arg1: i32) -> (i32, i32, i32) {
    %c0_i32 = arith.constant 0 : i32
    %c0_i32_0 = arith.constant 0 : i32
    return %arg0, %arg1, %c0_i32 : i32, i32, i32
  }
  func.func @transform_1(%arg0: i32, %arg1: i32) -> (i32, i32, i32) {
    %c0_i32 = arith.constant 0 : i32
    %c0_i32_0 = arith.constant 0 : i32
    %c0_i32_1 = arith.constant 0 : i32
    return %arg0, %c0_i32, %c0_i32_0 : i32, i32, i32
  }
  func.func @transform_2(%arg0: i32, %arg1: i32) -> (i32, i32, i32) {
    %c0_i32 = arith.constant 0 : i32
    %c0_i32_0 = arith.constant 0 : i32
    return %arg0, %arg1, %c0_i32 : i32, i32, i32
  }
}

module attributes {stable_mosaic.version = 11 : i64} {
  func.func @edgeconv_kernel(%arg0: i32, %arg1: memref<4x32x3xbf16, #tpu.memory_space<vmem>>, %arg2: memref<32x3xbf16, #tpu.memory_space<vmem>>, %arg3: memref<3x64xbf16, #tpu.memory_space<vmem>>, %arg4: memref<3x64xbf16, #tpu.memory_space<vmem>>, %arg5: memref<1x64xf32, #tpu.memory_space<vmem>>, %arg6: memref<1x64xf32, #tpu.memory_space<vmem>>, %arg7: memref<32x64xf32, #tpu.memory_space<vmem>>) attributes {dimension_semantics = [#tpu.dimension_semantics<parallel>], iteration_bounds = array<i64: 1>, scalar_prefetch = 0 : i64, scratch_operands = 0 : i64, tpu.core_type = #tpu.core_type<tc>, window_params = [{transform_indices = @transform_0, window_bounds = array<i64: 4, 32, 3>}, {transform_indices = @transform_1, window_bounds = array<i64: 32, 3>}, {pipeline_mode = #tpu.pipeline_mode<synchronous>, transform_indices = @transform_2, window_bounds = array<i64: 3, 64>}, {pipeline_mode = #tpu.pipeline_mode<synchronous>, transform_indices = @transform_3, window_bounds = array<i64: 3, 64>}, {pipeline_mode = #tpu.pipeline_mode<synchronous>, transform_indices = @transform_4, window_bounds = array<i64: 1, 64>}, {pipeline_mode = #tpu.pipeline_mode<synchronous>, transform_indices = @transform_5, window_bounds = array<i64: 1, 64>}, {transform_indices = @transform_6, window_bounds = array<i64: 32, 64>}]} {
    %c0 = arith.constant 0 : index
    %c0_0 = arith.constant 0 : index
    %0 = vector.load %arg5[%c0, %c0_0] : memref<1x64xf32, #tpu.memory_space<vmem>>, vector<1x64xf32>
    %c0_1 = arith.constant 0 : index
    %c0_2 = arith.constant 0 : index
    %1 = vector.load %arg2[%c0_1, %c0_2] : memref<32x3xbf16, #tpu.memory_space<vmem>>, vector<32x3xbf16>
    %c0_3 = arith.constant 0 : index
    %c0_4 = arith.constant 0 : index
    %2 = vector.load %arg4[%c0_3, %c0_4] : memref<3x64xbf16, #tpu.memory_space<vmem>>, vector<3x64xbf16>
    %cst = arith.constant dense<0.000000e+00> : vector<32x64xf32>
    %3 = tpu.matmul %1, %2, %cst {dimension_numbers = #tpu.dot_dimension_numbers<[1], [0], [0], [1], [0, 0, 1, 1], [], []>} : vector<32x3xbf16>, vector<3x64xbf16>, vector<32x64xf32> -> vector<32x64xf32>
    %4 = vector.broadcast %0 : vector<1x64xf32> to vector<32x64xf32>
    %5 = arith.mulf %3, %4 : vector<32x64xf32>
    %c0_5 = arith.constant 0 : index
    %c0_6 = arith.constant 0 : index
    %6 = vector.load %arg6[%c0_5, %c0_6] : memref<1x64xf32, #tpu.memory_space<vmem>>, vector<1x64xf32>
    %7 = vector.broadcast %6 : vector<1x64xf32> to vector<32x64xf32>
    %8 = arith.addf %5, %7 : vector<32x64xf32>
    %c0_7 = arith.constant 0 : index
    %c0_8 = arith.constant 0 : index
    %c0_9 = arith.constant 0 : index
    %9 = vector.load %arg1[%c0_7, %c0_8, %c0_9] : memref<4x32x3xbf16, #tpu.memory_space<vmem>>, vector<4x32x3xbf16>
    %10 = vector.shape_cast %9 : vector<4x32x3xbf16> to vector<128x3xbf16>
    %c0_10 = arith.constant 0 : index
    %c0_11 = arith.constant 0 : index
    %11 = vector.load %arg3[%c0_10, %c0_11] : memref<3x64xbf16, #tpu.memory_space<vmem>>, vector<3x64xbf16>
    %cst_12 = arith.constant dense<0.000000e+00> : vector<128x64xf32>
    %12 = tpu.matmul %10, %11, %cst_12 {dimension_numbers = #tpu.dot_dimension_numbers<[1], [0], [0], [1], [0, 0, 1, 1], [], []>} : vector<128x3xbf16>, vector<3x64xbf16>, vector<128x64xf32> -> vector<128x64xf32>
    %13 = vector.extract_strided_slice %12 {offsets = [0, 0], sizes = [32, 64], strides = [1, 1]} : vector<128x64xf32> to vector<32x64xf32>
    %14 = vector.broadcast %0 : vector<1x64xf32> to vector<32x64xf32>
    %15 = arith.mulf %13, %14 : vector<32x64xf32>
    %16 = arith.addf %15, %8 : vector<32x64xf32>
    %cst_13 = arith.constant 0.000000e+00 : f32
    %17 = vector.broadcast %cst_13 : f32 to vector<32x64xf32>
    %18 = arith.cmpf oge, %16, %17 : vector<32x64xf32>
    %cst_14 = arith.constant 2.000000e-01 : f32
    %19 = vector.broadcast %cst_14 : f32 to vector<32x64xf32>
    %20 = arith.mulf %19, %16 : vector<32x64xf32>
    %21 = arith.select %18, %16, %20 : vector<32x64xi1>, vector<32x64xf32>
    %22 = vector.extract_strided_slice %12 {offsets = [32, 0], sizes = [32, 64], strides = [1, 1]} : vector<128x64xf32> to vector<32x64xf32>
    %23 = vector.broadcast %0 : vector<1x64xf32> to vector<32x64xf32>
    %24 = arith.mulf %22, %23 : vector<32x64xf32>
    %25 = arith.addf %24, %8 : vector<32x64xf32>
    %cst_15 = arith.constant 0.000000e+00 : f32
    %26 = vector.broadcast %cst_15 : f32 to vector<32x64xf32>
    %27 = arith.cmpf oge, %25, %26 : vector<32x64xf32>
    %cst_16 = arith.constant 2.000000e-01 : f32
    %28 = vector.broadcast %cst_16 : f32 to vector<32x64xf32>
    %29 = arith.mulf %28, %25 : vector<32x64xf32>
    %30 = arith.select %27, %25, %29 : vector<32x64xi1>, vector<32x64xf32>
    %31 = arith.maximumf %21, %30 : vector<32x64xf32>
    %32 = vector.extract_strided_slice %12 {offsets = [64, 0], sizes = [32, 64], strides = [1, 1]} : vector<128x64xf32> to vector<32x64xf32>
    %33 = vector.broadcast %0 : vector<1x64xf32> to vector<32x64xf32>
    %34 = arith.mulf %32, %33 : vector<32x64xf32>
    %35 = arith.addf %34, %8 : vector<32x64xf32>
    %cst_17 = arith.constant 0.000000e+00 : f32
    %36 = vector.broadcast %cst_17 : f32 to vector<32x64xf32>
    %37 = arith.cmpf oge, %35, %36 : vector<32x64xf32>
    %cst_18 = arith.constant 2.000000e-01 : f32
    %38 = vector.broadcast %cst_18 : f32 to vector<32x64xf32>
    %39 = arith.mulf %38, %35 : vector<32x64xf32>
    %40 = arith.select %37, %35, %39 : vector<32x64xi1>, vector<32x64xf32>
    %41 = arith.maximumf %31, %40 : vector<32x64xf32>
    %42 = vector.extract_strided_slice %12 {offsets = [96, 0], sizes = [32, 64], strides = [1, 1]} : vector<128x64xf32> to vector<32x64xf32>
    %43 = vector.broadcast %0 : vector<1x64xf32> to vector<32x64xf32>
    %44 = arith.mulf %42, %43 : vector<32x64xf32>
    %45 = arith.addf %44, %8 : vector<32x64xf32>
    %cst_19 = arith.constant 0.000000e+00 : f32
    %46 = vector.broadcast %cst_19 : f32 to vector<32x64xf32>
    %47 = arith.cmpf oge, %45, %46 : vector<32x64xf32>
    %cst_20 = arith.constant 2.000000e-01 : f32
    %48 = vector.broadcast %cst_20 : f32 to vector<32x64xf32>
    %49 = arith.mulf %48, %45 : vector<32x64xf32>
    %50 = arith.select %47, %45, %49 : vector<32x64xi1>, vector<32x64xf32>
    %51 = arith.maximumf %41, %50 : vector<32x64xf32>
    %c0_21 = arith.constant 0 : index
    %c0_22 = arith.constant 0 : index
    %52 = vector.load %arg7[%c0_21, %c0_22] : memref<32x64xf32, #tpu.memory_space<vmem>>, vector<32x64xf32>
    tpu.vector_store %arg7[%c0_21, %c0_22], %51 {strides = array<i32>} : memref<32x64xf32, #tpu.memory_space<vmem>>, vector<32x64xf32>,
    return
  }
  func.func @transform_0(%arg0: i32) -> (i32, i32, i32) {
    %c0_i32 = arith.constant 0 : i32
    %c0_i32_0 = arith.constant 0 : i32
    %c0_i32_1 = arith.constant 0 : i32
    return %c0_i32, %arg0, %c0_i32_0 : i32, i32, i32
  }
  func.func @transform_1(%arg0: i32) -> (i32, i32) {
    %c0_i32 = arith.constant 0 : i32
    %c0_i32_0 = arith.constant 0 : i32
    return %arg0, %c0_i32 : i32, i32
  }
  func.func @transform_2(%arg0: i32) -> (i32, i32) {
    %c0_i32 = arith.constant 0 : i32
    %c0_i32_0 = arith.constant 0 : i32
    %c0_i32_1 = arith.constant 0 : i32
    return %c0_i32, %c0_i32_0 : i32, i32
  }
  func.func @transform_3(%arg0: i32) -> (i32, i32) {
    %c0_i32 = arith.constant 0 : i32
    %c0_i32_0 = arith.constant 0 : i32
    %c0_i32_1 = arith.constant 0 : i32
    return %c0_i32, %c0_i32_0 : i32, i32
  }
  func.func @transform_4(%arg0: i32) -> (i32, i32) {
    %c0_i32 = arith.constant 0 : i32
    %c0_i32_0 = arith.constant 0 : i32
    %c0_i32_1 = arith.constant 0 : i32
    return %c0_i32, %c0_i32_0 : i32, i32
  }
  func.func @transform_5(%arg0: i32) -> (i32, i32) {
    %c0_i32 = arith.constant 0 : i32
    %c0_i32_0 = arith.constant 0 : i32
    %c0_i32_1 = arith.constant 0 : i32
    return %c0_i32, %c0_i32_0 : i32, i32
  }
  func.func @transform_6(%arg0: i32) -> (i32, i32) {
    %c0_i32 = arith.constant 0 : i32
    %c0_i32_0 = arith.constant 0 : i32
    return %arg0, %c0_i32 : i32, i32
  }
}

module attributes {stable_mosaic.version = 11 : i64} {
  func.func @pdist_kernel(%arg0: i32, %arg1: i32, %arg2: memref<1x16x64xf32, #tpu.memory_space<vmem>>, %arg3: memref<1x16x64xf32, #tpu.memory_space<vmem>>, %arg4: memref<1x16x16xf32, #tpu.memory_space<vmem>>) attributes {dimension_semantics = [#tpu.dimension_semantics<parallel>, #tpu.dimension_semantics<parallel>], iteration_bounds = array<i64: 2, 1>, scalar_prefetch = 0 : i64, scratch_operands = 0 : i64, tpu.core_type = #tpu.core_type<tc>, window_params = [{transform_indices = @transform_0, window_bounds = array<i64: 1, 16, 64>}, {transform_indices = @transform_1, window_bounds = array<i64: 1, 16, 64>}, {transform_indices = @transform_2, window_bounds = array<i64: 1, 16, 16>}]} {
    %c0 = arith.constant 0 : index
    %c0_0 = arith.constant 0 : index
    %c0_1 = arith.constant 0 : index
    %0 = vector.load %arg2[%c0, %c0_0, %c0_1] : memref<1x16x64xf32, #tpu.memory_space<vmem>>, vector<1x16x64xf32>
    %1 = vector.shape_cast %0 : vector<1x16x64xf32> to vector<16x64xf32>
    %c0_2 = arith.constant 0 : index
    %c0_3 = arith.constant 0 : index
    %c0_4 = arith.constant 0 : index
    %2 = vector.load %arg3[%c0_2, %c0_3, %c0_4] : memref<1x16x64xf32, #tpu.memory_space<vmem>>, vector<1x16x64xf32>
    %3 = vector.shape_cast %2 : vector<1x16x64xf32> to vector<16x64xf32>
    %cst = arith.constant dense<0.000000e+00> : vector<16x16xf32>
    %4 = tpu.matmul %1, %3, %cst {dimension_numbers = #tpu.dot_dimension_numbers<[1], [1], [0], [0], [0, 0, 1, 0], [], []>} : vector<16x64xf32>, vector<16x64xf32>, vector<16x16xf32> -> vector<16x16xf32>
    %5 = arith.mulf %3, %3 : vector<16x64xf32>
    %cst_5 = arith.constant 1.000000e+00 : f32
    %6 = vector.broadcast %cst_5 : f32 to vector<1x64xf32>
    %cst_6 = arith.constant dense<0.000000e+00> : vector<1x16xf32>
    %7 = tpu.matmul %6, %5, %cst_6 {dimension_numbers = #tpu.dot_dimension_numbers<[1], [1], [0], [0], [0, 0, 1, 0], [], []>} : vector<1x64xf32>, vector<16x64xf32>, vector<1x16xf32> -> vector<1x16xf32>
    %cst_7 = arith.constant 2.000000e+00 : f32
    %8 = vector.broadcast %cst_7 : f32 to vector<16x16xf32>
    %9 = arith.mulf %8, %4 : vector<16x16xf32>
    %10 = vector.broadcast %7 : vector<1x16xf32> to vector<16x16xf32>
    %11 = arith.subf %9, %10 : vector<16x16xf32>
    %c0_8 = arith.constant 0 : index
    %c0_9 = arith.constant 0 : index
    %c0_10 = arith.constant 0 : index
    %12 = vector.load %arg4[%c0_8, %c0_9, %c0_10] : memref<1x16x16xf32, #tpu.memory_space<vmem>>, vector<1x16x16xf32>
    %13 = vector.shape_cast %12 : vector<1x16x16xf32> to vector<16x16xf32>
    %14 = vector.shape_cast %11 : vector<16x16xf32> to vector<1x16x16xf32>
    tpu.vector_store %arg4[%c0_8, %c0_9, %c0_10], %14 {strides = array<i32>} : memref<1x16x16xf32, #tpu.memory_space<vmem>>, vector<1x16x16xf32>,
    return
  }
  func.func @transform_0(%arg0: i32, %arg1: i32) -> (i32, i32, i32) {
    %c0_i32 = arith.constant 0 : i32
    %c0_i32_0 = arith.constant 0 : i32
    return %arg0, %arg1, %c0_i32 : i32, i32, i32
  }
  func.func @transform_1(%arg0: i32, %arg1: i32) -> (i32, i32, i32) {
    %c0_i32 = arith.constant 0 : i32
    %c0_i32_0 = arith.constant 0 : i32
    %c0_i32_1 = arith.constant 0 : i32
    return %arg0, %c0_i32, %c0_i32_0 : i32, i32, i32
  }
  func.func @transform_2(%arg0: i32, %arg1: i32) -> (i32, i32, i32) {
    %c0_i32 = arith.constant 0 : i32
    %c0_i32_0 = arith.constant 0 : i32
    return %arg0, %arg1, %c0_i32 : i32, i32, i32
  }
}

module attributes {stable_mosaic.version = 11 : i64} {
  func.func @edgeconv_kernel(%arg0: i32, %arg1: memref<4x32x64xbf16, #tpu.memory_space<vmem>>, %arg2: memref<32x64xbf16, #tpu.memory_space<vmem>>, %arg3: memref<64x64xbf16, #tpu.memory_space<vmem>>, %arg4: memref<64x64xbf16, #tpu.memory_space<vmem>>, %arg5: memref<1x64xf32, #tpu.memory_space<vmem>>, %arg6: memref<1x64xf32, #tpu.memory_space<vmem>>, %arg7: memref<32x64xf32, #tpu.memory_space<vmem>>) attributes {dimension_semantics = [#tpu.dimension_semantics<parallel>], iteration_bounds = array<i64: 1>, scalar_prefetch = 0 : i64, scratch_operands = 0 : i64, tpu.core_type = #tpu.core_type<tc>, window_params = [{transform_indices = @transform_0, window_bounds = array<i64: 4, 32, 64>}, {transform_indices = @transform_1, window_bounds = array<i64: 32, 64>}, {pipeline_mode = #tpu.pipeline_mode<synchronous>, transform_indices = @transform_2, window_bounds = array<i64: 64, 64>}, {pipeline_mode = #tpu.pipeline_mode<synchronous>, transform_indices = @transform_3, window_bounds = array<i64: 64, 64>}, {pipeline_mode = #tpu.pipeline_mode<synchronous>, transform_indices = @transform_4, window_bounds = array<i64: 1, 64>}, {pipeline_mode = #tpu.pipeline_mode<synchronous>, transform_indices = @transform_5, window_bounds = array<i64: 1, 64>}, {transform_indices = @transform_6, window_bounds = array<i64: 32, 64>}]} {
    %c0 = arith.constant 0 : index
    %c0_0 = arith.constant 0 : index
    %0 = vector.load %arg5[%c0, %c0_0] : memref<1x64xf32, #tpu.memory_space<vmem>>, vector<1x64xf32>
    %c0_1 = arith.constant 0 : index
    %c0_2 = arith.constant 0 : index
    %1 = vector.load %arg2[%c0_1, %c0_2] : memref<32x64xbf16, #tpu.memory_space<vmem>>, vector<32x64xbf16>
    %c0_3 = arith.constant 0 : index
    %c0_4 = arith.constant 0 : index
    %2 = vector.load %arg4[%c0_3, %c0_4] : memref<64x64xbf16, #tpu.memory_space<vmem>>, vector<64x64xbf16>
    %cst = arith.constant dense<0.000000e+00> : vector<32x64xf32>
    %3 = tpu.matmul %1, %2, %cst {dimension_numbers = #tpu.dot_dimension_numbers<[1], [0], [0], [1], [0, 0, 1, 1], [], []>} : vector<32x64xbf16>, vector<64x64xbf16>, vector<32x64xf32> -> vector<32x64xf32>
    %4 = vector.broadcast %0 : vector<1x64xf32> to vector<32x64xf32>
    %5 = arith.mulf %3, %4 : vector<32x64xf32>
    %c0_5 = arith.constant 0 : index
    %c0_6 = arith.constant 0 : index
    %6 = vector.load %arg6[%c0_5, %c0_6] : memref<1x64xf32, #tpu.memory_space<vmem>>, vector<1x64xf32>
    %7 = vector.broadcast %6 : vector<1x64xf32> to vector<32x64xf32>
    %8 = arith.addf %5, %7 : vector<32x64xf32>
    %c0_7 = arith.constant 0 : index
    %c0_8 = arith.constant 0 : index
    %c0_9 = arith.constant 0 : index
    %9 = vector.load %arg1[%c0_7, %c0_8, %c0_9] : memref<4x32x64xbf16, #tpu.memory_space<vmem>>, vector<4x32x64xbf16>
    %10 = vector.shape_cast %9 : vector<4x32x64xbf16> to vector<128x64xbf16>
    %c0_10 = arith.constant 0 : index
    %c0_11 = arith.constant 0 : index
    %11 = vector.load %arg3[%c0_10, %c0_11] : memref<64x64xbf16, #tpu.memory_space<vmem>>, vector<64x64xbf16>
    %cst_12 = arith.constant dense<0.000000e+00> : vector<128x64xf32>
    %12 = tpu.matmul %10, %11, %cst_12 {dimension_numbers = #tpu.dot_dimension_numbers<[1], [0], [0], [1], [0, 0, 1, 1], [], []>} : vector<128x64xbf16>, vector<64x64xbf16>, vector<128x64xf32> -> vector<128x64xf32>
    %13 = vector.extract_strided_slice %12 {offsets = [0, 0], sizes = [32, 64], strides = [1, 1]} : vector<128x64xf32> to vector<32x64xf32>
    %14 = vector.broadcast %0 : vector<1x64xf32> to vector<32x64xf32>
    %15 = arith.mulf %13, %14 : vector<32x64xf32>
    %16 = arith.addf %15, %8 : vector<32x64xf32>
    %cst_13 = arith.constant 0.000000e+00 : f32
    %17 = vector.broadcast %cst_13 : f32 to vector<32x64xf32>
    %18 = arith.cmpf oge, %16, %17 : vector<32x64xf32>
    %cst_14 = arith.constant 2.000000e-01 : f32
    %19 = vector.broadcast %cst_14 : f32 to vector<32x64xf32>
    %20 = arith.mulf %19, %16 : vector<32x64xf32>
    %21 = arith.select %18, %16, %20 : vector<32x64xi1>, vector<32x64xf32>
    %22 = vector.extract_strided_slice %12 {offsets = [32, 0], sizes = [32, 64], strides = [1, 1]} : vector<128x64xf32> to vector<32x64xf32>
    %23 = vector.broadcast %0 : vector<1x64xf32> to vector<32x64xf32>
    %24 = arith.mulf %22, %23 : vector<32x64xf32>
    %25 = arith.addf %24, %8 : vector<32x64xf32>
    %cst_15 = arith.constant 0.000000e+00 : f32
    %26 = vector.broadcast %cst_15 : f32 to vector<32x64xf32>
    %27 = arith.cmpf oge, %25, %26 : vector<32x64xf32>
    %cst_16 = arith.constant 2.000000e-01 : f32
    %28 = vector.broadcast %cst_16 : f32 to vector<32x64xf32>
    %29 = arith.mulf %28, %25 : vector<32x64xf32>
    %30 = arith.select %27, %25, %29 : vector<32x64xi1>, vector<32x64xf32>
    %31 = arith.maximumf %21, %30 : vector<32x64xf32>
    %32 = vector.extract_strided_slice %12 {offsets = [64, 0], sizes = [32, 64], strides = [1, 1]} : vector<128x64xf32> to vector<32x64xf32>
    %33 = vector.broadcast %0 : vector<1x64xf32> to vector<32x64xf32>
    %34 = arith.mulf %32, %33 : vector<32x64xf32>
    %35 = arith.addf %34, %8 : vector<32x64xf32>
    %cst_17 = arith.constant 0.000000e+00 : f32
    %36 = vector.broadcast %cst_17 : f32 to vector<32x64xf32>
    %37 = arith.cmpf oge, %35, %36 : vector<32x64xf32>
    %cst_18 = arith.constant 2.000000e-01 : f32
    %38 = vector.broadcast %cst_18 : f32 to vector<32x64xf32>
    %39 = arith.mulf %38, %35 : vector<32x64xf32>
    %40 = arith.select %37, %35, %39 : vector<32x64xi1>, vector<32x64xf32>
    %41 = arith.maximumf %31, %40 : vector<32x64xf32>
    %42 = vector.extract_strided_slice %12 {offsets = [96, 0], sizes = [32, 64], strides = [1, 1]} : vector<128x64xf32> to vector<32x64xf32>
    %43 = vector.broadcast %0 : vector<1x64xf32> to vector<32x64xf32>
    %44 = arith.mulf %42, %43 : vector<32x64xf32>
    %45 = arith.addf %44, %8 : vector<32x64xf32>
    %cst_19 = arith.constant 0.000000e+00 : f32
    %46 = vector.broadcast %cst_19 : f32 to vector<32x64xf32>
    %47 = arith.cmpf oge, %45, %46 : vector<32x64xf32>
    %cst_20 = arith.constant 2.000000e-01 : f32
    %48 = vector.broadcast %cst_20 : f32 to vector<32x64xf32>
    %49 = arith.mulf %48, %45 : vector<32x64xf32>
    %50 = arith.select %47, %45, %49 : vector<32x64xi1>, vector<32x64xf32>
    %51 = arith.maximumf %41, %50 : vector<32x64xf32>
    %c0_21 = arith.constant 0 : index
    %c0_22 = arith.constant 0 : index
    %52 = vector.load %arg7[%c0_21, %c0_22] : memref<32x64xf32, #tpu.memory_space<vmem>>, vector<32x64xf32>
    tpu.vector_store %arg7[%c0_21, %c0_22], %51 {strides = array<i32>} : memref<32x64xf32, #tpu.memory_space<vmem>>, vector<32x64xf32>,
    return
  }
  func.func @transform_0(%arg0: i32) -> (i32, i32, i32) {
    %c0_i32 = arith.constant 0 : i32
    %c0_i32_0 = arith.constant 0 : i32
    %c0_i32_1 = arith.constant 0 : i32
    return %c0_i32, %arg0, %c0_i32_0 : i32, i32, i32
  }
  func.func @transform_1(%arg0: i32) -> (i32, i32) {
    %c0_i32 = arith.constant 0 : i32
    %c0_i32_0 = arith.constant 0 : i32
    return %arg0, %c0_i32 : i32, i32
  }
  func.func @transform_2(%arg0: i32) -> (i32, i32) {
    %c0_i32 = arith.constant 0 : i32
    %c0_i32_0 = arith.constant 0 : i32
    %c0_i32_1 = arith.constant 0 : i32
    return %c0_i32, %c0_i32_0 : i32, i32
  }
  func.func @transform_3(%arg0: i32) -> (i32, i32) {
    %c0_i32 = arith.constant 0 : i32
    %c0_i32_0 = arith.constant 0 : i32
    %c0_i32_1 = arith.constant 0 : i32
    return %c0_i32, %c0_i32_0 : i32, i32
  }
  func.func @transform_4(%arg0: i32) -> (i32, i32) {
    %c0_i32 = arith.constant 0 : i32
    %c0_i32_0 = arith.constant 0 : i32
    %c0_i32_1 = arith.constant 0 : i32
    return %c0_i32, %c0_i32_0 : i32, i32
  }
  func.func @transform_5(%arg0: i32) -> (i32, i32) {
    %c0_i32 = arith.constant 0 : i32
    %c0_i32_0 = arith.constant 0 : i32
    %c0_i32_1 = arith.constant 0 : i32
    return %c0_i32, %c0_i32_0 : i32, i32
  }
  func.func @transform_6(%arg0: i32) -> (i32, i32) {
    %c0_i32 = arith.constant 0 : i32
    %c0_i32_0 = arith.constant 0 : i32
    return %arg0, %c0_i32 : i32, i32
  }
}

module attributes {stable_mosaic.version = 11 : i64} {
  func.func @edgeconv_kernel(%arg0: i32, %arg1: memref<4x32x64xbf16, #tpu.memory_space<vmem>>, %arg2: memref<32x64xbf16, #tpu.memory_space<vmem>>, %arg3: memref<64x128xbf16, #tpu.memory_space<vmem>>, %arg4: memref<64x128xbf16, #tpu.memory_space<vmem>>, %arg5: memref<1x128xf32, #tpu.memory_space<vmem>>, %arg6: memref<1x128xf32, #tpu.memory_space<vmem>>, %arg7: memref<32x128xf32, #tpu.memory_space<vmem>>) attributes {dimension_semantics = [#tpu.dimension_semantics<parallel>], iteration_bounds = array<i64: 1>, scalar_prefetch = 0 : i64, scratch_operands = 0 : i64, tpu.core_type = #tpu.core_type<tc>, window_params = [{transform_indices = @transform_0, window_bounds = array<i64: 4, 32, 64>}, {transform_indices = @transform_1, window_bounds = array<i64: 32, 64>}, {pipeline_mode = #tpu.pipeline_mode<synchronous>, transform_indices = @transform_2, window_bounds = array<i64: 64, 128>}, {pipeline_mode = #tpu.pipeline_mode<synchronous>, transform_indices = @transform_3, window_bounds = array<i64: 64, 128>}, {pipeline_mode = #tpu.pipeline_mode<synchronous>, transform_indices = @transform_4, window_bounds = array<i64: 1, 128>}, {pipeline_mode = #tpu.pipeline_mode<synchronous>, transform_indices = @transform_5, window_bounds = array<i64: 1, 128>}, {transform_indices = @transform_6, window_bounds = array<i64: 32, 128>}]} {
    %c0 = arith.constant 0 : index
    %c0_0 = arith.constant 0 : index
    %0 = vector.load %arg5[%c0, %c0_0] : memref<1x128xf32, #tpu.memory_space<vmem>>, vector<1x128xf32>
    %c0_1 = arith.constant 0 : index
    %c0_2 = arith.constant 0 : index
    %1 = vector.load %arg2[%c0_1, %c0_2] : memref<32x64xbf16, #tpu.memory_space<vmem>>, vector<32x64xbf16>
    %c0_3 = arith.constant 0 : index
    %c0_4 = arith.constant 0 : index
    %2 = vector.load %arg4[%c0_3, %c0_4] : memref<64x128xbf16, #tpu.memory_space<vmem>>, vector<64x128xbf16>
    %cst = arith.constant dense<0.000000e+00> : vector<32x128xf32>
    %3 = tpu.matmul %1, %2, %cst {dimension_numbers = #tpu.dot_dimension_numbers<[1], [0], [0], [1], [0, 0, 1, 1], [], []>} : vector<32x64xbf16>, vector<64x128xbf16>, vector<32x128xf32> -> vector<32x128xf32>
    %4 = vector.broadcast %0 : vector<1x128xf32> to vector<32x128xf32>
    %5 = arith.mulf %3, %4 : vector<32x128xf32>
    %c0_5 = arith.constant 0 : index
    %c0_6 = arith.constant 0 : index
    %6 = vector.load %arg6[%c0_5, %c0_6] : memref<1x128xf32, #tpu.memory_space<vmem>>, vector<1x128xf32>
    %7 = vector.broadcast %6 : vector<1x128xf32> to vector<32x128xf32>
    %8 = arith.addf %5, %7 : vector<32x128xf32>
    %c0_7 = arith.constant 0 : index
    %c0_8 = arith.constant 0 : index
    %c0_9 = arith.constant 0 : index
    %9 = vector.load %arg1[%c0_7, %c0_8, %c0_9] : memref<4x32x64xbf16, #tpu.memory_space<vmem>>, vector<4x32x64xbf16>
    %10 = vector.shape_cast %9 : vector<4x32x64xbf16> to vector<128x64xbf16>
    %c0_10 = arith.constant 0 : index
    %c0_11 = arith.constant 0 : index
    %11 = vector.load %arg3[%c0_10, %c0_11] : memref<64x128xbf16, #tpu.memory_space<vmem>>, vector<64x128xbf16>
    %cst_12 = arith.constant dense<0.000000e+00> : vector<128x128xf32>
    %12 = tpu.matmul %10, %11, %cst_12 {dimension_numbers = #tpu.dot_dimension_numbers<[1], [0], [0], [1], [0, 0, 1, 1], [], []>} : vector<128x64xbf16>, vector<64x128xbf16>, vector<128x128xf32> -> vector<128x128xf32>
    %13 = vector.extract_strided_slice %12 {offsets = [0, 0], sizes = [32, 128], strides = [1, 1]} : vector<128x128xf32> to vector<32x128xf32>
    %14 = vector.broadcast %0 : vector<1x128xf32> to vector<32x128xf32>
    %15 = arith.mulf %13, %14 : vector<32x128xf32>
    %16 = arith.addf %15, %8 : vector<32x128xf32>
    %cst_13 = arith.constant 0.000000e+00 : f32
    %17 = vector.broadcast %cst_13 : f32 to vector<32x128xf32>
    %18 = arith.cmpf oge, %16, %17 : vector<32x128xf32>
    %cst_14 = arith.constant 2.000000e-01 : f32
    %19 = vector.broadcast %cst_14 : f32 to vector<32x128xf32>
    %20 = arith.mulf %19, %16 : vector<32x128xf32>
    %21 = arith.select %18, %16, %20 : vector<32x128xi1>, vector<32x128xf32>
    %22 = vector.extract_strided_slice %12 {offsets = [32, 0], sizes = [32, 128], strides = [1, 1]} : vector<128x128xf32> to vector<32x128xf32>
    %23 = vector.broadcast %0 : vector<1x128xf32> to vector<32x128xf32>
    %24 = arith.mulf %22, %23 : vector<32x128xf32>
    %25 = arith.addf %24, %8 : vector<32x128xf32>
    %cst_15 = arith.constant 0.000000e+00 : f32
    %26 = vector.broadcast %cst_15 : f32 to vector<32x128xf32>
    %27 = arith.cmpf oge, %25, %26 : vector<32x128xf32>
    %cst_16 = arith.constant 2.000000e-01 : f32
    %28 = vector.broadcast %cst_16 : f32 to vector<32x128xf32>
    %29 = arith.mulf %28, %25 : vector<32x128xf32>
    %30 = arith.select %27, %25, %29 : vector<32x128xi1>, vector<32x128xf32>
    %31 = arith.maximumf %21, %30 : vector<32x128xf32>
    %32 = vector.extract_strided_slice %12 {offsets = [64, 0], sizes = [32, 128], strides = [1, 1]} : vector<128x128xf32> to vector<32x128xf32>
    %33 = vector.broadcast %0 : vector<1x128xf32> to vector<32x128xf32>
    %34 = arith.mulf %32, %33 : vector<32x128xf32>
    %35 = arith.addf %34, %8 : vector<32x128xf32>
    %cst_17 = arith.constant 0.000000e+00 : f32
    %36 = vector.broadcast %cst_17 : f32 to vector<32x128xf32>
    %37 = arith.cmpf oge, %35, %36 : vector<32x128xf32>
    %cst_18 = arith.constant 2.000000e-01 : f32
    %38 = vector.broadcast %cst_18 : f32 to vector<32x128xf32>
    %39 = arith.mulf %38, %35 : vector<32x128xf32>
    %40 = arith.select %37, %35, %39 : vector<32x128xi1>, vector<32x128xf32>
    %41 = arith.maximumf %31, %40 : vector<32x128xf32>
    %42 = vector.extract_strided_slice %12 {offsets = [96, 0], sizes = [32, 128], strides = [1, 1]} : vector<128x128xf32> to vector<32x128xf32>
    %43 = vector.broadcast %0 : vector<1x128xf32> to vector<32x128xf32>
    %44 = arith.mulf %42, %43 : vector<32x128xf32>
    %45 = arith.addf %44, %8 : vector<32x128xf32>
    %cst_19 = arith.constant 0.000000e+00 : f32
    %46 = vector.broadcast %cst_19 : f32 to vector<32x128xf32>
    %47 = arith.cmpf oge, %45, %46 : vector<32x128xf32>
    %cst_20 = arith.constant 2.000000e-01 : f32
    %48 = vector.broadcast %cst_20 : f32 to vector<32x128xf32>
    %49 = arith.mulf %48, %45 : vector<32x128xf32>
    %50 = arith.select %47, %45, %49 : vector<32x128xi1>, vector<32x128xf32>
    %51 = arith.maximumf %41, %50 : vector<32x128xf32>
    %c0_21 = arith.constant 0 : index
    %c0_22 = arith.constant 0 : index
    %52 = vector.load %arg7[%c0_21, %c0_22] : memref<32x128xf32, #tpu.memory_space<vmem>>, vector<32x128xf32>
    tpu.vector_store %arg7[%c0_21, %c0_22], %51 {strides = array<i32>} : memref<32x128xf32, #tpu.memory_space<vmem>>, vector<32x128xf32>,
    return
  }
  func.func @transform_0(%arg0: i32) -> (i32, i32, i32) {
    %c0_i32 = arith.constant 0 : i32
    %c0_i32_0 = arith.constant 0 : i32
    %c0_i32_1 = arith.constant 0 : i32
    return %c0_i32, %arg0, %c0_i32_0 : i32, i32, i32
  }
  func.func @transform_1(%arg0: i32) -> (i32, i32) {
    %c0_i32 = arith.constant 0 : i32
    %c0_i32_0 = arith.constant 0 : i32
    return %arg0, %c0_i32 : i32, i32
  }
  func.func @transform_2(%arg0: i32) -> (i32, i32) {
    %c0_i32 = arith.constant 0 : i32
    %c0_i32_0 = arith.constant 0 : i32
    %c0_i32_1 = arith.constant 0 : i32
    return %c0_i32, %c0_i32_0 : i32, i32
  }
  func.func @transform_3(%arg0: i32) -> (i32, i32) {
    %c0_i32 = arith.constant 0 : i32
    %c0_i32_0 = arith.constant 0 : i32
    %c0_i32_1 = arith.constant 0 : i32
    return %c0_i32, %c0_i32_0 : i32, i32
  }
  func.func @transform_4(%arg0: i32) -> (i32, i32) {
    %c0_i32 = arith.constant 0 : i32
    %c0_i32_0 = arith.constant 0 : i32
    %c0_i32_1 = arith.constant 0 : i32
    return %c0_i32, %c0_i32_0 : i32, i32
  }
  func.func @transform_5(%arg0: i32) -> (i32, i32) {
    %c0_i32 = arith.constant 0 : i32
    %c0_i32_0 = arith.constant 0 : i32
    %c0_i32_1 = arith.constant 0 : i32
    return %c0_i32, %c0_i32_0 : i32, i32
  }
  func.func @transform_6(%arg0: i32) -> (i32, i32) {
    %c0_i32 = arith.constant 0 : i32
    %c0_i32_0 = arith.constant 0 : i32
    return %arg0, %c0_i32 : i32, i32
  }
}

module attributes {stable_mosaic.version = 11 : i64} {
  func.func @pdist_kernel(%arg0: i32, %arg1: i32, %arg2: memref<1x16x128xf32, #tpu.memory_space<vmem>>, %arg3: memref<1x16x128xf32, #tpu.memory_space<vmem>>, %arg4: memref<1x16x16xf32, #tpu.memory_space<vmem>>) attributes {dimension_semantics = [#tpu.dimension_semantics<parallel>, #tpu.dimension_semantics<parallel>], iteration_bounds = array<i64: 2, 1>, scalar_prefetch = 0 : i64, scratch_operands = 0 : i64, tpu.core_type = #tpu.core_type<tc>, window_params = [{transform_indices = @transform_0, window_bounds = array<i64: 1, 16, 128>}, {transform_indices = @transform_1, window_bounds = array<i64: 1, 16, 128>}, {transform_indices = @transform_2, window_bounds = array<i64: 1, 16, 16>}]} {
    %c0 = arith.constant 0 : index
    %c0_0 = arith.constant 0 : index
    %c0_1 = arith.constant 0 : index
    %0 = vector.load %arg2[%c0, %c0_0, %c0_1] : memref<1x16x128xf32, #tpu.memory_space<vmem>>, vector<1x16x128xf32>
    %1 = vector.shape_cast %0 : vector<1x16x128xf32> to vector<16x128xf32>
    %c0_2 = arith.constant 0 : index
    %c0_3 = arith.constant 0 : index
    %c0_4 = arith.constant 0 : index
    %2 = vector.load %arg3[%c0_2, %c0_3, %c0_4] : memref<1x16x128xf32, #tpu.memory_space<vmem>>, vector<1x16x128xf32>
    %3 = vector.shape_cast %2 : vector<1x16x128xf32> to vector<16x128xf32>
    %cst = arith.constant dense<0.000000e+00> : vector<16x16xf32>
    %4 = tpu.matmul %1, %3, %cst {dimension_numbers = #tpu.dot_dimension_numbers<[1], [1], [0], [0], [0, 0, 1, 0], [], []>} : vector<16x128xf32>, vector<16x128xf32>, vector<16x16xf32> -> vector<16x16xf32>
    %5 = arith.mulf %3, %3 : vector<16x128xf32>
    %cst_5 = arith.constant 1.000000e+00 : f32
    %6 = vector.broadcast %cst_5 : f32 to vector<1x128xf32>
    %cst_6 = arith.constant dense<0.000000e+00> : vector<1x16xf32>
    %7 = tpu.matmul %6, %5, %cst_6 {dimension_numbers = #tpu.dot_dimension_numbers<[1], [1], [0], [0], [0, 0, 1, 0], [], []>} : vector<1x128xf32>, vector<16x128xf32>, vector<1x16xf32> -> vector<1x16xf32>
    %cst_7 = arith.constant 2.000000e+00 : f32
    %8 = vector.broadcast %cst_7 : f32 to vector<16x16xf32>
    %9 = arith.mulf %8, %4 : vector<16x16xf32>
    %10 = vector.broadcast %7 : vector<1x16xf32> to vector<16x16xf32>
    %11 = arith.subf %9, %10 : vector<16x16xf32>
    %c0_8 = arith.constant 0 : index
    %c0_9 = arith.constant 0 : index
    %c0_10 = arith.constant 0 : index
    %12 = vector.load %arg4[%c0_8, %c0_9, %c0_10] : memref<1x16x16xf32, #tpu.memory_space<vmem>>, vector<1x16x16xf32>
    %13 = vector.shape_cast %12 : vector<1x16x16xf32> to vector<16x16xf32>
    %14 = vector.shape_cast %11 : vector<16x16xf32> to vector<1x16x16xf32>
    tpu.vector_store %arg4[%c0_8, %c0_9, %c0_10], %14 {strides = array<i32>} : memref<1x16x16xf32, #tpu.memory_space<vmem>>, vector<1x16x16xf32>,
    return
  }
  func.func @transform_0(%arg0: i32, %arg1: i32) -> (i32, i32, i32) {
    %c0_i32 = arith.constant 0 : i32
    %c0_i32_0 = arith.constant 0 : i32
    return %arg0, %arg1, %c0_i32 : i32, i32, i32
  }
  func.func @transform_1(%arg0: i32, %arg1: i32) -> (i32, i32, i32) {
    %c0_i32 = arith.constant 0 : i32
    %c0_i32_0 = arith.constant 0 : i32
    %c0_i32_1 = arith.constant 0 : i32
    return %arg0, %c0_i32, %c0_i32_0 : i32, i32, i32
  }
  func.func @transform_2(%arg0: i32, %arg1: i32) -> (i32, i32, i32) {
    %c0_i32 = arith.constant 0 : i32
    %c0_i32_0 = arith.constant 0 : i32
    return %arg0, %arg1, %c0_i32 : i32, i32, i32
  }
}

module attributes {stable_mosaic.version = 11 : i64} {
  func.func @edgeconv_kernel(%arg0: i32, %arg1: memref<4x32x128xbf16, #tpu.memory_space<vmem>>, %arg2: memref<32x128xbf16, #tpu.memory_space<vmem>>, %arg3: memref<128x256xbf16, #tpu.memory_space<vmem>>, %arg4: memref<128x256xbf16, #tpu.memory_space<vmem>>, %arg5: memref<1x256xf32, #tpu.memory_space<vmem>>, %arg6: memref<1x256xf32, #tpu.memory_space<vmem>>, %arg7: memref<32x256xf32, #tpu.memory_space<vmem>>) attributes {dimension_semantics = [#tpu.dimension_semantics<parallel>], iteration_bounds = array<i64: 1>, scalar_prefetch = 0 : i64, scratch_operands = 0 : i64, tpu.core_type = #tpu.core_type<tc>, window_params = [{transform_indices = @transform_0, window_bounds = array<i64: 4, 32, 128>}, {transform_indices = @transform_1, window_bounds = array<i64: 32, 128>}, {pipeline_mode = #tpu.pipeline_mode<synchronous>, transform_indices = @transform_2, window_bounds = array<i64: 128, 256>}, {pipeline_mode = #tpu.pipeline_mode<synchronous>, transform_indices = @transform_3, window_bounds = array<i64: 128, 256>}, {pipeline_mode = #tpu.pipeline_mode<synchronous>, transform_indices = @transform_4, window_bounds = array<i64: 1, 256>}, {pipeline_mode = #tpu.pipeline_mode<synchronous>, transform_indices = @transform_5, window_bounds = array<i64: 1, 256>}, {transform_indices = @transform_6, window_bounds = array<i64: 32, 256>}]} {
    %c0 = arith.constant 0 : index
    %c0_0 = arith.constant 0 : index
    %0 = vector.load %arg5[%c0, %c0_0] : memref<1x256xf32, #tpu.memory_space<vmem>>, vector<1x256xf32>
    %c0_1 = arith.constant 0 : index
    %c0_2 = arith.constant 0 : index
    %1 = vector.load %arg2[%c0_1, %c0_2] : memref<32x128xbf16, #tpu.memory_space<vmem>>, vector<32x128xbf16>
    %c0_3 = arith.constant 0 : index
    %c0_4 = arith.constant 0 : index
    %2 = vector.load %arg4[%c0_3, %c0_4] : memref<128x256xbf16, #tpu.memory_space<vmem>>, vector<128x256xbf16>
    %cst = arith.constant dense<0.000000e+00> : vector<32x256xf32>
    %3 = tpu.matmul %1, %2, %cst {dimension_numbers = #tpu.dot_dimension_numbers<[1], [0], [0], [1], [0, 0, 1, 1], [], []>} : vector<32x128xbf16>, vector<128x256xbf16>, vector<32x256xf32> -> vector<32x256xf32>
    %4 = vector.broadcast %0 : vector<1x256xf32> to vector<32x256xf32>
    %5 = arith.mulf %3, %4 : vector<32x256xf32>
    %c0_5 = arith.constant 0 : index
    %c0_6 = arith.constant 0 : index
    %6 = vector.load %arg6[%c0_5, %c0_6] : memref<1x256xf32, #tpu.memory_space<vmem>>, vector<1x256xf32>
    %7 = vector.broadcast %6 : vector<1x256xf32> to vector<32x256xf32>
    %8 = arith.addf %5, %7 : vector<32x256xf32>
    %c0_7 = arith.constant 0 : index
    %c0_8 = arith.constant 0 : index
    %c0_9 = arith.constant 0 : index
    %9 = vector.load %arg1[%c0_7, %c0_8, %c0_9] : memref<4x32x128xbf16, #tpu.memory_space<vmem>>, vector<4x32x128xbf16>
    %10 = vector.shape_cast %9 : vector<4x32x128xbf16> to vector<128x128xbf16>
    %c0_10 = arith.constant 0 : index
    %c0_11 = arith.constant 0 : index
    %11 = vector.load %arg3[%c0_10, %c0_11] : memref<128x256xbf16, #tpu.memory_space<vmem>>, vector<128x256xbf16>
    %cst_12 = arith.constant dense<0.000000e+00> : vector<128x256xf32>
    %12 = tpu.matmul %10, %11, %cst_12 {dimension_numbers = #tpu.dot_dimension_numbers<[1], [0], [0], [1], [0, 0, 1, 1], [], []>} : vector<128x128xbf16>, vector<128x256xbf16>, vector<128x256xf32> -> vector<128x256xf32>
    %13 = vector.extract_strided_slice %12 {offsets = [0, 0], sizes = [32, 256], strides = [1, 1]} : vector<128x256xf32> to vector<32x256xf32>
    %14 = vector.broadcast %0 : vector<1x256xf32> to vector<32x256xf32>
    %15 = arith.mulf %13, %14 : vector<32x256xf32>
    %16 = arith.addf %15, %8 : vector<32x256xf32>
    %cst_13 = arith.constant 0.000000e+00 : f32
    %17 = vector.broadcast %cst_13 : f32 to vector<32x256xf32>
    %18 = arith.cmpf oge, %16, %17 : vector<32x256xf32>
    %cst_14 = arith.constant 2.000000e-01 : f32
    %19 = vector.broadcast %cst_14 : f32 to vector<32x256xf32>
    %20 = arith.mulf %19, %16 : vector<32x256xf32>
    %21 = arith.select %18, %16, %20 : vector<32x256xi1>, vector<32x256xf32>
    %22 = vector.extract_strided_slice %12 {offsets = [32, 0], sizes = [32, 256], strides = [1, 1]} : vector<128x256xf32> to vector<32x256xf32>
    %23 = vector.broadcast %0 : vector<1x256xf32> to vector<32x256xf32>
    %24 = arith.mulf %22, %23 : vector<32x256xf32>
    %25 = arith.addf %24, %8 : vector<32x256xf32>
    %cst_15 = arith.constant 0.000000e+00 : f32
    %26 = vector.broadcast %cst_15 : f32 to vector<32x256xf32>
    %27 = arith.cmpf oge, %25, %26 : vector<32x256xf32>
    %cst_16 = arith.constant 2.000000e-01 : f32
    %28 = vector.broadcast %cst_16 : f32 to vector<32x256xf32>
    %29 = arith.mulf %28, %25 : vector<32x256xf32>
    %30 = arith.select %27, %25, %29 : vector<32x256xi1>, vector<32x256xf32>
    %31 = arith.maximumf %21, %30 : vector<32x256xf32>
    %32 = vector.extract_strided_slice %12 {offsets = [64, 0], sizes = [32, 256], strides = [1, 1]} : vector<128x256xf32> to vector<32x256xf32>
    %33 = vector.broadcast %0 : vector<1x256xf32> to vector<32x256xf32>
    %34 = arith.mulf %32, %33 : vector<32x256xf32>
    %35 = arith.addf %34, %8 : vector<32x256xf32>
    %cst_17 = arith.constant 0.000000e+00 : f32
    %36 = vector.broadcast %cst_17 : f32 to vector<32x256xf32>
    %37 = arith.cmpf oge, %35, %36 : vector<32x256xf32>
    %cst_18 = arith.constant 2.000000e-01 : f32
    %38 = vector.broadcast %cst_18 : f32 to vector<32x256xf32>
    %39 = arith.mulf %38, %35 : vector<32x256xf32>
    %40 = arith.select %37, %35, %39 : vector<32x256xi1>, vector<32x256xf32>
    %41 = arith.maximumf %31, %40 : vector<32x256xf32>
    %42 = vector.extract_strided_slice %12 {offsets = [96, 0], sizes = [32, 256], strides = [1, 1]} : vector<128x256xf32> to vector<32x256xf32>
    %43 = vector.broadcast %0 : vector<1x256xf32> to vector<32x256xf32>
    %44 = arith.mulf %42, %43 : vector<32x256xf32>
    %45 = arith.addf %44, %8 : vector<32x256xf32>
    %cst_19 = arith.constant 0.000000e+00 : f32
    %46 = vector.broadcast %cst_19 : f32 to vector<32x256xf32>
    %47 = arith.cmpf oge, %45, %46 : vector<32x256xf32>
    %cst_20 = arith.constant 2.000000e-01 : f32
    %48 = vector.broadcast %cst_20 : f32 to vector<32x256xf32>
    %49 = arith.mulf %48, %45 : vector<32x256xf32>
    %50 = arith.select %47, %45, %49 : vector<32x256xi1>, vector<32x256xf32>
    %51 = arith.maximumf %41, %50 : vector<32x256xf32>
    %c0_21 = arith.constant 0 : index
    %c0_22 = arith.constant 0 : index
    %52 = vector.load %arg7[%c0_21, %c0_22] : memref<32x256xf32, #tpu.memory_space<vmem>>, vector<32x256xf32>
    tpu.vector_store %arg7[%c0_21, %c0_22], %51 {strides = array<i32>} : memref<32x256xf32, #tpu.memory_space<vmem>>, vector<32x256xf32>,
    return
  }
  func.func @transform_0(%arg0: i32) -> (i32, i32, i32) {
    %c0_i32 = arith.constant 0 : i32
    %c0_i32_0 = arith.constant 0 : i32
    %c0_i32_1 = arith.constant 0 : i32
    return %c0_i32, %arg0, %c0_i32_0 : i32, i32, i32
  }
  func.func @transform_1(%arg0: i32) -> (i32, i32) {
    %c0_i32 = arith.constant 0 : i32
    %c0_i32_0 = arith.constant 0 : i32
    return %arg0, %c0_i32 : i32, i32
  }
  func.func @transform_2(%arg0: i32) -> (i32, i32) {
    %c0_i32 = arith.constant 0 : i32
    %c0_i32_0 = arith.constant 0 : i32
    %c0_i32_1 = arith.constant 0 : i32
    return %c0_i32, %c0_i32_0 : i32, i32
  }
  func.func @transform_3(%arg0: i32) -> (i32, i32) {
    %c0_i32 = arith.constant 0 : i32
    %c0_i32_0 = arith.constant 0 : i32
    %c0_i32_1 = arith.constant 0 : i32
    return %c0_i32, %c0_i32_0 : i32, i32
  }
  func.func @transform_4(%arg0: i32) -> (i32, i32) {
    %c0_i32 = arith.constant 0 : i32
    %c0_i32_0 = arith.constant 0 : i32
    %c0_i32_1 = arith.constant 0 : i32
    return %c0_i32, %c0_i32_0 : i32, i32
  }
  func.func @transform_5(%arg0: i32) -> (i32, i32) {
    %c0_i32 = arith.constant 0 : i32
    %c0_i32_0 = arith.constant 0 : i32
    %c0_i32_1 = arith.constant 0 : i32
    return %c0_i32, %c0_i32_0 : i32, i32
  }
  func.func @transform_6(%arg0: i32) -> (i32, i32) {
    %c0_i32 = arith.constant 0 : i32
    %c0_i32_0 = arith.constant 0 : i32
    return %arg0, %c0_i32 : i32, i32
  }
}

module attributes {stable_mosaic.version = 11 : i64} {
  func.func @fused_dense_kernel(%arg0: i32, %arg1: memref<32x64xf32, #tpu.memory_space<vmem>>, %arg2: memref<32x64xf32, #tpu.memory_space<vmem>>, %arg3: memref<32x128xf32, #tpu.memory_space<vmem>>, %arg4: memref<32x256xf32, #tpu.memory_space<vmem>>, %arg5: memref<64x1024xbf16, #tpu.memory_space<vmem>>, %arg6: memref<64x1024xbf16, #tpu.memory_space<vmem>>, %arg7: memref<128x1024xbf16, #tpu.memory_space<vmem>>, %arg8: memref<256x1024xbf16, #tpu.memory_space<vmem>>, %arg9: memref<1x1024xf32, #tpu.memory_space<vmem>>, %arg10: memref<1x1024xf32, #tpu.memory_space<vmem>>, %arg11: memref<1024x512xbf16, #tpu.memory_space<vmem>>, %arg12: memref<1x512xf32, #tpu.memory_space<vmem>>, %arg13: memref<1x512xf32, #tpu.memory_space<vmem>>, %arg14: memref<512x32xbf16, #tpu.memory_space<vmem>>, %arg15: memref<1x32xf32, #tpu.memory_space<vmem>>, %arg16: memref<32x32xf32, #tpu.memory_space<vmem>>) attributes {dimension_semantics = [#tpu.dimension_semantics<parallel>], iteration_bounds = array<i64: 1>, scalar_prefetch = 0 : i64, scratch_operands = 0 : i64, tpu.core_type = #tpu.core_type<tc>, window_params = [{transform_indices = @transform_0, window_bounds = array<i64: 32, 64>}, {transform_indices = @transform_1, window_bounds = array<i64: 32, 64>}, {transform_indices = @transform_2, window_bounds = array<i64: 32, 128>}, {transform_indices = @transform_3, window_bounds = array<i64: 32, 256>}, {pipeline_mode = #tpu.pipeline_mode<synchronous>, transform_indices = @transform_4, window_bounds = array<i64: 64, 1024>}, {pipeline_mode = #tpu.pipeline_mode<synchronous>, transform_indices = @transform_5, window_bounds = array<i64: 64, 1024>}, {pipeline_mode = #tpu.pipeline_mode<synchronous>, transform_indices = @transform_6, window_bounds = array<i64: 128, 1024>}, {pipeline_mode = #tpu.pipeline_mode<synchronous>, transform_indices = @transform_7, window_bounds = array<i64: 256, 1024>}, {pipeline_mode = #tpu.pipeline_mode<synchronous>, transform_indices = @transform_8, window_bounds = array<i64: 1, 1024>}, {pipeline_mode = #tpu.pipeline_mode<synchronous>, transform_indices = @transform_9, window_bounds = array<i64: 1, 1024>}, {pipeline_mode = #tpu.pipeline_mode<synchronous>, transform_indices = @transform_10, window_bounds = array<i64: 1024, 512>}, {pipeline_mode = #tpu.pipeline_mode<synchronous>, transform_indices = @transform_11, window_bounds = array<i64: 1, 512>}, {pipeline_mode = #tpu.pipeline_mode<synchronous>, transform_indices = @transform_12, window_bounds = array<i64: 1, 512>}, {pipeline_mode = #tpu.pipeline_mode<synchronous>, transform_indices = @transform_13, window_bounds = array<i64: 512, 32>}, {pipeline_mode = #tpu.pipeline_mode<synchronous>, transform_indices = @transform_14, window_bounds = array<i64: 1, 32>}, {transform_indices = @transform_15, window_bounds = array<i64: 32, 32>}]} {
    %c0 = arith.constant 0 : index
    %c0_0 = arith.constant 0 : index
    %0 = vector.load %arg1[%c0, %c0_0] : memref<32x64xf32, #tpu.memory_space<vmem>>, vector<32x64xf32>
    %1 = arith.truncf %0 : vector<32x64xf32> to vector<32x64xbf16>
    %c0_1 = arith.constant 0 : index
    %c0_2 = arith.constant 0 : index
    %2 = vector.load %arg5[%c0_1, %c0_2] : memref<64x1024xbf16, #tpu.memory_space<vmem>>, vector<64x1024xbf16>
    %cst = arith.constant dense<0.000000e+00> : vector<32x1024xf32>
    %3 = tpu.matmul %1, %2, %cst {dimension_numbers = #tpu.dot_dimension_numbers<[1], [0], [0], [1], [0, 0, 1, 1], [], []>} : vector<32x64xbf16>, vector<64x1024xbf16>, vector<32x1024xf32> -> vector<32x1024xf32>
    %c0_3 = arith.constant 0 : index
    %c0_4 = arith.constant 0 : index
    %4 = vector.load %arg2[%c0_3, %c0_4] : memref<32x64xf32, #tpu.memory_space<vmem>>, vector<32x64xf32>
    %5 = arith.truncf %4 : vector<32x64xf32> to vector<32x64xbf16>
    %c0_5 = arith.constant 0 : index
    %c0_6 = arith.constant 0 : index
    %6 = vector.load %arg6[%c0_5, %c0_6] : memref<64x1024xbf16, #tpu.memory_space<vmem>>, vector<64x1024xbf16>
    %cst_7 = arith.constant dense<0.000000e+00> : vector<32x1024xf32>
    %7 = tpu.matmul %5, %6, %cst_7 {dimension_numbers = #tpu.dot_dimension_numbers<[1], [0], [0], [1], [0, 0, 1, 1], [], []>} : vector<32x64xbf16>, vector<64x1024xbf16>, vector<32x1024xf32> -> vector<32x1024xf32>
    %8 = arith.addf %3, %7 : vector<32x1024xf32>
    %c0_8 = arith.constant 0 : index
    %c0_9 = arith.constant 0 : index
    %9 = vector.load %arg3[%c0_8, %c0_9] : memref<32x128xf32, #tpu.memory_space<vmem>>, vector<32x128xf32>
    %10 = arith.truncf %9 : vector<32x128xf32> to vector<32x128xbf16>
    %c0_10 = arith.constant 0 : index
    %c0_11 = arith.constant 0 : index
    %11 = vector.load %arg7[%c0_10, %c0_11] : memref<128x1024xbf16, #tpu.memory_space<vmem>>, vector<128x1024xbf16>
    %cst_12 = arith.constant dense<0.000000e+00> : vector<32x1024xf32>
    %12 = tpu.matmul %10, %11, %cst_12 {dimension_numbers = #tpu.dot_dimension_numbers<[1], [0], [0], [1], [0, 0, 1, 1], [], []>} : vector<32x128xbf16>, vector<128x1024xbf16>, vector<32x1024xf32> -> vector<32x1024xf32>
    %13 = arith.addf %8, %12 : vector<32x1024xf32>
    %c0_13 = arith.constant 0 : index
    %c0_14 = arith.constant 0 : index
    %14 = vector.load %arg4[%c0_13, %c0_14] : memref<32x256xf32, #tpu.memory_space<vmem>>, vector<32x256xf32>
    %15 = arith.truncf %14 : vector<32x256xf32> to vector<32x256xbf16>
    %c0_15 = arith.constant 0 : index
    %c0_16 = arith.constant 0 : index
    %16 = vector.load %arg8[%c0_15, %c0_16] : memref<256x1024xbf16, #tpu.memory_space<vmem>>, vector<256x1024xbf16>
    %cst_17 = arith.constant dense<0.000000e+00> : vector<32x1024xf32>
    %17 = tpu.matmul %15, %16, %cst_17 {dimension_numbers = #tpu.dot_dimension_numbers<[1], [0], [0], [1], [0, 0, 1, 1], [], []>} : vector<32x256xbf16>, vector<256x1024xbf16>, vector<32x1024xf32> -> vector<32x1024xf32>
    %18 = arith.addf %13, %17 : vector<32x1024xf32>
    %c0_18 = arith.constant 0 : index
    %c0_19 = arith.constant 0 : index
    %19 = vector.load %arg9[%c0_18, %c0_19] : memref<1x1024xf32, #tpu.memory_space<vmem>>, vector<1x1024xf32>
    %20 = vector.broadcast %19 : vector<1x1024xf32> to vector<32x1024xf32>
    %21 = arith.mulf %18, %20 : vector<32x1024xf32>
    %c0_20 = arith.constant 0 : index
    %c0_21 = arith.constant 0 : index
    %22 = vector.load %arg10[%c0_20, %c0_21] : memref<1x1024xf32, #tpu.memory_space<vmem>>, vector<1x1024xf32>
    %23 = vector.broadcast %22 : vector<1x1024xf32> to vector<32x1024xf32>
    %24 = arith.addf %21, %23 : vector<32x1024xf32>
    %cst_22 = arith.constant 0.000000e+00 : f32
    %25 = vector.broadcast %cst_22 : f32 to vector<32x1024xf32>
    %26 = arith.cmpf oge, %24, %25 : vector<32x1024xf32>
    %cst_23 = arith.constant 2.000000e-01 : f32
    %27 = vector.broadcast %cst_23 : f32 to vector<32x1024xf32>
    %28 = arith.mulf %27, %24 : vector<32x1024xf32>
    %29 = arith.select %26, %24, %28 : vector<32x1024xi1>, vector<32x1024xf32>
    %30 = arith.truncf %29 : vector<32x1024xf32> to vector<32x1024xbf16>
    %c0_24 = arith.constant 0 : index
    %c0_25 = arith.constant 0 : index
    %31 = vector.load %arg11[%c0_24, %c0_25] : memref<1024x512xbf16, #tpu.memory_space<vmem>>, vector<1024x512xbf16>
    %cst_26 = arith.constant dense<0.000000e+00> : vector<32x512xf32>
    %32 = tpu.matmul %30, %31, %cst_26 {dimension_numbers = #tpu.dot_dimension_numbers<[1], [0], [0], [1], [0, 0, 1, 1], [], []>} : vector<32x1024xbf16>, vector<1024x512xbf16>, vector<32x512xf32> -> vector<32x512xf32>
    %c0_27 = arith.constant 0 : index
    %c0_28 = arith.constant 0 : index
    %33 = vector.load %arg12[%c0_27, %c0_28] : memref<1x512xf32, #tpu.memory_space<vmem>>, vector<1x512xf32>
    %34 = vector.broadcast %33 : vector<1x512xf32> to vector<32x512xf32>
    %35 = arith.mulf %32, %34 : vector<32x512xf32>
    %c0_29 = arith.constant 0 : index
    %c0_30 = arith.constant 0 : index
    %36 = vector.load %arg13[%c0_29, %c0_30] : memref<1x512xf32, #tpu.memory_space<vmem>>, vector<1x512xf32>
    %37 = vector.broadcast %36 : vector<1x512xf32> to vector<32x512xf32>
    %38 = arith.addf %35, %37 : vector<32x512xf32>
    %cst_31 = arith.constant 0.000000e+00 : f32
    %39 = vector.broadcast %cst_31 : f32 to vector<32x512xf32>
    %40 = arith.maximumf %38, %39 : vector<32x512xf32>
    %41 = arith.truncf %40 : vector<32x512xf32> to vector<32x512xbf16>
    %c0_32 = arith.constant 0 : index
    %c0_33 = arith.constant 0 : index
    %42 = vector.load %arg14[%c0_32, %c0_33] : memref<512x32xbf16, #tpu.memory_space<vmem>>, vector<512x32xbf16>
    %cst_34 = arith.constant dense<0.000000e+00> : vector<32x32xf32>
    %43 = tpu.matmul %41, %42, %cst_34 {dimension_numbers = #tpu.dot_dimension_numbers<[1], [0], [0], [1], [0, 0, 1, 1], [], []>} : vector<32x512xbf16>, vector<512x32xbf16>, vector<32x32xf32> -> vector<32x32xf32>
    %c0_35 = arith.constant 0 : index
    %c0_36 = arith.constant 0 : index
    %44 = vector.load %arg15[%c0_35, %c0_36] : memref<1x32xf32, #tpu.memory_space<vmem>>, vector<1x32xf32>
    %45 = vector.broadcast %44 : vector<1x32xf32> to vector<32x32xf32>
    %46 = arith.addf %43, %45 : vector<32x32xf32>
    %c0_37 = arith.constant 0 : index
    %c0_38 = arith.constant 0 : index
    %47 = vector.load %arg16[%c0_37, %c0_38] : memref<32x32xf32, #tpu.memory_space<vmem>>, vector<32x32xf32>
    tpu.vector_store %arg16[%c0_37, %c0_38], %46 {strides = array<i32>} : memref<32x32xf32, #tpu.memory_space<vmem>>, vector<32x32xf32>,
    return
  }
  func.func @transform_0(%arg0: i32) -> (i32, i32) {
    %c0_i32 = arith.constant 0 : i32
    %c0_i32_0 = arith.constant 0 : i32
    return %arg0, %c0_i32 : i32, i32
  }
  func.func @transform_1(%arg0: i32) -> (i32, i32) {
    %c0_i32 = arith.constant 0 : i32
    %c0_i32_0 = arith.constant 0 : i32
    return %arg0, %c0_i32 : i32, i32
  }
  func.func @transform_2(%arg0: i32) -> (i32, i32) {
    %c0_i32 = arith.constant 0 : i32
    %c0_i32_0 = arith.constant 0 : i32
    return %arg0, %c0_i32 : i32, i32
  }
  func.func @transform_3(%arg0: i32) -> (i32, i32) {
    %c0_i32 = arith.constant 0 : i32
    %c0_i32_0 = arith.constant 0 : i32
    return %arg0, %c0_i32 : i32, i32
  }
  func.func @transform_4(%arg0: i32) -> (i32, i32) {
    %c0_i32 = arith.constant 0 : i32
    %c0_i32_0 = arith.constant 0 : i32
    %c0_i32_1 = arith.constant 0 : i32
    return %c0_i32, %c0_i32_0 : i32, i32
  }
  func.func @transform_5(%arg0: i32) -> (i32, i32) {
    %c0_i32 = arith.constant 0 : i32
    %c0_i32_0 = arith.constant 0 : i32
    %c0_i32_1 = arith.constant 0 : i32
    return %c0_i32, %c0_i32_0 : i32, i32
  }
  func.func @transform_6(%arg0: i32) -> (i32, i32) {
    %c0_i32 = arith.constant 0 : i32
    %c0_i32_0 = arith.constant 0 : i32
    %c0_i32_1 = arith.constant 0 : i32
    return %c0_i32, %c0_i32_0 : i32, i32
  }
  func.func @transform_7(%arg0: i32) -> (i32, i32) {
    %c0_i32 = arith.constant 0 : i32
    %c0_i32_0 = arith.constant 0 : i32
    %c0_i32_1 = arith.constant 0 : i32
    return %c0_i32, %c0_i32_0 : i32, i32
  }
  func.func @transform_8(%arg0: i32) -> (i32, i32) {
    %c0_i32 = arith.constant 0 : i32
    %c0_i32_0 = arith.constant 0 : i32
    %c0_i32_1 = arith.constant 0 : i32
    return %c0_i32, %c0_i32_0 : i32, i32
  }
  func.func @transform_9(%arg0: i32) -> (i32, i32) {
    %c0_i32 = arith.constant 0 : i32
    %c0_i32_0 = arith.constant 0 : i32
    %c0_i32_1 = arith.constant 0 : i32
    return %c0_i32, %c0_i32_0 : i32, i32
  }
  func.func @transform_10(%arg0: i32) -> (i32, i32) {
    %c0_i32 = arith.constant 0 : i32
    %c0_i32_0 = arith.constant 0 : i32
    %c0_i32_1 = arith.constant 0 : i32
    return %c0_i32, %c0_i32_0 : i32, i32
  }
  func.func @transform_11(%arg0: i32) -> (i32, i32) {
    %c0_i32 = arith.constant 0 : i32
    %c0_i32_0 = arith.constant 0 : i32
    %c0_i32_1 = arith.constant 0 : i32
    return %c0_i32, %c0_i32_0 : i32, i32
  }
  func.func @transform_12(%arg0: i32) -> (i32, i32) {
    %c0_i32 = arith.constant 0 : i32
    %c0_i32_0 = arith.constant 0 : i32
    %c0_i32_1 = arith.constant 0 : i32
    return %c0_i32, %c0_i32_0 : i32, i32
  }
  func.func @transform_13(%arg0: i32) -> (i32, i32) {
    %c0_i32 = arith.constant 0 : i32
    %c0_i32_0 = arith.constant 0 : i32
    %c0_i32_1 = arith.constant 0 : i32
    return %c0_i32, %c0_i32_0 : i32, i32
  }
  func.func @transform_14(%arg0: i32) -> (i32, i32) {
    %c0_i32 = arith.constant 0 : i32
    %c0_i32_0 = arith.constant 0 : i32
    %c0_i32_1 = arith.constant 0 : i32
    return %c0_i32, %c0_i32_0 : i32, i32
  }
  func.func @transform_15(%arg0: i32) -> (i32, i32) {
    %c0_i32 = arith.constant 0 : i32
    %c0_i32_0 = arith.constant 0 : i32
    return %arg0, %c0_i32 : i32, i32
  }
}

</mosaic_0001>

<llo_original>
// kernel: dgcnn_point_forward.9
$region0: #{dgcnn_point_forward.9}
  #allocation0 [shape = 'u32[]', space=smem, size = 0x4, offset = 0x4, fixed_abs, tag = 'smem constant byte address 0x4 - core index']
  #allocation1 [shape = 'u32[144,128]{1,0:T(1,128)}', space=vmem, size = 0x12000, scoped, tag = 'internal scratch']
  %s0 = inlined_call_operand.vmem [shape: f32[2,16,3], index: 0, kind: input, shape index: {}, may-alias: {0,1}]
  %s1 = inlined_call_operand.vmem [shape: f32[2,16,3], index: 1, kind: input, shape index: {}, may-alias: {0,1}]
  %s2 = inlined_call_operand.vmem [shape: f32[2,16,16], index: 2, kind: output, shape index: {}]
  %s3 = sld [smem:[#allocation0]]
  $region41: #{dgcnn_point_forward.9} parent=0
    _
  %s5 = ssub.s32 1, %s3
  %s6 = scalar_select 0, %s5, %s3
  loop: start=0, step=1, limit=4
  $region2: #{dgcnn_point_forward.9} parent=0 // loop_pre_header
    _
  $region3: #{dgcnn_point_forward.9} parent=0 // loop_header
    %s8 = sphi 0, %s12
    %p9 = scmp.ge.s32.totalorder %s8, 4
    %s15 = sphi 0, %s27
    %s16 = sphi 0, %s23
    %s17 = sphi 0, %s15
    %s18 = sphi 0, %s16
    %s19 = sphi 0, %s17
    %s20 = sphi 0, %s18
    %s32 = sphi 0, %s34
    %s35 = sphi 0, %s32
    %s36 = sphi 0, %s35
    %s52 = sphi 0, %s36
    %s58 = sphi 0, %s60
    %s61 = sphi 0, %s58
    %s62 = sphi 0, %s61
    %s78 = sphi 0, %s62
    %s86 = sphi 0, %s88
    %s89 = sphi 0, %s86
    %s90 = sphi 0, %s89
    %s106 = sphi 0, %s90
  $region4: #{dgcnn_point_forward.9} parent=0 // loop_header_branch
    %11 = sbr.rel (%p9) target = $region8
  $region5: #{dgcnn_point_forward.9} parent=0 // loop_body
    %s13 = ssub.s32 %s8, 1
    %s14 = ssub.s32 %s8, 2
    %s21 = sadd.s32 1, %s16
    %p22 = scmp.ge.s32.totalorder %s21, 1
    %s23 = scalar_select %p22, 0, %s21
    %s24 = sadd.s32 1, %s15
    %s25 = scalar_select %p22, %s24, %s15
    %p26 = scmp.ge.s32.totalorder %s25, 2
    %s27 = scalar_select %p26, 0, %s25
    %s28 = ssub.s32 %s15, %s27
    %s29 = ssub.s32 %s16, %s23
    %s30 = sor.u32 %s28, %s29
    %p31 = scmp.eq.s32.totalorder %s30, 0
    %s33 = sadd.s32 %s32, 1
    %s34 = scalar_select %p31, %s32, %s33
    %p37 = pneg %p31
    %p38 = scmp.eq.s32.totalorder %s8, 1
    %p39 = por %p37, %p38
    %p40 = scmp.ne.s32.totalorder %s32, %s35
    %p41 = scmp.eq.s32.totalorder %s8, 0
    %p42 = por %p40, %p41
    %p43 = scmp.ne.s32.totalorder %s32, %s35
    %p44 = scmp.eq.s32.totalorder %s13, 1
    %p45 = por %p43, %p44
    %p46 = scmp.ne.s32.totalorder %s35, %s36
    %p47 = scmp.eq.s32.totalorder %s13, 0
    %p48 = por %p46, %p47
    %p49 = scmp.ne.s32.totalorder %s35, %s36
    %p50 = scmp.eq.s32.totalorder %s14, 1
    %p51 = por %p49, %p50
    %p53 = scmp.ne.s32.totalorder %s36, %s52
    %p54 = scmp.eq.s32.totalorder %s14, 0
    %p55 = por %p53, %p54
    %s56 = ssub.s32 %s15, %s27
    %p57 = scmp.eq.s32.totalorder %s56, 0
    %s59 = sadd.s32 %s58, 1
    %s60 = scalar_select %p57, %s58, %s59
    %p63 = pneg %p57
    %p64 = scmp.eq.s32.totalorder %s8, 1
    %p65 = por %p63, %p64
    %p66 = scmp.ne.s32.totalorder %s58, %s61
    %p67 = scmp.eq.s32.totalorder %s8, 0
    %p68 = por %p66, %p67
    %p69 = scmp.ne.s32.totalorder %s58, %s61
    %p70 = scmp.eq.s32.totalorder %s13, 1
    %p71 = por %p69, %p70
    %p72 = scmp.ne.s32.totalorder %s61, %s62
    %p73 = scmp.eq.s32.totalorder %s13, 0
    %p74 = por %p72, %p73
    %p75 = scmp.ne.s32.totalorder %s61, %s62
    %p76 = scmp.eq.s32.totalorder %s14, 1
    %p77 = por %p75, %p76
    %p79 = scmp.ne.s32.totalorder %s62, %s78
    %p80 = scmp.eq.s32.totalorder %s14, 0
    %p81 = por %p79, %p80
    %s82 = ssub.s32 %s15, %s27
    %s83 = ssub.s32 %s16, %s23
    %s84 = sor.u32 %s82, %s83
    %p85 = scmp.eq.s32.totalorder %s84, 0
    %s87 = sadd.s32 %s86, 1
    %s88 = scalar_select %p85, %s86, %s87
    %p91 = pneg %p85
    %p92 = scmp.eq.s32.totalorder %s8, 1
    %p93 = por %p91, %p92
    %p94 = scmp.ne.s32.totalorder %s86, %s89
    %p95 = scmp.eq.s32.totalorder %s8, 0
    %p96 = por %p94, %p95
    %p97 = scmp.ne.s32.totalorder %s86, %s89
    %p98 = scmp.eq.s32.totalorder %s13, 1
    %p99 = por %p97, %p98
    %p100 = scmp.ne.s32.totalorder %s89, %s90
    %p101 = scmp.eq.s32.totalorder %s13, 0
    %p102 = por %p100, %p101
    %p103 = scmp.ne.s32.totalorder %s89, %s90
    %p104 = scmp.eq.s32.totalorder %s14, 1
    %p105 = por %p103, %p104
    %p107 = scmp.ne.s32.totalorder %s90, %s106
    %p108 = scmp.eq.s32.totalorder %s14, 0
    %p109 = por %p107, %p108
    %p110 = scmp.le.s32.totalorder 1, %s8
    %p111 = scmp.lt.s32.totalorder %s8, 3
    %p112 = pnand %p110, %p111
    %p113 = pneg %p112
    // Predicated region
    $region9: #{dgcnn_point_forward.9} parent=5 // pred_check
      _
    $region10: #{dgcnn_point_forward.9} parent=5 // pred_check_branch
      %115 = sbr.rel (%p112) target = $region12
    $region11: #{dgcnn_point_forward.9} parent=5 // pred_region
      %s116 = ssub.s32 %s8, 1
    $region12: #{dgcnn_point_forward.9} parent=5 // pred_fallthru
      _
    %p117 = scmp.lt.s32.totalorder %s8, 2
    // Predicated region
    $region13: #{dgcnn_point_forward.9} parent=5 // pred_check
      %p118 = pneg %p117
    $region14: #{dgcnn_point_forward.9} parent=5 // pred_check_branch
      %120 = sbr.rel (%p118) target = $region16
    $region15: #{dgcnn_point_forward.9} parent=5 // pred_region
      // Predicated region
      $region17: #{dgcnn_point_forward.9} parent=15 // pred_check
        %p121 = pneg %p42
      $region18: #{dgcnn_point_forward.9} parent=15 // pred_check_branch
        %123 = sbr.rel (%p121) target = $region20
      $region19: #{dgcnn_point_forward.9} parent=15 // pred_region
        %s124 = smul.u32 2, %s16
        %p125 = scmp.lt.s32.totalorder %s15, 1
        %s126 = scalar_select %p125, %s15, 1
        %p127 = scmp.lt.s32.totalorder %s124, 1
        %s128 = scalar_select %p127, %s124, 1
        %s129 = smul.addr %s126, 2
        %s130 = sadd.s32 %s128, %s129
        %s131 = smul.addr %s130, 8
        %s132 = scalar_lea.vmem %s0, %s131
        %s133 = smul.u32 2, %s16
      $region20: #{dgcnn_point_forward.9} parent=15 // pred_fallthru
        _
      // Predicated region
      $region21: #{dgcnn_point_forward.9} parent=15 // pred_check
        %p134 = pneg %p68
      $region22: #{dgcnn_point_forward.9} parent=15 // pred_check_branch
        %136 = sbr.rel (%p134) target = $region24
      $region23: #{dgcnn_point_forward.9} parent=15 // pred_region
        %p137 = scmp.lt.s32.totalorder %s15, 1
        %s138 = scalar_select %p137, %s15, 1
        %s139 = smul.addr %s138, 2
        %s140 = smul.addr %s139, 8
        %s141 = scalar_lea.vmem %s1, %s140
      $region24: #{dgcnn_point_forward.9} parent=15 // pred_fallthru
        _
    $region16: #{dgcnn_point_forward.9} parent=5 // pred_fallthru
      _
    %p142 = scmp.le.s32.totalorder 1, %s8
    %p143 = scmp.lt.s32.totalorder %s8, 3
    %p144 = pnand %p142, %p143
    %p145 = pneg %p144
    // Predicated region
    $region25: #{dgcnn_point_forward.9} parent=5 // pred_check
      _
    $region26: #{dgcnn_point_forward.9} parent=5 // pred_check_branch
      %147 = sbr.rel (%p144) target = $region28
    $region27: #{dgcnn_point_forward.9} parent=5 // pred_region
      %s148 = ssub.s32 %s8, 1
      %s149 = smul.u32 2, %s18
      %p150 = scmp.lt.s32.totalorder %s17, 1
      %s151 = scalar_select %p150, %s17, 1
      %p152 = scmp.lt.s32.totalorder %s149, 1
      %s153 = scalar_select %p152, %s149, 1
      %s154 = smul.addr %s151, 2
      %s155 = sadd.s32 %s153, %s154
      %s156 = smul.addr %s155, 8
      %s157 = scalar_lea.vmem %s0, %s156
      %p158 = pneg %p48
      %p159 = pneg %p45
      %p160 = scmp.lt.s32.totalorder %s17, 1
      %s161 = scalar_select %p160, %s17, 1
      %s162 = smul.addr %s161, 2
      %s163 = smul.addr %s162, 8
      %s164 = scalar_lea.vmem %s1, %s163
      %p165 = pneg %p74
      %p166 = pneg %p71
      %p167 = pneg %p102
      %p168 = pneg %p99
      %s169 = smul.u32 2, %s18
      %p170 = scmp.lt.s32.totalorder %s17, 1
      %s171 = scalar_select %p170, %s17, 1
      %p172 = scmp.lt.s32.totalorder %s169, 1
      %s173 = scalar_select %p172, %s169, 1
      %s174 = smul.addr %s171, 2
      %s175 = sadd.s32 %s173, %s174
      %s176 = smul.addr %s175, 8
      %s177 = scalar_lea.vmem %s2, %s176
      %s178 = smul.u32 2, %s18
      %p179 = scmp.lt.s32.totalorder %s17, 1
      %s180 = scalar_select %p179, %s17, 1
      %p181 = scmp.lt.s32.totalorder %s178, 1
      %s182 = scalar_select %p181, %s178, 1
      %s183 = smul.addr %s180, 2
      %s184 = sadd.s32 %s182, %s183
      %s185 = smul.addr %s184, 8
      %s186 = scalar_lea.vmem %s0, %s185
      %s187 = smul.u32 2, %s18
      %p188 = scmp.lt.s32.totalorder %s17, 1
      %s189 = scalar_select %p188, %s17, 1
      %s190 = smul.addr %s189, 2
      %s191 = smul.addr %s190, 8
      %s192 = scalar_lea.vmem %s1, %s191
      %s193 = smul.u32 2, %s18
      %p194 = scmp.lt.s32.totalorder %s17, 1
      %s195 = scalar_select %p194, %s17, 1
      %p196 = scmp.lt.s32.totalorder %s193, 1
      %s197 = scalar_select %p196, %s193, 1
      %s198 = smul.addr %s195, 2
      %s199 = sadd.s32 %s197, %s198
      %s200 = smul.addr %s199, 8
      %s201 = scalar_lea.vmem %s2, %s200
      %s202 = smul.u32 2, %s18
      %v203 = vld [vmem:[%s186] sm:$0xff]
      %v204 = vld [vmem:[%s186 + $0x8] sm:$0xff]
      %v205 = vld [vmem:[%s192] sm:$0xff]
      %v206 = vld [vmem:[%s192 + $0x8] sm:$0xff]
      %vm207 = vcmask 23552
      %v209 = vsel %vm207, %v203, 0
      %v212 = vsel %vm207, %v204, 0
      %v215 = vsel %vm207, %v205, 0
      %v218 = vsel %vm207, %v206, 0
      %220 = vmatprep.subr.mxu0 0.0
      %221 = vmatpush1.xpose.msra.mxu0 %v215
      %222 = vmatprep.subr.mxu0 0.0
      %223 = vmatpush1.xpose.msra.mxu0 %v218
      %224 = vmatprep.subr.mxu0 0.0
      %225 = vmatpush1.xpose.msra.mxu0 0.0
      %226 = vmatprep.subr.mxu0 0.0
      %227 = vmatpush1.xpose.msra.mxu0 0.0
      %228 = vmatprep.subr.mxu0 0.0
      %229 = vmatpush1.xpose.msra.mxu0 0.0
      %230 = vmatprep.subr.mxu0 0.0
      %231 = vmatpush1.xpose.msra.mxu0 0.0
      %232 = vmatprep.subr.mxu0 0.0
      %233 = vmatpush1.xpose.msra.mxu0 0.0
      %234 = vmatprep.subr.mxu0 0.0
      %235 = vmatpush1.xpose.msra.mxu0 0.0
      %236 = vmatprep.subr.mxu0 0.0
      %237 = vmatpush1.xpose.msra.mxu0 0.0
      %238 = vmatprep.subr.mxu0 0.0
      %239 = vmatpush1.xpose.msra.mxu0 0.0
      %240 = vmatprep.subr.mxu0 0.0
      %241 = vmatpush1.xpose.msra.mxu0 0.0
      %242 = vmatprep.subr.mxu0 0.0
      %243 = vmatpush1.xpose.msra.mxu0 0.0
      %244 = vmatprep.subr.mxu0 0.0
      %245 = vmatpush1.xpose.msra.mxu0 0.0
      %246 = vmatprep.subr.mxu0 0.0
      %247 = vmatpush1.xpose.msra.mxu0 0.0
      %248 = vmatprep.subr.mxu0 0.0
      %249 = vmatpush1.xpose.msra.mxu0 0.0
      %250 = vmatprep.subr.mxu0 0.0
      %251 = vmatpush1.xpose.msra.mxu0 0.0
      %252 = vmatprep.subr.mxu0 0.0
      %253 = vmatpush1.xpose.msra.mxu0 0.0
      %254 = vmatprep.subr.mxu0 0.0
      %255 = vmatpush1.xpose.msra.mxu0 0.0
      %256 = vmatprep.subr.mxu0 0.0
      %257 = vmatpush1.xpose.msra.mxu0 0.0
      %258 = vmatprep.subr.mxu0 0.0
      %259 = vmatpush1.xpose.msra.mxu0 0.0
      %260 = vmatprep.subr.mxu0 0.0
      %261 = vmatpush1.xpose.msra.mxu0 0.0
      %262 = vmatprep.subr.mxu0 0.0
      %263 = vmatpush1.xpose.msra.mxu0 0.0
      %264 = vmatprep.subr.mxu0 0.0
      %265 = vmatpush1.xpose.msra.mxu0 0.0
      %266 = vmatprep.subr.mxu0 0.0
      %267 = vmatpush1.xpose.msra.mxu0 0.0
      %268 = vmatprep.subr.mxu0 0.0
      %269 = vmatpush1.xpose.msra.mxu0 0.0
      %270 = vmatprep.subr.mxu0 0.0
      %271 = vmatpush1.xpose.msra.mxu0 0.0
      %272 = vmatprep.subr.mxu0 0.0
      %273 = vmatpush1.xpose.msra.mxu0 0.0
      %274 = vmatprep.subr.mxu0 0.0
      %275 = vmatpush1.xpose.msra.mxu0 0.0
      %276 = vmatprep.subr.mxu0 0.0
      %277 = vmatpush1.xpose.msra.mxu0 0.0
      %278 = vmatprep.subr.mxu0 0.0
      %279 = vmatpush1.xpose.msra.mxu0 0.0
      %280 = vmatprep.subr.mxu0 0.0
      %281 = vmatpush1.xpose.msra.mxu0 0.0
      %282 = vmatprep.subr.mxu0 0.0
      %283 = vmatpush1.xpose.msra.mxu0 0.0
      %284 = vmatprep.mubr.f32.mxu0 0.0
      %285 = vmatmul.mubr.f32.gmra.mrb[0].mxu0 %v209
      %v286 = vpop.f32.mrb[0].mxu0
      %v287 = vadd.f32 0.0, %v286
      %v288 = vpop.f32.mrb[0].mxu0
      %289 = vmatprep.mubr.f32.mxu0 0.0
      %290 = vmatmul.mubr.f32.gmra.mrb[0].mxu0 %v212
      %v291 = vpop.f32.mrb[0].mxu0
      %v292 = vadd.f32 0.0, %v291
      %v293 = vpop.f32.mrb[0].mxu0
      %294 = vdwg.mxu0
      %v295 = vmul.f32 %v205, %v205
      %v296 = vmul.f32 %v206, %v206
      %v298 = vsel %vm207, 1.0, 0
      %v301 = vsel %vm207, %v295, 0
      %v304 = vsel %vm207, %v296, 0
      %306 = vmatprep.subr.mxu0 0.0
      %307 = vmatpush1.xpose.msra.mxu0 %v301
      %308 = vmatprep.subr.mxu0 0.0
      %309 = vmatpush1.xpose.msra.mxu0 %v304
      %310 = vmatprep.subr.mxu0 0.0
      %311 = vmatpush1.xpose.msra.mxu0 0.0
      %312 = vmatprep.subr.mxu0 0.0
      %313 = vmatpush1.xpose.msra.mxu0 0.0
      %314 = vmatprep.subr.mxu0 0.0
      %315 = vmatpush1.xpose.msra.mxu0 0.0
      %316 = vmatprep.subr.mxu0 0.0
      %317 = vmatpush1.xpose.msra.mxu0 0.0
      %318 = vmatprep.subr.mxu0 0.0
      %319 = vmatpush1.xpose.msra.mxu0 0.0
      %320 = vmatprep.subr.mxu0 0.0
      %321 = vmatpush1.xpose.msra.mxu0 0.0
      %322 = vmatprep.subr.mxu0 0.0
      %323 = vmatpush1.xpose.msra.mxu0 0.0
      %324 = vmatprep.subr.mxu0 0.0
      %325 = vmatpush1.xpose.msra.mxu0 0.0
      %326 = vmatprep.subr.mxu0 0.0
      %327 = vmatpush1.xpose.msra.mxu0 0.0
      %328 = vmatprep.subr.mxu0 0.0
      %329 = vmatpush1.xpose.msra.mxu0 0.0
      %330 = vmatprep.subr.mxu0 0.0
      %331 = vmatpush1.xpose.msra.mxu0 0.0
      %332 = vmatprep.subr.mxu0 0.0
      %333 = vmatpush1.xpose.msra.mxu0 0.0
      %334 = vmatprep.subr.mxu0 0.0
      %335 = vmatpush1.xpose.msra.mxu0 0.0
      %336 = vmatprep.subr.mxu0 0.0
      %337 = vmatpush1.xpose.msra.mxu0 0.0
      %338 = vmatprep.subr.mxu0 0.0
      %339 = vmatpush1.xpose.msra.mxu0 0.0
      %340 = vmatprep.subr.mxu0 0.0
      %341 = vmatpush1.xpose.msra.mxu0 0.0
      %342 = vmatprep.subr.mxu0 0.0
      %343 = vmatpush1.xpose.msra.mxu0 0.0
      %344 = vmatprep.subr.mxu0 0.0
      %345 = vmatpush1.xpose.msra.mxu0 0.0
      %346 = vmatprep.subr.mxu0 0.0
      %347 = vmatpush1.xpose.msra.mxu0 0.0
      %348 = vmatprep.subr.mxu0 0.0
      %349 = vmatpush1.xpose.msra.mxu0 0.0
      %350 = vmatprep.subr.mxu0 0.0
      %351 = vmatpush1.xpose.msra.mxu0 0.0
      %352 = vmatprep.subr.mxu0 0.0
      %353 = vmatpush1.xpose.msra.mxu0 0.0
      %354 = vmatprep.subr.mxu0 0.0
      %355 = vmatpush1.xpose.msra.mxu0 0.0
      %356 = vmatprep.subr.mxu0 0.0
      %357 = vmatpush1.xpose.msra.mxu0 0.0
      %358 = vmatprep.subr.mxu0 0.0
      %359 = vmatpush1.xpose.msra.mxu0 0.0
      %360 = vmatprep.subr.mxu0 0.0
      %361 = vmatpush1.xpose.msra.mxu0 0.0
      %362 = vmatprep.subr.mxu0 0.0
      %363 = vmatpush1.xpose.msra.mxu0 0.0
      %364 = vmatprep.subr.mxu0 0.0
      %365 = vmatpush1.xpose.msra.mxu0 0.0
      %366 = vmatprep.subr.mxu0 0.0
      %367 = vmatpush1.xpose.msra.mxu0 0.0
      %368 = vmatprep.subr.mxu0 0.0
      %369 = vmatpush1.xpose.msra.mxu0 0.0
      %370 = vmatprep.mubr.f32.mxu0 0.0
      %371 = vmatmul.mubr.f32.gmra.mrb[0].mxu0 %v298
      %v372 = vpop.f32.mrb[0].mxu0
      %v373 = vadd.f32 0.0, %v372
      %v374 = vpop.f32.mrb[0].mxu0
      %375 = vdwg.mxu0
      %v376 = vmul.f32 %v287, 2.0
      %v377 = vmul.f32 %v292, 2.0
      %v378 = vlaneseq
      %v379 = vshrl.u32 %v378, 7
      %v380 = vsub.s32 0, %v379
      %v381 = vrot.slane %v373, %v380
      %v382 = vsub.f32 %v376, %v381
      %v383 = vsub.f32 %v377, %v381
      %vm384 = vcmask 130048
      %385 = vst.msk [vmem:[%s201] sm:$0xff] %vm384, %v382
      %386 = vst.msk [vmem:[%s201 + $0x8] sm:$0xff] %vm384, %v383
      %s387 = smul.u32 2, %s18
      %p388 = scmp.lt.s32.totalorder %s17, 1
      %s389 = scalar_select %p388, %s17, 1
      %p390 = scmp.lt.s32.totalorder %s387, 1
      %s391 = scalar_select %p390, %s387, 1
      %s392 = smul.addr %s389, 2
      %s393 = sadd.s32 %s391, %s392
      %s394 = smul.addr %s393, 8
      %s395 = scalar_lea.vmem %s2, %s394
      // Predicated region
      $region29: #{dgcnn_point_forward.9} parent=27 // pred_check
        %p396 = pneg %p99
      $region30: #{dgcnn_point_forward.9} parent=27 // pred_check_branch
        %398 = sbr.rel (%p396) target = $region32
      $region31: #{dgcnn_point_forward.9} parent=27 // pred_region
        %s399 = smul.u32 2, %s18
      $region32: #{dgcnn_point_forward.9} parent=27 // pred_fallthru
        _
    $region28: #{dgcnn_point_forward.9} parent=5 // pred_fallthru
      _
    %p400 = scmp.le.s32.totalorder 2, %s8
    // Predicated region
    $region33: #{dgcnn_point_forward.9} parent=5 // pred_check
      %p401 = pneg %p400
    $region34: #{dgcnn_point_forward.9} parent=5 // pred_check_branch
      %403 = sbr.rel (%p401) target = $region36
    $region35: #{dgcnn_point_forward.9} parent=5 // pred_region
      %s404 = ssub.s32 %s8, 2
      // Predicated region
      $region37: #{dgcnn_point_forward.9} parent=35 // pred_check
        %p405 = pneg %p105
      $region38: #{dgcnn_point_forward.9} parent=35 // pred_check_branch
        %407 = sbr.rel (%p405) target = $region40
      $region39: #{dgcnn_point_forward.9} parent=35 // pred_region
        %s408 = smul.u32 2, %s20
        %p409 = scmp.lt.s32.totalorder %s19, 1
        %s410 = scalar_select %p409, %s19, 1
        %p411 = scmp.lt.s32.totalorder %s408, 1
        %s412 = scalar_select %p411, %s408, 1
        %s413 = smul.addr %s410, 2
        %s414 = sadd.s32 %s412, %s413
        %s415 = smul.addr %s414, 8
        %s416 = scalar_lea.vmem %s2, %s415
      $region40: #{dgcnn_point_forward.9} parent=35 // pred_fallthru
        _
    $region36: #{dgcnn_point_forward.9} parent=5 // pred_fallthru
      _
  $region6: #{dgcnn_point_forward.9} parent=0 // loop_footer
    %s12 = sadd.s32 1, %s8
  $region7: #{dgcnn_point_forward.9} parent=0 // loop_footer_branch
    %7 = sbr.rel target = $region3
  $region8: #{dgcnn_point_forward.9} parent=0 // loop_exit
    _

// kernel: dgcnn_point_forward.10
$region0: #{dgcnn_point_forward.10}
  #allocation0 [shape = 'u32[]', space=smem, size = 0x4, offset = 0x4, fixed_abs, tag = 'smem constant byte address 0x4 - core index']
  #allocation1 [shape = 'u32[144,128]{1,0:T(1,128)}', space=vmem, size = 0x12000, scoped, tag = 'internal scratch']
  %s0 = inlined_call_operand.vmem [shape: bf16[4,32,3], index: 0, kind: input, shape index: {}]
  %s1 = inlined_call_operand.vmem [shape: bf16[32,3], index: 1, kind: input, shape index: {}]
  %s2 = inlined_call_operand.vmem [shape: bf16[3,64], index: 2, kind: input, shape index: {}]
  %s3 = inlined_call_operand.vmem [shape: bf16[3,64], index: 3, kind: input, shape index: {}]
  %s4 = inlined_call_operand.vmem [shape: f32[1,64], index: 4, kind: input, shape index: {}]
  %s5 = inlined_call_operand.vmem [shape: f32[1,64], index: 5, kind: input, shape index: {}]
  %s6 = inlined_call_operand.vmem [shape: f32[32,64], index: 6, kind: output, shape index: {}]
  %s7 = sld [smem:[#allocation0]]
  $region34: #{dgcnn_point_forward.10} parent=0
    _
  %s9 = ssub.s32 1, %s7
  %s10 = scalar_select 0, %s9, %s7
  // Predicated region
  $region2: #{dgcnn_point_forward.10} parent=0 // pred_check
    _
  $region3: #{dgcnn_point_forward.10} parent=0 // pred_check_branch
    %12 = sbr.rel (0) target = $region5
  $region4: #{dgcnn_point_forward.10} parent=0 // pred_region
    _
  $region5: #{dgcnn_point_forward.10} parent=0 // pred_fallthru
    _
  // Predicated region
  $region6: #{dgcnn_point_forward.10} parent=0 // pred_check
    _
  $region7: #{dgcnn_point_forward.10} parent=0 // pred_check_branch
    %14 = sbr.rel (0) target = $region9
  $region8: #{dgcnn_point_forward.10} parent=0 // pred_region
    _
  $region9: #{dgcnn_point_forward.10} parent=0 // pred_fallthru
    _
  // Predicated region
  $region10: #{dgcnn_point_forward.10} parent=0 // pred_check
    _
  $region11: #{dgcnn_point_forward.10} parent=0 // pred_check_branch
    %16 = sbr.rel (0) target = $region13
  $region12: #{dgcnn_point_forward.10} parent=0 // pred_region
    _
  $region13: #{dgcnn_point_forward.10} parent=0 // pred_fallthru
    _
  // Predicated region
  $region14: #{dgcnn_point_forward.10} parent=0 // pred_check
    _
  $region15: #{dgcnn_point_forward.10} parent=0 // pred_check_branch
    %18 = sbr.rel (0) target = $region17
  $region16: #{dgcnn_point_forward.10} parent=0 // pred_region
    _
  $region17: #{dgcnn_point_forward.10} parent=0 // pred_fallthru
    _
  // Predicated region
  $region18: #{dgcnn_point_forward.10} parent=0 // pred_check
    _
  $region19: #{dgcnn_point_forward.10} parent=0 // pred_check_branch
    %20 = sbr.rel (0) target = $region21
  $region20: #{dgcnn_point_forward.10} parent=0 // pred_region
    _
  $region21: #{dgcnn_point_forward.10} parent=0 // pred_fallthru
    _
  // Predicated region
  $region22: #{dgcnn_point_forward.10} parent=0 // pred_check
    _
  $region23: #{dgcnn_point_forward.10} parent=0 // pred_check_branch
    %22 = sbr.rel (0) target = $region25
  $region24: #{dgcnn_point_forward.10} parent=0 // pred_region
    _
  $region25: #{dgcnn_point_forward.10} parent=0 // pred_fallthru
    _
  %v24 = vld [vmem:[%s4] sm:$0x1]
  %v25 = vld [vmem:[%s1] sm:$0xf]
  %v26 = vld [vmem:[%s1 + $0x4] sm:$0xf]
  %v27 = vld [vmem:[%s1 + $0x8] sm:$0xf]
  %v28 = vld [vmem:[%s1 + $0xc] sm:$0xf]
  %v29 = vld [vmem:[%s3] sm:$0x3]
  %v34 = vunpack.c.l.b16 %v25
  %v35 = vunpack.c.l.b16 %v26
  %v36 = vunpack.c.l.b16 %v27
  %v37 = vunpack.c.l.b16 %v28
  %v38 = vpack.c.b16 %v35, %v34
  %v39 = vpack.c.b16 %v37, %v36
  %vm40 = vcmask 23552
  %v42 = vsel %vm40, %v38, 0
  %v45 = vsel %vm40, %v39, 0
  %vm47 = vcmask 1040384
  %vm48 = vcmask 1041408
  %v49 = vsel %vm47, 4294967295, 65535
  %v50 = vsel %vm48, %v49, 0
  %v52 = vand.u32 %v29, %v50
  %54 = vmatprep.subr.bf16.mxu0 0
  %55 = vmatpush1.bf16.msra.mxu0 %v52
  %56 = vmatprep.subr.bf16.mxu0 0
  %57 = vmatpush1.bf16.msra.mxu0 0
  %58 = vmatprep.subr.bf16.mxu0 0
  %59 = vmatpush1.bf16.msra.mxu0 0
  %60 = vmatprep.subr.bf16.mxu0 0
  %61 = vmatpush1.bf16.msra.mxu0 0
  %62 = vmatprep.subr.bf16.mxu0 0
  %63 = vmatpush1.bf16.msra.mxu0 0
  %64 = vmatprep.subr.bf16.mxu0 0
  %65 = vmatpush1.bf16.msra.mxu0 0
  %66 = vmatprep.subr.bf16.mxu0 0
  %67 = vmatpush1.bf16.msra.mxu0 0
  %68 = vmatprep.subr.bf16.mxu0 0
  %69 = vmatpush1.bf16.msra.mxu0 0
  %70 = vmatprep.subr.bf16.mxu0 0
  %71 = vmatpush1.bf16.msra.mxu0 0
  %72 = vmatprep.subr.bf16.mxu0 0
  %73 = vmatpush1.bf16.msra.mxu0 0
  %74 = vmatprep.subr.bf16.mxu0 0
  %75 = vmatpush1.bf16.msra.mxu0 0
  %76 = vmatprep.subr.bf16.mxu0 0
  %77 = vmatpush1.bf16.msra.mxu0 0
  %78 = vmatprep.subr.bf16.mxu0 0
  %79 = vmatpush1.bf16.msra.mxu0 0
  %80 = vmatprep.subr.bf16.mxu0 0
  %81 = vmatpush1.bf16.msra.mxu0 0
  %82 = vmatprep.subr.bf16.mxu0 0
  %83 = vmatpush1.bf16.msra.mxu0 0
  %84 = vmatprep.subr.bf16.mxu0 0
  %85 = vmatpush1.bf16.msra.mxu0 0
  %86 = vmatprep.mubr.bf16.mxu0 0
  %87 = vmatmul.mubr.bf16.gmra.mrb[0].mxu0 %v42
  %v88 = vpop.f32.mrb[0].mxu0
  %v89 = vadd.f32 0.0, %v88
  %v90 = vpop.f32.mrb[0].mxu0
  %v91 = vpop.f32.mrb[0].mxu0
  %v92 = vadd.f32 0.0, %v91
  %v93 = vpop.f32.mrb[0].mxu0
  %94 = vmatprep.mubr.bf16.mxu0 0
  %95 = vmatmul.mubr.bf16.gmra.mrb[0].mxu0 %v45
  %v96 = vpop.f32.mrb[0].mxu0
  %v97 = vadd.f32 0.0, %v96
  %v98 = vpop.f32.mrb[0].mxu0
  %v99 = vpop.f32.mrb[0].mxu0
  %v100 = vadd.f32 0.0, %v99
  %v101 = vpop.f32.mrb[0].mxu0
  %102 = vdwg.mxu0
  %v104 = vlaneseq
  %v105 = vshrl.u32 %v104, 7
  %v106 = vsub.s32 0, %v105
  %v107 = vrot.slane %v24, %v106
  %v109 = vmul.f32 %v89, %v107
  %v110 = vmul.f32 %v92, %v107
  %v111 = vmul.f32 %v97, %v107
  %v112 = vmul.f32 %v100, %v107
  %v113 = vld [vmem:[%s5] sm:$0x1]
  %v115 = vlaneseq
  %v116 = vshrl.u32 %v115, 7
  %v117 = vsub.s32 0, %v116
  %v118 = vrot.slane %v113, %v117
  %v120 = vadd.f32 %v109, %v118
  %v121 = vadd.f32 %v110, %v118
  %v122 = vadd.f32 %v111, %v118
  %v123 = vadd.f32 %v112, %v118
  %v124 = vld [vmem:[%s0] sm:$0xf]
  %v125 = vld [vmem:[%s0 + $0x4] sm:$0xf]
  %v126 = vld [vmem:[%s0 + $0x8] sm:$0xf]
  %v127 = vld [vmem:[%s0 + $0xc] sm:$0xf]
  %v128 = vld [vmem:[%s0 + $0x10] sm:$0xf]
  %v129 = vld [vmem:[%s0 + $0x14] sm:$0xf]
  %v130 = vld [vmem:[%s0 + $0x18] sm:$0xf]
  %v131 = vld [vmem:[%s0 + $0x1c] sm:$0xf]
  %v132 = vld [vmem:[%s0 + $0x20] sm:$0xf]
  %v133 = vld [vmem:[%s0 + $0x24] sm:$0xf]
  %v134 = vld [vmem:[%s0 + $0x28] sm:$0xf]
  %v135 = vld [vmem:[%s0 + $0x2c] sm:$0xf]
  %v136 = vld [vmem:[%s0 + $0x30] sm:$0xf]
  %v137 = vld [vmem:[%s0 + $0x34] sm:$0xf]
  %v138 = vld [vmem:[%s0 + $0x38] sm:$0xf]
  %v139 = vld [vmem:[%s0 + $0x3c] sm:$0xf]
  %v140 = vld [vmem:[%s2] sm:$0x3]
  %v157 = vunpack.c.l.b16 %v124
  %v158 = vunpack.c.l.b16 %v125
  %v159 = vunpack.c.l.b16 %v126
  %v160 = vunpack.c.l.b16 %v127
  %v161 = vunpack.c.l.b16 %v128
  %v162 = vunpack.c.l.b16 %v129
  %v163 = vunpack.c.l.b16 %v130
  %v164 = vunpack.c.l.b16 %v131
  %v165 = vunpack.c.l.b16 %v132
  %v166 = vunpack.c.l.b16 %v133
  %v167 = vunpack.c.l.b16 %v134
  %v168 = vunpack.c.l.b16 %v135
  %v169 = vunpack.c.l.b16 %v136
  %v170 = vunpack.c.l.b16 %v137
  %v171 = vunpack.c.l.b16 %v138
  %v172 = vunpack.c.l.b16 %v139
  %v173 = vpack.c.b16 %v158, %v157
  %v174 = vpack.c.b16 %v160, %v159
  %v175 = vpack.c.b16 %v162, %v161
  %v176 = vpack.c.b16 %v164, %v163
  %v177 = vpack.c.b16 %v166, %v165
  %v178 = vpack.c.b16 %v168, %v167
  %v179 = vpack.c.b16 %v170, %v169
  %v180 = vpack.c.b16 %v172, %v171
  %v182 = vsel %vm40, %v173, 0
  %v185 = vsel %vm40, %v174, 0
  %v188 = vsel %vm40, %v175, 0
  %v191 = vsel %vm40, %v176, 0
  %v194 = vsel %vm40, %v177, 0
  %v197 = vsel %vm40, %v178, 0
  %v200 = vsel %vm40, %v179, 0
  %v203 = vsel %vm40, %v180, 0
  %v206 = vand.u32 %v140, %v50
  %208 = vmatprep.subr.bf16.mxu0 0
  %209 = vmatpush1.bf16.msra.mxu0 %v206
  %210 = vmatprep.subr.bf16.mxu0 0
  %211 = vmatpush1.bf16.msra.mxu0 0
  %212 = vmatprep.subr.bf16.mxu0 0
  %213 = vmatpush1.bf16.msra.mxu0 0
  %214 = vmatprep.subr.bf16.mxu0 0
  %215 = vmatpush1.bf16.msra.mxu0 0
  %216 = vmatprep.subr.bf16.mxu0 0
  %217 = vmatpush1.bf16.msra.mxu0 0
  %218 = vmatprep.subr.bf16.mxu0 0
  %219 = vmatpush1.bf16.msra.mxu0 0
  %220 = vmatprep.subr.bf16.mxu0 0
  %221 = vmatpush1.bf16.msra.mxu0 0
  %222 = vmatprep.subr.bf16.mxu0 0
  %223 = vmatpush1.bf16.msra.mxu0 0
  %224 = vmatprep.subr.bf16.mxu0 0
  %225 = vmatpush1.bf16.msra.mxu0 0
  %226 = vmatprep.subr.bf16.mxu0 0
  %227 = vmatpush1.bf16.msra.mxu0 0
  %228 = vmatprep.subr.bf16.mxu0 0
  %229 = vmatpush1.bf16.msra.mxu0 0
  %230 = vmatprep.subr.bf16.mxu0 0
  %231 = vmatpush1.bf16.msra.mxu0 0
  %232 = vmatprep.subr.bf16.mxu0 0
  %233 = vmatpush1.bf16.msra.mxu0 0
  %234 = vmatprep.subr.bf16.mxu0 0
  %235 = vmatpush1.bf16.msra.mxu0 0
  %236 = vmatprep.subr.bf16.mxu0 0
  %237 = vmatpush1.bf16.msra.mxu0 0
  %238 = vmatprep.subr.bf16.mxu0 0
  %239 = vmatpush1.bf16.msra.mxu0 0
  %240 = vmatprep.mubr.bf16.mxu0 0
  %241 = vmatmul.mubr.bf16.gmra.mrb[0].mxu0 %v182
  %v242 = vpop.f32.mrb[0].mxu0
  %v243 = vadd.f32 0.0, %v242
  %v244 = vpop.f32.mrb[0].mxu0
  %v245 = vpop.f32.mrb[0].mxu0
  %v246 = vadd.f32 0.0, %v245
  %v247 = vpop.f32.mrb[0].mxu0
  %248 = vmatprep.mubr.bf16.mxu0 0
  %249 = vmatmul.mubr.bf16.gmra.mrb[0].mxu0 %v185
  %v250 = vpop.f32.mrb[0].mxu0
  %v251 = vadd.f32 0.0, %v250
  %v252 = vpop.f32.mrb[0].mxu0
  %v253 = vpop.f32.mrb[0].mxu0
  %v254 = vadd.f32 0.0, %v253
  %v255 = vpop.f32.mrb[0].mxu0
  %256 = vmatprep.mubr.bf16.mxu0 0
  %257 = vmatmul.mubr.bf16.gmra.mrb[0].mxu0 %v188
  %v258 = vpop.f32.mrb[0].mxu0
  %v259 = vadd.f32 0.0, %v258
  %v260 = vpop.f32.mrb[0].mxu0
  %v261 = vpop.f32.mrb[0].mxu0
  %v262 = vadd.f32 0.0, %v261
  %v263 = vpop.f32.mrb[0].mxu0
  %264 = vmatprep.mubr.bf16.mxu0 0
  %265 = vmatmul.mubr.bf16.gmra.mrb[0].mxu0 %v191
  %v266 = vpop.f32.mrb[0].mxu0
  %v267 = vadd.f32 0.0, %v266
  %v268 = vpop.f32.mrb[0].mxu0
  %v269 = vpop.f32.mrb[0].mxu0
  %v270 = vadd.f32 0.0, %v269
  %v271 = vpop.f32.mrb[0].mxu0
  %272 = vmatprep.mubr.bf16.mxu0 0
  %273 = vmatmul.mubr.bf16.gmra.mrb[0].mxu0 %v194
  %v274 = vpop.f32.mrb[0].mxu0
  %v275 = vadd.f32 0.0, %v274
  %v276 = vpop.f32.mrb[0].mxu0
  %v277 = vpop.f32.mrb[0].mxu0
  %v278 = vadd.f32 0.0, %v277
  %v279 = vpop.f32.mrb[0].mxu0
  %280 = vmatprep.mubr.bf16.mxu0 0
  %281 = vmatmul.mubr.bf16.gmra.mrb[0].mxu0 %v197
  %v282 = vpop.f32.mrb[0].mxu0
  %v283 = vadd.f32 0.0, %v282
  %v284 = vpop.f32.mrb[0].mxu0
  %v285 = vpop.f32.mrb[0].mxu0
  %v286 = vadd.f32 0.0, %v285
  %v287 = vpop.f32.mrb[0].mxu0
  %288 = vmatprep.mubr.bf16.mxu0 0
  %289 = vmatmul.mubr.bf16.gmra.mrb[0].mxu0 %v200
  %v290 = vpop.f32.mrb[0].mxu0
  %v291 = vadd.f32 0.0, %v290
  %v292 = vpop.f32.mrb[0].mxu0
  %v293 = vpop.f32.mrb[0].mxu0
  %v294 = vadd.f32 0.0, %v293
  %v295 = vpop.f32.mrb[0].mxu0
  %296 = vmatprep.mubr.bf16.mxu0 0
  %297 = vmatmul.mubr.bf16.gmra.mrb[0].mxu0 %v203
  %v298 = vpop.f32.mrb[0].mxu0
  %v299 = vadd.f32 0.0, %v298
  %v300 = vpop.f32.mrb[0].mxu0
  %v301 = vpop.f32.mrb[0].mxu0
  %v302 = vadd.f32 0.0, %v301
  %v303 = vpop.f32.mrb[0].mxu0
  %304 = vdwg.mxu0
  %v305 = vmul.f32 %v243, %v107
  %v306 = vmul.f32 %v246, %v107
  %v307 = vmul.f32 %v251, %v107
  %v308 = vmul.f32 %v254, %v107
  %v309 = vadd.f32 %v305, %v120
  %v310 = vadd.f32 %v306, %v121
  %v311 = vadd.f32 %v307, %v122
  %v312 = vadd.f32 %v308, %v123
  %vm313 = vcmp.ge.f32.partialorder %v309, 0.0
  %vm314 = vcmp.ge.f32.partialorder %v310, 0.0
  %vm315 = vcmp.ge.f32.partialorder %v311, 0.0
  %vm316 = vcmp.ge.f32.partialorder %v312, 0.0
  %v317 = vmul.f32 %v309, 0.2
  %v318 = vmul.f32 %v310, 0.2
  %v319 = vmul.f32 %v311, 0.2
  %v320 = vmul.f32 %v312, 0.2
  %v321 = vsel %vm313, %v309, %v317
  %v322 = vsel %vm314, %v310, %v318
  %v323 = vsel %vm315, %v311, %v319
  %v324 = vsel %vm316, %v312, %v320
  %v325 = vmul.f32 %v259, %v107
  %v326 = vmul.f32 %v262, %v107
  %v327 = vmul.f32 %v267, %v107
  %v328 = vmul.f32 %v270, %v107
  %v329 = vadd.f32 %v325, %v120
  %v330 = vadd.f32 %v326, %v121
  %v331 = vadd.f32 %v327, %v122
  %v332 = vadd.f32 %v328, %v123
  %vm333 = vcmp.ge.f32.partialorder %v329, 0.0
  %vm334 = vcmp.ge.f32.partialorder %v330, 0.0
  %vm335 = vcmp.ge.f32.partialorder %v331, 0.0
  %vm336 = vcmp.ge.f32.partialorder %v332, 0.0
  %v337 = vmul.f32 %v329, 0.2
  %v338 = vmul.f32 %v330, 0.2
  %v339 = vmul.f32 %v331, 0.2
  %v340 = vmul.f32 %v332, 0.2
  %v341 = vsel %vm333, %v329, %v337
  %v342 = vsel %vm334, %v330, %v338
  %v343 = vsel %vm335, %v331, %v339
  %v344 = vsel %vm336, %v332, %v340
  %v345 = vmax.f32 %v321, %v341
  %v346 = vmax.f32 %v322, %v342
  %v347 = vmax.f32 %v323, %v343
  %v348 = vmax.f32 %v324, %v344
  %v349 = vmul.f32 %v275, %v107
  %v350 = vmul.f32 %v278, %v107
  %v351 = vmul.f32 %v283, %v107
  %v352 = vmul.f32 %v286, %v107
  %v353 = vadd.f32 %v349, %v120
  %v354 = vadd.f32 %v350, %v121
  %v355 = vadd.f32 %v351, %v122
  %v356 = vadd.f32 %v352, %v123
  %vm357 = vcmp.ge.f32.partialorder %v353, 0.0
  %vm358 = vcmp.ge.f32.partialorder %v354, 0.0
  %vm359 = vcmp.ge.f32.partialorder %v355, 0.0
  %vm360 = vcmp.ge.f32.partialorder %v356, 0.0
  %v361 = vmul.f32 %v353, 0.2
  %v362 = vmul.f32 %v354, 0.2
  %v363 = vmul.f32 %v355, 0.2
  %v364 = vmul.f32 %v356, 0.2
  %v365 = vsel %vm357, %v353, %v361
  %v366 = vsel %vm358, %v354, %v362
  %v367 = vsel %vm359, %v355, %v363
  %v368 = vsel %vm360, %v356, %v364
  %v369 = vmax.f32 %v345, %v365
  %v370 = vmax.f32 %v346, %v366
  %v371 = vmax.f32 %v347, %v367
  %v372 = vmax.f32 %v348, %v368
  %v373 = vmul.f32 %v291, %v107
  %v374 = vmul.f32 %v294, %v107
  %v375 = vmul.f32 %v299, %v107
  %v376 = vmul.f32 %v302, %v107
  %v377 = vadd.f32 %v373, %v120
  %v378 = vadd.f32 %v374, %v121
  %v379 = vadd.f32 %v375, %v122
  %v380 = vadd.f32 %v376, %v123
  %vm381 = vcmp.ge.f32.partialorder %v377, 0.0
  %vm382 = vcmp.ge.f32.partialorder %v378, 0.0
  %vm383 = vcmp.ge.f32.partialorder %v379, 0.0
  %vm384 = vcmp.ge.f32.partialorder %v380, 0.0
  %v385 = vmul.f32 %v377, 0.2
  %v386 = vmul.f32 %v378, 0.2
  %v387 = vmul.f32 %v379, 0.2
  %v388 = vmul.f32 %v380, 0.2
  %v389 = vsel %vm381, %v377, %v385
  %v390 = vsel %vm382, %v378, %v386
  %v391 = vsel %vm383, %v379, %v387
  %v392 = vsel %vm384, %v380, %v388
  %v393 = vmax.f32 %v369, %v389
  %v394 = vmax.f32 %v370, %v390
  %v395 = vmax.f32 %v371, %v391
  %v396 = vmax.f32 %v372, %v392
  %vm397 = vcmask 523264
  %398 = vst.msk [vmem:[%s6] sm:$0xff] %vm397, %v393
  %399 = vst.msk [vmem:[%s6 + $0x8] sm:$0xff] %vm397, %v394
  %400 = vst.msk [vmem:[%s6 + $0x10] sm:$0xff] %vm397, %v395
  %401 = vst.msk [vmem:[%s6 + $0x18] sm:$0xff] %vm397, %v396
  // Predicated region
  $region26: #{dgcnn_point_forward.10} parent=0 // pred_check
    _
  $region27: #{dgcnn_point_forward.10} parent=0 // pred_check_branch
    %403 = sbr.rel (0) target = $region29
  $region28: #{dgcnn_point_forward.10} parent=0 // pred_region
    _
  $region29: #{dgcnn_point_forward.10} parent=0 // pred_fallthru
    _
  // Predicated region
  $region30: #{dgcnn_point_forward.10} parent=0 // pred_check
    _
  $region31: #{dgcnn_point_forward.10} parent=0 // pred_check_branch
    %405 = sbr.rel (0) target = $region33
  $region32: #{dgcnn_point_forward.10} parent=0 // pred_region
    _
  $region33: #{dgcnn_point_forward.10} parent=0 // pred_fallthru
    _

// kernel: dgcnn_point_forward.11
$region0: #{dgcnn_point_forward.11}
  #allocation0 [shape = 'u32[]', space=smem, size = 0x4, offset = 0x4, fixed_abs, tag = 'smem constant byte address 0x4 - core index']
  #allocation1 [shape = 'u32[144,128]{1,0:T(1,128)}', space=vmem, size = 0x12000, scoped, tag = 'internal scratch']
  %s0 = inlined_call_operand.vmem [shape: f32[2,16,64], index: 0, kind: input, shape index: {}, may-alias: {0,1}]
  %s1 = inlined_call_operand.vmem [shape: f32[2,16,64], index: 1, kind: input, shape index: {}, may-alias: {0,1}]
  %s2 = inlined_call_operand.vmem [shape: f32[2,16,16], index: 2, kind: output, shape index: {}]
  %s3 = sld [smem:[#allocation0]]
  $region41: #{dgcnn_point_forward.11} parent=0
    _
  %s5 = ssub.s32 1, %s3
  %s6 = scalar_select 0, %s5, %s3
  loop: start=0, step=1, limit=4
  $region2: #{dgcnn_point_forward.11} parent=0 // loop_pre_header
    _
  $region3: #{dgcnn_point_forward.11} parent=0 // loop_header
    %s8 = sphi 0, %s12
    %p9 = scmp.ge.s32.totalorder %s8, 4
    %s15 = sphi 0, %s27
    %s16 = sphi 0, %s23
    %s17 = sphi 0, %s15
    %s18 = sphi 0, %s16
    %s19 = sphi 0, %s17
    %s20 = sphi 0, %s18
    %s32 = sphi 0, %s34
    %s35 = sphi 0, %s32
    %s36 = sphi 0, %s35
    %s52 = sphi 0, %s36
    %s58 = sphi 0, %s60
    %s61 = sphi 0, %s58
    %s62 = sphi 0, %s61
    %s78 = sphi 0, %s62
    %s86 = sphi 0, %s88
    %s89 = sphi 0, %s86
    %s90 = sphi 0, %s89
    %s106 = sphi 0, %s90
  $region4: #{dgcnn_point_forward.11} parent=0 // loop_header_branch
    %11 = sbr.rel (%p9) target = $region8
  $region5: #{dgcnn_point_forward.11} parent=0 // loop_body
    %s13 = ssub.s32 %s8, 1
    %s14 = ssub.s32 %s8, 2
    %s21 = sadd.s32 1, %s16
    %p22 = scmp.ge.s32.totalorder %s21, 1
    %s23 = scalar_select %p22, 0, %s21
    %s24 = sadd.s32 1, %s15
    %s25 = scalar_select %p22, %s24, %s15
    %p26 = scmp.ge.s32.totalorder %s25, 2
    %s27 = scalar_select %p26, 0, %s25
    %s28 = ssub.s32 %s15, %s27
    %s29 = ssub.s32 %s16, %s23
    %s30 = sor.u32 %s28, %s29
    %p31 = scmp.eq.s32.totalorder %s30, 0
    %s33 = sadd.s32 %s32, 1
    %s34 = scalar_select %p31, %s32, %s33
    %p37 = pneg %p31
    %p38 = scmp.eq.s32.totalorder %s8, 1
    %p39 = por %p37, %p38
    %p40 = scmp.ne.s32.totalorder %s32, %s35
    %p41 = scmp.eq.s32.totalorder %s8, 0
    %p42 = por %p40, %p41
    %p43 = scmp.ne.s32.totalorder %s32, %s35
    %p44 = scmp.eq.s32.totalorder %s13, 1
    %p45 = por %p43, %p44
    %p46 = scmp.ne.s32.totalorder %s35, %s36
    %p47 = scmp.eq.s32.totalorder %s13, 0
    %p48 = por %p46, %p47
    %p49 = scmp.ne.s32.totalorder %s35, %s36
    %p50 = scmp.eq.s32.totalorder %s14, 1
    %p51 = por %p49, %p50
    %p53 = scmp.ne.s32.totalorder %s36, %s52
    %p54 = scmp.eq.s32.totalorder %s14, 0
    %p55 = por %p53, %p54
    %s56 = ssub.s32 %s15, %s27
    %p57 = scmp.eq.s32.totalorder %s56, 0
    %s59 = sadd.s32 %s58, 1
    %s60 = scalar_select %p57, %s58, %s59
    %p63 = pneg %p57
    %p64 = scmp.eq.s32.totalorder %s8, 1
    %p65 = por %p63, %p64
    %p66 = scmp.ne.s32.totalorder %s58, %s61
    %p67 = scmp.eq.s32.totalorder %s8, 0
    %p68 = por %p66, %p67
    %p69 = scmp.ne.s32.totalorder %s58, %s61
    %p70 = scmp.eq.s32.totalorder %s13, 1
    %p71 = por %p69, %p70
    %p72 = scmp.ne.s32.totalorder %s61, %s62
    %p73 = scmp.eq.s32.totalorder %s13, 0
    %p74 = por %p72, %p73
    %p75 = scmp.ne.s32.totalorder %s61, %s62
    %p76 = scmp.eq.s32.totalorder %s14, 1
    %p77 = por %p75, %p76
    %p79 = scmp.ne.s32.totalorder %s62, %s78
    %p80 = scmp.eq.s32.totalorder %s14, 0
    %p81 = por %p79, %p80
    %s82 = ssub.s32 %s15, %s27
    %s83 = ssub.s32 %s16, %s23
    %s84 = sor.u32 %s82, %s83
    %p85 = scmp.eq.s32.totalorder %s84, 0
    %s87 = sadd.s32 %s86, 1
    %s88 = scalar_select %p85, %s86, %s87
    %p91 = pneg %p85
    %p92 = scmp.eq.s32.totalorder %s8, 1
    %p93 = por %p91, %p92
    %p94 = scmp.ne.s32.totalorder %s86, %s89
    %p95 = scmp.eq.s32.totalorder %s8, 0
    %p96 = por %p94, %p95
    %p97 = scmp.ne.s32.totalorder %s86, %s89
    %p98 = scmp.eq.s32.totalorder %s13, 1
    %p99 = por %p97, %p98
    %p100 = scmp.ne.s32.totalorder %s89, %s90
    %p101 = scmp.eq.s32.totalorder %s13, 0
    %p102 = por %p100, %p101
    %p103 = scmp.ne.s32.totalorder %s89, %s90
    %p104 = scmp.eq.s32.totalorder %s14, 1
    %p105 = por %p103, %p104
    %p107 = scmp.ne.s32.totalorder %s90, %s106
    %p108 = scmp.eq.s32.totalorder %s14, 0
    %p109 = por %p107, %p108
    %p110 = scmp.le.s32.totalorder 1, %s8
    %p111 = scmp.lt.s32.totalorder %s8, 3
    %p112 = pnand %p110, %p111
    %p113 = pneg %p112
    // Predicated region
    $region9: #{dgcnn_point_forward.11} parent=5 // pred_check
      _
    $region10: #{dgcnn_point_forward.11} parent=5 // pred_check_branch
      %115 = sbr.rel (%p112) target = $region12
    $region11: #{dgcnn_point_forward.11} parent=5 // pred_region
      %s116 = ssub.s32 %s8, 1
    $region12: #{dgcnn_point_forward.11} parent=5 // pred_fallthru
      _
    %p117 = scmp.lt.s32.totalorder %s8, 2
    // Predicated region
    $region13: #{dgcnn_point_forward.11} parent=5 // pred_check
      %p118 = pneg %p117
    $region14: #{dgcnn_point_forward.11} parent=5 // pred_check_branch
      %120 = sbr.rel (%p118) target = $region16
    $region15: #{dgcnn_point_forward.11} parent=5 // pred_region
      // Predicated region
      $region17: #{dgcnn_point_forward.11} parent=15 // pred_check
        %p121 = pneg %p42
      $region18: #{dgcnn_point_forward.11} parent=15 // pred_check_branch
        %123 = sbr.rel (%p121) target = $region20
      $region19: #{dgcnn_point_forward.11} parent=15 // pred_region
        %s124 = smul.u32 2, %s16
        %p125 = scmp.lt.s32.totalorder %s15, 1
        %s126 = scalar_select %p125, %s15, 1
        %p127 = scmp.lt.s32.totalorder %s124, 1
        %s128 = scalar_select %p127, %s124, 1
        %s129 = smul.addr %s126, 2
        %s130 = sadd.s32 %s128, %s129
        %s131 = smul.addr %s130, 8
        %s132 = scalar_lea.vmem %s0, %s131
        %s133 = smul.u32 2, %s16
      $region20: #{dgcnn_point_forward.11} parent=15 // pred_fallthru
        _
      // Predicated region
      $region21: #{dgcnn_point_forward.11} parent=15 // pred_check
        %p134 = pneg %p68
      $region22: #{dgcnn_point_forward.11} parent=15 // pred_check_branch
        %136 = sbr.rel (%p134) target = $region24
      $region23: #{dgcnn_point_forward.11} parent=15 // pred_region
        %p137 = scmp.lt.s32.totalorder %s15, 1
        %s138 = scalar_select %p137, %s15, 1
        %s139 = smul.addr %s138, 2
        %s140 = smul.addr %s139, 8
        %s141 = scalar_lea.vmem %s1, %s140
      $region24: #{dgcnn_point_forward.11} parent=15 // pred_fallthru
        _
    $region16: #{dgcnn_point_forward.11} parent=5 // pred_fallthru
      _
    %p142 = scmp.le.s32.totalorder 1, %s8
    %p143 = scmp.lt.s32.totalorder %s8, 3
    %p144 = pnand %p142, %p143
    %p145 = pneg %p144
    // Predicated region
    $region25: #{dgcnn_point_forward.11} parent=5 // pred_check
      _
    $region26: #{dgcnn_point_forward.11} parent=5 // pred_check_branch
      %147 = sbr.rel (%p144) target = $region28
    $region27: #{dgcnn_point_forward.11} parent=5 // pred_region
      %s148 = ssub.s32 %s8, 1
      %s149 = smul.u32 2, %s18
      %p150 = scmp.lt.s32.totalorder %s17, 1
      %s151 = scalar_select %p150, %s17, 1
      %p152 = scmp.lt.s32.totalorder %s149, 1
      %s153 = scalar_select %p152, %s149, 1
      %s154 = smul.addr %s151, 2
      %s155 = sadd.s32 %s153, %s154
      %s156 = smul.addr %s155, 8
      %s157 = scalar_lea.vmem %s0, %s156
      %p158 = pneg %p48
      %p159 = pneg %p45
      %p160 = scmp.lt.s32.totalorder %s17, 1
      %s161 = scalar_select %p160, %s17, 1
      %s162 = smul.addr %s161, 2
      %s163 = smul.addr %s162, 8
      %s164 = scalar_lea.vmem %s1, %s163
      %p165 = pneg %p74
      %p166 = pneg %p71
      %p167 = pneg %p102
      %p168 = pneg %p99
      %s169 = smul.u32 2, %s18
      %p170 = scmp.lt.s32.totalorder %s17, 1
      %s171 = scalar_select %p170, %s17, 1
      %p172 = scmp.lt.s32.totalorder %s169, 1
      %s173 = scalar_select %p172, %s169, 1
      %s174 = smul.addr %s171, 2
      %s175 = sadd.s32 %s173, %s174
      %s176 = smul.addr %s175, 8
      %s177 = scalar_lea.vmem %s2, %s176
      %s178 = smul.u32 2, %s18
      %p179 = scmp.lt.s32.totalorder %s17, 1
      %s180 = scalar_select %p179, %s17, 1
      %p181 = scmp.lt.s32.totalorder %s178, 1
      %s182 = scalar_select %p181, %s178, 1
      %s183 = smul.addr %s180, 2
      %s184 = sadd.s32 %s182, %s183
      %s185 = smul.addr %s184, 8
      %s186 = scalar_lea.vmem %s0, %s185
      %s187 = smul.u32 2, %s18
      %p188 = scmp.lt.s32.totalorder %s17, 1
      %s189 = scalar_select %p188, %s17, 1
      %s190 = smul.addr %s189, 2
      %s191 = smul.addr %s190, 8
      %s192 = scalar_lea.vmem %s1, %s191
      %s193 = smul.u32 2, %s18
      %p194 = scmp.lt.s32.totalorder %s17, 1
      %s195 = scalar_select %p194, %s17, 1
      %p196 = scmp.lt.s32.totalorder %s193, 1
      %s197 = scalar_select %p196, %s193, 1
      %s198 = smul.addr %s195, 2
      %s199 = sadd.s32 %s197, %s198
      %s200 = smul.addr %s199, 8
      %s201 = scalar_lea.vmem %s2, %s200
      %s202 = smul.u32 2, %s18
      %v203 = vld [vmem:[%s186] sm:$0xff]
      %v204 = vld [vmem:[%s186 + $0x8] sm:$0xff]
      %v205 = vld [vmem:[%s192] sm:$0xff]
      %v206 = vld [vmem:[%s192 + $0x8] sm:$0xff]
      %vm207 = vcmask 523264
      %v209 = vsel %vm207, %v203, 0
      %v212 = vsel %vm207, %v204, 0
      %v215 = vsel %vm207, %v205, 0
      %v218 = vsel %vm207, %v206, 0
      %220 = vmatprep.subr.mxu0 0.0
      %221 = vmatpush1.xpose.msra.mxu0 %v215
      %222 = vmatprep.subr.mxu0 0.0
      %223 = vmatpush1.xpose.msra.mxu0 %v218
      %224 = vmatprep.subr.mxu0 0.0
      %225 = vmatpush1.xpose.msra.mxu0 0.0
      %226 = vmatprep.subr.mxu0 0.0
      %227 = vmatpush1.xpose.msra.mxu0 0.0
      %228 = vmatprep.subr.mxu0 0.0
      %229 = vmatpush1.xpose.msra.mxu0 0.0
      %230 = vmatprep.subr.mxu0 0.0
      %231 = vmatpush1.xpose.msra.mxu0 0.0
      %232 = vmatprep.subr.mxu0 0.0
      %233 = vmatpush1.xpose.msra.mxu0 0.0
      %234 = vmatprep.subr.mxu0 0.0
      %235 = vmatpush1.xpose.msra.mxu0 0.0
      %236 = vmatprep.subr.mxu0 0.0
      %237 = vmatpush1.xpose.msra.mxu0 0.0
      %238 = vmatprep.subr.mxu0 0.0
      %239 = vmatpush1.xpose.msra.mxu0 0.0
      %240 = vmatprep.subr.mxu0 0.0
      %241 = vmatpush1.xpose.msra.mxu0 0.0
      %242 = vmatprep.subr.mxu0 0.0
      %243 = vmatpush1.xpose.msra.mxu0 0.0
      %244 = vmatprep.subr.mxu0 0.0
      %245 = vmatpush1.xpose.msra.mxu0 0.0
      %246 = vmatprep.subr.mxu0 0.0
      %247 = vmatpush1.xpose.msra.mxu0 0.0
      %248 = vmatprep.subr.mxu0 0.0
      %249 = vmatpush1.xpose.msra.mxu0 0.0
      %250 = vmatprep.subr.mxu0 0.0
      %251 = vmatpush1.xpose.msra.mxu0 0.0
      %252 = vmatprep.subr.mxu0 0.0
      %253 = vmatpush1.xpose.msra.mxu0 0.0
      %254 = vmatprep.subr.mxu0 0.0
      %255 = vmatpush1.xpose.msra.mxu0 0.0
      %256 = vmatprep.subr.mxu0 0.0
      %257 = vmatpush1.xpose.msra.mxu0 0.0
      %258 = vmatprep.subr.mxu0 0.0
      %259 = vmatpush1.xpose.msra.mxu0 0.0
      %260 = vmatprep.subr.mxu0 0.0
      %261 = vmatpush1.xpose.msra.mxu0 0.0
      %262 = vmatprep.subr.mxu0 0.0
      %263 = vmatpush1.xpose.msra.mxu0 0.0
      %264 = vmatprep.subr.mxu0 0.0
      %265 = vmatpush1.xpose.msra.mxu0 0.0
      %266 = vmatprep.subr.mxu0 0.0
      %267 = vmatpush1.xpose.msra.mxu0 0.0
      %268 = vmatprep.subr.mxu0 0.0
      %269 = vmatpush1.xpose.msra.mxu0 0.0
      %270 = vmatprep.subr.mxu0 0.0
      %271 = vmatpush1.xpose.msra.mxu0 0.0
      %272 = vmatprep.subr.mxu0 0.0
      %273 = vmatpush1.xpose.msra.mxu0 0.0
      %274 = vmatprep.subr.mxu0 0.0
      %275 = vmatpush1.xpose.msra.mxu0 0.0
      %276 = vmatprep.subr.mxu0 0.0
      %277 = vmatpush1.xpose.msra.mxu0 0.0
      %278 = vmatprep.subr.mxu0 0.0
      %279 = vmatpush1.xpose.msra.mxu0 0.0
      %280 = vmatprep.subr.mxu0 0.0
      %281 = vmatpush1.xpose.msra.mxu0 0.0
      %282 = vmatprep.subr.mxu0 0.0
      %283 = vmatpush1.xpose.msra.mxu0 0.0
      %284 = vmatprep.mubr.f32.mxu0 0.0
      %285 = vmatmul.mubr.f32.gmra.mrb[0].mxu0 %v209
      %v286 = vpop.f32.mrb[0].mxu0
      %v287 = vadd.f32 0.0, %v286
      %v288 = vpop.f32.mrb[0].mxu0
      %289 = vmatprep.mubr.f32.mxu0 0.0
      %290 = vmatmul.mubr.f32.gmra.mrb[0].mxu0 %v212
      %v291 = vpop.f32.mrb[0].mxu0
      %v292 = vadd.f32 0.0, %v291
      %v293 = vpop.f32.mrb[0].mxu0
      %294 = vdwg.mxu0
      %v295 = vmul.f32 %v205, %v205
      %v296 = vmul.f32 %v206, %v206
      %v298 = vsel %vm207, 1.0, 0
      %v301 = vsel %vm207, %v295, 0
      %v304 = vsel %vm207, %v296, 0
      %306 = vmatprep.subr.mxu0 0.0
      %307 = vmatpush1.xpose.msra.mxu0 %v301
      %308 = vmatprep.subr.mxu0 0.0
      %309 = vmatpush1.xpose.msra.mxu0 %v304
      %310 = vmatprep.subr.mxu0 0.0
      %311 = vmatpush1.xpose.msra.mxu0 0.0
      %312 = vmatprep.subr.mxu0 0.0
      %313 = vmatpush1.xpose.msra.mxu0 0.0
      %314 = vmatprep.subr.mxu0 0.0
      %315 = vmatpush1.xpose.msra.mxu0 0.0
      %316 = vmatprep.subr.mxu0 0.0
      %317 = vmatpush1.xpose.msra.mxu0 0.0
      %318 = vmatprep.subr.mxu0 0.0
      %319 = vmatpush1.xpose.msra.mxu0 0.0
      %320 = vmatprep.subr.mxu0 0.0
      %321 = vmatpush1.xpose.msra.mxu0 0.0
      %322 = vmatprep.subr.mxu0 0.0
      %323 = vmatpush1.xpose.msra.mxu0 0.0
      %324 = vmatprep.subr.mxu0 0.0
      %325 = vmatpush1.xpose.msra.mxu0 0.0
      %326 = vmatprep.subr.mxu0 0.0
      %327 = vmatpush1.xpose.msra.mxu0 0.0
      %328 = vmatprep.subr.mxu0 0.0
      %329 = vmatpush1.xpose.msra.mxu0 0.0
      %330 = vmatprep.subr.mxu0 0.0
      %331 = vmatpush1.xpose.msra.mxu0 0.0
      %332 = vmatprep.subr.mxu0 0.0
      %333 = vmatpush1.xpose.msra.mxu0 0.0
      %334 = vmatprep.subr.mxu0 0.0
      %335 = vmatpush1.xpose.msra.mxu0 0.0
      %336 = vmatprep.subr.mxu0 0.0
      %337 = vmatpush1.xpose.msra.mxu0 0.0
      %338 = vmatprep.subr.mxu0 0.0
      %339 = vmatpush1.xpose.msra.mxu0 0.0
      %340 = vmatprep.subr.mxu0 0.0
      %341 = vmatpush1.xpose.msra.mxu0 0.0
      %342 = vmatprep.subr.mxu0 0.0
      %343 = vmatpush1.xpose.msra.mxu0 0.0
      %344 = vmatprep.subr.mxu0 0.0
      %345 = vmatpush1.xpose.msra.mxu0 0.0
      %346 = vmatprep.subr.mxu0 0.0
      %347 = vmatpush1.xpose.msra.mxu0 0.0
      %348 = vmatprep.subr.mxu0 0.0
      %349 = vmatpush1.xpose.msra.mxu0 0.0
      %350 = vmatprep.subr.mxu0 0.0
      %351 = vmatpush1.xpose.msra.mxu0 0.0
      %352 = vmatprep.subr.mxu0 0.0
      %353 = vmatpush1.xpose.msra.mxu0 0.0
      %354 = vmatprep.subr.mxu0 0.0
      %355 = vmatpush1.xpose.msra.mxu0 0.0
      %356 = vmatprep.subr.mxu0 0.0
      %357 = vmatpush1.xpose.msra.mxu0 0.0
      %358 = vmatprep.subr.mxu0 0.0
      %359 = vmatpush1.xpose.msra.mxu0 0.0
      %360 = vmatprep.subr.mxu0 0.0
      %361 = vmatpush1.xpose.msra.mxu0 0.0
      %362 = vmatprep.subr.mxu0 0.0
      %363 = vmatpush1.xpose.msra.mxu0 0.0
      %364 = vmatprep.subr.mxu0 0.0
      %365 = vmatpush1.xpose.msra.mxu0 0.0
      %366 = vmatprep.subr.mxu0 0.0
      %367 = vmatpush1.xpose.msra.mxu0 0.0
      %368 = vmatprep.subr.mxu0 0.0
      %369 = vmatpush1.xpose.msra.mxu0 0.0
      %370 = vmatprep.mubr.f32.mxu0 0.0
      %371 = vmatmul.mubr.f32.gmra.mrb[0].mxu0 %v298
      %v372 = vpop.f32.mrb[0].mxu0
      %v373 = vadd.f32 0.0, %v372
      %v374 = vpop.f32.mrb[0].mxu0
      %375 = vdwg.mxu0
      %v376 = vmul.f32 %v287, 2.0
      %v377 = vmul.f32 %v292, 2.0
      %v378 = vlaneseq
      %v379 = vshrl.u32 %v378, 7
      %v380 = vsub.s32 0, %v379
      %v381 = vrot.slane %v373, %v380
      %v382 = vsub.f32 %v376, %v381
      %v383 = vsub.f32 %v377, %v381
      %vm384 = vcmask 130048
      %385 = vst.msk [vmem:[%s201] sm:$0xff] %vm384, %v382
      %386 = vst.msk [vmem:[%s201 + $0x8] sm:$0xff] %vm384, %v383
      %s387 = smul.u32 2, %s18
      %p388 = scmp.lt.s32.totalorder %s17, 1
      %s389 = scalar_select %p388, %s17, 1
      %p390 = scmp.lt.s32.totalorder %s387, 1
      %s391 = scalar_select %p390, %s387, 1
      %s392 = smul.addr %s389, 2
      %s393 = sadd.s32 %s391, %s392
      %s394 = smul.addr %s393, 8
      %s395 = scalar_lea.vmem %s2, %s394
      // Predicated region
      $region29: #{dgcnn_point_forward.11} parent=27 // pred_check
        %p396 = pneg %p99
      $region30: #{dgcnn_point_forward.11} parent=27 // pred_check_branch
        %398 = sbr.rel (%p396) target = $region32
      $region31: #{dgcnn_point_forward.11} parent=27 // pred_region
        %s399 = smul.u32 2, %s18
      $region32: #{dgcnn_point_forward.11} parent=27 // pred_fallthru
        _
    $region28: #{dgcnn_point_forward.11} parent=5 // pred_fallthru
      _
    %p400 = scmp.le.s32.totalorder 2, %s8
    // Predicated region
    $region33: #{dgcnn_point_forward.11} parent=5 // pred_check
      %p401 = pneg %p400
    $region34: #{dgcnn_point_forward.11} parent=5 // pred_check_branch
      %403 = sbr.rel (%p401) target = $region36
    $region35: #{dgcnn_point_forward.11} parent=5 // pred_region
      %s404 = ssub.s32 %s8, 2
      // Predicated region
      $region37: #{dgcnn_point_forward.11} parent=35 // pred_check
        %p405 = pneg %p105
      $region38: #{dgcnn_point_forward.11} parent=35 // pred_check_branch
        %407 = sbr.rel (%p405) target = $region40
      $region39: #{dgcnn_point_forward.11} parent=35 // pred_region
        %s408 = smul.u32 2, %s20
        %p409 = scmp.lt.s32.totalorder %s19, 1
        %s410 = scalar_select %p409, %s19, 1
        %p411 = scmp.lt.s32.totalorder %s408, 1
        %s412 = scalar_select %p411, %s408, 1
        %s413 = smul.addr %s410, 2
        %s414 = sadd.s32 %s412, %s413
        %s415 = smul.addr %s414, 8
        %s416 = scalar_lea.vmem %s2, %s415
      $region40: #{dgcnn_point_forward.11} parent=35 // pred_fallthru
        _
    $region36: #{dgcnn_point_forward.11} parent=5 // pred_fallthru
      _
  $region6: #{dgcnn_point_forward.11} parent=0 // loop_footer
    %s12 = sadd.s32 1, %s8
  $region7: #{dgcnn_point_forward.11} parent=0 // loop_footer_branch
    %7 = sbr.rel target = $region3
  $region8: #{dgcnn_point_forward.11} parent=0 // loop_exit
    _

// kernel: dgcnn_point_forward.12
$region0: #{dgcnn_point_forward.12}
  #allocation0 [shape = 'u32[]', space=smem, size = 0x4, offset = 0x4, fixed_abs, tag = 'smem constant byte address 0x4 - core index']
  #allocation1 [shape = 'u32[144,128]{1,0:T(1,128)}', space=vmem, size = 0x12000, scoped, tag = 'internal scratch']
  %s0 = inlined_call_operand.vmem [shape: bf16[4,32,64], index: 0, kind: input, shape index: {}]
  %s1 = inlined_call_operand.vmem [shape: bf16[32,64], index: 1, kind: input, shape index: {}]
  %s2 = inlined_call_operand.vmem [shape: bf16[64,64], index: 2, kind: input, shape index: {}]
  %s3 = inlined_call_operand.vmem [shape: bf16[64,64], index: 3, kind: input, shape index: {}]
  %s4 = inlined_call_operand.vmem [shape: f32[1,64], index: 4, kind: input, shape index: {}]
  %s5 = inlined_call_operand.vmem [shape: f32[1,64], index: 5, kind: input, shape index: {}]
  %s6 = inlined_call_operand.vmem [shape: f32[32,64], index: 6, kind: output, shape index: {}]
  %s7 = sld [smem:[#allocation0]]
  $region34: #{dgcnn_point_forward.12} parent=0
    _
  %s9 = ssub.s32 1, %s7
  %s10 = scalar_select 0, %s9, %s7
  // Predicated region
  $region2: #{dgcnn_point_forward.12} parent=0 // pred_check
    _
  $region3: #{dgcnn_point_forward.12} parent=0 // pred_check_branch
    %12 = sbr.rel (0) target = $region5
  $region4: #{dgcnn_point_forward.12} parent=0 // pred_region
    _
  $region5: #{dgcnn_point_forward.12} parent=0 // pred_fallthru
    _
  // Predicated region
  $region6: #{dgcnn_point_forward.12} parent=0 // pred_check
    _
  $region7: #{dgcnn_point_forward.12} parent=0 // pred_check_branch
    %14 = sbr.rel (0) target = $region9
  $region8: #{dgcnn_point_forward.12} parent=0 // pred_region
    _
  $region9: #{dgcnn_point_forward.12} parent=0 // pred_fallthru
    _
  // Predicated region
  $region10: #{dgcnn_point_forward.12} parent=0 // pred_check
    _
  $region11: #{dgcnn_point_forward.12} parent=0 // pred_check_branch
    %16 = sbr.rel (0) target = $region13
  $region12: #{dgcnn_point_forward.12} parent=0 // pred_region
    _
  $region13: #{dgcnn_point_forward.12} parent=0 // pred_fallthru
    _
  // Predicated region
  $region14: #{dgcnn_point_forward.12} parent=0 // pred_check
    _
  $region15: #{dgcnn_point_forward.12} parent=0 // pred_check_branch
    %18 = sbr.rel (0) target = $region17
  $region16: #{dgcnn_point_forward.12} parent=0 // pred_region
    _
  $region17: #{dgcnn_point_forward.12} parent=0 // pred_fallthru
    _
  // Predicated region
  $region18: #{dgcnn_point_forward.12} parent=0 // pred_check
    _
  $region19: #{dgcnn_point_forward.12} parent=0 // pred_check_branch
    %20 = sbr.rel (0) target = $region21
  $region20: #{dgcnn_point_forward.12} parent=0 // pred_region
    _
  $region21: #{dgcnn_point_forward.12} parent=0 // pred_fallthru
    _
  // Predicated region
  $region22: #{dgcnn_point_forward.12} parent=0 // pred_check
    _
  $region23: #{dgcnn_point_forward.12} parent=0 // pred_check_branch
    %22 = sbr.rel (0) target = $region25
  $region24: #{dgcnn_point_forward.12} parent=0 // pred_region
    _
  $region25: #{dgcnn_point_forward.12} parent=0 // pred_fallthru
    _
  %v24 = vld [vmem:[%s4] sm:$0x1]
  %v25 = vld [vmem:[%s1] sm:$0xf]
  %v26 = vld [vmem:[%s1 + $0x4] sm:$0xf]
  %v27 = vld [vmem:[%s1 + $0x8] sm:$0xf]
  %v28 = vld [vmem:[%s1 + $0xc] sm:$0xf]
  %v29 = vld [vmem:[%s3] sm:$0xf]
  %v30 = vld [vmem:[%s3 + $0x4] sm:$0xf]
  %v31 = vld [vmem:[%s3 + $0x8] sm:$0xf]
  %v32 = vld [vmem:[%s3 + $0xc] sm:$0xf]
  %v33 = vld [vmem:[%s3 + $0x10] sm:$0xf]
  %v34 = vld [vmem:[%s3 + $0x14] sm:$0xf]
  %v35 = vld [vmem:[%s3 + $0x18] sm:$0xf]
  %v36 = vld [vmem:[%s3 + $0x1c] sm:$0xf]
  %v41 = vunpack.c.l.b16 %v25
  %v42 = vunpack.c.l.b16 %v26
  %v43 = vunpack.c.l.b16 %v27
  %v44 = vunpack.c.l.b16 %v28
  %v45 = vpack.c.b16 %v42, %v41
  %v46 = vpack.c.b16 %v44, %v43
  %v55 = vunpack.c.l.b16 %v29
  %v56 = vunpack.c.l.b16 %v30
  %v57 = vunpack.c.l.b16 %v31
  %v58 = vunpack.c.l.b16 %v32
  %v59 = vunpack.c.l.b16 %v33
  %v60 = vunpack.c.l.b16 %v34
  %v61 = vunpack.c.l.b16 %v35
  %v62 = vunpack.c.l.b16 %v36
  %v63 = vpack.c.b16 %v56, %v55
  %v64 = vpack.c.b16 %v58, %v57
  %v65 = vpack.c.b16 %v60, %v59
  %v66 = vpack.c.b16 %v62, %v61
  %vm71 = vcmask 523264
  %v73 = vsel %vm71, %v45, 0
  %v76 = vsel %vm71, %v46, 0
  %78 = vmatprep.subr.bf16.mxu0 0
  %79 = vmatpush1.bf16.msra.mxu0 %v63
  %80 = vmatprep.subr.bf16.mxu0 0
  %81 = vmatpush1.bf16.msra.mxu0 %v64
  %82 = vmatprep.subr.bf16.mxu0 0
  %83 = vmatpush1.bf16.msra.mxu0 %v65
  %84 = vmatprep.subr.bf16.mxu0 0
  %85 = vmatpush1.bf16.msra.mxu0 %v66
  %86 = vmatprep.subr.bf16.mxu0 0
  %87 = vmatpush1.bf16.msra.mxu0 0
  %88 = vmatprep.subr.bf16.mxu0 0
  %89 = vmatpush1.bf16.msra.mxu0 0
  %90 = vmatprep.subr.bf16.mxu0 0
  %91 = vmatpush1.bf16.msra.mxu0 0
  %92 = vmatprep.subr.bf16.mxu0 0
  %93 = vmatpush1.bf16.msra.mxu0 0
  %94 = vmatprep.subr.bf16.mxu0 0
  %95 = vmatpush1.bf16.msra.mxu0 0
  %96 = vmatprep.subr.bf16.mxu0 0
  %97 = vmatpush1.bf16.msra.mxu0 0
  %98 = vmatprep.subr.bf16.mxu0 0
  %99 = vmatpush1.bf16.msra.mxu0 0
  %100 = vmatprep.subr.bf16.mxu0 0
  %101 = vmatpush1.bf16.msra.mxu0 0
  %102 = vmatprep.subr.bf16.mxu0 0
  %103 = vmatpush1.bf16.msra.mxu0 0
  %104 = vmatprep.subr.bf16.mxu0 0
  %105 = vmatpush1.bf16.msra.mxu0 0
  %106 = vmatprep.subr.bf16.mxu0 0
  %107 = vmatpush1.bf16.msra.mxu0 0
  %108 = vmatprep.subr.bf16.mxu0 0
  %109 = vmatpush1.bf16.msra.mxu0 0
  %110 = vmatprep.mubr.bf16.mxu0 0
  %111 = vmatmul.mubr.bf16.gmra.mrb[0].mxu0 %v73
  %v112 = vpop.f32.mrb[0].mxu0
  %v113 = vadd.f32 0.0, %v112
  %v114 = vpop.f32.mrb[0].mxu0
  %v115 = vpop.f32.mrb[0].mxu0
  %v116 = vadd.f32 0.0, %v115
  %v117 = vpop.f32.mrb[0].mxu0
  %118 = vmatprep.mubr.bf16.mxu0 0
  %119 = vmatmul.mubr.bf16.gmra.mrb[0].mxu0 %v76
  %v120 = vpop.f32.mrb[0].mxu0
  %v121 = vadd.f32 0.0, %v120
  %v122 = vpop.f32.mrb[0].mxu0
  %v123 = vpop.f32.mrb[0].mxu0
  %v124 = vadd.f32 0.0, %v123
  %v125 = vpop.f32.mrb[0].mxu0
  %126 = vdwg.mxu0
  %v128 = vlaneseq
  %v129 = vshrl.u32 %v128, 7
  %v130 = vsub.s32 0, %v129
  %v131 = vrot.slane %v24, %v130
  %v133 = vmul.f32 %v113, %v131
  %v134 = vmul.f32 %v116, %v131
  %v135 = vmul.f32 %v121, %v131
  %v136 = vmul.f32 %v124, %v131
  %v137 = vld [vmem:[%s5] sm:$0x1]
  %v139 = vlaneseq
  %v140 = vshrl.u32 %v139, 7
  %v141 = vsub.s32 0, %v140
  %v142 = vrot.slane %v137, %v141
  %v144 = vadd.f32 %v133, %v142
  %v145 = vadd.f32 %v134, %v142
  %v146 = vadd.f32 %v135, %v142
  %v147 = vadd.f32 %v136, %v142
  %v148 = vld [vmem:[%s0] sm:$0xf]
  %v149 = vld [vmem:[%s0 + $0x4] sm:$0xf]
  %v150 = vld [vmem:[%s0 + $0x8] sm:$0xf]
  %v151 = vld [vmem:[%s0 + $0xc] sm:$0xf]
  %v152 = vld [vmem:[%s0 + $0x10] sm:$0xf]
  %v153 = vld [vmem:[%s0 + $0x14] sm:$0xf]
  %v154 = vld [vmem:[%s0 + $0x18] sm:$0xf]
  %v155 = vld [vmem:[%s0 + $0x1c] sm:$0xf]
  %v156 = vld [vmem:[%s0 + $0x20] sm:$0xf]
  %v157 = vld [vmem:[%s0 + $0x24] sm:$0xf]
  %v158 = vld [vmem:[%s0 + $0x28] sm:$0xf]
  %v159 = vld [vmem:[%s0 + $0x2c] sm:$0xf]
  %v160 = vld [vmem:[%s0 + $0x30] sm:$0xf]
  %v161 = vld [vmem:[%s0 + $0x34] sm:$0xf]
  %v162 = vld [vmem:[%s0 + $0x38] sm:$0xf]
  %v163 = vld [vmem:[%s0 + $0x3c] sm:$0xf]
  %v164 = vld [vmem:[%s2] sm:$0xf]
  %v165 = vld [vmem:[%s2 + $0x4] sm:$0xf]
  %v166 = vld [vmem:[%s2 + $0x8] sm:$0xf]
  %v167 = vld [vmem:[%s2 + $0xc] sm:$0xf]
  %v168 = vld [vmem:[%s2 + $0x10] sm:$0xf]
  %v169 = vld [vmem:[%s2 + $0x14] sm:$0xf]
  %v170 = vld [vmem:[%s2 + $0x18] sm:$0xf]
  %v171 = vld [vmem:[%s2 + $0x1c] sm:$0xf]
  %v188 = vunpack.c.l.b16 %v148
  %v189 = vunpack.c.l.b16 %v149
  %v190 = vunpack.c.l.b16 %v150
  %v191 = vunpack.c.l.b16 %v151
  %v192 = vunpack.c.l.b16 %v152
  %v193 = vunpack.c.l.b16 %v153
  %v194 = vunpack.c.l.b16 %v154
  %v195 = vunpack.c.l.b16 %v155
  %v196 = vunpack.c.l.b16 %v156
  %v197 = vunpack.c.l.b16 %v157
  %v198 = vunpack.c.l.b16 %v158
  %v199 = vunpack.c.l.b16 %v159
  %v200 = vunpack.c.l.b16 %v160
  %v201 = vunpack.c.l.b16 %v161
  %v202 = vunpack.c.l.b16 %v162
  %v203 = vunpack.c.l.b16 %v163
  %v204 = vpack.c.b16 %v189, %v188
  %v205 = vpack.c.b16 %v191, %v190
  %v206 = vpack.c.b16 %v193, %v192
  %v207 = vpack.c.b16 %v195, %v194
  %v208 = vpack.c.b16 %v197, %v196
  %v209 = vpack.c.b16 %v199, %v198
  %v210 = vpack.c.b16 %v201, %v200
  %v211 = vpack.c.b16 %v203, %v202
  %v220 = vunpack.c.l.b16 %v164
  %v221 = vunpack.c.l.b16 %v165
  %v222 = vunpack.c.l.b16 %v166
  %v223 = vunpack.c.l.b16 %v167
  %v224 = vunpack.c.l.b16 %v168
  %v225 = vunpack.c.l.b16 %v169
  %v226 = vunpack.c.l.b16 %v170
  %v227 = vunpack.c.l.b16 %v171
  %v228 = vpack.c.b16 %v221, %v220
  %v229 = vpack.c.b16 %v223, %v222
  %v230 = vpack.c.b16 %v225, %v224
  %v231 = vpack.c.b16 %v227, %v226
  %v237 = vsel %vm71, %v204, 0
  %v240 = vsel %vm71, %v205, 0
  %v243 = vsel %vm71, %v206, 0
  %v246 = vsel %vm71, %v207, 0
  %v249 = vsel %vm71, %v208, 0
  %v252 = vsel %vm71, %v209, 0
  %v255 = vsel %vm71, %v210, 0
  %v258 = vsel %vm71, %v211, 0
  %260 = vmatprep.subr.bf16.mxu0 0
  %261 = vmatpush1.bf16.msra.mxu0 %v228
  %262 = vmatprep.subr.bf16.mxu0 0
  %263 = vmatpush1.bf16.msra.mxu0 %v229
  %264 = vmatprep.subr.bf16.mxu0 0
  %265 = vmatpush1.bf16.msra.mxu0 %v230
  %266 = vmatprep.subr.bf16.mxu0 0
  %267 = vmatpush1.bf16.msra.mxu0 %v231
  %268 = vmatprep.subr.bf16.mxu0 0
  %269 = vmatpush1.bf16.msra.mxu0 0
  %270 = vmatprep.subr.bf16.mxu0 0
  %271 = vmatpush1.bf16.msra.mxu0 0
  %272 = vmatprep.subr.bf16.mxu0 0
  %273 = vmatpush1.bf16.msra.mxu0 0
  %274 = vmatprep.subr.bf16.mxu0 0
  %275 = vmatpush1.bf16.msra.mxu0 0
  %276 = vmatprep.subr.bf16.mxu0 0
  %277 = vmatpush1.bf16.msra.mxu0 0
  %278 = vmatprep.subr.bf16.mxu0 0
  %279 = vmatpush1.bf16.msra.mxu0 0
  %280 = vmatprep.subr.bf16.mxu0 0
  %281 = vmatpush1.bf16.msra.mxu0 0
  %282 = vmatprep.subr.bf16.mxu0 0
  %283 = vmatpush1.bf16.msra.mxu0 0
  %284 = vmatprep.subr.bf16.mxu0 0
  %285 = vmatpush1.bf16.msra.mxu0 0
  %286 = vmatprep.subr.bf16.mxu0 0
  %287 = vmatpush1.bf16.msra.mxu0 0
  %288 = vmatprep.subr.bf16.mxu0 0
  %289 = vmatpush1.bf16.msra.mxu0 0
  %290 = vmatprep.subr.bf16.mxu0 0
  %291 = vmatpush1.bf16.msra.mxu0 0
  %292 = vmatprep.mubr.bf16.mxu0 0
  %293 = vmatmul.mubr.bf16.gmra.mrb[0].mxu0 %v237
  %v294 = vpop.f32.mrb[0].mxu0
  %v295 = vadd.f32 0.0, %v294
  %v296 = vpop.f32.mrb[0].mxu0
  %v297 = vpop.f32.mrb[0].mxu0
  %v298 = vadd.f32 0.0, %v297
  %v299 = vpop.f32.mrb[0].mxu0
  %300 = vmatprep.mubr.bf16.mxu0 0
  %301 = vmatmul.mubr.bf16.gmra.mrb[0].mxu0 %v240
  %v302 = vpop.f32.mrb[0].mxu0
  %v303 = vadd.f32 0.0, %v302
  %v304 = vpop.f32.mrb[0].mxu0
  %v305 = vpop.f32.mrb[0].mxu0
  %v306 = vadd.f32 0.0, %v305
  %v307 = vpop.f32.mrb[0].mxu0
  %308 = vmatprep.mubr.bf16.mxu0 0
  %309 = vmatmul.mubr.bf16.gmra.mrb[0].mxu0 %v243
  %v310 = vpop.f32.mrb[0].mxu0
  %v311 = vadd.f32 0.0, %v310
  %v312 = vpop.f32.mrb[0].mxu0
  %v313 = vpop.f32.mrb[0].mxu0
  %v314 = vadd.f32 0.0, %v313
  %v315 = vpop.f32.mrb[0].mxu0
  %316 = vmatprep.mubr.bf16.mxu0 0
  %317 = vmatmul.mubr.bf16.gmra.mrb[0].mxu0 %v246
  %v318 = vpop.f32.mrb[0].mxu0
  %v319 = vadd.f32 0.0, %v318
  %v320 = vpop.f32.mrb[0].mxu0
  %v321 = vpop.f32.mrb[0].mxu0
  %v322 = vadd.f32 0.0, %v321
  %v323 = vpop.f32.mrb[0].mxu0
  %324 = vmatprep.mubr.bf16.mxu0 0
  %325 = vmatmul.mubr.bf16.gmra.mrb[0].mxu0 %v249
  %v326 = vpop.f32.mrb[0].mxu0
  %v327 = vadd.f32 0.0, %v326
  %v328 = vpop.f32.mrb[0].mxu0
  %v329 = vpop.f32.mrb[0].mxu0
  %v330 = vadd.f32 0.0, %v329
  %v331 = vpop.f32.mrb[0].mxu0
  %332 = vmatprep.mubr.bf16.mxu0 0
  %333 = vmatmul.mubr.bf16.gmra.mrb[0].mxu0 %v252
  %v334 = vpop.f32.mrb[0].mxu0
  %v335 = vadd.f32 0.0, %v334
  %v336 = vpop.f32.mrb[0].mxu0
  %v337 = vpop.f32.mrb[0].mxu0
  %v338 = vadd.f32 0.0, %v337
  %v339 = vpop.f32.mrb[0].mxu0
  %340 = vmatprep.mubr.bf16.mxu0 0
  %341 = vmatmul.mubr.bf16.gmra.mrb[0].mxu0 %v255
  %v342 = vpop.f32.mrb[0].mxu0
  %v343 = vadd.f32 0.0, %v342
  %v344 = vpop.f32.mrb[0].mxu0
  %v345 = vpop.f32.mrb[0].mxu0
  %v346 = vadd.f32 0.0, %v345
  %v347 = vpop.f32.mrb[0].mxu0
  %348 = vmatprep.mubr.bf16.mxu0 0
  %349 = vmatmul.mubr.bf16.gmra.mrb[0].mxu0 %v258
  %v350 = vpop.f32.mrb[0].mxu0
  %v351 = vadd.f32 0.0, %v350
  %v352 = vpop.f32.mrb[0].mxu0
  %v353 = vpop.f32.mrb[0].mxu0
  %v354 = vadd.f32 0.0, %v353
  %v355 = vpop.f32.mrb[0].mxu0
  %356 = vdwg.mxu0
  %v357 = vmul.f32 %v295, %v131
  %v358 = vmul.f32 %v298, %v131
  %v359 = vmul.f32 %v303, %v131
  %v360 = vmul.f32 %v306, %v131
  %v361 = vadd.f32 %v357, %v144
  %v362 = vadd.f32 %v358, %v145
  %v363 = vadd.f32 %v359, %v146
  %v364 = vadd.f32 %v360, %v147
  %vm365 = vcmp.ge.f32.partialorder %v361, 0.0
  %vm366 = vcmp.ge.f32.partialorder %v362, 0.0
  %vm367 = vcmp.ge.f32.partialorder %v363, 0.0
  %vm368 = vcmp.ge.f32.partialorder %v364, 0.0
  %v369 = vmul.f32 %v361, 0.2
  %v370 = vmul.f32 %v362, 0.2
  %v371 = vmul.f32 %v363, 0.2
  %v372 = vmul.f32 %v364, 0.2
  %v373 = vsel %vm365, %v361, %v369
  %v374 = vsel %vm366, %v362, %v370
  %v375 = vsel %vm367, %v363, %v371
  %v376 = vsel %vm368, %v364, %v372
  %v377 = vmul.f32 %v311, %v131
  %v378 = vmul.f32 %v314, %v131
  %v379 = vmul.f32 %v319, %v131
  %v380 = vmul.f32 %v322, %v131
  %v381 = vadd.f32 %v377, %v144
  %v382 = vadd.f32 %v378, %v145
  %v383 = vadd.f32 %v379, %v146
  %v384 = vadd.f32 %v380, %v147
  %vm385 = vcmp.ge.f32.partialorder %v381, 0.0
  %vm386 = vcmp.ge.f32.partialorder %v382, 0.0
  %vm387 = vcmp.ge.f32.partialorder %v383, 0.0
  %vm388 = vcmp.ge.f32.partialorder %v384, 0.0
  %v389 = vmul.f32 %v381, 0.2
  %v390 = vmul.f32 %v382, 0.2
  %v391 = vmul.f32 %v383, 0.2
  %v392 = vmul.f32 %v384, 0.2
  %v393 = vsel %vm385, %v381, %v389
  %v394 = vsel %vm386, %v382, %v390
  %v395 = vsel %vm387, %v383, %v391
  %v396 = vsel %vm388, %v384, %v392
  %v397 = vmax.f32 %v373, %v393
  %v398 = vmax.f32 %v374, %v394
  %v399 = vmax.f32 %v375, %v395
  %v400 = vmax.f32 %v376, %v396
  %v401 = vmul.f32 %v327, %v131
  %v402 = vmul.f32 %v330, %v131
  %v403 = vmul.f32 %v335, %v131
  %v404 = vmul.f32 %v338, %v131
  %v405 = vadd.f32 %v401, %v144
  %v406 = vadd.f32 %v402, %v145
  %v407 = vadd.f32 %v403, %v146
  %v408 = vadd.f32 %v404, %v147
  %vm409 = vcmp.ge.f32.partialorder %v405, 0.0
  %vm410 = vcmp.ge.f32.partialorder %v406, 0.0
  %vm411 = vcmp.ge.f32.partialorder %v407, 0.0
  %vm412 = vcmp.ge.f32.partialorder %v408, 0.0
  %v413 = vmul.f32 %v405, 0.2
  %v414 = vmul.f32 %v406, 0.2
  %v415 = vmul.f32 %v407, 0.2
  %v416 = vmul.f32 %v408, 0.2
  %v417 = vsel %vm409, %v405, %v413
  %v418 = vsel %vm410, %v406, %v414
  %v419 = vsel %vm411, %v407, %v415
  %v420 = vsel %vm412, %v408, %v416
  %v421 = vmax.f32 %v397, %v417
  %v422 = vmax.f32 %v398, %v418
  %v423 = vmax.f32 %v399, %v419
  %v424 = vmax.f32 %v400, %v420
  %v425 = vmul.f32 %v343, %v131
  %v426 = vmul.f32 %v346, %v131
  %v427 = vmul.f32 %v351, %v131
  %v428 = vmul.f32 %v354, %v131
  %v429 = vadd.f32 %v425, %v144
  %v430 = vadd.f32 %v426, %v145
  %v431 = vadd.f32 %v427, %v146
  %v432 = vadd.f32 %v428, %v147
  %vm433 = vcmp.ge.f32.partialorder %v429, 0.0
  %vm434 = vcmp.ge.f32.partialorder %v430, 0.0
  %vm435 = vcmp.ge.f32.partialorder %v431, 0.0
  %vm436 = vcmp.ge.f32.partialorder %v432, 0.0
  %v437 = vmul.f32 %v429, 0.2
  %v438 = vmul.f32 %v430, 0.2
  %v439 = vmul.f32 %v431, 0.2
  %v440 = vmul.f32 %v432, 0.2
  %v441 = vsel %vm433, %v429, %v437
  %v442 = vsel %vm434, %v430, %v438
  %v443 = vsel %vm435, %v431, %v439
  %v444 = vsel %vm436, %v432, %v440
  %v445 = vmax.f32 %v421, %v441
  %v446 = vmax.f32 %v422, %v442
  %v447 = vmax.f32 %v423, %v443
  %v448 = vmax.f32 %v424, %v444
  %449 = vst.msk [vmem:[%s6] sm:$0xff] %vm71, %v445
  %450 = vst.msk [vmem:[%s6 + $0x8] sm:$0xff] %vm71, %v446
  %451 = vst.msk [vmem:[%s6 + $0x10] sm:$0xff] %vm71, %v447
  %452 = vst.msk [vmem:[%s6 + $0x18] sm:$0xff] %vm71, %v448
  // Predicated region
  $region26: #{dgcnn_point_forward.12} parent=0 // pred_check
    _
  $region27: #{dgcnn_point_forward.12} parent=0 // pred_check_branch
    %454 = sbr.rel (0) target = $region29
  $region28: #{dgcnn_point_forward.12} parent=0 // pred_region
    _
  $region29: #{dgcnn_point_forward.12} parent=0 // pred_fallthru
    _
  // Predicated region
  $region30: #{dgcnn_point_forward.12} parent=0 // pred_check
    _
  $region31: #{dgcnn_point_forward.12} parent=0 // pred_check_branch
    %456 = sbr.rel (0) target = $region33
  $region32: #{dgcnn_point_forward.12} parent=0 // pred_region
    _
  $region33: #{dgcnn_point_forward.12} parent=0 // pred_fallthru
    _

// kernel: dgcnn_point_forward.14
$region0: #{dgcnn_point_forward.14}
  #allocation0 [shape = 'u32[]', space=smem, size = 0x4, offset = 0x4, fixed_abs, tag = 'smem constant byte address 0x4 - core index']
  #allocation1 [shape = 'u32[144,128]{1,0:T(1,128)}', space=vmem, size = 0x12000, scoped, tag = 'internal scratch']
  %s0 = inlined_call_operand.vmem [shape: bf16[4,32,64], index: 0, kind: input, shape index: {}]
  %s1 = inlined_call_operand.vmem [shape: bf16[32,64], index: 1, kind: input, shape index: {}]
  %s2 = inlined_call_operand.vmem [shape: bf16[64,128], index: 2, kind: input, shape index: {}]
  %s3 = inlined_call_operand.vmem [shape: bf16[64,128], index: 3, kind: input, shape index: {}]
  %s4 = inlined_call_operand.vmem [shape: f32[1,128], index: 4, kind: input, shape index: {}]
  %s5 = inlined_call_operand.vmem [shape: f32[1,128], index: 5, kind: input, shape index: {}]
  %s6 = inlined_call_operand.vmem [shape: f32[32,128], index: 6, kind: output, shape index: {}]
  %s7 = sld [smem:[#allocation0]]
  $region34: #{dgcnn_point_forward.14} parent=0
    _
  %s9 = ssub.s32 1, %s7
  %s10 = scalar_select 0, %s9, %s7
  // Predicated region
  $region2: #{dgcnn_point_forward.14} parent=0 // pred_check
    _
  $region3: #{dgcnn_point_forward.14} parent=0 // pred_check_branch
    %12 = sbr.rel (0) target = $region5
  $region4: #{dgcnn_point_forward.14} parent=0 // pred_region
    _
  $region5: #{dgcnn_point_forward.14} parent=0 // pred_fallthru
    _
  // Predicated region
  $region6: #{dgcnn_point_forward.14} parent=0 // pred_check
    _
  $region7: #{dgcnn_point_forward.14} parent=0 // pred_check_branch
    %14 = sbr.rel (0) target = $region9
  $region8: #{dgcnn_point_forward.14} parent=0 // pred_region
    _
  $region9: #{dgcnn_point_forward.14} parent=0 // pred_fallthru
    _
  // Predicated region
  $region10: #{dgcnn_point_forward.14} parent=0 // pred_check
    _
  $region11: #{dgcnn_point_forward.14} parent=0 // pred_check_branch
    %16 = sbr.rel (0) target = $region13
  $region12: #{dgcnn_point_forward.14} parent=0 // pred_region
    _
  $region13: #{dgcnn_point_forward.14} parent=0 // pred_fallthru
    _
  // Predicated region
  $region14: #{dgcnn_point_forward.14} parent=0 // pred_check
    _
  $region15: #{dgcnn_point_forward.14} parent=0 // pred_check_branch
    %18 = sbr.rel (0) target = $region17
  $region16: #{dgcnn_point_forward.14} parent=0 // pred_region
    _
  $region17: #{dgcnn_point_forward.14} parent=0 // pred_fallthru
    _
  // Predicated region
  $region18: #{dgcnn_point_forward.14} parent=0 // pred_check
    _
  $region19: #{dgcnn_point_forward.14} parent=0 // pred_check_branch
    %20 = sbr.rel (0) target = $region21
  $region20: #{dgcnn_point_forward.14} parent=0 // pred_region
    _
  $region21: #{dgcnn_point_forward.14} parent=0 // pred_fallthru
    _
  // Predicated region
  $region22: #{dgcnn_point_forward.14} parent=0 // pred_check
    _
  $region23: #{dgcnn_point_forward.14} parent=0 // pred_check_branch
    %22 = sbr.rel (0) target = $region25
  $region24: #{dgcnn_point_forward.14} parent=0 // pred_region
    _
  $region25: #{dgcnn_point_forward.14} parent=0 // pred_fallthru
    _
  %v24 = vld [vmem:[%s4] sm:$0x1]
  %v25 = vld [vmem:[%s1] sm:$0xf]
  %v26 = vld [vmem:[%s1 + $0x4] sm:$0xf]
  %v27 = vld [vmem:[%s1 + $0x8] sm:$0xf]
  %v28 = vld [vmem:[%s1 + $0xc] sm:$0xf]
  %v29 = vld [vmem:[%s3] sm:$0xf]
  %v30 = vld [vmem:[%s3 + $0x4] sm:$0xf]
  %v31 = vld [vmem:[%s3 + $0x8] sm:$0xf]
  %v32 = vld [vmem:[%s3 + $0xc] sm:$0xf]
  %v33 = vld [vmem:[%s3 + $0x10] sm:$0xf]
  %v34 = vld [vmem:[%s3 + $0x14] sm:$0xf]
  %v35 = vld [vmem:[%s3 + $0x18] sm:$0xf]
  %v36 = vld [vmem:[%s3 + $0x1c] sm:$0xf]
  %v41 = vunpack.c.l.b16 %v25
  %v42 = vunpack.c.l.b16 %v26
  %v43 = vunpack.c.l.b16 %v27
  %v44 = vunpack.c.l.b16 %v28
  %v45 = vpack.c.b16 %v42, %v41
  %v46 = vpack.c.b16 %v44, %v43
  %v55 = vunpack.c.l.b16 %v29
  %v56 = vunpack.c.l.b16 %v30
  %v57 = vunpack.c.l.b16 %v31
  %v58 = vunpack.c.l.b16 %v32
  %v59 = vunpack.c.l.b16 %v33
  %v60 = vunpack.c.l.b16 %v34
  %v61 = vunpack.c.l.b16 %v35
  %v62 = vunpack.c.l.b16 %v36
  %v63 = vpack.c.b16 %v56, %v55
  %v64 = vpack.c.b16 %v58, %v57
  %v65 = vpack.c.b16 %v60, %v59
  %v66 = vpack.c.b16 %v62, %v61
  %vm71 = vcmask 523264
  %v73 = vsel %vm71, %v45, 0
  %v76 = vsel %vm71, %v46, 0
  %78 = vmatprep.subr.bf16.mxu0 0
  %79 = vmatpush1.bf16.msra.mxu0 %v63
  %80 = vmatprep.subr.bf16.mxu0 0
  %81 = vmatpush1.bf16.msra.mxu0 %v64
  %82 = vmatprep.subr.bf16.mxu0 0
  %83 = vmatpush1.bf16.msra.mxu0 %v65
  %84 = vmatprep.subr.bf16.mxu0 0
  %85 = vmatpush1.bf16.msra.mxu0 %v66
  %86 = vmatprep.subr.bf16.mxu0 0
  %87 = vmatpush1.bf16.msra.mxu0 0
  %88 = vmatprep.subr.bf16.mxu0 0
  %89 = vmatpush1.bf16.msra.mxu0 0
  %90 = vmatprep.subr.bf16.mxu0 0
  %91 = vmatpush1.bf16.msra.mxu0 0
  %92 = vmatprep.subr.bf16.mxu0 0
  %93 = vmatpush1.bf16.msra.mxu0 0
  %94 = vmatprep.subr.bf16.mxu0 0
  %95 = vmatpush1.bf16.msra.mxu0 0
  %96 = vmatprep.subr.bf16.mxu0 0
  %97 = vmatpush1.bf16.msra.mxu0 0
  %98 = vmatprep.subr.bf16.mxu0 0
  %99 = vmatpush1.bf16.msra.mxu0 0
  %100 = vmatprep.subr.bf16.mxu0 0
  %101 = vmatpush1.bf16.msra.mxu0 0
  %102 = vmatprep.subr.bf16.mxu0 0
  %103 = vmatpush1.bf16.msra.mxu0 0
  %104 = vmatprep.subr.bf16.mxu0 0
  %105 = vmatpush1.bf16.msra.mxu0 0
  %106 = vmatprep.subr.bf16.mxu0 0
  %107 = vmatpush1.bf16.msra.mxu0 0
  %108 = vmatprep.subr.bf16.mxu0 0
  %109 = vmatpush1.bf16.msra.mxu0 0
  %110 = vmatprep.mubr.bf16.mxu0 0
  %111 = vmatmul.mubr.bf16.gmra.mrb[0].mxu0 %v73
  %v112 = vpop.f32.mrb[0].mxu0
  %v113 = vadd.f32 0.0, %v112
  %v114 = vpop.f32.mrb[0].mxu0
  %v115 = vpop.f32.mrb[0].mxu0
  %v116 = vadd.f32 0.0, %v115
  %v117 = vpop.f32.mrb[0].mxu0
  %118 = vmatprep.mubr.bf16.mxu0 0
  %119 = vmatmul.mubr.bf16.gmra.mrb[0].mxu0 %v76
  %v120 = vpop.f32.mrb[0].mxu0
  %v121 = vadd.f32 0.0, %v120
  %v122 = vpop.f32.mrb[0].mxu0
  %v123 = vpop.f32.mrb[0].mxu0
  %v124 = vadd.f32 0.0, %v123
  %v125 = vpop.f32.mrb[0].mxu0
  %126 = vdwg.mxu0
  %v128 = vlaneseq
  %v129 = vshrl.u32 %v128, 7
  %v130 = vsub.s32 0, %v129
  %v131 = vrot.slane %v24, %v130
  %v133 = vmul.f32 %v113, %v131
  %v134 = vmul.f32 %v116, %v131
  %v135 = vmul.f32 %v121, %v131
  %v136 = vmul.f32 %v124, %v131
  %v137 = vld [vmem:[%s5] sm:$0x1]
  %v139 = vlaneseq
  %v140 = vshrl.u32 %v139, 7
  %v141 = vsub.s32 0, %v140
  %v142 = vrot.slane %v137, %v141
  %v144 = vadd.f32 %v133, %v142
  %v145 = vadd.f32 %v134, %v142
  %v146 = vadd.f32 %v135, %v142
  %v147 = vadd.f32 %v136, %v142
  %v148 = vld [vmem:[%s0] sm:$0xf]
  %v149 = vld [vmem:[%s0 + $0x4] sm:$0xf]
  %v150 = vld [vmem:[%s0 + $0x8] sm:$0xf]
  %v151 = vld [vmem:[%s0 + $0xc] sm:$0xf]
  %v152 = vld [vmem:[%s0 + $0x10] sm:$0xf]
  %v153 = vld [vmem:[%s0 + $0x14] sm:$0xf]
  %v154 = vld [vmem:[%s0 + $0x18] sm:$0xf]
  %v155 = vld [vmem:[%s0 + $0x1c] sm:$0xf]
  %v156 = vld [vmem:[%s0 + $0x20] sm:$0xf]
  %v157 = vld [vmem:[%s0 + $0x24] sm:$0xf]
  %v158 = vld [vmem:[%s0 + $0x28] sm:$0xf]
  %v159 = vld [vmem:[%s0 + $0x2c] sm:$0xf]
  %v160 = vld [vmem:[%s0 + $0x30] sm:$0xf]
  %v161 = vld [vmem:[%s0 + $0x34] sm:$0xf]
  %v162 = vld [vmem:[%s0 + $0x38] sm:$0xf]
  %v163 = vld [vmem:[%s0 + $0x3c] sm:$0xf]
  %v164 = vld [vmem:[%s2] sm:$0xf]
  %v165 = vld [vmem:[%s2 + $0x4] sm:$0xf]
  %v166 = vld [vmem:[%s2 + $0x8] sm:$0xf]
  %v167 = vld [vmem:[%s2 + $0xc] sm:$0xf]
  %v168 = vld [vmem:[%s2 + $0x10] sm:$0xf]
  %v169 = vld [vmem:[%s2 + $0x14] sm:$0xf]
  %v170 = vld [vmem:[%s2 + $0x18] sm:$0xf]
  %v171 = vld [vmem:[%s2 + $0x1c] sm:$0xf]
  %v188 = vunpack.c.l.b16 %v148
  %v189 = vunpack.c.l.b16 %v149
  %v190 = vunpack.c.l.b16 %v150
  %v191 = vunpack.c.l.b16 %v151
  %v192 = vunpack.c.l.b16 %v152
  %v193 = vunpack.c.l.b16 %v153
  %v194 = vunpack.c.l.b16 %v154
  %v195 = vunpack.c.l.b16 %v155
  %v196 = vunpack.c.l.b16 %v156
  %v197 = vunpack.c.l.b16 %v157
  %v198 = vunpack.c.l.b16 %v158
  %v199 = vunpack.c.l.b16 %v159
  %v200 = vunpack.c.l.b16 %v160
  %v201 = vunpack.c.l.b16 %v161
  %v202 = vunpack.c.l.b16 %v162
  %v203 = vunpack.c.l.b16 %v163
  %v204 = vpack.c.b16 %v189, %v188
  %v205 = vpack.c.b16 %v191, %v190
  %v206 = vpack.c.b16 %v193, %v192
  %v207 = vpack.c.b16 %v195, %v194
  %v208 = vpack.c.b16 %v197, %v196
  %v209 = vpack.c.b16 %v199, %v198
  %v210 = vpack.c.b16 %v201, %v200
  %v211 = vpack.c.b16 %v203, %v202
  %v220 = vunpack.c.l.b16 %v164
  %v221 = vunpack.c.l.b16 %v165
  %v222 = vunpack.c.l.b16 %v166
  %v223 = vunpack.c.l.b16 %v167
  %v224 = vunpack.c.l.b16 %v168
  %v225 = vunpack.c.l.b16 %v169
  %v226 = vunpack.c.l.b16 %v170
  %v227 = vunpack.c.l.b16 %v171
  %v228 = vpack.c.b16 %v221, %v220
  %v229 = vpack.c.b16 %v223, %v222
  %v230 = vpack.c.b16 %v225, %v224
  %v231 = vpack.c.b16 %v227, %v226
  %v237 = vsel %vm71, %v204, 0
  %v240 = vsel %vm71, %v205, 0
  %v243 = vsel %vm71, %v206, 0
  %v246 = vsel %vm71, %v207, 0
  %v249 = vsel %vm71, %v208, 0
  %v252 = vsel %vm71, %v209, 0
  %v255 = vsel %vm71, %v210, 0
  %v258 = vsel %vm71, %v211, 0
  %260 = vmatprep.subr.bf16.mxu0 0
  %261 = vmatpush1.bf16.msra.mxu0 %v228
  %262 = vmatprep.subr.bf16.mxu0 0
  %263 = vmatpush1.bf16.msra.mxu0 %v229
  %264 = vmatprep.subr.bf16.mxu0 0
  %265 = vmatpush1.bf16.msra.mxu0 %v230
  %266 = vmatprep.subr.bf16.mxu0 0
  %267 = vmatpush1.bf16.msra.mxu0 %v231
  %268 = vmatprep.subr.bf16.mxu0 0
  %269 = vmatpush1.bf16.msra.mxu0 0
  %270 = vmatprep.subr.bf16.mxu0 0
  %271 = vmatpush1.bf16.msra.mxu0 0
  %272 = vmatprep.subr.bf16.mxu0 0
  %273 = vmatpush1.bf16.msra.mxu0 0
  %274 = vmatprep.subr.bf16.mxu0 0
  %275 = vmatpush1.bf16.msra.mxu0 0
  %276 = vmatprep.subr.bf16.mxu0 0
  %277 = vmatpush1.bf16.msra.mxu0 0
  %278 = vmatprep.subr.bf16.mxu0 0
  %279 = vmatpush1.bf16.msra.mxu0 0
  %280 = vmatprep.subr.bf16.mxu0 0
  %281 = vmatpush1.bf16.msra.mxu0 0
  %282 = vmatprep.subr.bf16.mxu0 0
  %283 = vmatpush1.bf16.msra.mxu0 0
  %284 = vmatprep.subr.bf16.mxu0 0
  %285 = vmatpush1.bf16.msra.mxu0 0
  %286 = vmatprep.subr.bf16.mxu0 0
  %287 = vmatpush1.bf16.msra.mxu0 0
  %288 = vmatprep.subr.bf16.mxu0 0
  %289 = vmatpush1.bf16.msra.mxu0 0
  %290 = vmatprep.subr.bf16.mxu0 0
  %291 = vmatpush1.bf16.msra.mxu0 0
  %292 = vmatprep.mubr.bf16.mxu0 0
  %293 = vmatmul.mubr.bf16.gmra.mrb[0].mxu0 %v237
  %v294 = vpop.f32.mrb[0].mxu0
  %v295 = vadd.f32 0.0, %v294
  %v296 = vpop.f32.mrb[0].mxu0
  %v297 = vpop.f32.mrb[0].mxu0
  %v298 = vadd.f32 0.0, %v297
  %v299 = vpop.f32.mrb[0].mxu0
  %300 = vmatprep.mubr.bf16.mxu0 0
  %301 = vmatmul.mubr.bf16.gmra.mrb[0].mxu0 %v240
  %v302 = vpop.f32.mrb[0].mxu0
  %v303 = vadd.f32 0.0, %v302
  %v304 = vpop.f32.mrb[0].mxu0
  %v305 = vpop.f32.mrb[0].mxu0
  %v306 = vadd.f32 0.0, %v305
  %v307 = vpop.f32.mrb[0].mxu0
  %308 = vmatprep.mubr.bf16.mxu0 0
  %309 = vmatmul.mubr.bf16.gmra.mrb[0].mxu0 %v243
  %v310 = vpop.f32.mrb[0].mxu0
  %v311 = vadd.f32 0.0, %v310
  %v312 = vpop.f32.mrb[0].mxu0
  %v313 = vpop.f32.mrb[0].mxu0
  %v314 = vadd.f32 0.0, %v313
  %v315 = vpop.f32.mrb[0].mxu0
  %316 = vmatprep.mubr.bf16.mxu0 0
  %317 = vmatmul.mubr.bf16.gmra.mrb[0].mxu0 %v246
  %v318 = vpop.f32.mrb[0].mxu0
  %v319 = vadd.f32 0.0, %v318
  %v320 = vpop.f32.mrb[0].mxu0
  %v321 = vpop.f32.mrb[0].mxu0
  %v322 = vadd.f32 0.0, %v321
  %v323 = vpop.f32.mrb[0].mxu0
  %324 = vmatprep.mubr.bf16.mxu0 0
  %325 = vmatmul.mubr.bf16.gmra.mrb[0].mxu0 %v249
  %v326 = vpop.f32.mrb[0].mxu0
  %v327 = vadd.f32 0.0, %v326
  %v328 = vpop.f32.mrb[0].mxu0
  %v329 = vpop.f32.mrb[0].mxu0
  %v330 = vadd.f32 0.0, %v329
  %v331 = vpop.f32.mrb[0].mxu0
  %332 = vmatprep.mubr.bf16.mxu0 0
  %333 = vmatmul.mubr.bf16.gmra.mrb[0].mxu0 %v252
  %v334 = vpop.f32.mrb[0].mxu0
  %v335 = vadd.f32 0.0, %v334
  %v336 = vpop.f32.mrb[0].mxu0
  %v337 = vpop.f32.mrb[0].mxu0
  %v338 = vadd.f32 0.0, %v337
  %v339 = vpop.f32.mrb[0].mxu0
  %340 = vmatprep.mubr.bf16.mxu0 0
  %341 = vmatmul.mubr.bf16.gmra.mrb[0].mxu0 %v255
  %v342 = vpop.f32.mrb[0].mxu0
  %v343 = vadd.f32 0.0, %v342
  %v344 = vpop.f32.mrb[0].mxu0
  %v345 = vpop.f32.mrb[0].mxu0
  %v346 = vadd.f32 0.0, %v345
  %v347 = vpop.f32.mrb[0].mxu0
  %348 = vmatprep.mubr.bf16.mxu0 0
  %349 = vmatmul.mubr.bf16.gmra.mrb[0].mxu0 %v258
  %v350 = vpop.f32.mrb[0].mxu0
  %v351 = vadd.f32 0.0, %v350
  %v352 = vpop.f32.mrb[0].mxu0
  %v353 = vpop.f32.mrb[0].mxu0
  %v354 = vadd.f32 0.0, %v353
  %v355 = vpop.f32.mrb[0].mxu0
  %356 = vdwg.mxu0
  %v357 = vmul.f32 %v295, %v131
  %v358 = vmul.f32 %v298, %v131
  %v359 = vmul.f32 %v303, %v131
  %v360 = vmul.f32 %v306, %v131
  %v361 = vadd.f32 %v357, %v144
  %v362 = vadd.f32 %v358, %v145
  %v363 = vadd.f32 %v359, %v146
  %v364 = vadd.f32 %v360, %v147
  %vm365 = vcmp.ge.f32.partialorder %v361, 0.0
  %vm366 = vcmp.ge.f32.partialorder %v362, 0.0
  %vm367 = vcmp.ge.f32.partialorder %v363, 0.0
  %vm368 = vcmp.ge.f32.partialorder %v364, 0.0
  %v369 = vmul.f32 %v361, 0.2
  %v370 = vmul.f32 %v362, 0.2
  %v371 = vmul.f32 %v363, 0.2
  %v372 = vmul.f32 %v364, 0.2
  %v373 = vsel %vm365, %v361, %v369
  %v374 = vsel %vm366, %v362, %v370
  %v375 = vsel %vm367, %v363, %v371
  %v376 = vsel %vm368, %v364, %v372
  %v377 = vmul.f32 %v311, %v131
  %v378 = vmul.f32 %v314, %v131
  %v379 = vmul.f32 %v319, %v131
  %v380 = vmul.f32 %v322, %v131
  %v381 = vadd.f32 %v377, %v144
  %v382 = vadd.f32 %v378, %v145
  %v383 = vadd.f32 %v379, %v146
  %v384 = vadd.f32 %v380, %v147
  %vm385 = vcmp.ge.f32.partialorder %v381, 0.0
  %vm386 = vcmp.ge.f32.partialorder %v382, 0.0
  %vm387 = vcmp.ge.f32.partialorder %v383, 0.0
  %vm388 = vcmp.ge.f32.partialorder %v384, 0.0
  %v389 = vmul.f32 %v381, 0.2
  %v390 = vmul.f32 %v382, 0.2
  %v391 = vmul.f32 %v383, 0.2
  %v392 = vmul.f32 %v384, 0.2
  %v393 = vsel %vm385, %v381, %v389
  %v394 = vsel %vm386, %v382, %v390
  %v395 = vsel %vm387, %v383, %v391
  %v396 = vsel %vm388, %v384, %v392
  %v397 = vmax.f32 %v373, %v393
  %v398 = vmax.f32 %v374, %v394
  %v399 = vmax.f32 %v375, %v395
  %v400 = vmax.f32 %v376, %v396
  %v401 = vmul.f32 %v327, %v131
  %v402 = vmul.f32 %v330, %v131
  %v403 = vmul.f32 %v335, %v131
  %v404 = vmul.f32 %v338, %v131
  %v405 = vadd.f32 %v401, %v144
  %v406 = vadd.f32 %v402, %v145
  %v407 = vadd.f32 %v403, %v146
  %v408 = vadd.f32 %v404, %v147
  %vm409 = vcmp.ge.f32.partialorder %v405, 0.0
  %vm410 = vcmp.ge.f32.partialorder %v406, 0.0
  %vm411 = vcmp.ge.f32.partialorder %v407, 0.0
  %vm412 = vcmp.ge.f32.partialorder %v408, 0.0
  %v413 = vmul.f32 %v405, 0.2
  %v414 = vmul.f32 %v406, 0.2
  %v415 = vmul.f32 %v407, 0.2
  %v416 = vmul.f32 %v408, 0.2
  %v417 = vsel %vm409, %v405, %v413
  %v418 = vsel %vm410, %v406, %v414
  %v419 = vsel %vm411, %v407, %v415
  %v420 = vsel %vm412, %v408, %v416
  %v421 = vmax.f32 %v397, %v417
  %v422 = vmax.f32 %v398, %v418
  %v423 = vmax.f32 %v399, %v419
  %v424 = vmax.f32 %v400, %v420
  %v425 = vmul.f32 %v343, %v131
  %v426 = vmul.f32 %v346, %v131
  %v427 = vmul.f32 %v351, %v131
  %v428 = vmul.f32 %v354, %v131
  %v429 = vadd.f32 %v425, %v144
  %v430 = vadd.f32 %v426, %v145
  %v431 = vadd.f32 %v427, %v146
  %v432 = vadd.f32 %v428, %v147
  %vm433 = vcmp.ge.f32.partialorder %v429, 0.0
  %vm434 = vcmp.ge.f32.partialorder %v430, 0.0
  %vm435 = vcmp.ge.f32.partialorder %v431, 0.0
  %vm436 = vcmp.ge.f32.partialorder %v432, 0.0
  %v437 = vmul.f32 %v429, 0.2
  %v438 = vmul.f32 %v430, 0.2
  %v439 = vmul.f32 %v431, 0.2
  %v440 = vmul.f32 %v432, 0.2
  %v441 = vsel %vm433, %v429, %v437
  %v442 = vsel %vm434, %v430, %v438
  %v443 = vsel %vm435, %v431, %v439
  %v444 = vsel %vm436, %v432, %v440
  %v445 = vmax.f32 %v421, %v441
  %v446 = vmax.f32 %v422, %v442
  %v447 = vmax.f32 %v423, %v443
  %v448 = vmax.f32 %v424, %v444
  %449 = vst [vmem:[%s6] sm:$0xff] %v445
  %450 = vst [vmem:[%s6 + $0x8] sm:$0xff] %v446
  %451 = vst [vmem:[%s6 + $0x10] sm:$0xff] %v447
  %452 = vst [vmem:[%s6 + $0x18] sm:$0xff] %v448
  // Predicated region
  $region26: #{dgcnn_point_forward.14} parent=0 // pred_check
    _
  $region27: #{dgcnn_point_forward.14} parent=0 // pred_check_branch
    %454 = sbr.rel (0) target = $region29
  $region28: #{dgcnn_point_forward.14} parent=0 // pred_region
    _
  $region29: #{dgcnn_point_forward.14} parent=0 // pred_fallthru
    _
  // Predicated region
  $region30: #{dgcnn_point_forward.14} parent=0 // pred_check
    _
  $region31: #{dgcnn_point_forward.14} parent=0 // pred_check_branch
    %456 = sbr.rel (0) target = $region33
  $region32: #{dgcnn_point_forward.14} parent=0 // pred_region
    _
  $region33: #{dgcnn_point_forward.14} parent=0 // pred_fallthru
    _

// kernel: dgcnn_point_forward.15
$region0: #{dgcnn_point_forward.15}
  #allocation0 [shape = 'u32[]', space=smem, size = 0x4, offset = 0x4, fixed_abs, tag = 'smem constant byte address 0x4 - core index']
  #allocation1 [shape = 'u32[144,128]{1,0:T(1,128)}', space=vmem, size = 0x12000, scoped, tag = 'internal scratch']
  %s0 = inlined_call_operand.vmem [shape: f32[2,16,128], index: 0, kind: input, shape index: {}, may-alias: {0,1}]
  %s1 = inlined_call_operand.vmem [shape: f32[2,16,128], index: 1, kind: input, shape index: {}, may-alias: {0,1}]
  %s2 = inlined_call_operand.vmem [shape: f32[2,16,16], index: 2, kind: output, shape index: {}]
  %s3 = sld [smem:[#allocation0]]
  $region41: #{dgcnn_point_forward.15} parent=0
    _
  %s5 = ssub.s32 1, %s3
  %s6 = scalar_select 0, %s5, %s3
  loop: start=0, step=1, limit=4
  $region2: #{dgcnn_point_forward.15} parent=0 // loop_pre_header
    _
  $region3: #{dgcnn_point_forward.15} parent=0 // loop_header
    %s8 = sphi 0, %s12
    %p9 = scmp.ge.s32.totalorder %s8, 4
    %s15 = sphi 0, %s27
    %s16 = sphi 0, %s23
    %s17 = sphi 0, %s15
    %s18 = sphi 0, %s16
    %s19 = sphi 0, %s17
    %s20 = sphi 0, %s18
    %s32 = sphi 0, %s34
    %s35 = sphi 0, %s32
    %s36 = sphi 0, %s35
    %s52 = sphi 0, %s36
    %s58 = sphi 0, %s60
    %s61 = sphi 0, %s58
    %s62 = sphi 0, %s61
    %s78 = sphi 0, %s62
    %s86 = sphi 0, %s88
    %s89 = sphi 0, %s86
    %s90 = sphi 0, %s89
    %s106 = sphi 0, %s90
  $region4: #{dgcnn_point_forward.15} parent=0 // loop_header_branch
    %11 = sbr.rel (%p9) target = $region8
  $region5: #{dgcnn_point_forward.15} parent=0 // loop_body
    %s13 = ssub.s32 %s8, 1
    %s14 = ssub.s32 %s8, 2
    %s21 = sadd.s32 1, %s16
    %p22 = scmp.ge.s32.totalorder %s21, 1
    %s23 = scalar_select %p22, 0, %s21
    %s24 = sadd.s32 1, %s15
    %s25 = scalar_select %p22, %s24, %s15
    %p26 = scmp.ge.s32.totalorder %s25, 2
    %s27 = scalar_select %p26, 0, %s25
    %s28 = ssub.s32 %s15, %s27
    %s29 = ssub.s32 %s16, %s23
    %s30 = sor.u32 %s28, %s29
    %p31 = scmp.eq.s32.totalorder %s30, 0
    %s33 = sadd.s32 %s32, 1
    %s34 = scalar_select %p31, %s32, %s33
    %p37 = pneg %p31
    %p38 = scmp.eq.s32.totalorder %s8, 1
    %p39 = por %p37, %p38
    %p40 = scmp.ne.s32.totalorder %s32, %s35
    %p41 = scmp.eq.s32.totalorder %s8, 0
    %p42 = por %p40, %p41
    %p43 = scmp.ne.s32.totalorder %s32, %s35
    %p44 = scmp.eq.s32.totalorder %s13, 1
    %p45 = por %p43, %p44
    %p46 = scmp.ne.s32.totalorder %s35, %s36
    %p47 = scmp.eq.s32.totalorder %s13, 0
    %p48 = por %p46, %p47
    %p49 = scmp.ne.s32.totalorder %s35, %s36
    %p50 = scmp.eq.s32.totalorder %s14, 1
    %p51 = por %p49, %p50
    %p53 = scmp.ne.s32.totalorder %s36, %s52
    %p54 = scmp.eq.s32.totalorder %s14, 0
    %p55 = por %p53, %p54
    %s56 = ssub.s32 %s15, %s27
    %p57 = scmp.eq.s32.totalorder %s56, 0
    %s59 = sadd.s32 %s58, 1
    %s60 = scalar_select %p57, %s58, %s59
    %p63 = pneg %p57
    %p64 = scmp.eq.s32.totalorder %s8, 1
    %p65 = por %p63, %p64
    %p66 = scmp.ne.s32.totalorder %s58, %s61
    %p67 = scmp.eq.s32.totalorder %s8, 0
    %p68 = por %p66, %p67
    %p69 = scmp.ne.s32.totalorder %s58, %s61
    %p70 = scmp.eq.s32.totalorder %s13, 1
    %p71 = por %p69, %p70
    %p72 = scmp.ne.s32.totalorder %s61, %s62
    %p73 = scmp.eq.s32.totalorder %s13, 0
    %p74 = por %p72, %p73
    %p75 = scmp.ne.s32.totalorder %s61, %s62
    %p76 = scmp.eq.s32.totalorder %s14, 1
    %p77 = por %p75, %p76
    %p79 = scmp.ne.s32.totalorder %s62, %s78
    %p80 = scmp.eq.s32.totalorder %s14, 0
    %p81 = por %p79, %p80
    %s82 = ssub.s32 %s15, %s27
    %s83 = ssub.s32 %s16, %s23
    %s84 = sor.u32 %s82, %s83
    %p85 = scmp.eq.s32.totalorder %s84, 0
    %s87 = sadd.s32 %s86, 1
    %s88 = scalar_select %p85, %s86, %s87
    %p91 = pneg %p85
    %p92 = scmp.eq.s32.totalorder %s8, 1
    %p93 = por %p91, %p92
    %p94 = scmp.ne.s32.totalorder %s86, %s89
    %p95 = scmp.eq.s32.totalorder %s8, 0
    %p96 = por %p94, %p95
    %p97 = scmp.ne.s32.totalorder %s86, %s89
    %p98 = scmp.eq.s32.totalorder %s13, 1
    %p99 = por %p97, %p98
    %p100 = scmp.ne.s32.totalorder %s89, %s90
    %p101 = scmp.eq.s32.totalorder %s13, 0
    %p102 = por %p100, %p101
    %p103 = scmp.ne.s32.totalorder %s89, %s90
    %p104 = scmp.eq.s32.totalorder %s14, 1
    %p105 = por %p103, %p104
    %p107 = scmp.ne.s32.totalorder %s90, %s106
    %p108 = scmp.eq.s32.totalorder %s14, 0
    %p109 = por %p107, %p108
    %p110 = scmp.le.s32.totalorder 1, %s8
    %p111 = scmp.lt.s32.totalorder %s8, 3
    %p112 = pnand %p110, %p111
    %p113 = pneg %p112
    // Predicated region
    $region9: #{dgcnn_point_forward.15} parent=5 // pred_check
      _
    $region10: #{dgcnn_point_forward.15} parent=5 // pred_check_branch
      %115 = sbr.rel (%p112) target = $region12
    $region11: #{dgcnn_point_forward.15} parent=5 // pred_region
      %s116 = ssub.s32 %s8, 1
    $region12: #{dgcnn_point_forward.15} parent=5 // pred_fallthru
      _
    %p117 = scmp.lt.s32.totalorder %s8, 2
    // Predicated region
    $region13: #{dgcnn_point_forward.15} parent=5 // pred_check
      %p118 = pneg %p117
    $region14: #{dgcnn_point_forward.15} parent=5 // pred_check_branch
      %120 = sbr.rel (%p118) target = $region16
    $region15: #{dgcnn_point_forward.15} parent=5 // pred_region
      // Predicated region
      $region17: #{dgcnn_point_forward.15} parent=15 // pred_check
        %p121 = pneg %p42
      $region18: #{dgcnn_point_forward.15} parent=15 // pred_check_branch
        %123 = sbr.rel (%p121) target = $region20
      $region19: #{dgcnn_point_forward.15} parent=15 // pred_region
        %s124 = smul.u32 2, %s16
        %p125 = scmp.lt.s32.totalorder %s15, 1
        %s126 = scalar_select %p125, %s15, 1
        %p127 = scmp.lt.s32.totalorder %s124, 1
        %s128 = scalar_select %p127, %s124, 1
        %s129 = smul.addr %s126, 2
        %s130 = sadd.s32 %s128, %s129
        %s131 = smul.addr %s130, 8
        %s132 = scalar_lea.vmem %s0, %s131
        %s133 = smul.u32 2, %s16
      $region20: #{dgcnn_point_forward.15} parent=15 // pred_fallthru
        _
      // Predicated region
      $region21: #{dgcnn_point_forward.15} parent=15 // pred_check
        %p134 = pneg %p68
      $region22: #{dgcnn_point_forward.15} parent=15 // pred_check_branch
        %136 = sbr.rel (%p134) target = $region24
      $region23: #{dgcnn_point_forward.15} parent=15 // pred_region
        %p137 = scmp.lt.s32.totalorder %s15, 1
        %s138 = scalar_select %p137, %s15, 1
        %s139 = smul.addr %s138, 2
        %s140 = smul.addr %s139, 8
        %s141 = scalar_lea.vmem %s1, %s140
      $region24: #{dgcnn_point_forward.15} parent=15 // pred_fallthru
        _
    $region16: #{dgcnn_point_forward.15} parent=5 // pred_fallthru
      _
    %p142 = scmp.le.s32.totalorder 1, %s8
    %p143 = scmp.lt.s32.totalorder %s8, 3
    %p144 = pnand %p142, %p143
    %p145 = pneg %p144
    // Predicated region
    $region25: #{dgcnn_point_forward.15} parent=5 // pred_check
      _
    $region26: #{dgcnn_point_forward.15} parent=5 // pred_check_branch
      %147 = sbr.rel (%p144) target = $region28
    $region27: #{dgcnn_point_forward.15} parent=5 // pred_region
      %s148 = ssub.s32 %s8, 1
      %s149 = smul.u32 2, %s18
      %p150 = scmp.lt.s32.totalorder %s17, 1
      %s151 = scalar_select %p150, %s17, 1
      %p152 = scmp.lt.s32.totalorder %s149, 1
      %s153 = scalar_select %p152, %s149, 1
      %s154 = smul.addr %s151, 2
      %s155 = sadd.s32 %s153, %s154
      %s156 = smul.addr %s155, 8
      %s157 = scalar_lea.vmem %s0, %s156
      %p158 = pneg %p48
      %p159 = pneg %p45
      %p160 = scmp.lt.s32.totalorder %s17, 1
      %s161 = scalar_select %p160, %s17, 1
      %s162 = smul.addr %s161, 2
      %s163 = smul.addr %s162, 8
      %s164 = scalar_lea.vmem %s1, %s163
      %p165 = pneg %p74
      %p166 = pneg %p71
      %p167 = pneg %p102
      %p168 = pneg %p99
      %s169 = smul.u32 2, %s18
      %p170 = scmp.lt.s32.totalorder %s17, 1
      %s171 = scalar_select %p170, %s17, 1
      %p172 = scmp.lt.s32.totalorder %s169, 1
      %s173 = scalar_select %p172, %s169, 1
      %s174 = smul.addr %s171, 2
      %s175 = sadd.s32 %s173, %s174
      %s176 = smul.addr %s175, 8
      %s177 = scalar_lea.vmem %s2, %s176
      %s178 = smul.u32 2, %s18
      %p179 = scmp.lt.s32.totalorder %s17, 1
      %s180 = scalar_select %p179, %s17, 1
      %p181 = scmp.lt.s32.totalorder %s178, 1
      %s182 = scalar_select %p181, %s178, 1
      %s183 = smul.addr %s180, 2
      %s184 = sadd.s32 %s182, %s183
      %s185 = smul.addr %s184, 8
      %s186 = scalar_lea.vmem %s0, %s185
      %s187 = smul.u32 2, %s18
      %p188 = scmp.lt.s32.totalorder %s17, 1
      %s189 = scalar_select %p188, %s17, 1
      %s190 = smul.addr %s189, 2
      %s191 = smul.addr %s190, 8
      %s192 = scalar_lea.vmem %s1, %s191
      %s193 = smul.u32 2, %s18
      %p194 = scmp.lt.s32.totalorder %s17, 1
      %s195 = scalar_select %p194, %s17, 1
      %p196 = scmp.lt.s32.totalorder %s193, 1
      %s197 = scalar_select %p196, %s193, 1
      %s198 = smul.addr %s195, 2
      %s199 = sadd.s32 %s197, %s198
      %s200 = smul.addr %s199, 8
      %s201 = scalar_lea.vmem %s2, %s200
      %s202 = smul.u32 2, %s18
      %v203 = vld [vmem:[%s186] sm:$0xff]
      %v204 = vld [vmem:[%s186 + $0x8] sm:$0xff]
      %v205 = vld [vmem:[%s192] sm:$0xff]
      %v206 = vld [vmem:[%s192 + $0x8] sm:$0xff]
      %207 = vmatprep.subr.mxu0 0.0
      %208 = vmatpush1.xpose.msra.mxu0 %v205
      %209 = vmatprep.subr.mxu0 0.0
      %210 = vmatpush1.xpose.msra.mxu0 %v206
      %211 = vmatprep.subr.mxu0 0.0
      %212 = vmatpush1.xpose.msra.mxu0 0.0
      %213 = vmatprep.subr.mxu0 0.0
      %214 = vmatpush1.xpose.msra.mxu0 0.0
      %215 = vmatprep.subr.mxu0 0.0
      %216 = vmatpush1.xpose.msra.mxu0 0.0
      %217 = vmatprep.subr.mxu0 0.0
      %218 = vmatpush1.xpose.msra.mxu0 0.0
      %219 = vmatprep.subr.mxu0 0.0
      %220 = vmatpush1.xpose.msra.mxu0 0.0
      %221 = vmatprep.subr.mxu0 0.0
      %222 = vmatpush1.xpose.msra.mxu0 0.0
      %223 = vmatprep.subr.mxu0 0.0
      %224 = vmatpush1.xpose.msra.mxu0 0.0
      %225 = vmatprep.subr.mxu0 0.0
      %226 = vmatpush1.xpose.msra.mxu0 0.0
      %227 = vmatprep.subr.mxu0 0.0
      %228 = vmatpush1.xpose.msra.mxu0 0.0
      %229 = vmatprep.subr.mxu0 0.0
      %230 = vmatpush1.xpose.msra.mxu0 0.0
      %231 = vmatprep.subr.mxu0 0.0
      %232 = vmatpush1.xpose.msra.mxu0 0.0
      %233 = vmatprep.subr.mxu0 0.0
      %234 = vmatpush1.xpose.msra.mxu0 0.0
      %235 = vmatprep.subr.mxu0 0.0
      %236 = vmatpush1.xpose.msra.mxu0 0.0
      %237 = vmatprep.subr.mxu0 0.0
      %238 = vmatpush1.xpose.msra.mxu0 0.0
      %239 = vmatprep.subr.mxu0 0.0
      %240 = vmatpush1.xpose.msra.mxu0 0.0
      %241 = vmatprep.subr.mxu0 0.0
      %242 = vmatpush1.xpose.msra.mxu0 0.0
      %243 = vmatprep.subr.mxu0 0.0
      %244 = vmatpush1.xpose.msra.mxu0 0.0
      %245 = vmatprep.subr.mxu0 0.0
      %246 = vmatpush1.xpose.msra.mxu0 0.0
      %247 = vmatprep.subr.mxu0 0.0
      %248 = vmatpush1.xpose.msra.mxu0 0.0
      %249 = vmatprep.subr.mxu0 0.0
      %250 = vmatpush1.xpose.msra.mxu0 0.0
      %251 = vmatprep.subr.mxu0 0.0
      %252 = vmatpush1.xpose.msra.mxu0 0.0
      %253 = vmatprep.subr.mxu0 0.0
      %254 = vmatpush1.xpose.msra.mxu0 0.0
      %255 = vmatprep.subr.mxu0 0.0
      %256 = vmatpush1.xpose.msra.mxu0 0.0
      %257 = vmatprep.subr.mxu0 0.0
      %258 = vmatpush1.xpose.msra.mxu0 0.0
      %259 = vmatprep.subr.mxu0 0.0
      %260 = vmatpush1.xpose.msra.mxu0 0.0
      %261 = vmatprep.subr.mxu0 0.0
      %262 = vmatpush1.xpose.msra.mxu0 0.0
      %263 = vmatprep.subr.mxu0 0.0
      %264 = vmatpush1.xpose.msra.mxu0 0.0
      %265 = vmatprep.subr.mxu0 0.0
      %266 = vmatpush1.xpose.msra.mxu0 0.0
      %267 = vmatprep.subr.mxu0 0.0
      %268 = vmatpush1.xpose.msra.mxu0 0.0
      %269 = vmatprep.subr.mxu0 0.0
      %270 = vmatpush1.xpose.msra.mxu0 0.0
      %271 = vmatprep.mubr.f32.mxu0 0.0
      %272 = vmatmul.mubr.f32.gmra.mrb[0].mxu0 %v203
      %v273 = vpop.f32.mrb[0].mxu0
      %v274 = vadd.f32 0.0, %v273
      %v275 = vpop.f32.mrb[0].mxu0
      %276 = vmatprep.mubr.f32.mxu0 0.0
      %277 = vmatmul.mubr.f32.gmra.mrb[0].mxu0 %v204
      %v278 = vpop.f32.mrb[0].mxu0
      %v279 = vadd.f32 0.0, %v278
      %v280 = vpop.f32.mrb[0].mxu0
      %281 = vdwg.mxu0
      %v282 = vmul.f32 %v205, %v205
      %v283 = vmul.f32 %v206, %v206
      %284 = vmatprep.subr.mxu0 0.0
      %285 = vmatpush1.xpose.msra.mxu0 %v282
      %286 = vmatprep.subr.mxu0 0.0
      %287 = vmatpush1.xpose.msra.mxu0 %v283
      %288 = vmatprep.subr.mxu0 0.0
      %289 = vmatpush1.xpose.msra.mxu0 0.0
      %290 = vmatprep.subr.mxu0 0.0
      %291 = vmatpush1.xpose.msra.mxu0 0.0
      %292 = vmatprep.subr.mxu0 0.0
      %293 = vmatpush1.xpose.msra.mxu0 0.0
      %294 = vmatprep.subr.mxu0 0.0
      %295 = vmatpush1.xpose.msra.mxu0 0.0
      %296 = vmatprep.subr.mxu0 0.0
      %297 = vmatpush1.xpose.msra.mxu0 0.0
      %298 = vmatprep.subr.mxu0 0.0
      %299 = vmatpush1.xpose.msra.mxu0 0.0
      %300 = vmatprep.subr.mxu0 0.0
      %301 = vmatpush1.xpose.msra.mxu0 0.0
      %302 = vmatprep.subr.mxu0 0.0
      %303 = vmatpush1.xpose.msra.mxu0 0.0
      %304 = vmatprep.subr.mxu0 0.0
      %305 = vmatpush1.xpose.msra.mxu0 0.0
      %306 = vmatprep.subr.mxu0 0.0
      %307 = vmatpush1.xpose.msra.mxu0 0.0
      %308 = vmatprep.subr.mxu0 0.0
      %309 = vmatpush1.xpose.msra.mxu0 0.0
      %310 = vmatprep.subr.mxu0 0.0
      %311 = vmatpush1.xpose.msra.mxu0 0.0
      %312 = vmatprep.subr.mxu0 0.0
      %313 = vmatpush1.xpose.msra.mxu0 0.0
      %314 = vmatprep.subr.mxu0 0.0
      %315 = vmatpush1.xpose.msra.mxu0 0.0
      %316 = vmatprep.subr.mxu0 0.0
      %317 = vmatpush1.xpose.msra.mxu0 0.0
      %318 = vmatprep.subr.mxu0 0.0
      %319 = vmatpush1.xpose.msra.mxu0 0.0
      %320 = vmatprep.subr.mxu0 0.0
      %321 = vmatpush1.xpose.msra.mxu0 0.0
      %322 = vmatprep.subr.mxu0 0.0
      %323 = vmatpush1.xpose.msra.mxu0 0.0
      %324 = vmatprep.subr.mxu0 0.0
      %325 = vmatpush1.xpose.msra.mxu0 0.0
      %326 = vmatprep.subr.mxu0 0.0
      %327 = vmatpush1.xpose.msra.mxu0 0.0
      %328 = vmatprep.subr.mxu0 0.0
      %329 = vmatpush1.xpose.msra.mxu0 0.0
      %330 = vmatprep.subr.mxu0 0.0
      %331 = vmatpush1.xpose.msra.mxu0 0.0
      %332 = vmatprep.subr.mxu0 0.0
      %333 = vmatpush1.xpose.msra.mxu0 0.0
      %334 = vmatprep.subr.mxu0 0.0
      %335 = vmatpush1.xpose.msra.mxu0 0.0
      %336 = vmatprep.subr.mxu0 0.0
      %337 = vmatpush1.xpose.msra.mxu0 0.0
      %338 = vmatprep.subr.mxu0 0.0
      %339 = vmatpush1.xpose.msra.mxu0 0.0
      %340 = vmatprep.subr.mxu0 0.0
      %341 = vmatpush1.xpose.msra.mxu0 0.0
      %342 = vmatprep.subr.mxu0 0.0
      %343 = vmatpush1.xpose.msra.mxu0 0.0
      %344 = vmatprep.subr.mxu0 0.0
      %345 = vmatpush1.xpose.msra.mxu0 0.0
      %346 = vmatprep.subr.mxu0 0.0
      %347 = vmatpush1.xpose.msra.mxu0 0.0
      %348 = vmatprep.mubr.f32.mxu0 0.0
      %349 = vmatmul.mubr.f32.gmra.mrb[0].mxu0 1.0
      %v350 = vpop.f32.mrb[0].mxu0
      %v351 = vadd.f32 0.0, %v350
      %v352 = vpop.f32.mrb[0].mxu0
      %353 = vdwg.mxu0
      %v354 = vmul.f32 %v274, 2.0
      %v355 = vmul.f32 %v279, 2.0
      %v356 = vlaneseq
      %v357 = vshrl.u32 %v356, 7
      %v358 = vsub.s32 0, %v357
      %v359 = vrot.slane %v351, %v358
      %v360 = vsub.f32 %v354, %v359
      %v361 = vsub.f32 %v355, %v359
      %vm362 = vcmask 130048
      %363 = vst.msk [vmem:[%s201] sm:$0xff] %vm362, %v360
      %364 = vst.msk [vmem:[%s201 + $0x8] sm:$0xff] %vm362, %v361
      %s365 = smul.u32 2, %s18
      %p366 = scmp.lt.s32.totalorder %s17, 1
      %s367 = scalar_select %p366, %s17, 1
      %p368 = scmp.lt.s32.totalorder %s365, 1
      %s369 = scalar_select %p368, %s365, 1
      %s370 = smul.addr %s367, 2
      %s371 = sadd.s32 %s369, %s370
      %s372 = smul.addr %s371, 8
      %s373 = scalar_lea.vmem %s2, %s372
      // Predicated region
      $region29: #{dgcnn_point_forward.15} parent=27 // pred_check
        %p374 = pneg %p99
      $region30: #{dgcnn_point_forward.15} parent=27 // pred_check_branch
        %376 = sbr.rel (%p374) target = $region32
      $region31: #{dgcnn_point_forward.15} parent=27 // pred_region
        %s377 = smul.u32 2, %s18
      $region32: #{dgcnn_point_forward.15} parent=27 // pred_fallthru
        _
    $region28: #{dgcnn_point_forward.15} parent=5 // pred_fallthru
      _
    %p378 = scmp.le.s32.totalorder 2, %s8
    // Predicated region
    $region33: #{dgcnn_point_forward.15} parent=5 // pred_check
      %p379 = pneg %p378
    $region34: #{dgcnn_point_forward.15} parent=5 // pred_check_branch
      %381 = sbr.rel (%p379) target = $region36
    $region35: #{dgcnn_point_forward.15} parent=5 // pred_region
      %s382 = ssub.s32 %s8, 2
      // Predicated region
      $region37: #{dgcnn_point_forward.15} parent=35 // pred_check
        %p383 = pneg %p105
      $region38: #{dgcnn_point_forward.15} parent=35 // pred_check_branch
        %385 = sbr.rel (%p383) target = $region40
      $region39: #{dgcnn_point_forward.15} parent=35 // pred_region
        %s386 = smul.u32 2, %s20
        %p387 = scmp.lt.s32.totalorder %s19, 1
        %s388 = scalar_select %p387, %s19, 1
        %p389 = scmp.lt.s32.totalorder %s386, 1
        %s390 = scalar_select %p389, %s386, 1
        %s391 = smul.addr %s388, 2
        %s392 = sadd.s32 %s390, %s391
        %s393 = smul.addr %s392, 8
        %s394 = scalar_lea.vmem %s2, %s393
      $region40: #{dgcnn_point_forward.15} parent=35 // pred_fallthru
        _
    $region36: #{dgcnn_point_forward.15} parent=5 // pred_fallthru
      _
  $region6: #{dgcnn_point_forward.15} parent=0 // loop_footer
    %s12 = sadd.s32 1, %s8
  $region7: #{dgcnn_point_forward.15} parent=0 // loop_footer_branch
    %7 = sbr.rel target = $region3
  $region8: #{dgcnn_point_forward.15} parent=0 // loop_exit
    _

// kernel: dgcnn_point_forward.16
$region0: #{dgcnn_point_forward.16}
  #allocation0 [shape = 'u32[]', space=smem, size = 0x4, offset = 0x4, fixed_abs, tag = 'smem constant byte address 0x4 - core index']
  #allocation1 [shape = 'u32[144,128]{1,0:T(1,128)}', space=vmem, size = 0x12000, scoped, tag = 'internal scratch']
  %s0 = inlined_call_operand.vmem [shape: bf16[4,32,128], index: 0, kind: input, shape index: {}]
  %s1 = inlined_call_operand.vmem [shape: bf16[32,128], index: 1, kind: input, shape index: {}]
  %s2 = inlined_call_operand.vmem [shape: bf16[128,256], index: 2, kind: input, shape index: {}]
  %s3 = inlined_call_operand.vmem [shape: bf16[128,256], index: 3, kind: input, shape index: {}]
  %s4 = inlined_call_operand.vmem [shape: f32[1,256], index: 4, kind: input, shape index: {}]
  %s5 = inlined_call_operand.vmem [shape: f32[1,256], index: 5, kind: input, shape index: {}]
  %s6 = inlined_call_operand.vmem [shape: f32[32,256], index: 6, kind: output, shape index: {}]
  %s7 = sld [smem:[#allocation0]]
  $region34: #{dgcnn_point_forward.16} parent=0
    _
  %s9 = ssub.s32 1, %s7
  %s10 = scalar_select 0, %s9, %s7
  // Predicated region
  $region2: #{dgcnn_point_forward.16} parent=0 // pred_check
    _
  $region3: #{dgcnn_point_forward.16} parent=0 // pred_check_branch
    %12 = sbr.rel (0) target = $region5
  $region4: #{dgcnn_point_forward.16} parent=0 // pred_region
    _
  $region5: #{dgcnn_point_forward.16} parent=0 // pred_fallthru
    _
  // Predicated region
  $region6: #{dgcnn_point_forward.16} parent=0 // pred_check
    _
  $region7: #{dgcnn_point_forward.16} parent=0 // pred_check_branch
    %14 = sbr.rel (0) target = $region9
  $region8: #{dgcnn_point_forward.16} parent=0 // pred_region
    _
  $region9: #{dgcnn_point_forward.16} parent=0 // pred_fallthru
    _
  // Predicated region
  $region10: #{dgcnn_point_forward.16} parent=0 // pred_check
    _
  $region11: #{dgcnn_point_forward.16} parent=0 // pred_check_branch
    %16 = sbr.rel (0) target = $region13
  $region12: #{dgcnn_point_forward.16} parent=0 // pred_region
    _
  $region13: #{dgcnn_point_forward.16} parent=0 // pred_fallthru
    _
  // Predicated region
  $region14: #{dgcnn_point_forward.16} parent=0 // pred_check
    _
  $region15: #{dgcnn_point_forward.16} parent=0 // pred_check_branch
    %18 = sbr.rel (0) target = $region17
  $region16: #{dgcnn_point_forward.16} parent=0 // pred_region
    _
  $region17: #{dgcnn_point_forward.16} parent=0 // pred_fallthru
    _
  // Predicated region
  $region18: #{dgcnn_point_forward.16} parent=0 // pred_check
    _
  $region19: #{dgcnn_point_forward.16} parent=0 // pred_check_branch
    %20 = sbr.rel (0) target = $region21
  $region20: #{dgcnn_point_forward.16} parent=0 // pred_region
    _
  $region21: #{dgcnn_point_forward.16} parent=0 // pred_fallthru
    _
  // Predicated region
  $region22: #{dgcnn_point_forward.16} parent=0 // pred_check
    _
  $region23: #{dgcnn_point_forward.16} parent=0 // pred_check_branch
    %22 = sbr.rel (0) target = $region25
  $region24: #{dgcnn_point_forward.16} parent=0 // pred_region
    _
  $region25: #{dgcnn_point_forward.16} parent=0 // pred_fallthru
    _
  %v24 = vld [vmem:[%s4] sm:$0x3]
  %v25 = vld [vmem:[%s1] sm:$0xf]
  %v26 = vld [vmem:[%s1 + $0x4] sm:$0xf]
  %v27 = vld [vmem:[%s1 + $0x8] sm:$0xf]
  %v28 = vld [vmem:[%s1 + $0xc] sm:$0xf]
  %v29 = vld [vmem:[%s3] sm:$0xff]
  %v30 = vld [vmem:[%s3 + $0x8] sm:$0xff]
  %v31 = vld [vmem:[%s3 + $0x10] sm:$0xff]
  %v32 = vld [vmem:[%s3 + $0x18] sm:$0xff]
  %v33 = vld [vmem:[%s3 + $0x20] sm:$0xff]
  %v34 = vld [vmem:[%s3 + $0x28] sm:$0xff]
  %v35 = vld [vmem:[%s3 + $0x30] sm:$0xff]
  %v36 = vld [vmem:[%s3 + $0x38] sm:$0xff]
  %v37 = vld [vmem:[%s3 + $0x40] sm:$0xff]
  %v38 = vld [vmem:[%s3 + $0x48] sm:$0xff]
  %v39 = vld [vmem:[%s3 + $0x50] sm:$0xff]
  %v40 = vld [vmem:[%s3 + $0x58] sm:$0xff]
  %v41 = vld [vmem:[%s3 + $0x60] sm:$0xff]
  %v42 = vld [vmem:[%s3 + $0x68] sm:$0xff]
  %v43 = vld [vmem:[%s3 + $0x70] sm:$0xff]
  %v44 = vld [vmem:[%s3 + $0x78] sm:$0xff]
  %v49 = vunpack.c.l.b16 %v25
  %v50 = vunpack.c.l.b16 %v26
  %v51 = vunpack.c.l.b16 %v27
  %v52 = vunpack.c.l.b16 %v28
  %v53 = vpack.c.b16 %v50, %v49
  %v54 = vpack.c.b16 %v52, %v51
  %v73 = vunpack.c.l.b16 %v29
  %v74 = vunpack.c.h.b16 %v29
  %v75 = vunpack.c.l.b16 %v30
  %v76 = vunpack.c.h.b16 %v30
  %v77 = vunpack.c.l.b16 %v31
  %v78 = vunpack.c.h.b16 %v31
  %v79 = vunpack.c.l.b16 %v32
  %v80 = vunpack.c.h.b16 %v32
  %v81 = vunpack.c.l.b16 %v33
  %v82 = vunpack.c.h.b16 %v33
  %v83 = vunpack.c.l.b16 %v34
  %v84 = vunpack.c.h.b16 %v34
  %v85 = vunpack.c.l.b16 %v35
  %v86 = vunpack.c.h.b16 %v35
  %v87 = vunpack.c.l.b16 %v36
  %v88 = vunpack.c.h.b16 %v36
  %v89 = vunpack.c.l.b16 %v37
  %v90 = vunpack.c.h.b16 %v37
  %v91 = vunpack.c.l.b16 %v38
  %v92 = vunpack.c.h.b16 %v38
  %v93 = vunpack.c.l.b16 %v39
  %v94 = vunpack.c.h.b16 %v39
  %v95 = vunpack.c.l.b16 %v40
  %v96 = vunpack.c.h.b16 %v40
  %v97 = vunpack.c.l.b16 %v41
  %v98 = vunpack.c.h.b16 %v41
  %v99 = vunpack.c.l.b16 %v42
  %v100 = vunpack.c.h.b16 %v42
  %v101 = vunpack.c.l.b16 %v43
  %v102 = vunpack.c.h.b16 %v43
  %v103 = vunpack.c.l.b16 %v44
  %v104 = vunpack.c.h.b16 %v44
  %v105 = vpack.c.b16 %v75, %v73
  %v106 = vpack.c.b16 %v76, %v74
  %v107 = vpack.c.b16 %v79, %v77
  %v108 = vpack.c.b16 %v80, %v78
  %v109 = vpack.c.b16 %v83, %v81
  %v110 = vpack.c.b16 %v84, %v82
  %v111 = vpack.c.b16 %v87, %v85
  %v112 = vpack.c.b16 %v88, %v86
  %v113 = vpack.c.b16 %v91, %v89
  %v114 = vpack.c.b16 %v92, %v90
  %v115 = vpack.c.b16 %v95, %v93
  %v116 = vpack.c.b16 %v96, %v94
  %v117 = vpack.c.b16 %v99, %v97
  %v118 = vpack.c.b16 %v100, %v98
  %v119 = vpack.c.b16 %v103, %v101
  %v120 = vpack.c.b16 %v104, %v102
  %137 = vmatprep.subr.bf16.mxu0 %v106
  %138 = vmatpush1.bf16.msra.mxu0 %v105
  %139 = vmatprep.subr.bf16.mxu0 %v108
  %140 = vmatpush1.bf16.msra.mxu0 %v107
  %141 = vmatprep.subr.bf16.mxu0 %v110
  %142 = vmatpush1.bf16.msra.mxu0 %v109
  %143 = vmatprep.subr.bf16.mxu0 %v112
  %144 = vmatpush1.bf16.msra.mxu0 %v111
  %145 = vmatprep.subr.bf16.mxu0 %v114
  %146 = vmatpush1.bf16.msra.mxu0 %v113
  %147 = vmatprep.subr.bf16.mxu0 %v116
  %148 = vmatpush1.bf16.msra.mxu0 %v115
  %149 = vmatprep.subr.bf16.mxu0 %v118
  %150 = vmatpush1.bf16.msra.mxu0 %v117
  %151 = vmatprep.subr.bf16.mxu0 %v120
  %152 = vmatpush1.bf16.msra.mxu0 %v119
  %153 = vmatprep.subr.bf16.mxu0 0
  %154 = vmatpush1.bf16.msra.mxu0 0
  %155 = vmatprep.subr.bf16.mxu0 0
  %156 = vmatpush1.bf16.msra.mxu0 0
  %157 = vmatprep.subr.bf16.mxu0 0
  %158 = vmatpush1.bf16.msra.mxu0 0
  %159 = vmatprep.subr.bf16.mxu0 0
  %160 = vmatpush1.bf16.msra.mxu0 0
  %161 = vmatprep.subr.bf16.mxu0 0
  %162 = vmatpush1.bf16.msra.mxu0 0
  %163 = vmatprep.subr.bf16.mxu0 0
  %164 = vmatpush1.bf16.msra.mxu0 0
  %165 = vmatprep.subr.bf16.mxu0 0
  %166 = vmatpush1.bf16.msra.mxu0 0
  %167 = vmatprep.subr.bf16.mxu0 0
  %168 = vmatpush1.bf16.msra.mxu0 0
  %169 = vmatprep.mubr.bf16.mxu0 0
  %170 = vmatmul.mubr.bf16.gmra.mrb[0].mxu0 %v53
  %v171 = vpop.f32.mrb[0].mxu0
  %v172 = vadd.f32 0.0, %v171
  %v173 = vpop.f32.mrb[0].mxu0
  %v174 = vadd.f32 0.0, %v173
  %v175 = vpop.f32.mrb[0].mxu0
  %v176 = vadd.f32 0.0, %v175
  %v177 = vpop.f32.mrb[0].mxu0
  %v178 = vadd.f32 0.0, %v177
  %179 = vmatprep.mubr.bf16.mxu0 0
  %180 = vmatmul.mubr.bf16.gmra.mrb[0].mxu0 %v54
  %v181 = vpop.f32.mrb[0].mxu0
  %v182 = vadd.f32 0.0, %v181
  %v183 = vpop.f32.mrb[0].mxu0
  %v184 = vadd.f32 0.0, %v183
  %v185 = vpop.f32.mrb[0].mxu0
  %v186 = vadd.f32 0.0, %v185
  %v187 = vpop.f32.mrb[0].mxu0
  %v188 = vadd.f32 0.0, %v187
  %189 = vdwg.mxu0
  %v191 = vlaneseq
  %v192 = vshrl.u32 %v191, 7
  %v193 = vsub.s32 0, %v192
  %v194 = vrot.slane %v24, %v193
  %v195 = vlaneseq
  %v196 = vshrl.u32 %v195, 7
  %v197 = vsub.s32 1, %v196
  %v198 = vrot.slane %v24, %v197
  %v201 = vmul.f32 %v172, %v194
  %v202 = vmul.f32 %v174, %v198
  %v203 = vmul.f32 %v176, %v194
  %v204 = vmul.f32 %v178, %v198
  %v205 = vmul.f32 %v182, %v194
  %v206 = vmul.f32 %v184, %v198
  %v207 = vmul.f32 %v186, %v194
  %v208 = vmul.f32 %v188, %v198
  %v209 = vld [vmem:[%s5] sm:$0x3]
  %v211 = vlaneseq
  %v212 = vshrl.u32 %v211, 7
  %v213 = vsub.s32 0, %v212
  %v214 = vrot.slane %v209, %v213
  %v215 = vlaneseq
  %v216 = vshrl.u32 %v215, 7
  %v217 = vsub.s32 1, %v216
  %v218 = vrot.slane %v209, %v217
  %v221 = vadd.f32 %v201, %v214
  %v222 = vadd.f32 %v202, %v218
  %v223 = vadd.f32 %v203, %v214
  %v224 = vadd.f32 %v204, %v218
  %v225 = vadd.f32 %v205, %v214
  %v226 = vadd.f32 %v206, %v218
  %v227 = vadd.f32 %v207, %v214
  %v228 = vadd.f32 %v208, %v218
  %v229 = vld [vmem:[%s0] sm:$0xf]
  %v230 = vld [vmem:[%s0 + $0x4] sm:$0xf]
  %v231 = vld [vmem:[%s0 + $0x8] sm:$0xf]
  %v232 = vld [vmem:[%s0 + $0xc] sm:$0xf]
  %v233 = vld [vmem:[%s0 + $0x10] sm:$0xf]
  %v234 = vld [vmem:[%s0 + $0x14] sm:$0xf]
  %v235 = vld [vmem:[%s0 + $0x18] sm:$0xf]
  %v236 = vld [vmem:[%s0 + $0x1c] sm:$0xf]
  %v237 = vld [vmem:[%s0 + $0x20] sm:$0xf]
  %v238 = vld [vmem:[%s0 + $0x24] sm:$0xf]
  %v239 = vld [vmem:[%s0 + $0x28] sm:$0xf]
  %v240 = vld [vmem:[%s0 + $0x2c] sm:$0xf]
  %v241 = vld [vmem:[%s0 + $0x30] sm:$0xf]
  %v242 = vld [vmem:[%s0 + $0x34] sm:$0xf]
  %v243 = vld [vmem:[%s0 + $0x38] sm:$0xf]
  %v244 = vld [vmem:[%s0 + $0x3c] sm:$0xf]
  %v245 = vld [vmem:[%s2] sm:$0xff]
  %v246 = vld [vmem:[%s2 + $0x8] sm:$0xff]
  %v247 = vld [vmem:[%s2 + $0x10] sm:$0xff]
  %v248 = vld [vmem:[%s2 + $0x18] sm:$0xff]
  %v249 = vld [vmem:[%s2 + $0x20] sm:$0xff]
  %v250 = vld [vmem:[%s2 + $0x28] sm:$0xff]
  %v251 = vld [vmem:[%s2 + $0x30] sm:$0xff]
  %v252 = vld [vmem:[%s2 + $0x38] sm:$0xff]
  %v253 = vld [vmem:[%s2 + $0x40] sm:$0xff]
  %v254 = vld [vmem:[%s2 + $0x48] sm:$0xff]
  %v255 = vld [vmem:[%s2 + $0x50] sm:$0xff]
  %v256 = vld [vmem:[%s2 + $0x58] sm:$0xff]
  %v257 = vld [vmem:[%s2 + $0x60] sm:$0xff]
  %v258 = vld [vmem:[%s2 + $0x68] sm:$0xff]
  %v259 = vld [vmem:[%s2 + $0x70] sm:$0xff]
  %v260 = vld [vmem:[%s2 + $0x78] sm:$0xff]
  %v277 = vunpack.c.l.b16 %v229
  %v278 = vunpack.c.l.b16 %v230
  %v279 = vunpack.c.l.b16 %v231
  %v280 = vunpack.c.l.b16 %v232
  %v281 = vunpack.c.l.b16 %v233
  %v282 = vunpack.c.l.b16 %v234
  %v283 = vunpack.c.l.b16 %v235
  %v284 = vunpack.c.l.b16 %v236
  %v285 = vunpack.c.l.b16 %v237
  %v286 = vunpack.c.l.b16 %v238
  %v287 = vunpack.c.l.b16 %v239
  %v288 = vunpack.c.l.b16 %v240
  %v289 = vunpack.c.l.b16 %v241
  %v290 = vunpack.c.l.b16 %v242
  %v291 = vunpack.c.l.b16 %v243
  %v292 = vunpack.c.l.b16 %v244
  %v293 = vpack.c.b16 %v278, %v277
  %v294 = vpack.c.b16 %v280, %v279
  %v295 = vpack.c.b16 %v282, %v281
  %v296 = vpack.c.b16 %v284, %v283
  %v297 = vpack.c.b16 %v286, %v285
  %v298 = vpack.c.b16 %v288, %v287
  %v299 = vpack.c.b16 %v290, %v289
  %v300 = vpack.c.b16 %v292, %v291
  %v325 = vunpack.c.l.b16 %v245
  %v326 = vunpack.c.h.b16 %v245
  %v327 = vunpack.c.l.b16 %v246
  %v328 = vunpack.c.h.b16 %v246
  %v329 = vunpack.c.l.b16 %v247
  %v330 = vunpack.c.h.b16 %v247
  %v331 = vunpack.c.l.b16 %v248
  %v332 = vunpack.c.h.b16 %v248
  %v333 = vunpack.c.l.b16 %v249
  %v334 = vunpack.c.h.b16 %v249
  %v335 = vunpack.c.l.b16 %v250
  %v336 = vunpack.c.h.b16 %v250
  %v337 = vunpack.c.l.b16 %v251
  %v338 = vunpack.c.h.b16 %v251
  %v339 = vunpack.c.l.b16 %v252
  %v340 = vunpack.c.h.b16 %v252
  %v341 = vunpack.c.l.b16 %v253
  %v342 = vunpack.c.h.b16 %v253
  %v343 = vunpack.c.l.b16 %v254
  %v344 = vunpack.c.h.b16 %v254
  %v345 = vunpack.c.l.b16 %v255
  %v346 = vunpack.c.h.b16 %v255
  %v347 = vunpack.c.l.b16 %v256
  %v348 = vunpack.c.h.b16 %v256
  %v349 = vunpack.c.l.b16 %v257
  %v350 = vunpack.c.h.b16 %v257
  %v351 = vunpack.c.l.b16 %v258
  %v352 = vunpack.c.h.b16 %v258
  %v353 = vunpack.c.l.b16 %v259
  %v354 = vunpack.c.h.b16 %v259
  %v355 = vunpack.c.l.b16 %v260
  %v356 = vunpack.c.h.b16 %v260
  %v357 = vpack.c.b16 %v327, %v325
  %v358 = vpack.c.b16 %v328, %v326
  %v359 = vpack.c.b16 %v331, %v329
  %v360 = vpack.c.b16 %v332, %v330
  %v361 = vpack.c.b16 %v335, %v333
  %v362 = vpack.c.b16 %v336, %v334
  %v363 = vpack.c.b16 %v339, %v337
  %v364 = vpack.c.b16 %v340, %v338
  %v365 = vpack.c.b16 %v343, %v341
  %v366 = vpack.c.b16 %v344, %v342
  %v367 = vpack.c.b16 %v347, %v345
  %v368 = vpack.c.b16 %v348, %v346
  %v369 = vpack.c.b16 %v351, %v349
  %v370 = vpack.c.b16 %v352, %v350
  %v371 = vpack.c.b16 %v355, %v353
  %v372 = vpack.c.b16 %v356, %v354
  %389 = vmatprep.subr.bf16.mxu0 %v358
  %390 = vmatpush1.bf16.msra.mxu0 %v357
  %391 = vmatprep.subr.bf16.mxu0 %v360
  %392 = vmatpush1.bf16.msra.mxu0 %v359
  %393 = vmatprep.subr.bf16.mxu0 %v362
  %394 = vmatpush1.bf16.msra.mxu0 %v361
  %395 = vmatprep.subr.bf16.mxu0 %v364
  %396 = vmatpush1.bf16.msra.mxu0 %v363
  %397 = vmatprep.subr.bf16.mxu0 %v366
  %398 = vmatpush1.bf16.msra.mxu0 %v365
  %399 = vmatprep.subr.bf16.mxu0 %v368
  %400 = vmatpush1.bf16.msra.mxu0 %v367
  %401 = vmatprep.subr.bf16.mxu0 %v370
  %402 = vmatpush1.bf16.msra.mxu0 %v369
  %403 = vmatprep.subr.bf16.mxu0 %v372
  %404 = vmatpush1.bf16.msra.mxu0 %v371
  %405 = vmatprep.subr.bf16.mxu0 0
  %406 = vmatpush1.bf16.msra.mxu0 0
  %407 = vmatprep.subr.bf16.mxu0 0
  %408 = vmatpush1.bf16.msra.mxu0 0
  %409 = vmatprep.subr.bf16.mxu0 0
  %410 = vmatpush1.bf16.msra.mxu0 0
  %411 = vmatprep.subr.bf16.mxu0 0
  %412 = vmatpush1.bf16.msra.mxu0 0
  %413 = vmatprep.subr.bf16.mxu0 0
  %414 = vmatpush1.bf16.msra.mxu0 0
  %415 = vmatprep.subr.bf16.mxu0 0
  %416 = vmatpush1.bf16.msra.mxu0 0
  %417 = vmatprep.subr.bf16.mxu0 0
  %418 = vmatpush1.bf16.msra.mxu0 0
  %419 = vmatprep.subr.bf16.mxu0 0
  %420 = vmatpush1.bf16.msra.mxu0 0
  %421 = vmatprep.mubr.bf16.mxu0 0
  %422 = vmatmul.mubr.bf16.gmra.mrb[0].mxu0 %v293
  %v423 = vpop.f32.mrb[0].mxu0
  %v424 = vadd.f32 0.0, %v423
  %v425 = vpop.f32.mrb[0].mxu0
  %v426 = vadd.f32 0.0, %v425
  %v427 = vpop.f32.mrb[0].mxu0
  %v428 = vadd.f32 0.0, %v427
  %v429 = vpop.f32.mrb[0].mxu0
  %v430 = vadd.f32 0.0, %v429
  %431 = vmatprep.mubr.bf16.mxu0 0
  %432 = vmatmul.mubr.bf16.gmra.mrb[0].mxu0 %v294
  %v433 = vpop.f32.mrb[0].mxu0
  %v434 = vadd.f32 0.0, %v433
  %v435 = vpop.f32.mrb[0].mxu0
  %v436 = vadd.f32 0.0, %v435
  %v437 = vpop.f32.mrb[0].mxu0
  %v438 = vadd.f32 0.0, %v437
  %v439 = vpop.f32.mrb[0].mxu0
  %v440 = vadd.f32 0.0, %v439
  %441 = vmatprep.mubr.bf16.mxu0 0
  %442 = vmatmul.mubr.bf16.gmra.mrb[0].mxu0 %v295
  %v443 = vpop.f32.mrb[0].mxu0
  %v444 = vadd.f32 0.0, %v443
  %v445 = vpop.f32.mrb[0].mxu0
  %v446 = vadd.f32 0.0, %v445
  %v447 = vpop.f32.mrb[0].mxu0
  %v448 = vadd.f32 0.0, %v447
  %v449 = vpop.f32.mrb[0].mxu0
  %v450 = vadd.f32 0.0, %v449
  %451 = vmatprep.mubr.bf16.mxu0 0
  %452 = vmatmul.mubr.bf16.gmra.mrb[0].mxu0 %v296
  %v453 = vpop.f32.mrb[0].mxu0
  %v454 = vadd.f32 0.0, %v453
  %v455 = vpop.f32.mrb[0].mxu0
  %v456 = vadd.f32 0.0, %v455
  %v457 = vpop.f32.mrb[0].mxu0
  %v458 = vadd.f32 0.0, %v457
  %v459 = vpop.f32.mrb[0].mxu0
  %v460 = vadd.f32 0.0, %v459
  %461 = vmatprep.mubr.bf16.mxu0 0
  %462 = vmatmul.mubr.bf16.gmra.mrb[0].mxu0 %v297
  %v463 = vpop.f32.mrb[0].mxu0
  %v464 = vadd.f32 0.0, %v463
  %v465 = vpop.f32.mrb[0].mxu0
  %v466 = vadd.f32 0.0, %v465
  %v467 = vpop.f32.mrb[0].mxu0
  %v468 = vadd.f32 0.0, %v467
  %v469 = vpop.f32.mrb[0].mxu0
  %v470 = vadd.f32 0.0, %v469
  %471 = vmatprep.mubr.bf16.mxu0 0
  %472 = vmatmul.mubr.bf16.gmra.mrb[0].mxu0 %v298
  %v473 = vpop.f32.mrb[0].mxu0
  %v474 = vadd.f32 0.0, %v473
  %v475 = vpop.f32.mrb[0].mxu0
  %v476 = vadd.f32 0.0, %v475
  %v477 = vpop.f32.mrb[0].mxu0
  %v478 = vadd.f32 0.0, %v477
  %v479 = vpop.f32.mrb[0].mxu0
  %v480 = vadd.f32 0.0, %v479
  %481 = vmatprep.mubr.bf16.mxu0 0
  %482 = vmatmul.mubr.bf16.gmra.mrb[0].mxu0 %v299
  %v483 = vpop.f32.mrb[0].mxu0
  %v484 = vadd.f32 0.0, %v483
  %v485 = vpop.f32.mrb[0].mxu0
  %v486 = vadd.f32 0.0, %v485
  %v487 = vpop.f32.mrb[0].mxu0
  %v488 = vadd.f32 0.0, %v487
  %v489 = vpop.f32.mrb[0].mxu0
  %v490 = vadd.f32 0.0, %v489
  %491 = vmatprep.mubr.bf16.mxu0 0
  %492 = vmatmul.mubr.bf16.gmra.mrb[0].mxu0 %v300
  %v493 = vpop.f32.mrb[0].mxu0
  %v494 = vadd.f32 0.0, %v493
  %v495 = vpop.f32.mrb[0].mxu0
  %v496 = vadd.f32 0.0, %v495
  %v497 = vpop.f32.mrb[0].mxu0
  %v498 = vadd.f32 0.0, %v497
  %v499 = vpop.f32.mrb[0].mxu0
  %v500 = vadd.f32 0.0, %v499
  %501 = vdwg.mxu0
  %v502 = vmul.f32 %v424, %v194
  %v503 = vmul.f32 %v426, %v198
  %v504 = vmul.f32 %v428, %v194
  %v505 = vmul.f32 %v430, %v198
  %v506 = vmul.f32 %v434, %v194
  %v507 = vmul.f32 %v436, %v198
  %v508 = vmul.f32 %v438, %v194
  %v509 = vmul.f32 %v440, %v198
  %v510 = vadd.f32 %v502, %v221
  %v511 = vadd.f32 %v503, %v222
  %v512 = vadd.f32 %v504, %v223
  %v513 = vadd.f32 %v505, %v224
  %v514 = vadd.f32 %v506, %v225
  %v515 = vadd.f32 %v507, %v226
  %v516 = vadd.f32 %v508, %v227
  %v517 = vadd.f32 %v509, %v228
  %vm518 = vcmp.ge.f32.partialorder %v510, 0.0
  %vm519 = vcmp.ge.f32.partialorder %v511, 0.0
  %vm520 = vcmp.ge.f32.partialorder %v512, 0.0
  %vm521 = vcmp.ge.f32.partialorder %v513, 0.0
  %vm522 = vcmp.ge.f32.partialorder %v514, 0.0
  %vm523 = vcmp.ge.f32.partialorder %v515, 0.0
  %vm524 = vcmp.ge.f32.partialorder %v516, 0.0
  %vm525 = vcmp.ge.f32.partialorder %v517, 0.0
  %v526 = vmul.f32 %v510, 0.2
  %v527 = vmul.f32 %v511, 0.2
  %v528 = vmul.f32 %v512, 0.2
  %v529 = vmul.f32 %v513, 0.2
  %v530 = vmul.f32 %v514, 0.2
  %v531 = vmul.f32 %v515, 0.2
  %v532 = vmul.f32 %v516, 0.2
  %v533 = vmul.f32 %v517, 0.2
  %v534 = vsel %vm518, %v510, %v526
  %v535 = vsel %vm519, %v511, %v527
  %v536 = vsel %vm520, %v512, %v528
  %v537 = vsel %vm521, %v513, %v529
  %v538 = vsel %vm522, %v514, %v530
  %v539 = vsel %vm523, %v515, %v531
  %v540 = vsel %vm524, %v516, %v532
  %v541 = vsel %vm525, %v517, %v533
  %v542 = vmul.f32 %v444, %v194
  %v543 = vmul.f32 %v446, %v198
  %v544 = vmul.f32 %v448, %v194
  %v545 = vmul.f32 %v450, %v198
  %v546 = vmul.f32 %v454, %v194
  %v547 = vmul.f32 %v456, %v198
  %v548 = vmul.f32 %v458, %v194
  %v549 = vmul.f32 %v460, %v198
  %v550 = vadd.f32 %v542, %v221
  %v551 = vadd.f32 %v543, %v222
  %v552 = vadd.f32 %v544, %v223
  %v553 = vadd.f32 %v545, %v224
  %v554 = vadd.f32 %v546, %v225
  %v555 = vadd.f32 %v547, %v226
  %v556 = vadd.f32 %v548, %v227
  %v557 = vadd.f32 %v549, %v228
  %vm558 = vcmp.ge.f32.partialorder %v550, 0.0
  %vm559 = vcmp.ge.f32.partialorder %v551, 0.0
  %vm560 = vcmp.ge.f32.partialorder %v552, 0.0
  %vm561 = vcmp.ge.f32.partialorder %v553, 0.0
  %vm562 = vcmp.ge.f32.partialorder %v554, 0.0
  %vm563 = vcmp.ge.f32.partialorder %v555, 0.0
  %vm564 = vcmp.ge.f32.partialorder %v556, 0.0
  %vm565 = vcmp.ge.f32.partialorder %v557, 0.0
  %v566 = vmul.f32 %v550, 0.2
  %v567 = vmul.f32 %v551, 0.2
  %v568 = vmul.f32 %v552, 0.2
  %v569 = vmul.f32 %v553, 0.2
  %v570 = vmul.f32 %v554, 0.2
  %v571 = vmul.f32 %v555, 0.2
  %v572 = vmul.f32 %v556, 0.2
  %v573 = vmul.f32 %v557, 0.2
  %v574 = vsel %vm558, %v550, %v566
  %v575 = vsel %vm559, %v551, %v567
  %v576 = vsel %vm560, %v552, %v568
  %v577 = vsel %vm561, %v553, %v569
  %v578 = vsel %vm562, %v554, %v570
  %v579 = vsel %vm563, %v555, %v571
  %v580 = vsel %vm564, %v556, %v572
  %v581 = vsel %vm565, %v557, %v573
  %v582 = vmax.f32 %v534, %v574
  %v583 = vmax.f32 %v535, %v575
  %v584 = vmax.f32 %v536, %v576
  %v585 = vmax.f32 %v537, %v577
  %v586 = vmax.f32 %v538, %v578
  %v587 = vmax.f32 %v539, %v579
  %v588 = vmax.f32 %v540, %v580
  %v589 = vmax.f32 %v541, %v581
  %v590 = vmul.f32 %v464, %v194
  %v591 = vmul.f32 %v466, %v198
  %v592 = vmul.f32 %v468, %v194
  %v593 = vmul.f32 %v470, %v198
  %v594 = vmul.f32 %v474, %v194
  %v595 = vmul.f32 %v476, %v198
  %v596 = vmul.f32 %v478, %v194
  %v597 = vmul.f32 %v480, %v198
  %v598 = vadd.f32 %v590, %v221
  %v599 = vadd.f32 %v591, %v222
  %v600 = vadd.f32 %v592, %v223
  %v601 = vadd.f32 %v593, %v224
  %v602 = vadd.f32 %v594, %v225
  %v603 = vadd.f32 %v595, %v226
  %v604 = vadd.f32 %v596, %v227
  %v605 = vadd.f32 %v597, %v228
  %vm606 = vcmp.ge.f32.partialorder %v598, 0.0
  %vm607 = vcmp.ge.f32.partialorder %v599, 0.0
  %vm608 = vcmp.ge.f32.partialorder %v600, 0.0
  %vm609 = vcmp.ge.f32.partialorder %v601, 0.0
  %vm610 = vcmp.ge.f32.partialorder %v602, 0.0
  %vm611 = vcmp.ge.f32.partialorder %v603, 0.0
  %vm612 = vcmp.ge.f32.partialorder %v604, 0.0
  %vm613 = vcmp.ge.f32.partialorder %v605, 0.0
  %v614 = vmul.f32 %v598, 0.2
  %v615 = vmul.f32 %v599, 0.2
  %v616 = vmul.f32 %v600, 0.2
  %v617 = vmul.f32 %v601, 0.2
  %v618 = vmul.f32 %v602, 0.2
  %v619 = vmul.f32 %v603, 0.2
  %v620 = vmul.f32 %v604, 0.2
  %v621 = vmul.f32 %v605, 0.2
  %v622 = vsel %vm606, %v598, %v614
  %v623 = vsel %vm607, %v599, %v615
  %v624 = vsel %vm608, %v600, %v616
  %v625 = vsel %vm609, %v601, %v617
  %v626 = vsel %vm610, %v602, %v618
  %v627 = vsel %vm611, %v603, %v619
  %v628 = vsel %vm612, %v604, %v620
  %v629 = vsel %vm613, %v605, %v621
  %v630 = vmax.f32 %v582, %v622
  %v631 = vmax.f32 %v583, %v623
  %v632 = vmax.f32 %v584, %v624
  %v633 = vmax.f32 %v585, %v625
  %v634 = vmax.f32 %v586, %v626
  %v635 = vmax.f32 %v587, %v627
  %v636 = vmax.f32 %v588, %v628
  %v637 = vmax.f32 %v589, %v629
  %v638 = vmul.f32 %v484, %v194
  %v639 = vmul.f32 %v486, %v198
  %v640 = vmul.f32 %v488, %v194
  %v641 = vmul.f32 %v490, %v198
  %v642 = vmul.f32 %v494, %v194
  %v643 = vmul.f32 %v496, %v198
  %v644 = vmul.f32 %v498, %v194
  %v645 = vmul.f32 %v500, %v198
  %v646 = vadd.f32 %v638, %v221
  %v647 = vadd.f32 %v639, %v222
  %v648 = vadd.f32 %v640, %v223
  %v649 = vadd.f32 %v641, %v224
  %v650 = vadd.f32 %v642, %v225
  %v651 = vadd.f32 %v643, %v226
  %v652 = vadd.f32 %v644, %v227
  %v653 = vadd.f32 %v645, %v228
  %vm654 = vcmp.ge.f32.partialorder %v646, 0.0
  %vm655 = vcmp.ge.f32.partialorder %v647, 0.0
  %vm656 = vcmp.ge.f32.partialorder %v648, 0.0
  %vm657 = vcmp.ge.f32.partialorder %v649, 0.0
  %vm658 = vcmp.ge.f32.partialorder %v650, 0.0
  %vm659 = vcmp.ge.f32.partialorder %v651, 0.0
  %vm660 = vcmp.ge.f32.partialorder %v652, 0.0
  %vm661 = vcmp.ge.f32.partialorder %v653, 0.0
  %v662 = vmul.f32 %v646, 0.2
  %v663 = vmul.f32 %v647, 0.2
  %v664 = vmul.f32 %v648, 0.2
  %v665 = vmul.f32 %v649, 0.2
  %v666 = vmul.f32 %v650, 0.2
  %v667 = vmul.f32 %v651, 0.2
  %v668 = vmul.f32 %v652, 0.2
  %v669 = vmul.f32 %v653, 0.2
  %v670 = vsel %vm654, %v646, %v662
  %v671 = vsel %vm655, %v647, %v663
  %v672 = vsel %vm656, %v648, %v664
  %v673 = vsel %vm657, %v649, %v665
  %v674 = vsel %vm658, %v650, %v666
  %v675 = vsel %vm659, %v651, %v667
  %v676 = vsel %vm660, %v652, %v668
  %v677 = vsel %vm661, %v653, %v669
  %v678 = vmax.f32 %v630, %v670
  %v679 = vmax.f32 %v631, %v671
  %v680 = vmax.f32 %v632, %v672
  %v681 = vmax.f32 %v633, %v673
  %v682 = vmax.f32 %v634, %v674
  %v683 = vmax.f32 %v635, %v675
  %v684 = vmax.f32 %v636, %v676
  %v685 = vmax.f32 %v637, %v677
  %686 = vst [vmem:[%s6] sm:$0xff] %v678
  %687 = vst [vmem:[%s6 + $0x8] sm:$0xff] %v679
  %688 = vst [vmem:[%s6 + $0x10] sm:$0xff] %v680
  %689 = vst [vmem:[%s6 + $0x18] sm:$0xff] %v681
  %690 = vst [vmem:[%s6 + $0x20] sm:$0xff] %v682
  %691 = vst [vmem:[%s6 + $0x28] sm:$0xff] %v683
  %692 = vst [vmem:[%s6 + $0x30] sm:$0xff] %v684
  %693 = vst [vmem:[%s6 + $0x38] sm:$0xff] %v685
  // Predicated region
  $region26: #{dgcnn_point_forward.16} parent=0 // pred_check
    _
  $region27: #{dgcnn_point_forward.16} parent=0 // pred_check_branch
    %695 = sbr.rel (0) target = $region29
  $region28: #{dgcnn_point_forward.16} parent=0 // pred_region
    _
  $region29: #{dgcnn_point_forward.16} parent=0 // pred_fallthru
    _
  // Predicated region
  $region30: #{dgcnn_point_forward.16} parent=0 // pred_check
    _
  $region31: #{dgcnn_point_forward.16} parent=0 // pred_check_branch
    %697 = sbr.rel (0) target = $region33
  $region32: #{dgcnn_point_forward.16} parent=0 // pred_region
    _
  $region33: #{dgcnn_point_forward.16} parent=0 // pred_fallthru
    _

// kernel: dgcnn_point_forward.17
$region0: #{dgcnn_point_forward.17}
  #allocation0 [shape = 'u32[]', space=smem, size = 0x4, offset = 0x4, fixed_abs, tag = 'smem constant byte address 0x4 - core index']
  #allocation1 [shape = 'u32[144,128]{1,0:T(1,128)}', space=vmem, size = 0x12000, scoped, tag = 'internal scratch']
  %s0 = inlined_call_operand.vmem [shape: f32[32,64], index: 0, kind: input, shape index: {}]
  %s1 = inlined_call_operand.vmem [shape: f32[32,64], index: 1, kind: input, shape index: {}]
  %s2 = inlined_call_operand.vmem [shape: f32[32,128], index: 2, kind: input, shape index: {}]
  %s3 = inlined_call_operand.vmem [shape: f32[32,256], index: 3, kind: input, shape index: {}]
  %s4 = inlined_call_operand.vmem [shape: bf16[64,1024], index: 4, kind: input, shape index: {}]
  %s5 = inlined_call_operand.vmem [shape: bf16[64,1024], index: 5, kind: input, shape index: {}]
  %s6 = inlined_call_operand.vmem [shape: bf16[128,1024], index: 6, kind: input, shape index: {}]
  %s7 = inlined_call_operand.vmem [shape: bf16[256,1024], index: 7, kind: input, shape index: {}]
  %s8 = inlined_call_operand.vmem [shape: f32[1,1024], index: 8, kind: input, shape index: {}]
  %s9 = inlined_call_operand.vmem [shape: f32[1,1024], index: 9, kind: input, shape index: {}]
  %s10 = inlined_call_operand.vmem [shape: bf16[1024,512], index: 10, kind: input, shape index: {}]
  %s11 = inlined_call_operand.vmem [shape: f32[1,512], index: 11, kind: input, shape index: {}]
  %s12 = inlined_call_operand.vmem [shape: f32[1,512], index: 12, kind: input, shape index: {}]
  %s13 = inlined_call_operand.vmem [shape: bf16[512,32], index: 13, kind: input, shape index: {}]
  %s14 = inlined_call_operand.vmem [shape: f32[1,32], index: 14, kind: input, shape index: {}]
  %s15 = inlined_call_operand.hbm [shape: f32[32,32], index: 15, kind: output, shape index: {}]
  %s16 = sld [smem:[#allocation0]]
  $region70: #{dgcnn_point_forward.17} parent=0
    _
  %s18 = ssub.s32 1, %s16
  %s19 = scalar_select 0, %s18, %s16
  $region1: #{dgcnn_point_forward.17} parent=0
    #allocation2 [shape = 'u8[16384]{0}', space=vmem, size = 0x4000, scoped, tag = 'output window, operand 0, single buffered']
    #allocation3 [shape = 's32[1]{0}', space=sflag, size = 0x4, scoped, tag = 'scoped memory for dgcnn_point_forward.17']
    %20 = vsyncpa [#allocation3], 0
    // Predicated region
    $region2: #{dgcnn_point_forward.17} parent=1 // pred_check
      _
    $region3: #{dgcnn_point_forward.17} parent=1 // pred_check_branch
      %22 = sbr.rel (0) target = $region5
    $region4: #{dgcnn_point_forward.17} parent=1 // pred_region
      _
    $region5: #{dgcnn_point_forward.17} parent=1 // pred_fallthru
      _
    // Predicated region
    $region6: #{dgcnn_point_forward.17} parent=1 // pred_check
      _
    $region7: #{dgcnn_point_forward.17} parent=1 // pred_check_branch
      %24 = sbr.rel (0) target = $region9
    $region8: #{dgcnn_point_forward.17} parent=1 // pred_region
      _
    $region9: #{dgcnn_point_forward.17} parent=1 // pred_fallthru
      _
    // Predicated region
    $region10: #{dgcnn_point_forward.17} parent=1 // pred_check
      _
    $region11: #{dgcnn_point_forward.17} parent=1 // pred_check_branch
      %26 = sbr.rel (0) target = $region13
    $region12: #{dgcnn_point_forward.17} parent=1 // pred_region
      _
    $region13: #{dgcnn_point_forward.17} parent=1 // pred_fallthru
      _
    // Predicated region
    $region14: #{dgcnn_point_forward.17} parent=1 // pred_check
      _
    $region15: #{dgcnn_point_forward.17} parent=1 // pred_check_branch
      %28 = sbr.rel (0) target = $region17
    $region16: #{dgcnn_point_forward.17} parent=1 // pred_region
      _
    $region17: #{dgcnn_point_forward.17} parent=1 // pred_fallthru
      _
    // Predicated region
    $region18: #{dgcnn_point_forward.17} parent=1 // pred_check
      _
    $region19: #{dgcnn_point_forward.17} parent=1 // pred_check_branch
      %30 = sbr.rel (0) target = $region21
    $region20: #{dgcnn_point_forward.17} parent=1 // pred_region
      _
    $region21: #{dgcnn_point_forward.17} parent=1 // pred_fallthru
      _
    // Predicated region
    $region22: #{dgcnn_point_forward.17} parent=1 // pred_check
      _
    $region23: #{dgcnn_point_forward.17} parent=1 // pred_check_branch
      %32 = sbr.rel (0) target = $region25
    $region24: #{dgcnn_point_forward.17} parent=1 // pred_region
      _
    $region25: #{dgcnn_point_forward.17} parent=1 // pred_fallthru
      _
    // Predicated region
    $region26: #{dgcnn_point_forward.17} parent=1 // pred_check
      _
    $region27: #{dgcnn_point_forward.17} parent=1 // pred_check_branch
      %34 = sbr.rel (0) target = $region29
    $region28: #{dgcnn_point_forward.17} parent=1 // pred_region
      _
    $region29: #{dgcnn_point_forward.17} parent=1 // pred_fallthru
      _
    // Predicated region
    $region30: #{dgcnn_point_forward.17} parent=1 // pred_check
      _
    $region31: #{dgcnn_point_forward.17} parent=1 // pred_check_branch
      %36 = sbr.rel (0) target = $region33
    $region32: #{dgcnn_point_forward.17} parent=1 // pred_region
      _
    $region33: #{dgcnn_point_forward.17} parent=1 // pred_fallthru
      _
    // Predicated region
    $region34: #{dgcnn_point_forward.17} parent=1 // pred_check
      _
    $region35: #{dgcnn_point_forward.17} parent=1 // pred_check_branch
      %38 = sbr.rel (0) target = $region37
    $region36: #{dgcnn_point_forward.17} parent=1 // pred_region
      _
    $region37: #{dgcnn_point_forward.17} parent=1 // pred_fallthru
      _
    // Predicated region
    $region38: #{dgcnn_point_forward.17} parent=1 // pred_check
      _
    $region39: #{dgcnn_point_forward.17} parent=1 // pred_check_branch
      %40 = sbr.rel (0) target = $region41
    $region40: #{dgcnn_point_forward.17} parent=1 // pred_region
      _
    $region41: #{dgcnn_point_forward.17} parent=1 // pred_fallthru
      _
    // Predicated region
    $region42: #{dgcnn_point_forward.17} parent=1 // pred_check
      _
    $region43: #{dgcnn_point_forward.17} parent=1 // pred_check_branch
      %42 = sbr.rel (0) target = $region45
    $region44: #{dgcnn_point_forward.17} parent=1 // pred_region
      _
    $region45: #{dgcnn_point_forward.17} parent=1 // pred_fallthru
      _
    // Predicated region
    $region46: #{dgcnn_point_forward.17} parent=1 // pred_check
      _
    $region47: #{dgcnn_point_forward.17} parent=1 // pred_check_branch
      %44 = sbr.rel (0) target = $region49
    $region48: #{dgcnn_point_forward.17} parent=1 // pred_region
      _
    $region49: #{dgcnn_point_forward.17} parent=1 // pred_fallthru
      _
    // Predicated region
    $region50: #{dgcnn_point_forward.17} parent=1 // pred_check
      _
    $region51: #{dgcnn_point_forward.17} parent=1 // pred_check_branch
      %46 = sbr.rel (0) target = $region53
    $region52: #{dgcnn_point_forward.17} parent=1 // pred_region
      _
    $region53: #{dgcnn_point_forward.17} parent=1 // pred_fallthru
      _
    // Predicated region
    $region54: #{dgcnn_point_forward.17} parent=1 // pred_check
      _
    $region55: #{dgcnn_point_forward.17} parent=1 // pred_check_branch
      %48 = sbr.rel (0) target = $region57
    $region56: #{dgcnn_point_forward.17} parent=1 // pred_region
      _
    $region57: #{dgcnn_point_forward.17} parent=1 // pred_fallthru
      _
    // Predicated region
    $region58: #{dgcnn_point_forward.17} parent=1 // pred_check
      _
    $region59: #{dgcnn_point_forward.17} parent=1 // pred_check_branch
      %50 = sbr.rel (0) target = $region61
    $region60: #{dgcnn_point_forward.17} parent=1 // pred_region
      _
    $region61: #{dgcnn_point_forward.17} parent=1 // pred_fallthru
      _
    %v52 = vld [vmem:[%s0] sm:$0xff]
    %v53 = vld [vmem:[%s0 + $0x8] sm:$0xff]
    %v54 = vld [vmem:[%s0 + $0x10] sm:$0xff]
    %v55 = vld [vmem:[%s0 + $0x18] sm:$0xff]
    %v56 = vpack.c.bf16 %v53, %v52
    %v57 = vpack.c.bf16 %v55, %v54
    %v58 = vld [vmem:[%s4] sm:$0xff]
    %v59 = vld [vmem:[%s4 + $0x8] sm:$0xff]
    %v60 = vld [vmem:[%s4 + $0x10] sm:$0xff]
    %v61 = vld [vmem:[%s4 + $0x18] sm:$0xff]
    %v62 = vld [vmem:[%s4 + $0x20] sm:$0xff]
    %v63 = vld [vmem:[%s4 + $0x28] sm:$0xff]
    %v64 = vld [vmem:[%s4 + $0x30] sm:$0xff]
    %v65 = vld [vmem:[%s4 + $0x38] sm:$0xff]
    %v66 = vld [vmem:[%s4 + $0x40] sm:$0xff]
    %v67 = vld [vmem:[%s4 + $0x48] sm:$0xff]
    %v68 = vld [vmem:[%s4 + $0x50] sm:$0xff]
    %v69 = vld [vmem:[%s4 + $0x58] sm:$0xff]
    %v70 = vld [vmem:[%s4 + $0x60] sm:$0xff]
    %v71 = vld [vmem:[%s4 + $0x68] sm:$0xff]
    %v72 = vld [vmem:[%s4 + $0x70] sm:$0xff]
    %v73 = vld [vmem:[%s4 + $0x78] sm:$0xff]
    %v74 = vld [vmem:[%s4 + $0x80] sm:$0xff]
    %v75 = vld [vmem:[%s4 + $0x88] sm:$0xff]
    %v76 = vld [vmem:[%s4 + $0x90] sm:$0xff]
    %v77 = vld [vmem:[%s4 + $0x98] sm:$0xff]
    %v78 = vld [vmem:[%s4 + $0xa0] sm:$0xff]
    %v79 = vld [vmem:[%s4 + $0xa8] sm:$0xff]
    %v80 = vld [vmem:[%s4 + $0xb0] sm:$0xff]
    %v81 = vld [vmem:[%s4 + $0xb8] sm:$0xff]
    %v82 = vld [vmem:[%s4 + $0xc0] sm:$0xff]
    %v83 = vld [vmem:[%s4 + $0xc8] sm:$0xff]
    %v84 = vld [vmem:[%s4 + $0xd0] sm:$0xff]
    %v85 = vld [vmem:[%s4 + $0xd8] sm:$0xff]
    %v86 = vld [vmem:[%s4 + $0xe0] sm:$0xff]
    %v87 = vld [vmem:[%s4 + $0xe8] sm:$0xff]
    %v88 = vld [vmem:[%s4 + $0xf0] sm:$0xff]
    %v89 = vld [vmem:[%s4 + $0xf8] sm:$0xff]
    %v90 = vld [vmem:[%s1] sm:$0xff]
    %v91 = vld [vmem:[%s1 + $0x8] sm:$0xff]
    %v92 = vld [vmem:[%s1 + $0x10] sm:$0xff]
    %v93 = vld [vmem:[%s1 + $0x18] sm:$0xff]
    %v94 = vpack.c.bf16 %v91, %v90
    %v95 = vpack.c.bf16 %v93, %v92
    %v96 = vld [vmem:[%s5] sm:$0xff]
    %v97 = vld [vmem:[%s5 + $0x8] sm:$0xff]
    %v98 = vld [vmem:[%s5 + $0x10] sm:$0xff]
    %v99 = vld [vmem:[%s5 + $0x18] sm:$0xff]
    %v100 = vld [vmem:[%s5 + $0x20] sm:$0xff]
    %v101 = vld [vmem:[%s5 + $0x28] sm:$0xff]
    %v102 = vld [vmem:[%s5 + $0x30] sm:$0xff]
    %v103 = vld [vmem:[%s5 + $0x38] sm:$0xff]
    %v104 = vld [vmem:[%s5 + $0x40] sm:$0xff]
    %v105 = vld [vmem:[%s5 + $0x48] sm:$0xff]
    %v106 = vld [vmem:[%s5 + $0x50] sm:$0xff]
    %v107 = vld [vmem:[%s5 + $0x58] sm:$0xff]
    %v108 = vld [vmem:[%s5 + $0x60] sm:$0xff]
    %v109 = vld [vmem:[%s5 + $0x68] sm:$0xff]
    %v110 = vld [vmem:[%s5 + $0x70] sm:$0xff]
    %v111 = vld [vmem:[%s5 + $0x78] sm:$0xff]
    %v112 = vld [vmem:[%s5 + $0x80] sm:$0xff]
    %v113 = vld [vmem:[%s5 + $0x88] sm:$0xff]
    %v114 = vld [vmem:[%s5 + $0x90] sm:$0xff]
    %v115 = vld [vmem:[%s5 + $0x98] sm:$0xff]
    %v116 = vld [vmem:[%s5 + $0xa0] sm:$0xff]
    %v117 = vld [vmem:[%s5 + $0xa8] sm:$0xff]
    %v118 = vld [vmem:[%s5 + $0xb0] sm:$0xff]
    %v119 = vld [vmem:[%s5 + $0xb8] sm:$0xff]
    %v120 = vld [vmem:[%s5 + $0xc0] sm:$0xff]
    %v121 = vld [vmem:[%s5 + $0xc8] sm:$0xff]
    %v122 = vld [vmem:[%s5 + $0xd0] sm:$0xff]
    %v123 = vld [vmem:[%s5 + $0xd8] sm:$0xff]
    %v124 = vld [vmem:[%s5 + $0xe0] sm:$0xff]
    %v125 = vld [vmem:[%s5 + $0xe8] sm:$0xff]
    %v126 = vld [vmem:[%s5 + $0xf0] sm:$0xff]
    %v127 = vld [vmem:[%s5 + $0xf8] sm:$0xff]
    %v160 = vunpack.c.l.b16 %v96
    %v161 = vunpack.c.h.b16 %v96
    %v162 = vunpack.c.l.b16 %v97
    %v163 = vunpack.c.h.b16 %v97
    %v164 = vunpack.c.l.b16 %v98
    %v165 = vunpack.c.h.b16 %v98
    %v166 = vunpack.c.l.b16 %v99
    %v167 = vunpack.c.h.b16 %v99
    %v168 = vunpack.c.l.b16 %v100
    %v169 = vunpack.c.h.b16 %v100
    %v170 = vunpack.c.l.b16 %v101
    %v171 = vunpack.c.h.b16 %v101
    %v172 = vunpack.c.l.b16 %v102
    %v173 = vunpack.c.h.b16 %v102
    %v174 = vunpack.c.l.b16 %v103
    %v175 = vunpack.c.h.b16 %v103
    %v176 = vunpack.c.l.b16 %v104
    %v177 = vunpack.c.h.b16 %v104
    %v178 = vunpack.c.l.b16 %v105
    %v179 = vunpack.c.h.b16 %v105
    %v180 = vunpack.c.l.b16 %v106
    %v181 = vunpack.c.h.b16 %v106
    %v182 = vunpack.c.l.b16 %v107
    %v183 = vunpack.c.h.b16 %v107
    %v184 = vunpack.c.l.b16 %v108
    %v185 = vunpack.c.h.b16 %v108
    %v186 = vunpack.c.l.b16 %v109
    %v187 = vunpack.c.h.b16 %v109
    %v188 = vunpack.c.l.b16 %v110
    %v189 = vunpack.c.h.b16 %v110
    %v190 = vunpack.c.l.b16 %v111
    %v191 = vunpack.c.h.b16 %v111
    %v192 = vunpack.c.l.b16 %v112
    %v193 = vunpack.c.h.b16 %v112
    %v194 = vunpack.c.l.b16 %v113
    %v195 = vunpack.c.h.b16 %v113
    %v196 = vunpack.c.l.b16 %v114
    %v197 = vunpack.c.h.b16 %v114
    %v198 = vunpack.c.l.b16 %v115
    %v199 = vunpack.c.h.b16 %v115
    %v200 = vunpack.c.l.b16 %v116
    %v201 = vunpack.c.h.b16 %v116
    %v202 = vunpack.c.l.b16 %v117
    %v203 = vunpack.c.h.b16 %v117
    %v204 = vunpack.c.l.b16 %v118
    %v205 = vunpack.c.h.b16 %v118
    %v206 = vunpack.c.l.b16 %v119
    %v207 = vunpack.c.h.b16 %v119
    %v208 = vunpack.c.l.b16 %v120
    %v209 = vunpack.c.h.b16 %v120
    %v210 = vunpack.c.l.b16 %v121
    %v211 = vunpack.c.h.b16 %v121
    %v212 = vunpack.c.l.b16 %v122
    %v213 = vunpack.c.h.b16 %v122
    %v214 = vunpack.c.l.b16 %v123
    %v215 = vunpack.c.h.b16 %v123
    %v216 = vunpack.c.l.b16 %v124
    %v217 = vunpack.c.h.b16 %v124
    %v218 = vunpack.c.l.b16 %v125
    %v219 = vunpack.c.h.b16 %v125
    %v220 = vunpack.c.l.b16 %v126
    %v221 = vunpack.c.h.b16 %v126
    %v222 = vunpack.c.l.b16 %v127
    %v223 = vunpack.c.h.b16 %v127
    %v224 = vpack.c.b16 %v168, %v160
    %v225 = vpack.c.b16 %v169, %v161
    %v226 = vpack.c.b16 %v170, %v162
    %v227 = vpack.c.b16 %v171, %v163
    %v228 = vpack.c.b16 %v172, %v164
    %v229 = vpack.c.b16 %v173, %v165
    %v230 = vpack.c.b16 %v174, %v166
    %v231 = vpack.c.b16 %v175, %v167
    %v232 = vpack.c.b16 %v184, %v176
    %v233 = vpack.c.b16 %v185, %v177
    %v234 = vpack.c.b16 %v186, %v178
    %v235 = vpack.c.b16 %v187, %v179
    %v236 = vpack.c.b16 %v188, %v180
    %v237 = vpack.c.b16 %v189, %v181
    %v238 = vpack.c.b16 %v190, %v182
    %v239 = vpack.c.b16 %v191, %v183
    %v240 = vpack.c.b16 %v200, %v192
    %v241 = vpack.c.b16 %v201, %v193
    %v242 = vpack.c.b16 %v202, %v194
    %v243 = vpack.c.b16 %v203, %v195
    %v244 = vpack.c.b16 %v204, %v196
    %v245 = vpack.c.b16 %v205, %v197
    %v246 = vpack.c.b16 %v206, %v198
    %v247 = vpack.c.b16 %v207, %v199
    %v248 = vpack.c.b16 %v216, %v208
    %v249 = vpack.c.b16 %v217, %v209
    %v250 = vpack.c.b16 %v218, %v210
    %v251 = vpack.c.b16 %v219, %v211
    %v252 = vpack.c.b16 %v220, %v212
    %v253 = vpack.c.b16 %v221, %v213
    %v254 = vpack.c.b16 %v222, %v214
    %v255 = vpack.c.b16 %v223, %v215
    %vm288 = vcmask 523264
    %v290 = vsel %vm288, %v94, 0
    %v293 = vsel %vm288, %v95, 0
    %295 = vmatprep.subr.bf16.mxu0 %v225
    %296 = vmatpush1.bf16.msra.mxu0 %v224
    %297 = vmatprep.subr.bf16.mxu0 %v233
    %298 = vmatpush1.bf16.msra.mxu0 %v232
    %299 = vmatprep.subr.bf16.mxu0 %v241
    %300 = vmatpush1.bf16.msra.mxu0 %v240
    %301 = vmatprep.subr.bf16.mxu0 %v249
    %302 = vmatpush1.bf16.msra.mxu0 %v248
    %303 = vmatprep.subr.bf16.mxu0 0
    %304 = vmatpush1.bf16.msra.mxu0 0
    %305 = vmatprep.subr.bf16.mxu0 0
    %306 = vmatpush1.bf16.msra.mxu0 0
    %307 = vmatprep.subr.bf16.mxu0 0
    %308 = vmatpush1.bf16.msra.mxu0 0
    %309 = vmatprep.subr.bf16.mxu0 0
    %310 = vmatpush1.bf16.msra.mxu0 0
    %311 = vmatprep.subr.bf16.mxu0 0
    %312 = vmatpush1.bf16.msra.mxu0 0
    %313 = vmatprep.subr.bf16.mxu0 0
    %314 = vmatpush1.bf16.msra.mxu0 0
    %315 = vmatprep.subr.bf16.mxu0 0
    %316 = vmatpush1.bf16.msra.mxu0 0
    %317 = vmatprep.subr.bf16.mxu0 0
    %318 = vmatpush1.bf16.msra.mxu0 0
    %319 = vmatprep.subr.bf16.mxu0 0
    %320 = vmatpush1.bf16.msra.mxu0 0
    %321 = vmatprep.subr.bf16.mxu0 0
    %322 = vmatpush1.bf16.msra.mxu0 0
    %323 = vmatprep.subr.bf16.mxu0 0
    %324 = vmatpush1.bf16.msra.mxu0 0
    %325 = vmatprep.subr.bf16.mxu0 0
    %326 = vmatpush1.bf16.msra.mxu0 0
    %327 = vmatprep.mubr.bf16.mxu0 0
    %328 = vmatmul.mubr.bf16.gmra.mrb[0].mxu0 %v290
    %v329 = vpop.f32.mrb[0].mxu0
    %v330 = vadd.f32 0.0, %v329
    %v331 = vpop.f32.mrb[0].mxu0
    %v332 = vadd.f32 0.0, %v331
    %v333 = vpop.f32.mrb[0].mxu0
    %v334 = vadd.f32 0.0, %v333
    %v335 = vpop.f32.mrb[0].mxu0
    %v336 = vadd.f32 0.0, %v335
    %337 = vmatprep.mubr.bf16.mxu0 0
    %338 = vmatmul.mubr.bf16.gmra.mrb[0].mxu0 %v293
    %v339 = vpop.f32.mrb[0].mxu0
    %v340 = vadd.f32 0.0, %v339
    %v341 = vpop.f32.mrb[0].mxu0
    %v342 = vadd.f32 0.0, %v341
    %v343 = vpop.f32.mrb[0].mxu0
    %v344 = vadd.f32 0.0, %v343
    %v345 = vpop.f32.mrb[0].mxu0
    %v346 = vadd.f32 0.0, %v345
    %347 = vdwg.mxu0
    %348 = vmatprep.subr.bf16.mxu0 %v227
    %349 = vmatpush1.bf16.msra.mxu0 %v226
    %350 = vmatprep.subr.bf16.mxu0 %v235
    %351 = vmatpush1.bf16.msra.mxu0 %v234
    %352 = vmatprep.subr.bf16.mxu0 %v243
    %353 = vmatpush1.bf16.msra.mxu0 %v242
    %354 = vmatprep.subr.bf16.mxu0 %v251
    %355 = vmatpush1.bf16.msra.mxu0 %v250
    %356 = vmatprep.subr.bf16.mxu0 0
    %357 = vmatpush1.bf16.msra.mxu0 0
    %358 = vmatprep.subr.bf16.mxu0 0
    %359 = vmatpush1.bf16.msra.mxu0 0
    %360 = vmatprep.subr.bf16.mxu0 0
    %361 = vmatpush1.bf16.msra.mxu0 0
    %362 = vmatprep.subr.bf16.mxu0 0
    %363 = vmatpush1.bf16.msra.mxu0 0
    %364 = vmatprep.subr.bf16.mxu0 0
    %365 = vmatpush1.bf16.msra.mxu0 0
    %366 = vmatprep.subr.bf16.mxu0 0
    %367 = vmatpush1.bf16.msra.mxu0 0
    %368 = vmatprep.subr.bf16.mxu0 0
    %369 = vmatpush1.bf16.msra.mxu0 0
    %370 = vmatprep.subr.bf16.mxu0 0
    %371 = vmatpush1.bf16.msra.mxu0 0
    %372 = vmatprep.subr.bf16.mxu0 0
    %373 = vmatpush1.bf16.msra.mxu0 0
    %374 = vmatprep.subr.bf16.mxu0 0
    %375 = vmatpush1.bf16.msra.mxu0 0
    %376 = vmatprep.subr.bf16.mxu0 0
    %377 = vmatpush1.bf16.msra.mxu0 0
    %378 = vmatprep.subr.bf16.mxu0 0
    %379 = vmatpush1.bf16.msra.mxu0 0
    %380 = vmatprep.mubr.bf16.mxu0 0
    %381 = vmatmul.mubr.bf16.gmra.mrb[0].mxu0 %v290
    %v382 = vpop.f32.mrb[0].mxu0
    %v383 = vadd.f32 0.0, %v382
    %v384 = vpop.f32.mrb[0].mxu0
    %v385 = vadd.f32 0.0, %v384
    %v386 = vpop.f32.mrb[0].mxu0
    %v387 = vadd.f32 0.0, %v386
    %v388 = vpop.f32.mrb[0].mxu0
    %v389 = vadd.f32 0.0, %v388
    %390 = vmatprep.mubr.bf16.mxu0 0
    %391 = vmatmul.mubr.bf16.gmra.mrb[0].mxu0 %v293
    %v392 = vpop.f32.mrb[0].mxu0
    %v393 = vadd.f32 0.0, %v392
    %v394 = vpop.f32.mrb[0].mxu0
    %v395 = vadd.f32 0.0, %v394
    %v396 = vpop.f32.mrb[0].mxu0
    %v397 = vadd.f32 0.0, %v396
    %v398 = vpop.f32.mrb[0].mxu0
    %v399 = vadd.f32 0.0, %v398
    %400 = vdwg.mxu0
    %401 = vmatprep.subr.bf16.mxu0 %v229
    %402 = vmatpush1.bf16.msra.mxu0 %v228
    %403 = vmatprep.subr.bf16.mxu0 %v237
    %404 = vmatpush1.bf16.msra.mxu0 %v236
    %405 = vmatprep.subr.bf16.mxu0 %v245
    %406 = vmatpush1.bf16.msra.mxu0 %v244
    %407 = vmatprep.subr.bf16.mxu0 %v253
    %408 = vmatpush1.bf16.msra.mxu0 %v252
    %409 = vmatprep.subr.bf16.mxu0 0
    %410 = vmatpush1.bf16.msra.mxu0 0
    %411 = vmatprep.subr.bf16.mxu0 0
    %412 = vmatpush1.bf16.msra.mxu0 0
    %413 = vmatprep.subr.bf16.mxu0 0
    %414 = vmatpush1.bf16.msra.mxu0 0
    %415 = vmatprep.subr.bf16.mxu0 0
    %416 = vmatpush1.bf16.msra.mxu0 0
    %417 = vmatprep.subr.bf16.mxu0 0
    %418 = vmatpush1.bf16.msra.mxu0 0
    %419 = vmatprep.subr.bf16.mxu0 0
    %420 = vmatpush1.bf16.msra.mxu0 0
    %421 = vmatprep.subr.bf16.mxu0 0
    %422 = vmatpush1.bf16.msra.mxu0 0
    %423 = vmatprep.subr.bf16.mxu0 0
    %424 = vmatpush1.bf16.msra.mxu0 0
    %425 = vmatprep.subr.bf16.mxu0 0
    %426 = vmatpush1.bf16.msra.mxu0 0
    %427 = vmatprep.subr.bf16.mxu0 0
    %428 = vmatpush1.bf16.msra.mxu0 0
    %429 = vmatprep.subr.bf16.mxu0 0
    %430 = vmatpush1.bf16.msra.mxu0 0
    %431 = vmatprep.subr.bf16.mxu0 0
    %432 = vmatpush1.bf16.msra.mxu0 0
    %433 = vmatprep.mubr.bf16.mxu0 0
    %434 = vmatmul.mubr.bf16.gmra.mrb[0].mxu0 %v290
    %v435 = vpop.f32.mrb[0].mxu0
    %v436 = vadd.f32 0.0, %v435
    %v437 = vpop.f32.mrb[0].mxu0
    %v438 = vadd.f32 0.0, %v437
    %v439 = vpop.f32.mrb[0].mxu0
    %v440 = vadd.f32 0.0, %v439
    %v441 = vpop.f32.mrb[0].mxu0
    %v442 = vadd.f32 0.0, %v441
    %443 = vmatprep.mubr.bf16.mxu0 0
    %444 = vmatmul.mubr.bf16.gmra.mrb[0].mxu0 %v293
    %v445 = vpop.f32.mrb[0].mxu0
    %v446 = vadd.f32 0.0, %v445
    %v447 = vpop.f32.mrb[0].mxu0
    %v448 = vadd.f32 0.0, %v447
    %v449 = vpop.f32.mrb[0].mxu0
    %v450 = vadd.f32 0.0, %v449
    %v451 = vpop.f32.mrb[0].mxu0
    %v452 = vadd.f32 0.0, %v451
    %453 = vdwg.mxu0
    %454 = vmatprep.subr.bf16.mxu0 %v231
    %455 = vmatpush1.bf16.msra.mxu0 %v230
    %456 = vmatprep.subr.bf16.mxu0 %v239
    %457 = vmatpush1.bf16.msra.mxu0 %v238
    %458 = vmatprep.subr.bf16.mxu0 %v247
    %459 = vmatpush1.bf16.msra.mxu0 %v246
    %460 = vmatprep.subr.bf16.mxu0 %v255
    %461 = vmatpush1.bf16.msra.mxu0 %v254
    %462 = vmatprep.subr.bf16.mxu0 0
    %463 = vmatpush1.bf16.msra.mxu0 0
    %464 = vmatprep.subr.bf16.mxu0 0
    %465 = vmatpush1.bf16.msra.mxu0 0
    %466 = vmatprep.subr.bf16.mxu0 0
    %467 = vmatpush1.bf16.msra.mxu0 0
    %468 = vmatprep.subr.bf16.mxu0 0
    %469 = vmatpush1.bf16.msra.mxu0 0
    %470 = vmatprep.subr.bf16.mxu0 0
    %471 = vmatpush1.bf16.msra.mxu0 0
    %472 = vmatprep.subr.bf16.mxu0 0
    %473 = vmatpush1.bf16.msra.mxu0 0
    %474 = vmatprep.subr.bf16.mxu0 0
    %475 = vmatpush1.bf16.msra.mxu0 0
    %476 = vmatprep.subr.bf16.mxu0 0
    %477 = vmatpush1.bf16.msra.mxu0 0
    %478 = vmatprep.subr.bf16.mxu0 0
    %479 = vmatpush1.bf16.msra.mxu0 0
    %480 = vmatprep.subr.bf16.mxu0 0
    %481 = vmatpush1.bf16.msra.mxu0 0
    %482 = vmatprep.subr.bf16.mxu0 0
    %483 = vmatpush1.bf16.msra.mxu0 0
    %484 = vmatprep.subr.bf16.mxu0 0
    %485 = vmatpush1.bf16.msra.mxu0 0
    %486 = vmatprep.mubr.bf16.mxu0 0
    %487 = vmatmul.mubr.bf16.gmra.mrb[0].mxu0 %v290
    %v488 = vpop.f32.mrb[0].mxu0
    %v489 = vadd.f32 0.0, %v488
    %v490 = vpop.f32.mrb[0].mxu0
    %v491 = vadd.f32 0.0, %v490
    %v492 = vpop.f32.mrb[0].mxu0
    %v493 = vadd.f32 0.0, %v492
    %v494 = vpop.f32.mrb[0].mxu0
    %v495 = vadd.f32 0.0, %v494
    %496 = vmatprep.mubr.bf16.mxu0 0
    %497 = vmatmul.mubr.bf16.gmra.mrb[0].mxu0 %v293
    %v498 = vpop.f32.mrb[0].mxu0
    %v499 = vadd.f32 0.0, %v498
    %v500 = vpop.f32.mrb[0].mxu0
    %v501 = vadd.f32 0.0, %v500
    %v502 = vpop.f32.mrb[0].mxu0
    %v503 = vadd.f32 0.0, %v502
    %v504 = vpop.f32.mrb[0].mxu0
    %v505 = vadd.f32 0.0, %v504
    %506 = vdwg.mxu0
    %v539 = vunpack.c.l.b16 %v58
    %v540 = vunpack.c.h.b16 %v58
    %v541 = vunpack.c.l.b16 %v59
    %v542 = vunpack.c.h.b16 %v59
    %v543 = vunpack.c.l.b16 %v60
    %v544 = vunpack.c.h.b16 %v60
    %v545 = vunpack.c.l.b16 %v61
    %v546 = vunpack.c.h.b16 %v61
    %v547 = vunpack.c.l.b16 %v62
    %v548 = vunpack.c.h.b16 %v62
    %v549 = vunpack.c.l.b16 %v63
    %v550 = vunpack.c.h.b16 %v63
    %v551 = vunpack.c.l.b16 %v64
    %v552 = vunpack.c.h.b16 %v64
    %v553 = vunpack.c.l.b16 %v65
    %v554 = vunpack.c.h.b16 %v65
    %v555 = vunpack.c.l.b16 %v66
    %v556 = vunpack.c.h.b16 %v66
    %v557 = vunpack.c.l.b16 %v67
    %v558 = vunpack.c.h.b16 %v67
    %v559 = vunpack.c.l.b16 %v68
    %v560 = vunpack.c.h.b16 %v68
    %v561 = vunpack.c.l.b16 %v69
    %v562 = vunpack.c.h.b16 %v69
    %v563 = vunpack.c.l.b16 %v70
    %v564 = vunpack.c.h.b16 %v70
    %v565 = vunpack.c.l.b16 %v71
    %v566 = vunpack.c.h.b16 %v71
    %v567 = vunpack.c.l.b16 %v72
    %v568 = vunpack.c.h.b16 %v72
    %v569 = vunpack.c.l.b16 %v73
    %v570 = vunpack.c.h.b16 %v73
    %v571 = vunpack.c.l.b16 %v74
    %v572 = vunpack.c.h.b16 %v74
    %v573 = vunpack.c.l.b16 %v75
    %v574 = vunpack.c.h.b16 %v75
    %v575 = vunpack.c.l.b16 %v76
    %v576 = vunpack.c.h.b16 %v76
    %v577 = vunpack.c.l.b16 %v77
    %v578 = vunpack.c.h.b16 %v77
    %v579 = vunpack.c.l.b16 %v78
    %v580 = vunpack.c.h.b16 %v78
    %v581 = vunpack.c.l.b16 %v79
    %v582 = vunpack.c.h.b16 %v79
    %v583 = vunpack.c.l.b16 %v80
    %v584 = vunpack.c.h.b16 %v80
    %v585 = vunpack.c.l.b16 %v81
    %v586 = vunpack.c.h.b16 %v81
    %v587 = vunpack.c.l.b16 %v82
    %v588 = vunpack.c.h.b16 %v82
    %v589 = vunpack.c.l.b16 %v83
    %v590 = vunpack.c.h.b16 %v83
    %v591 = vunpack.c.l.b16 %v84
    %v592 = vunpack.c.h.b16 %v84
    %v593 = vunpack.c.l.b16 %v85
    %v594 = vunpack.c.h.b16 %v85
    %v595 = vunpack.c.l.b16 %v86
    %v596 = vunpack.c.h.b16 %v86
    %v597 = vunpack.c.l.b16 %v87
    %v598 = vunpack.c.h.b16 %v87
    %v599 = vunpack.c.l.b16 %v88
    %v600 = vunpack.c.h.b16 %v88
    %v601 = vunpack.c.l.b16 %v89
    %v602 = vunpack.c.h.b16 %v89
    %v603 = vpack.c.b16 %v547, %v539
    %v604 = vpack.c.b16 %v548, %v540
    %v605 = vpack.c.b16 %v549, %v541
    %v606 = vpack.c.b16 %v550, %v542
    %v607 = vpack.c.b16 %v551, %v543
    %v608 = vpack.c.b16 %v552, %v544
    %v609 = vpack.c.b16 %v553, %v545
    %v610 = vpack.c.b16 %v554, %v546
    %v611 = vpack.c.b16 %v563, %v555
    %v612 = vpack.c.b16 %v564, %v556
    %v613 = vpack.c.b16 %v565, %v557
    %v614 = vpack.c.b16 %v566, %v558
    %v615 = vpack.c.b16 %v567, %v559
    %v616 = vpack.c.b16 %v568, %v560
    %v617 = vpack.c.b16 %v569, %v561
    %v618 = vpack.c.b16 %v570, %v562
    %v619 = vpack.c.b16 %v579, %v571
    %v620 = vpack.c.b16 %v580, %v572
    %v621 = vpack.c.b16 %v581, %v573
    %v622 = vpack.c.b16 %v582, %v574
    %v623 = vpack.c.b16 %v583, %v575
    %v624 = vpack.c.b16 %v584, %v576
    %v625 = vpack.c.b16 %v585, %v577
    %v626 = vpack.c.b16 %v586, %v578
    %v627 = vpack.c.b16 %v595, %v587
    %v628 = vpack.c.b16 %v596, %v588
    %v629 = vpack.c.b16 %v597, %v589
    %v630 = vpack.c.b16 %v598, %v590
    %v631 = vpack.c.b16 %v599, %v591
    %v632 = vpack.c.b16 %v600, %v592
    %v633 = vpack.c.b16 %v601, %v593
    %v634 = vpack.c.b16 %v602, %v594
    %v668 = vsel %vm288, %v56, 0
    %v671 = vsel %vm288, %v57, 0
    %673 = vmatprep.subr.bf16.mxu0 %v604
    %674 = vmatpush1.bf16.msra.mxu0 %v603
    %675 = vmatprep.subr.bf16.mxu0 %v612
    %676 = vmatpush1.bf16.msra.mxu0 %v611
    %677 = vmatprep.subr.bf16.mxu0 %v620
    %678 = vmatpush1.bf16.msra.mxu0 %v619
    %679 = vmatprep.subr.bf16.mxu0 %v628
    %680 = vmatpush1.bf16.msra.mxu0 %v627
    %681 = vmatprep.subr.bf16.mxu0 0
    %682 = vmatpush1.bf16.msra.mxu0 0
    %683 = vmatprep.subr.bf16.mxu0 0
    %684 = vmatpush1.bf16.msra.mxu0 0
    %685 = vmatprep.subr.bf16.mxu0 0
    %686 = vmatpush1.bf16.msra.mxu0 0
    %687 = vmatprep.subr.bf16.mxu0 0
    %688 = vmatpush1.bf16.msra.mxu0 0
    %689 = vmatprep.subr.bf16.mxu0 0
    %690 = vmatpush1.bf16.msra.mxu0 0
    %691 = vmatprep.subr.bf16.mxu0 0
    %692 = vmatpush1.bf16.msra.mxu0 0
    %693 = vmatprep.subr.bf16.mxu0 0
    %694 = vmatpush1.bf16.msra.mxu0 0
    %695 = vmatprep.subr.bf16.mxu0 0
    %696 = vmatpush1.bf16.msra.mxu0 0
    %697 = vmatprep.subr.bf16.mxu0 0
    %698 = vmatpush1.bf16.msra.mxu0 0
    %699 = vmatprep.subr.bf16.mxu0 0
    %700 = vmatpush1.bf16.msra.mxu0 0
    %701 = vmatprep.subr.bf16.mxu0 0
    %702 = vmatpush1.bf16.msra.mxu0 0
    %703 = vmatprep.subr.bf16.mxu0 0
    %704 = vmatpush1.bf16.msra.mxu0 0
    %705 = vmatprep.mubr.bf16.mxu0 0
    %706 = vmatmul.mubr.bf16.gmra.mrb[0].mxu0 %v668
    %v707 = vpop.f32.mrb[0].mxu0
    %v708 = vadd.f32 %v330, %v707
    %v709 = vpop.f32.mrb[0].mxu0
    %v710 = vadd.f32 %v332, %v709
    %v711 = vpop.f32.mrb[0].mxu0
    %v712 = vadd.f32 %v334, %v711
    %v713 = vpop.f32.mrb[0].mxu0
    %v714 = vadd.f32 %v336, %v713
    %715 = vmatprep.mubr.bf16.mxu0 0
    %716 = vmatmul.mubr.bf16.gmra.mrb[0].mxu0 %v671
    %v717 = vpop.f32.mrb[0].mxu0
    %v718 = vadd.f32 %v340, %v717
    %v719 = vpop.f32.mrb[0].mxu0
    %v720 = vadd.f32 %v342, %v719
    %v721 = vpop.f32.mrb[0].mxu0
    %v722 = vadd.f32 %v344, %v721
    %v723 = vpop.f32.mrb[0].mxu0
    %v724 = vadd.f32 %v346, %v723
    %725 = vdwg.mxu0
    %726 = vmatprep.subr.bf16.mxu0 %v606
    %727 = vmatpush1.bf16.msra.mxu0 %v605
    %728 = vmatprep.subr.bf16.mxu0 %v614
    %729 = vmatpush1.bf16.msra.mxu0 %v613
    %730 = vmatprep.subr.bf16.mxu0 %v622
    %731 = vmatpush1.bf16.msra.mxu0 %v621
    %732 = vmatprep.subr.bf16.mxu0 %v630
    %733 = vmatpush1.bf16.msra.mxu0 %v629
    %734 = vmatprep.subr.bf16.mxu0 0
    %735 = vmatpush1.bf16.msra.mxu0 0
    %736 = vmatprep.subr.bf16.mxu0 0
    %737 = vmatpush1.bf16.msra.mxu0 0
    %738 = vmatprep.subr.bf16.mxu0 0
    %739 = vmatpush1.bf16.msra.mxu0 0
    %740 = vmatprep.subr.bf16.mxu0 0
    %741 = vmatpush1.bf16.msra.mxu0 0
    %742 = vmatprep.subr.bf16.mxu0 0
    %743 = vmatpush1.bf16.msra.mxu0 0
    %744 = vmatprep.subr.bf16.mxu0 0
    %745 = vmatpush1.bf16.msra.mxu0 0
    %746 = vmatprep.subr.bf16.mxu0 0
    %747 = vmatpush1.bf16.msra.mxu0 0
    %748 = vmatprep.subr.bf16.mxu0 0
    %749 = vmatpush1.bf16.msra.mxu0 0
    %750 = vmatprep.subr.bf16.mxu0 0
    %751 = vmatpush1.bf16.msra.mxu0 0
    %752 = vmatprep.subr.bf16.mxu0 0
    %753 = vmatpush1.bf16.msra.mxu0 0
    %754 = vmatprep.subr.bf16.mxu0 0
    %755 = vmatpush1.bf16.msra.mxu0 0
    %756 = vmatprep.subr.bf16.mxu0 0
    %757 = vmatpush1.bf16.msra.mxu0 0
    %758 = vmatprep.mubr.bf16.mxu0 0
    %759 = vmatmul.mubr.bf16.gmra.mrb[0].mxu0 %v668
    %v760 = vpop.f32.mrb[0].mxu0
    %v761 = vadd.f32 %v383, %v760
    %v762 = vpop.f32.mrb[0].mxu0
    %v763 = vadd.f32 %v385, %v762
    %v764 = vpop.f32.mrb[0].mxu0
    %v765 = vadd.f32 %v387, %v764
    %v766 = vpop.f32.mrb[0].mxu0
    %v767 = vadd.f32 %v389, %v766
    %768 = vmatprep.mubr.bf16.mxu0 0
    %769 = vmatmul.mubr.bf16.gmra.mrb[0].mxu0 %v671
    %v770 = vpop.f32.mrb[0].mxu0
    %v771 = vadd.f32 %v393, %v770
    %v772 = vpop.f32.mrb[0].mxu0
    %v773 = vadd.f32 %v395, %v772
    %v774 = vpop.f32.mrb[0].mxu0
    %v775 = vadd.f32 %v397, %v774
    %v776 = vpop.f32.mrb[0].mxu0
    %v777 = vadd.f32 %v399, %v776
    %778 = vdwg.mxu0
    %779 = vmatprep.subr.bf16.mxu0 %v608
    %780 = vmatpush1.bf16.msra.mxu0 %v607
    %781 = vmatprep.subr.bf16.mxu0 %v616
    %782 = vmatpush1.bf16.msra.mxu0 %v615
    %783 = vmatprep.subr.bf16.mxu0 %v624
    %784 = vmatpush1.bf16.msra.mxu0 %v623
    %785 = vmatprep.subr.bf16.mxu0 %v632
    %786 = vmatpush1.bf16.msra.mxu0 %v631
    %787 = vmatprep.subr.bf16.mxu0 0
    %788 = vmatpush1.bf16.msra.mxu0 0
    %789 = vmatprep.subr.bf16.mxu0 0
    %790 = vmatpush1.bf16.msra.mxu0 0
    %791 = vmatprep.subr.bf16.mxu0 0
    %792 = vmatpush1.bf16.msra.mxu0 0
    %793 = vmatprep.subr.bf16.mxu0 0
    %794 = vmatpush1.bf16.msra.mxu0 0
    %795 = vmatprep.subr.bf16.mxu0 0
    %796 = vmatpush1.bf16.msra.mxu0 0
    %797 = vmatprep.subr.bf16.mxu0 0
    %798 = vmatpush1.bf16.msra.mxu0 0
    %799 = vmatprep.subr.bf16.mxu0 0
    %800 = vmatpush1.bf16.msra.mxu0 0
    %801 = vmatprep.subr.bf16.mxu0 0
    %802 = vmatpush1.bf16.msra.mxu0 0
    %803 = vmatprep.subr.bf16.mxu0 0
    %804 = vmatpush1.bf16.msra.mxu0 0
    %805 = vmatprep.subr.bf16.mxu0 0
    %806 = vmatpush1.bf16.msra.mxu0 0
    %807 = vmatprep.subr.bf16.mxu0 0
    %808 = vmatpush1.bf16.msra.mxu0 0
    %809 = vmatprep.subr.bf16.mxu0 0
    %810 = vmatpush1.bf16.msra.mxu0 0
    %811 = vmatprep.mubr.bf16.mxu0 0
    %812 = vmatmul.mubr.bf16.gmra.mrb[0].mxu0 %v668
    %v813 = vpop.f32.mrb[0].mxu0
    %v814 = vadd.f32 %v436, %v813
    %v815 = vpop.f32.mrb[0].mxu0
    %v816 = vadd.f32 %v438, %v815
    %v817 = vpop.f32.mrb[0].mxu0
    %v818 = vadd.f32 %v440, %v817
    %v819 = vpop.f32.mrb[0].mxu0
    %v820 = vadd.f32 %v442, %v819
    %821 = vmatprep.mubr.bf16.mxu0 0
    %822 = vmatmul.mubr.bf16.gmra.mrb[0].mxu0 %v671
    %v823 = vpop.f32.mrb[0].mxu0
    %v824 = vadd.f32 %v446, %v823
    %v825 = vpop.f32.mrb[0].mxu0
    %v826 = vadd.f32 %v448, %v825
    %v827 = vpop.f32.mrb[0].mxu0
    %v828 = vadd.f32 %v450, %v827
    %v829 = vpop.f32.mrb[0].mxu0
    %v830 = vadd.f32 %v452, %v829
    %831 = vdwg.mxu0
    %832 = vmatprep.subr.bf16.mxu0 %v610
    %833 = vmatpush1.bf16.msra.mxu0 %v609
    %834 = vmatprep.subr.bf16.mxu0 %v618
    %835 = vmatpush1.bf16.msra.mxu0 %v617
    %836 = vmatprep.subr.bf16.mxu0 %v626
    %837 = vmatpush1.bf16.msra.mxu0 %v625
    %838 = vmatprep.subr.bf16.mxu0 %v634
    %839 = vmatpush1.bf16.msra.mxu0 %v633
    %840 = vmatprep.subr.bf16.mxu0 0
    %841 = vmatpush1.bf16.msra.mxu0 0
    %842 = vmatprep.subr.bf16.mxu0 0
    %843 = vmatpush1.bf16.msra.mxu0 0
    %844 = vmatprep.subr.bf16.mxu0 0
    %845 = vmatpush1.bf16.msra.mxu0 0
    %846 = vmatprep.subr.bf16.mxu0 0
    %847 = vmatpush1.bf16.msra.mxu0 0
    %848 = vmatprep.subr.bf16.mxu0 0
    %849 = vmatpush1.bf16.msra.mxu0 0
    %850 = vmatprep.subr.bf16.mxu0 0
    %851 = vmatpush1.bf16.msra.mxu0 0
    %852 = vmatprep.subr.bf16.mxu0 0
    %853 = vmatpush1.bf16.msra.mxu0 0
    %854 = vmatprep.subr.bf16.mxu0 0
    %855 = vmatpush1.bf16.msra.mxu0 0
    %856 = vmatprep.subr.bf16.mxu0 0
    %857 = vmatpush1.bf16.msra.mxu0 0
    %858 = vmatprep.subr.bf16.mxu0 0
    %859 = vmatpush1.bf16.msra.mxu0 0
    %860 = vmatprep.subr.bf16.mxu0 0
    %861 = vmatpush1.bf16.msra.mxu0 0
    %862 = vmatprep.subr.bf16.mxu0 0
    %863 = vmatpush1.bf16.msra.mxu0 0
    %864 = vmatprep.mubr.bf16.mxu0 0
    %865 = vmatmul.mubr.bf16.gmra.mrb[0].mxu0 %v668
    %v866 = vpop.f32.mrb[0].mxu0
    %v867 = vadd.f32 %v489, %v866
    %v868 = vpop.f32.mrb[0].mxu0
    %v869 = vadd.f32 %v491, %v868
    %v870 = vpop.f32.mrb[0].mxu0
    %v871 = vadd.f32 %v493, %v870
    %v872 = vpop.f32.mrb[0].mxu0
    %v873 = vadd.f32 %v495, %v872
    %874 = vmatprep.mubr.bf16.mxu0 0
    %875 = vmatmul.mubr.bf16.gmra.mrb[0].mxu0 %v671
    %v876 = vpop.f32.mrb[0].mxu0
    %v877 = vadd.f32 %v499, %v876
    %v878 = vpop.f32.mrb[0].mxu0
    %v879 = vadd.f32 %v501, %v878
    %v880 = vpop.f32.mrb[0].mxu0
    %v881 = vadd.f32 %v503, %v880
    %v882 = vpop.f32.mrb[0].mxu0
    %v883 = vadd.f32 %v505, %v882
    %884 = vdwg.mxu0
    %v885 = vld [vmem:[%s2] sm:$0xff]
    %v886 = vld [vmem:[%s2 + $0x8] sm:$0xff]
    %v887 = vld [vmem:[%s2 + $0x10] sm:$0xff]
    %v888 = vld [vmem:[%s2 + $0x18] sm:$0xff]
    %v889 = vpack.c.bf16 %v886, %v885
    %v890 = vpack.c.bf16 %v888, %v887
    %v891 = vld [vmem:[%s6] sm:$0xff]
    %v892 = vld [vmem:[%s6 + $0x8] sm:$0xff]
    %v893 = vld [vmem:[%s6 + $0x10] sm:$0xff]
    %v894 = vld [vmem:[%s6 + $0x18] sm:$0xff]
    %v895 = vld [vmem:[%s6 + $0x20] sm:$0xff]
    %v896 = vld [vmem:[%s6 + $0x28] sm:$0xff]
    %v897 = vld [vmem:[%s6 + $0x30] sm:$0xff]
    %v898 = vld [vmem:[%s6 + $0x38] sm:$0xff]
    %v899 = vld [vmem:[%s6 + $0x40] sm:$0xff]
    %v900 = vld [vmem:[%s6 + $0x48] sm:$0xff]
    %v901 = vld [vmem:[%s6 + $0x50] sm:$0xff]
    %v902 = vld [vmem:[%s6 + $0x58] sm:$0xff]
    %v903 = vld [vmem:[%s6 + $0x60] sm:$0xff]
    %v904 = vld [vmem:[%s6 + $0x68] sm:$0xff]
    %v905 = vld [vmem:[%s6 + $0x70] sm:$0xff]
    %v906 = vld [vmem:[%s6 + $0x78] sm:$0xff]
    %v907 = vld [vmem:[%s6 + $0x80] sm:$0xff]
    %v908 = vld [vmem:[%s6 + $0x88] sm:$0xff]
    %v909 = vld [vmem:[%s6 + $0x90] sm:$0xff]
    %v910 = vld [vmem:[%s6 + $0x98] sm:$0xff]
    %v911 = vld [vmem:[%s6 + $0xa0] sm:$0xff]
    %v912 = vld [vmem:[%s6 + $0xa8] sm:$0xff]
    %v913 = vld [vmem:[%s6 + $0xb0] sm:$0xff]
    %v914 = vld [vmem:[%s6 + $0xb8] sm:$0xff]
    %v915 = vld [vmem:[%s6 + $0xc0] sm:$0xff]
    %v916 = vld [vmem:[%s6 + $0xc8] sm:$0xff]
    %v917 = vld [vmem:[%s6 + $0xd0] sm:$0xff]
    %v918 = vld [vmem:[%s6 + $0xd8] sm:$0xff]
    %v919 = vld [vmem:[%s6 + $0xe0] sm:$0xff]
    %v920 = vld [vmem:[%s6 + $0xe8] sm:$0xff]
    %v921 = vld [vmem:[%s6 + $0xf0] sm:$0xff]
    %v922 = vld [vmem:[%s6 + $0xf8] sm:$0xff]
    %v923 = vld [vmem:[%s6 + $0x100] sm:$0xff]
    %v924 = vld [vmem:[%s6 + $0x108] sm:$0xff]
    %v925 = vld [vmem:[%s6 + $0x110] sm:$0xff]
    %v926 = vld [vmem:[%s6 + $0x118] sm:$0xff]
    %v927 = vld [vmem:[%s6 + $0x120] sm:$0xff]
    %v928 = vld [vmem:[%s6 + $0x128] sm:$0xff]
    %v929 = vld [vmem:[%s6 + $0x130] sm:$0xff]
    %v930 = vld [vmem:[%s6 + $0x138] sm:$0xff]
    %v931 = vld [vmem:[%s6 + $0x140] sm:$0xff]
    %v932 = vld [vmem:[%s6 + $0x148] sm:$0xff]
    %v933 = vld [vmem:[%s6 + $0x150] sm:$0xff]
    %v934 = vld [vmem:[%s6 + $0x158] sm:$0xff]
    %v935 = vld [vmem:[%s6 + $0x160] sm:$0xff]
    %v936 = vld [vmem:[%s6 + $0x168] sm:$0xff]
    %v937 = vld [vmem:[%s6 + $0x170] sm:$0xff]
    %v938 = vld [vmem:[%s6 + $0x178] sm:$0xff]
    %v939 = vld [vmem:[%s6 + $0x180] sm:$0xff]
    %v940 = vld [vmem:[%s6 + $0x188] sm:$0xff]
    %v941 = vld [vmem:[%s6 + $0x190] sm:$0xff]
    %v942 = vld [vmem:[%s6 + $0x198] sm:$0xff]
    %v943 = vld [vmem:[%s6 + $0x1a0] sm:$0xff]
    %v944 = vld [vmem:[%s6 + $0x1a8] sm:$0xff]
    %v945 = vld [vmem:[%s6 + $0x1b0] sm:$0xff]
    %v946 = vld [vmem:[%s6 + $0x1b8] sm:$0xff]
    %v947 = vld [vmem:[%s6 + $0x1c0] sm:$0xff]
    %v948 = vld [vmem:[%s6 + $0x1c8] sm:$0xff]
    %v949 = vld [vmem:[%s6 + $0x1d0] sm:$0xff]
    %v950 = vld [vmem:[%s6 + $0x1d8] sm:$0xff]
    %v951 = vld [vmem:[%s6 + $0x1e0] sm:$0xff]
    %v952 = vld [vmem:[%s6 + $0x1e8] sm:$0xff]
    %v953 = vld [vmem:[%s6 + $0x1f0] sm:$0xff]
    %v954 = vld [vmem:[%s6 + $0x1f8] sm:$0xff]
    %v1019 = vunpack.c.l.b16 %v891
    %v1020 = vunpack.c.h.b16 %v891
    %v1021 = vunpack.c.l.b16 %v892
    %v1022 = vunpack.c.h.b16 %v892
    %v1023 = vunpack.c.l.b16 %v893
    %v1024 = vunpack.c.h.b16 %v893
    %v1025 = vunpack.c.l.b16 %v894
    %v1026 = vunpack.c.h.b16 %v894
    %v1027 = vunpack.c.l.b16 %v895
    %v1028 = vunpack.c.h.b16 %v895
    %v1029 = vunpack.c.l.b16 %v896
    %v1030 = vunpack.c.h.b16 %v896
    %v1031 = vunpack.c.l.b16 %v897
    %v1032 = vunpack.c.h.b16 %v897
    %v1033 = vunpack.c.l.b16 %v898
    %v1034 = vunpack.c.h.b16 %v898
    %v1035 = vunpack.c.l.b16 %v899
    %v1036 = vunpack.c.h.b16 %v899
    %v1037 = vunpack.c.l.b16 %v900
    %v1038 = vunpack.c.h.b16 %v900
    %v1039 = vunpack.c.l.b16 %v901
    %v1040 = vunpack.c.h.b16 %v901
    %v1041 = vunpack.c.l.b16 %v902
    %v1042 = vunpack.c.h.b16 %v902
    %v1043 = vunpack.c.l.b16 %v903
    %v1044 = vunpack.c.h.b16 %v903
    %v1045 = vunpack.c.l.b16 %v904
    %v1046 = vunpack.c.h.b16 %v904
    %v1047 = vunpack.c.l.b16 %v905
    %v1048 = vunpack.c.h.b16 %v905
    %v1049 = vunpack.c.l.b16 %v906
    %v1050 = vunpack.c.h.b16 %v906
    %v1051 = vunpack.c.l.b16 %v907
    %v1052 = vunpack.c.h.b16 %v907
    %v1053 = vunpack.c.l.b16 %v908
    %v1054 = vunpack.c.h.b16 %v908
    %v1055 = vunpack.c.l.b16 %v909
    %v1056 = vunpack.c.h.b16 %v909
    %v1057 = vunpack.c.l.b16 %v910
    %v1058 = vunpack.c.h.b16 %v910
    %v1059 = vunpack.c.l.b16 %v911
    %v1060 = vunpack.c.h.b16 %v911
    %v1061 = vunpack.c.l.b16 %v912
    %v1062 = vunpack.c.h.b16 %v912
    %v1063 = vunpack.c.l.b16 %v913
    %v1064 = vunpack.c.h.b16 %v913
    %v1065 = vunpack.c.l.b16 %v914
    %v1066 = vunpack.c.h.b16 %v914
    %v1067 = vunpack.c.l.b16 %v915
    %v1068 = vunpack.c.h.b16 %v915
    %v1069 = vunpack.c.l.b16 %v916
    %v1070 = vunpack.c.h.b16 %v916
    %v1071 = vunpack.c.l.b16 %v917
    %v1072 = vunpack.c.h.b16 %v917
    %v1073 = vunpack.c.l.b16 %v918
    %v1074 = vunpack.c.h.b16 %v918
    %v1075 = vunpack.c.l.b16 %v919
    %v1076 = vunpack.c.h.b16 %v919
    %v1077 = vunpack.c.l.b16 %v920
    %v1078 = vunpack.c.h.b16 %v920
    %v1079 = vunpack.c.l.b16 %v921
    %v1080 = vunpack.c.h.b16 %v921
    %v1081 = vunpack.c.l.b16 %v922
    %v1082 = vunpack.c.h.b16 %v922
    %v1083 = vunpack.c.l.b16 %v923
    %v1084 = vunpack.c.h.b16 %v923
    %v1085 = vunpack.c.l.b16 %v924
    %v1086 = vunpack.c.h.b16 %v924
    %v1087 = vunpack.c.l.b16 %v925
    %v1088 = vunpack.c.h.b16 %v925
    %v1089 = vunpack.c.l.b16 %v926
    %v1090 = vunpack.c.h.b16 %v926
    %v1091 = vunpack.c.l.b16 %v927
    %v1092 = vunpack.c.h.b16 %v927
    %v1093 = vunpack.c.l.b16 %v928
    %v1094 = vunpack.c.h.b16 %v928
    %v1095 = vunpack.c.l.b16 %v929
    %v1096 = vunpack.c.h.b16 %v929
    %v1097 = vunpack.c.l.b16 %v930
    %v1098 = vunpack.c.h.b16 %v930
    %v1099 = vunpack.c.l.b16 %v931
    %v1100 = vunpack.c.h.b16 %v931
    %v1101 = vunpack.c.l.b16 %v932
    %v1102 = vunpack.c.h.b16 %v932
    %v1103 = vunpack.c.l.b16 %v933
    %v1104 = vunpack.c.h.b16 %v933
    %v1105 = vunpack.c.l.b16 %v934
    %v1106 = vunpack.c.h.b16 %v934
    %v1107 = vunpack.c.l.b16 %v935
    %v1108 = vunpack.c.h.b16 %v935
    %v1109 = vunpack.c.l.b16 %v936
    %v1110 = vunpack.c.h.b16 %v936
    %v1111 = vunpack.c.l.b16 %v937
    %v1112 = vunpack.c.h.b16 %v937
    %v1113 = vunpack.c.l.b16 %v938
    %v1114 = vunpack.c.h.b16 %v938
    %v1115 = vunpack.c.l.b16 %v939
    %v1116 = vunpack.c.h.b16 %v939
    %v1117 = vunpack.c.l.b16 %v940
    %v1118 = vunpack.c.h.b16 %v940
    %v1119 = vunpack.c.l.b16 %v941
    %v1120 = vunpack.c.h.b16 %v941
    %v1121 = vunpack.c.l.b16 %v942
    %v1122 = vunpack.c.h.b16 %v942
    %v1123 = vunpack.c.l.b16 %v943
    %v1124 = vunpack.c.h.b16 %v943
    %v1125 = vunpack.c.l.b16 %v944
    %v1126 = vunpack.c.h.b16 %v944
    %v1127 = vunpack.c.l.b16 %v945
    %v1128 = vunpack.c.h.b16 %v945
    %v1129 = vunpack.c.l.b16 %v946
    %v1130 = vunpack.c.h.b16 %v946
    %v1131 = vunpack.c.l.b16 %v947
    %v1132 = vunpack.c.h.b16 %v947
    %v1133 = vunpack.c.l.b16 %v948
    %v1134 = vunpack.c.h.b16 %v948
    %v1135 = vunpack.c.l.b16 %v949
    %v1136 = vunpack.c.h.b16 %v949
    %v1137 = vunpack.c.l.b16 %v950
    %v1138 = vunpack.c.h.b16 %v950
    %v1139 = vunpack.c.l.b16 %v951
    %v1140 = vunpack.c.h.b16 %v951
    %v1141 = vunpack.c.l.b16 %v952
    %v1142 = vunpack.c.h.b16 %v952
    %v1143 = vunpack.c.l.b16 %v953
    %v1144 = vunpack.c.h.b16 %v953
    %v1145 = vunpack.c.l.b16 %v954
    %v1146 = vunpack.c.h.b16 %v954
    %v1147 = vpack.c.b16 %v1027, %v1019
    %v1148 = vpack.c.b16 %v1028, %v1020
    %v1149 = vpack.c.b16 %v1029, %v1021
    %v1150 = vpack.c.b16 %v1030, %v1022
    %v1151 = vpack.c.b16 %v1031, %v1023
    %v1152 = vpack.c.b16 %v1032, %v1024
    %v1153 = vpack.c.b16 %v1033, %v1025
    %v1154 = vpack.c.b16 %v1034, %v1026
    %v1155 = vpack.c.b16 %v1043, %v1035
    %v1156 = vpack.c.b16 %v1044, %v1036
    %v1157 = vpack.c.b16 %v1045, %v1037
    %v1158 = vpack.c.b16 %v1046, %v1038
    %v1159 = vpack.c.b16 %v1047, %v1039
    %v1160 = vpack.c.b16 %v1048, %v1040
    %v1161 = vpack.c.b16 %v1049, %v1041
    %v1162 = vpack.c.b16 %v1050, %v1042
    %v1163 = vpack.c.b16 %v1059, %v1051
    %v1164 = vpack.c.b16 %v1060, %v1052
    %v1165 = vpack.c.b16 %v1061, %v1053
    %v1166 = vpack.c.b16 %v1062, %v1054
    %v1167 = vpack.c.b16 %v1063, %v1055
    %v1168 = vpack.c.b16 %v1064, %v1056
    %v1169 = vpack.c.b16 %v1065, %v1057
    %v1170 = vpack.c.b16 %v1066, %v1058
    %v1171 = vpack.c.b16 %v1075, %v1067
    %v1172 = vpack.c.b16 %v1076, %v1068
    %v1173 = vpack.c.b16 %v1077, %v1069
    %v1174 = vpack.c.b16 %v1078, %v1070
    %v1175 = vpack.c.b16 %v1079, %v1071
    %v1176 = vpack.c.b16 %v1080, %v1072
    %v1177 = vpack.c.b16 %v1081, %v1073
    %v1178 = vpack.c.b16 %v1082, %v1074
    %v1179 = vpack.c.b16 %v1091, %v1083
    %v1180 = vpack.c.b16 %v1092, %v1084
    %v1181 = vpack.c.b16 %v1093, %v1085
    %v1182 = vpack.c.b16 %v1094, %v1086
    %v1183 = vpack.c.b16 %v1095, %v1087
    %v1184 = vpack.c.b16 %v1096, %v1088
    %v1185 = vpack.c.b16 %v1097, %v1089
    %v1186 = vpack.c.b16 %v1098, %v1090
    %v1187 = vpack.c.b16 %v1107, %v1099
    %v1188 = vpack.c.b16 %v1108, %v1100
    %v1189 = vpack.c.b16 %v1109, %v1101
    %v1190 = vpack.c.b16 %v1110, %v1102
    %v1191 = vpack.c.b16 %v1111, %v1103
    %v1192 = vpack.c.b16 %v1112, %v1104
    %v1193 = vpack.c.b16 %v1113, %v1105
    %v1194 = vpack.c.b16 %v1114, %v1106
    %v1195 = vpack.c.b16 %v1123, %v1115
    %v1196 = vpack.c.b16 %v1124, %v1116
    %v1197 = vpack.c.b16 %v1125, %v1117
    %v1198 = vpack.c.b16 %v1126, %v1118
    %v1199 = vpack.c.b16 %v1127, %v1119
    %v1200 = vpack.c.b16 %v1128, %v1120
    %v1201 = vpack.c.b16 %v1129, %v1121
    %v1202 = vpack.c.b16 %v1130, %v1122
    %v1203 = vpack.c.b16 %v1139, %v1131
    %v1204 = vpack.c.b16 %v1140, %v1132
    %v1205 = vpack.c.b16 %v1141, %v1133
    %v1206 = vpack.c.b16 %v1142, %v1134
    %v1207 = vpack.c.b16 %v1143, %v1135
    %v1208 = vpack.c.b16 %v1144, %v1136
    %v1209 = vpack.c.b16 %v1145, %v1137
    %v1210 = vpack.c.b16 %v1146, %v1138
    %1275 = vmatprep.subr.bf16.mxu0 %v1148
    %1276 = vmatpush1.bf16.msra.mxu0 %v1147
    %1277 = vmatprep.subr.bf16.mxu0 %v1156
    %1278 = vmatpush1.bf16.msra.mxu0 %v1155
    %1279 = vmatprep.subr.bf16.mxu0 %v1164
    %1280 = vmatpush1.bf16.msra.mxu0 %v1163
    %1281 = vmatprep.subr.bf16.mxu0 %v1172
    %1282 = vmatpush1.bf16.msra.mxu0 %v1171
    %1283 = vmatprep.subr.bf16.mxu0 %v1180
    %1284 = vmatpush1.bf16.msra.mxu0 %v1179
    %1285 = vmatprep.subr.bf16.mxu0 %v1188
    %1286 = vmatpush1.bf16.msra.mxu0 %v1187
    %1287 = vmatprep.subr.bf16.mxu0 %v1196
    %1288 = vmatpush1.bf16.msra.mxu0 %v1195
    %1289 = vmatprep.subr.bf16.mxu0 %v1204
    %1290 = vmatpush1.bf16.msra.mxu0 %v1203
    %1291 = vmatprep.subr.bf16.mxu0 0
    %1292 = vmatpush1.bf16.msra.mxu0 0
    %1293 = vmatprep.subr.bf16.mxu0 0
    %1294 = vmatpush1.bf16.msra.mxu0 0
    %1295 = vmatprep.subr.bf16.mxu0 0
    %1296 = vmatpush1.bf16.msra.mxu0 0
    %1297 = vmatprep.subr.bf16.mxu0 0
    %1298 = vmatpush1.bf16.msra.mxu0 0
    %1299 = vmatprep.subr.bf16.mxu0 0
    %1300 = vmatpush1.bf16.msra.mxu0 0
    %1301 = vmatprep.subr.bf16.mxu0 0
    %1302 = vmatpush1.bf16.msra.mxu0 0
    %1303 = vmatprep.subr.bf16.mxu0 0
    %1304 = vmatpush1.bf16.msra.mxu0 0
    %1305 = vmatprep.subr.bf16.mxu0 0
    %1306 = vmatpush1.bf16.msra.mxu0 0
    %1307 = vmatprep.mubr.bf16.mxu0 0
    %1308 = vmatmul.mubr.bf16.gmra.mrb[0].mxu0 %v889
    %v1309 = vpop.f32.mrb[0].mxu0
    %v1310 = vadd.f32 0.0, %v1309
    %v1311 = vpop.f32.mrb[0].mxu0
    %v1312 = vadd.f32 0.0, %v1311
    %v1313 = vpop.f32.mrb[0].mxu0
    %v1314 = vadd.f32 0.0, %v1313
    %v1315 = vpop.f32.mrb[0].mxu0
    %v1316 = vadd.f32 0.0, %v1315
    %1317 = vmatprep.mubr.bf16.mxu0 0
    %1318 = vmatmul.mubr.bf16.gmra.mrb[0].mxu0 %v890
    %v1319 = vpop.f32.mrb[0].mxu0
    %v1320 = vadd.f32 0.0, %v1319
    %v1321 = vpop.f32.mrb[0].mxu0
    %v1322 = vadd.f32 0.0, %v1321
    %v1323 = vpop.f32.mrb[0].mxu0
    %v1324 = vadd.f32 0.0, %v1323
    %v1325 = vpop.f32.mrb[0].mxu0
    %v1326 = vadd.f32 0.0, %v1325
    %1327 = vdwg.mxu0
    %1328 = vmatprep.subr.bf16.mxu0 %v1150
    %1329 = vmatpush1.bf16.msra.mxu0 %v1149
    %1330 = vmatprep.subr.bf16.mxu0 %v1158
    %1331 = vmatpush1.bf16.msra.mxu0 %v1157
    %1332 = vmatprep.subr.bf16.mxu0 %v1166
    %1333 = vmatpush1.bf16.msra.mxu0 %v1165
    %1334 = vmatprep.subr.bf16.mxu0 %v1174
    %1335 = vmatpush1.bf16.msra.mxu0 %v1173
    %1336 = vmatprep.subr.bf16.mxu0 %v1182
    %1337 = vmatpush1.bf16.msra.mxu0 %v1181
    %1338 = vmatprep.subr.bf16.mxu0 %v1190
    %1339 = vmatpush1.bf16.msra.mxu0 %v1189
    %1340 = vmatprep.subr.bf16.mxu0 %v1198
    %1341 = vmatpush1.bf16.msra.mxu0 %v1197
    %1342 = vmatprep.subr.bf16.mxu0 %v1206
    %1343 = vmatpush1.bf16.msra.mxu0 %v1205
    %1344 = vmatprep.subr.bf16.mxu0 0
    %1345 = vmatpush1.bf16.msra.mxu0 0
    %1346 = vmatprep.subr.bf16.mxu0 0
    %1347 = vmatpush1.bf16.msra.mxu0 0
    %1348 = vmatprep.subr.bf16.mxu0 0
    %1349 = vmatpush1.bf16.msra.mxu0 0
    %1350 = vmatprep.subr.bf16.mxu0 0
    %1351 = vmatpush1.bf16.msra.mxu0 0
    %1352 = vmatprep.subr.bf16.mxu0 0
    %1353 = vmatpush1.bf16.msra.mxu0 0
    %1354 = vmatprep.subr.bf16.mxu0 0
    %1355 = vmatpush1.bf16.msra.mxu0 0
    %1356 = vmatprep.subr.bf16.mxu0 0
    %1357 = vmatpush1.bf16.msra.mxu0 0
    %1358 = vmatprep.subr.bf16.mxu0 0
    %1359 = vmatpush1.bf16.msra.mxu0 0
    %1360 = vmatprep.mubr.bf16.mxu0 0
    %1361 = vmatmul.mubr.bf16.gmra.mrb[0].mxu0 %v889
    %v1362 = vpop.f32.mrb[0].mxu0
    %v1363 = vadd.f32 0.0, %v1362
    %v1364 = vpop.f32.mrb[0].mxu0
    %v1365 = vadd.f32 0.0, %v1364
    %v1366 = vpop.f32.mrb[0].mxu0
    %v1367 = vadd.f32 0.0, %v1366
    %v1368 = vpop.f32.mrb[0].mxu0
    %v1369 = vadd.f32 0.0, %v1368
    %1370 = vmatprep.mubr.bf16.mxu0 0
    %1371 = vmatmul.mubr.bf16.gmra.mrb[0].mxu0 %v890
    %v1372 = vpop.f32.mrb[0].mxu0
    %v1373 = vadd.f32 0.0, %v1372
    %v1374 = vpop.f32.mrb[0].mxu0
    %v1375 = vadd.f32 0.0, %v1374
    %v1376 = vpop.f32.mrb[0].mxu0
    %v1377 = vadd.f32 0.0, %v1376
    %v1378 = vpop.f32.mrb[0].mxu0
    %v1379 = vadd.f32 0.0, %v1378
    %1380 = vdwg.mxu0
    %1381 = vmatprep.subr.bf16.mxu0 %v1152
    %1382 = vmatpush1.bf16.msra.mxu0 %v1151
    %1383 = vmatprep.subr.bf16.mxu0 %v1160
    %1384 = vmatpush1.bf16.msra.mxu0 %v1159
    %1385 = vmatprep.subr.bf16.mxu0 %v1168
    %1386 = vmatpush1.bf16.msra.mxu0 %v1167
    %1387 = vmatprep.subr.bf16.mxu0 %v1176
    %1388 = vmatpush1.bf16.msra.mxu0 %v1175
    %1389 = vmatprep.subr.bf16.mxu0 %v1184
    %1390 = vmatpush1.bf16.msra.mxu0 %v1183
    %1391 = vmatprep.subr.bf16.mxu0 %v1192
    %1392 = vmatpush1.bf16.msra.mxu0 %v1191
    %1393 = vmatprep.subr.bf16.mxu0 %v1200
    %1394 = vmatpush1.bf16.msra.mxu0 %v1199
    %1395 = vmatprep.subr.bf16.mxu0 %v1208
    %1396 = vmatpush1.bf16.msra.mxu0 %v1207
    %1397 = vmatprep.subr.bf16.mxu0 0
    %1398 = vmatpush1.bf16.msra.mxu0 0
    %1399 = vmatprep.subr.bf16.mxu0 0
    %1400 = vmatpush1.bf16.msra.mxu0 0
    %1401 = vmatprep.subr.bf16.mxu0 0
    %1402 = vmatpush1.bf16.msra.mxu0 0
    %1403 = vmatprep.subr.bf16.mxu0 0
    %1404 = vmatpush1.bf16.msra.mxu0 0
    %1405 = vmatprep.subr.bf16.mxu0 0
    %1406 = vmatpush1.bf16.msra.mxu0 0
    %1407 = vmatprep.subr.bf16.mxu0 0
    %1408 = vmatpush1.bf16.msra.mxu0 0
    %1409 = vmatprep.subr.bf16.mxu0 0
    %1410 = vmatpush1.bf16.msra.mxu0 0
    %1411 = vmatprep.subr.bf16.mxu0 0
    %1412 = vmatpush1.bf16.msra.mxu0 0
    %1413 = vmatprep.mubr.bf16.mxu0 0
    %1414 = vmatmul.mubr.bf16.gmra.mrb[0].mxu0 %v889
    %v1415 = vpop.f32.mrb[0].mxu0
    %v1416 = vadd.f32 0.0, %v1415
    %v1417 = vpop.f32.mrb[0].mxu0
    %v1418 = vadd.f32 0.0, %v1417
    %v1419 = vpop.f32.mrb[0].mxu0
    %v1420 = vadd.f32 0.0, %v1419
    %v1421 = vpop.f32.mrb[0].mxu0
    %v1422 = vadd.f32 0.0, %v1421
    %1423 = vmatprep.mubr.bf16.mxu0 0
    %1424 = vmatmul.mubr.bf16.gmra.mrb[0].mxu0 %v890
    %v1425 = vpop.f32.mrb[0].mxu0
    %v1426 = vadd.f32 0.0, %v1425
    %v1427 = vpop.f32.mrb[0].mxu0
    %v1428 = vadd.f32 0.0, %v1427
    %v1429 = vpop.f32.mrb[0].mxu0
    %v1430 = vadd.f32 0.0, %v1429
    %v1431 = vpop.f32.mrb[0].mxu0
    %v1432 = vadd.f32 0.0, %v1431
    %1433 = vdwg.mxu0
    %1434 = vmatprep.subr.bf16.mxu0 %v1154
    %1435 = vmatpush1.bf16.msra.mxu0 %v1153
    %1436 = vmatprep.subr.bf16.mxu0 %v1162
    %1437 = vmatpush1.bf16.msra.mxu0 %v1161
    %1438 = vmatprep.subr.bf16.mxu0 %v1170
    %1439 = vmatpush1.bf16.msra.mxu0 %v1169
    %1440 = vmatprep.subr.bf16.mxu0 %v1178
    %1441 = vmatpush1.bf16.msra.mxu0 %v1177
    %1442 = vmatprep.subr.bf16.mxu0 %v1186
    %1443 = vmatpush1.bf16.msra.mxu0 %v1185
    %1444 = vmatprep.subr.bf16.mxu0 %v1194
    %1445 = vmatpush1.bf16.msra.mxu0 %v1193
    %1446 = vmatprep.subr.bf16.mxu0 %v1202
    %1447 = vmatpush1.bf16.msra.mxu0 %v1201
    %1448 = vmatprep.subr.bf16.mxu0 %v1210
    %1449 = vmatpush1.bf16.msra.mxu0 %v1209
    %1450 = vmatprep.subr.bf16.mxu0 0
    %1451 = vmatpush1.bf16.msra.mxu0 0
    %1452 = vmatprep.subr.bf16.mxu0 0
    %1453 = vmatpush1.bf16.msra.mxu0 0
    %1454 = vmatprep.subr.bf16.mxu0 0
    %1455 = vmatpush1.bf16.msra.mxu0 0
    %1456 = vmatprep.subr.bf16.mxu0 0
    %1457 = vmatpush1.bf16.msra.mxu0 0
    %1458 = vmatprep.subr.bf16.mxu0 0
    %1459 = vmatpush1.bf16.msra.mxu0 0
    %1460 = vmatprep.subr.bf16.mxu0 0
    %1461 = vmatpush1.bf16.msra.mxu0 0
    %1462 = vmatprep.subr.bf16.mxu0 0
    %1463 = vmatpush1.bf16.msra.mxu0 0
    %1464 = vmatprep.subr.bf16.mxu0 0
    %1465 = vmatpush1.bf16.msra.mxu0 0
    %1466 = vmatprep.mubr.bf16.mxu0 0
    %1467 = vmatmul.mubr.bf16.gmra.mrb[0].mxu0 %v889
    %v1468 = vpop.f32.mrb[0].mxu0
    %v1469 = vadd.f32 0.0, %v1468
    %v1470 = vpop.f32.mrb[0].mxu0
    %v1471 = vadd.f32 0.0, %v1470
    %v1472 = vpop.f32.mrb[0].mxu0
    %v1473 = vadd.f32 0.0, %v1472
    %v1474 = vpop.f32.mrb[0].mxu0
    %v1475 = vadd.f32 0.0, %v1474
    %1476 = vmatprep.mubr.bf16.mxu0 0
    %1477 = vmatmul.mubr.bf16.gmra.mrb[0].mxu0 %v890
    %v1478 = vpop.f32.mrb[0].mxu0
    %v1479 = vadd.f32 0.0, %v1478
    %v1480 = vpop.f32.mrb[0].mxu0
    %v1481 = vadd.f32 0.0, %v1480
    %v1482 = vpop.f32.mrb[0].mxu0
    %v1483 = vadd.f32 0.0, %v1482
    %v1484 = vpop.f32.mrb[0].mxu0
    %v1485 = vadd.f32 0.0, %v1484
    %1486 = vdwg.mxu0
    %v1487 = vadd.f32 %v708, %v1310
    %v1488 = vadd.f32 %v710, %v1312
    %v1489 = vadd.f32 %v761, %v1363
    %v1490 = vadd.f32 %v763, %v1365
    %v1491 = vadd.f32 %v814, %v1416
    %v1492 = vadd.f32 %v816, %v1418
    %v1493 = vadd.f32 %v867, %v1469
    %v1494 = vadd.f32 %v869, %v1471
    %v1495 = vadd.f32 %v712, %v1314
    %v1496 = vadd.f32 %v714, %v1316
    %v1497 = vadd.f32 %v765, %v1367
    %v1498 = vadd.f32 %v767, %v1369
    %v1499 = vadd.f32 %v818, %v1420
    %v1500 = vadd.f32 %v820, %v1422
    %v1501 = vadd.f32 %v871, %v1473
    %v1502 = vadd.f32 %v873, %v1475
    %v1503 = vadd.f32 %v718, %v1320
    %v1504 = vadd.f32 %v720, %v1322
    %v1505 = vadd.f32 %v771, %v1373
    %v1506 = vadd.f32 %v773, %v1375
    %v1507 = vadd.f32 %v824, %v1426
    %v1508 = vadd.f32 %v826, %v1428
    %v1509 = vadd.f32 %v877, %v1479
    %v1510 = vadd.f32 %v879, %v1481
    %v1511 = vadd.f32 %v722, %v1324
    %v1512 = vadd.f32 %v724, %v1326
    %v1513 = vadd.f32 %v775, %v1377
    %v1514 = vadd.f32 %v777, %v1379
    %v1515 = vadd.f32 %v828, %v1430
    %v1516 = vadd.f32 %v830, %v1432
    %v1517 = vadd.f32 %v881, %v1483
    %v1518 = vadd.f32 %v883, %v1485
    %v1519 = vld [vmem:[%s3] sm:$0xff]
    %v1520 = vld [vmem:[%s3 + $0x8] sm:$0xff]
    %v1521 = vld [vmem:[%s3 + $0x10] sm:$0xff]
    %v1522 = vld [vmem:[%s3 + $0x18] sm:$0xff]
    %v1523 = vld [vmem:[%s3 + $0x20] sm:$0xff]
    %v1524 = vld [vmem:[%s3 + $0x28] sm:$0xff]
    %v1525 = vld [vmem:[%s3 + $0x30] sm:$0xff]
    %v1526 = vld [vmem:[%s3 + $0x38] sm:$0xff]
    %v1527 = vpack.c.bf16 %v1521, %v1519
    %v1528 = vpack.c.bf16 %v1522, %v1520
    %v1529 = vpack.c.bf16 %v1525, %v1523
    %v1530 = vpack.c.bf16 %v1526, %v1524
    %v1531 = vld [vmem:[%s7] sm:$0xff]
    %v1532 = vld [vmem:[%s7 + $0x8] sm:$0xff]
    %v1533 = vld [vmem:[%s7 + $0x10] sm:$0xff]
    %v1534 = vld [vmem:[%s7 + $0x18] sm:$0xff]
    %v1535 = vld [vmem:[%s7 + $0x20] sm:$0xff]
    %v1536 = vld [vmem:[%s7 + $0x28] sm:$0xff]
    %v1537 = vld [vmem:[%s7 + $0x30] sm:$0xff]
    %v1538 = vld [vmem:[%s7 + $0x38] sm:$0xff]
    %v1539 = vld [vmem:[%s7 + $0x40] sm:$0xff]
    %v1540 = vld [vmem:[%s7 + $0x48] sm:$0xff]
    %v1541 = vld [vmem:[%s7 + $0x50] sm:$0xff]
    %v1542 = vld [vmem:[%s7 + $0x58] sm:$0xff]
    %v1543 = vld [vmem:[%s7 + $0x60] sm:$0xff]
    %v1544 = vld [vmem:[%s7 + $0x68] sm:$0xff]
    %v1545 = vld [vmem:[%s7 + $0x70] sm:$0xff]
    %v1546 = vld [vmem:[%s7 + $0x78] sm:$0xff]
    %v1547 = vld [vmem:[%s7 + $0x80] sm:$0xff]
    %v1548 = vld [vmem:[%s7 + $0x88] sm:$0xff]
    %v1549 = vld [vmem:[%s7 + $0x90] sm:$0xff]
    %v1550 = vld [vmem:[%s7 + $0x98] sm:$0xff]
    %v1551 = vld [vmem:[%s7 + $0xa0] sm:$0xff]
    %v1552 = vld [vmem:[%s7 + $0xa8] sm:$0xff]
    %v1553 = vld [vmem:[%s7 + $0xb0] sm:$0xff]
    %v1554 = vld [vmem:[%s7 + $0xb8] sm:$0xff]
    %v1555 = vld [vmem:[%s7 + $0xc0] sm:$0xff]
    %v1556 = vld [vmem:[%s7 + $0xc8] sm:$0xff]
    %v1557 = vld [vmem:[%s7 + $0xd0] sm:$0xff]
    %v1558 = vld [vmem:[%s7 + $0xd8] sm:$0xff]
    %v1559 = vld [vmem:[%s7 + $0xe0] sm:$0xff]
    %v1560 = vld [vmem:[%s7 + $0xe8] sm:$0xff]
    %v1561 = vld [vmem:[%s7 + $0xf0] sm:$0xff]
    %v1562 = vld [vmem:[%s7 + $0xf8] sm:$0xff]
    %v1563 = vld [vmem:[%s7 + $0x100] sm:$0xff]
    %v1564 = vld [vmem:[%s7 + $0x108] sm:$0xff]
    %v1565 = vld [vmem:[%s7 + $0x110] sm:$0xff]
    %v1566 = vld [vmem:[%s7 + $0x118] sm:$0xff]
    %v1567 = vld [vmem:[%s7 + $0x120] sm:$0xff]
    %v1568 = vld [vmem:[%s7 + $0x128] sm:$0xff]
    %v1569 = vld [vmem:[%s7 + $0x130] sm:$0xff]
    %v1570 = vld [vmem:[%s7 + $0x138] sm:$0xff]
    %v1571 = vld [vmem:[%s7 + $0x140] sm:$0xff]
    %v1572 = vld [vmem:[%s7 + $0x148] sm:$0xff]
    %v1573 = vld [vmem:[%s7 + $0x150] sm:$0xff]
    %v1574 = vld [vmem:[%s7 + $0x158] sm:$0xff]
    %v1575 = vld [vmem:[%s7 + $0x160] sm:$0xff]
    %v1576 = vld [vmem:[%s7 + $0x168] sm:$0xff]
    %v1577 = vld [vmem:[%s7 + $0x170] sm:$0xff]
    %v1578 = vld [vmem:[%s7 + $0x178] sm:$0xff]
    %v1579 = vld [vmem:[%s7 + $0x180] sm:$0xff]
    %v1580 = vld [vmem:[%s7 + $0x188] sm:$0xff]
    %v1581 = vld [vmem:[%s7 + $0x190] sm:$0xff]
    %v1582 = vld [vmem:[%s7 + $0x198] sm:$0xff]
    %v1583 = vld [vmem:[%s7 + $0x1a0] sm:$0xff]
    %v1584 = vld [vmem:[%s7 + $0x1a8] sm:$0xff]
    %v1585 = vld [vmem:[%s7 + $0x1b0] sm:$0xff]
    %v1586 = vld [vmem:[%s7 + $0x1b8] sm:$0xff]
    %v1587 = vld [vmem:[%s7 + $0x1c0] sm:$0xff]
    %v1588 = vld [vmem:[%s7 + $0x1c8] sm:$0xff]
    %v1589 = vld [vmem:[%s7 + $0x1d0] sm:$0xff]
    %v1590 = vld [vmem:[%s7 + $0x1d8] sm:$0xff]
    %v1591 = vld [vmem:[%s7 + $0x1e0] sm:$0xff]
    %v1592 = vld [vmem:[%s7 + $0x1e8] sm:$0xff]
    %v1593 = vld [vmem:[%s7 + $0x1f0] sm:$0xff]
    %v1594 = vld [vmem:[%s7 + $0x1f8] sm:$0xff]
    %v1595 = vld [vmem:[%s7 + $0x200] sm:$0xff]
    %v1596 = vld [vmem:[%s7 + $0x208] sm:$0xff]
    %v1597 = vld [vmem:[%s7 + $0x210] sm:$0xff]
    %v1598 = vld [vmem:[%s7 + $0x218] sm:$0xff]
    %v1599 = vld [vmem:[%s7 + $0x220] sm:$0xff]
    %v1600 = vld [vmem:[%s7 + $0x228] sm:$0xff]
    %v1601 = vld [vmem:[%s7 + $0x230] sm:$0xff]
    %v1602 = vld [vmem:[%s7 + $0x238] sm:$0xff]
    %v1603 = vld [vmem:[%s7 + $0x240] sm:$0xff]
    %v1604 = vld [vmem:[%s7 + $0x248] sm:$0xff]
    %v1605 = vld [vmem:[%s7 + $0x250] sm:$0xff]
    %v1606 = vld [vmem:[%s7 + $0x258] sm:$0xff]
    %v1607 = vld [vmem:[%s7 + $0x260] sm:$0xff]
    %v1608 = vld [vmem:[%s7 + $0x268] sm:$0xff]
    %v1609 = vld [vmem:[%s7 + $0x270] sm:$0xff]
    %v1610 = vld [vmem:[%s7 + $0x278] sm:$0xff]
    %v1611 = vld [vmem:[%s7 + $0x280] sm:$0xff]
    %v1612 = vld [vmem:[%s7 + $0x288] sm:$0xff]
    %v1613 = vld [vmem:[%s7 + $0x290] sm:$0xff]
    %v1614 = vld [vmem:[%s7 + $0x298] sm:$0xff]
    %v1615 = vld [vmem:[%s7 + $0x2a0] sm:$0xff]
    %v1616 = vld [vmem:[%s7 + $0x2a8] sm:$0xff]
    %v1617 = vld [vmem:[%s7 + $0x2b0] sm:$0xff]
    %v1618 = vld [vmem:[%s7 + $0x2b8] sm:$0xff]
    %v1619 = vld [vmem:[%s7 + $0x2c0] sm:$0xff]
    %v1620 = vld [vmem:[%s7 + $0x2c8] sm:$0xff]
    %v1621 = vld [vmem:[%s7 + $0x2d0] sm:$0xff]
    %v1622 = vld [vmem:[%s7 + $0x2d8] sm:$0xff]
    %v1623 = vld [vmem:[%s7 + $0x2e0] sm:$0xff]
    %v1624 = vld [vmem:[%s7 + $0x2e8] sm:$0xff]
    %v1625 = vld [vmem:[%s7 + $0x2f0] sm:$0xff]
    %v1626 = vld [vmem:[%s7 + $0x2f8] sm:$0xff]
    %v1627 = vld [vmem:[%s7 + $0x300] sm:$0xff]
    %v1628 = vld [vmem:[%s7 + $0x308] sm:$0xff]
    %v1629 = vld [vmem:[%s7 + $0x310] sm:$0xff]
    %v1630 = vld [vmem:[%s7 + $0x318] sm:$0xff]
    %v1631 = vld [vmem:[%s7 + $0x320] sm:$0xff]
    %v1632 = vld [vmem:[%s7 + $0x328] sm:$0xff]
    %v1633 = vld [vmem:[%s7 + $0x330] sm:$0xff]
    %v1634 = vld [vmem:[%s7 + $0x338] sm:$0xff]
    %v1635 = vld [vmem:[%s7 + $0x340] sm:$0xff]
    %v1636 = vld [vmem:[%s7 + $0x348] sm:$0xff]
    %v1637 = vld [vmem:[%s7 + $0x350] sm:$0xff]
    %v1638 = vld [vmem:[%s7 + $0x358] sm:$0xff]
    %v1639 = vld [vmem:[%s7 + $0x360] sm:$0xff]
    %v1640 = vld [vmem:[%s7 + $0x368] sm:$0xff]
    %v1641 = vld [vmem:[%s7 + $0x370] sm:$0xff]
    %v1642 = vld [vmem:[%s7 + $0x378] sm:$0xff]
    %v1643 = vld [vmem:[%s7 + $0x380] sm:$0xff]
    %v1644 = vld [vmem:[%s7 + $0x388] sm:$0xff]
    %v1645 = vld [vmem:[%s7 + $0x390] sm:$0xff]
    %v1646 = vld [vmem:[%s7 + $0x398] sm:$0xff]
    %v1647 = vld [vmem:[%s7 + $0x3a0] sm:$0xff]
    %v1648 = vld [vmem:[%s7 + $0x3a8] sm:$0xff]
    %v1649 = vld [vmem:[%s7 + $0x3b0] sm:$0xff]
    %v1650 = vld [vmem:[%s7 + $0x3b8] sm:$0xff]
    %v1651 = vld [vmem:[%s7 + $0x3c0] sm:$0xff]
    %v1652 = vld [vmem:[%s7 + $0x3c8] sm:$0xff]
    %v1653 = vld [vmem:[%s7 + $0x3d0] sm:$0xff]
    %v1654 = vld [vmem:[%s7 + $0x3d8] sm:$0xff]
    %v1655 = vld [vmem:[%s7 + $0x3e0] sm:$0xff]
    %v1656 = vld [vmem:[%s7 + $0x3e8] sm:$0xff]
    %v1657 = vld [vmem:[%s7 + $0x3f0] sm:$0xff]
    %v1658 = vld [vmem:[%s7 + $0x3f8] sm:$0xff]
    %v1787 = vunpack.c.l.b16 %v1531
    %v1788 = vunpack.c.h.b16 %v1531
    %v1789 = vunpack.c.l.b16 %v1532
    %v1790 = vunpack.c.h.b16 %v1532
    %v1791 = vunpack.c.l.b16 %v1533
    %v1792 = vunpack.c.h.b16 %v1533
    %v1793 = vunpack.c.l.b16 %v1534
    %v1794 = vunpack.c.h.b16 %v1534
    %v1795 = vunpack.c.l.b16 %v1535
    %v1796 = vunpack.c.h.b16 %v1535
    %v1797 = vunpack.c.l.b16 %v1536
    %v1798 = vunpack.c.h.b16 %v1536
    %v1799 = vunpack.c.l.b16 %v1537
    %v1800 = vunpack.c.h.b16 %v1537
    %v1801 = vunpack.c.l.b16 %v1538
    %v1802 = vunpack.c.h.b16 %v1538
    %v1803 = vunpack.c.l.b16 %v1539
    %v1804 = vunpack.c.h.b16 %v1539
    %v1805 = vunpack.c.l.b16 %v1540
    %v1806 = vunpack.c.h.b16 %v1540
    %v1807 = vunpack.c.l.b16 %v1541
    %v1808 = vunpack.c.h.b16 %v1541
    %v1809 = vunpack.c.l.b16 %v1542
    %v1810 = vunpack.c.h.b16 %v1542
    %v1811 = vunpack.c.l.b16 %v1543
    %v1812 = vunpack.c.h.b16 %v1543
    %v1813 = vunpack.c.l.b16 %v1544
    %v1814 = vunpack.c.h.b16 %v1544
    %v1815 = vunpack.c.l.b16 %v1545
    %v1816 = vunpack.c.h.b16 %v1545
    %v1817 = vunpack.c.l.b16 %v1546
    %v1818 = vunpack.c.h.b16 %v1546
    %v1819 = vunpack.c.l.b16 %v1547
    %v1820 = vunpack.c.h.b16 %v1547
    %v1821 = vunpack.c.l.b16 %v1548
    %v1822 = vunpack.c.h.b16 %v1548
    %v1823 = vunpack.c.l.b16 %v1549
    %v1824 = vunpack.c.h.b16 %v1549
    %v1825 = vunpack.c.l.b16 %v1550
    %v1826 = vunpack.c.h.b16 %v1550
    %v1827 = vunpack.c.l.b16 %v1551
    %v1828 = vunpack.c.h.b16 %v1551
    %v1829 = vunpack.c.l.b16 %v1552
    %v1830 = vunpack.c.h.b16 %v1552
    %v1831 = vunpack.c.l.b16 %v1553
    %v1832 = vunpack.c.h.b16 %v1553
    %v1833 = vunpack.c.l.b16 %v1554
    %v1834 = vunpack.c.h.b16 %v1554
    %v1835 = vunpack.c.l.b16 %v1555
    %v1836 = vunpack.c.h.b16 %v1555
    %v1837 = vunpack.c.l.b16 %v1556
    %v1838 = vunpack.c.h.b16 %v1556
    %v1839 = vunpack.c.l.b16 %v1557
    %v1840 = vunpack.c.h.b16 %v1557
    %v1841 = vunpack.c.l.b16 %v1558
    %v1842 = vunpack.c.h.b16 %v1558
    %v1843 = vunpack.c.l.b16 %v1559
    %v1844 = vunpack.c.h.b16 %v1559
    %v1845 = vunpack.c.l.b16 %v1560
    %v1846 = vunpack.c.h.b16 %v1560
    %v1847 = vunpack.c.l.b16 %v1561
    %v1848 = vunpack.c.h.b16 %v1561
    %v1849 = vunpack.c.l.b16 %v1562
    %v1850 = vunpack.c.h.b16 %v1562
    %v1851 = vunpack.c.l.b16 %v1563
    %v1852 = vunpack.c.h.b16 %v1563
    %v1853 = vunpack.c.l.b16 %v1564
    %v1854 = vunpack.c.h.b16 %v1564
    %v1855 = vunpack.c.l.b16 %v1565
    %v1856 = vunpack.c.h.b16 %v1565
    %v1857 = vunpack.c.l.b16 %v1566
    %v1858 = vunpack.c.h.b16 %v1566
    %v1859 = vunpack.c.l.b16 %v1567
    %v1860 = vunpack.c.h.b16 %v1567
    %v1861 = vunpack.c.l.b16 %v1568
    %v1862 = vunpack.c.h.b16 %v1568
    %v1863 = vunpack.c.l.b16 %v1569
    %v1864 = vunpack.c.h.b16 %v1569
    %v1865 = vunpack.c.l.b16 %v1570
    %v1866 = vunpack.c.h.b16 %v1570
    %v1867 = vunpack.c.l.b16 %v1571
    %v1868 = vunpack.c.h.b16 %v1571
    %v1869 = vunpack.c.l.b16 %v1572
    %v1870 = vunpack.c.h.b16 %v1572
    %v1871 = vunpack.c.l.b16 %v1573
    %v1872 = vunpack.c.h.b16 %v1573
    %v1873 = vunpack.c.l.b16 %v1574
    %v1874 = vunpack.c.h.b16 %v1574
    %v1875 = vunpack.c.l.b16 %v1575
    %v1876 = vunpack.c.h.b16 %v1575
    %v1877 = vunpack.c.l.b16 %v1576
    %v1878 = vunpack.c.h.b16 %v1576
    %v1879 = vunpack.c.l.b16 %v1577
    %v1880 = vunpack.c.h.b16 %v1577
    %v1881 = vunpack.c.l.b16 %v1578
    %v1882 = vunpack.c.h.b16 %v1578
    %v1883 = vunpack.c.l.b16 %v1579
    %v1884 = vunpack.c.h.b16 %v1579
    %v1885 = vunpack.c.l.b16 %v1580
    %v1886 = vunpack.c.h.b16 %v1580
    %v1887 = vunpack.c.l.b16 %v1581
    %v1888 = vunpack.c.h.b16 %v1581
    %v1889 = vunpack.c.l.b16 %v1582
    %v1890 = vunpack.c.h.b16 %v1582
    %v1891 = vunpack.c.l.b16 %v1583
    %v1892 = vunpack.c.h.b16 %v1583
    %v1893 = vunpack.c.l.b16 %v1584
    %v1894 = vunpack.c.h.b16 %v1584
    %v1895 = vunpack.c.l.b16 %v1585
    %v1896 = vunpack.c.h.b16 %v1585
    %v1897 = vunpack.c.l.b16 %v1586
    %v1898 = vunpack.c.h.b16 %v1586
    %v1899 = vunpack.c.l.b16 %v1587
    %v1900 = vunpack.c.h.b16 %v1587
    %v1901 = vunpack.c.l.b16 %v1588
    %v1902 = vunpack.c.h.b16 %v1588
    %v1903 = vunpack.c.l.b16 %v1589
    %v1904 = vunpack.c.h.b16 %v1589
    %v1905 = vunpack.c.l.b16 %v1590
    %v1906 = vunpack.c.h.b16 %v1590
    %v1907 = vunpack.c.l.b16 %v1591
    %v1908 = vunpack.c.h.b16 %v1591
    %v1909 = vunpack.c.l.b16 %v1592
    %v1910 = vunpack.c.h.b16 %v1592
    %v1911 = vunpack.c.l.b16 %v1593
    %v1912 = vunpack.c.h.b16 %v1593
    %v1913 = vunpack.c.l.b16 %v1594
    %v1914 = vunpack.c.h.b16 %v1594
    %v1915 = vunpack.c.l.b16 %v1595
    %v1916 = vunpack.c.h.b16 %v1595
    %v1917 = vunpack.c.l.b16 %v1596
    %v1918 = vunpack.c.h.b16 %v1596
    %v1919 = vunpack.c.l.b16 %v1597
    %v1920 = vunpack.c.h.b16 %v1597
    %v1921 = vunpack.c.l.b16 %v1598
    %v1922 = vunpack.c.h.b16 %v1598
    %v1923 = vunpack.c.l.b16 %v1599
    %v1924 = vunpack.c.h.b16 %v1599
    %v1925 = vunpack.c.l.b16 %v1600
    %v1926 = vunpack.c.h.b16 %v1600
    %v1927 = vunpack.c.l.b16 %v1601
    %v1928 = vunpack.c.h.b16 %v1601
    %v1929 = vunpack.c.l.b16 %v1602
    %v1930 = vunpack.c.h.b16 %v1602
    %v1931 = vunpack.c.l.b16 %v1603
    %v1932 = vunpack.c.h.b16 %v1603
    %v1933 = vunpack.c.l.b16 %v1604
    %v1934 = vunpack.c.h.b16 %v1604
    %v1935 = vunpack.c.l.b16 %v1605
    %v1936 = vunpack.c.h.b16 %v1605
    %v1937 = vunpack.c.l.b16 %v1606
    %v1938 = vunpack.c.h.b16 %v1606
    %v1939 = vunpack.c.l.b16 %v1607
    %v1940 = vunpack.c.h.b16 %v1607
    %v1941 = vunpack.c.l.b16 %v1608
    %v1942 = vunpack.c.h.b16 %v1608
    %v1943 = vunpack.c.l.b16 %v1609
    %v1944 = vunpack.c.h.b16 %v1609
    %v1945 = vunpack.c.l.b16 %v1610
    %v1946 = vunpack.c.h.b16 %v1610
    %v1947 = vunpack.c.l.b16 %v1611
    %v1948 = vunpack.c.h.b16 %v1611
    %v1949 = vunpack.c.l.b16 %v1612
    %v1950 = vunpack.c.h.b16 %v1612
    %v1951 = vunpack.c.l.b16 %v1613
    %v1952 = vunpack.c.h.b16 %v1613
    %v1953 = vunpack.c.l.b16 %v1614
    %v1954 = vunpack.c.h.b16 %v1614
    %v1955 = vunpack.c.l.b16 %v1615
    %v1956 = vunpack.c.h.b16 %v1615
    %v1957 = vunpack.c.l.b16 %v1616
    %v1958 = vunpack.c.h.b16 %v1616
    %v1959 = vunpack.c.l.b16 %v1617
    %v1960 = vunpack.c.h.b16 %v1617
    %v1961 = vunpack.c.l.b16 %v1618
    %v1962 = vunpack.c.h.b16 %v1618
    %v1963 = vunpack.c.l.b16 %v1619
    %v1964 = vunpack.c.h.b16 %v1619
    %v1965 = vunpack.c.l.b16 %v1620
    %v1966 = vunpack.c.h.b16 %v1620
    %v1967 = vunpack.c.l.b16 %v1621
    %v1968 = vunpack.c.h.b16 %v1621
    %v1969 = vunpack.c.l.b16 %v1622
    %v1970 = vunpack.c.h.b16 %v1622
    %v1971 = vunpack.c.l.b16 %v1623
    %v1972 = vunpack.c.h.b16 %v1623
    %v1973 = vunpack.c.l.b16 %v1624
    %v1974 = vunpack.c.h.b16 %v1624
    %v1975 = vunpack.c.l.b16 %v1625
    %v1976 = vunpack.c.h.b16 %v1625
    %v1977 = vunpack.c.l.b16 %v1626
    %v1978 = vunpack.c.h.b16 %v1626
    %v1979 = vunpack.c.l.b16 %v1627
    %v1980 = vunpack.c.h.b16 %v1627
    %v1981 = vunpack.c.l.b16 %v1628
    %v1982 = vunpack.c.h.b16 %v1628
    %v1983 = vunpack.c.l.b16 %v1629
    %v1984 = vunpack.c.h.b16 %v1629
    %v1985 = vunpack.c.l.b16 %v1630
    %v1986 = vunpack.c.h.b16 %v1630
    %v1987 = vunpack.c.l.b16 %v1631
    %v1988 = vunpack.c.h.b16 %v1631
    %v1989 = vunpack.c.l.b16 %v1632
    %v1990 = vunpack.c.h.b16 %v1632
    %v1991 = vunpack.c.l.b16 %v1633
    %v1992 = vunpack.c.h.b16 %v1633
    %v1993 = vunpack.c.l.b16 %v1634
    %v1994 = vunpack.c.h.b16 %v1634
    %v1995 = vunpack.c.l.b16 %v1635
    %v1996 = vunpack.c.h.b16 %v1635
    %v1997 = vunpack.c.l.b16 %v1636
    %v1998 = vunpack.c.h.b16 %v1636
    %v1999 = vunpack.c.l.b16 %v1637
    %v2000 = vunpack.c.h.b16 %v1637
    %v2001 = vunpack.c.l.b16 %v1638
    %v2002 = vunpack.c.h.b16 %v1638
    %v2003 = vunpack.c.l.b16 %v1639
    %v2004 = vunpack.c.h.b16 %v1639
    %v2005 = vunpack.c.l.b16 %v1640
    %v2006 = vunpack.c.h.b16 %v1640
    %v2007 = vunpack.c.l.b16 %v1641
    %v2008 = vunpack.c.h.b16 %v1641
    %v2009 = vunpack.c.l.b16 %v1642
    %v2010 = vunpack.c.h.b16 %v1642
    %v2011 = vunpack.c.l.b16 %v1643
    %v2012 = vunpack.c.h.b16 %v1643
    %v2013 = vunpack.c.l.b16 %v1644
    %v2014 = vunpack.c.h.b16 %v1644
    %v2015 = vunpack.c.l.b16 %v1645
    %v2016 = vunpack.c.h.b16 %v1645
    %v2017 = vunpack.c.l.b16 %v1646
    %v2018 = vunpack.c.h.b16 %v1646
    %v2019 = vunpack.c.l.b16 %v1647
    %v2020 = vunpack.c.h.b16 %v1647
    %v2021 = vunpack.c.l.b16 %v1648
    %v2022 = vunpack.c.h.b16 %v1648
    %v2023 = vunpack.c.l.b16 %v1649
    %v2024 = vunpack.c.h.b16 %v1649
    %v2025 = vunpack.c.l.b16 %v1650
    %v2026 = vunpack.c.h.b16 %v1650
    %v2027 = vunpack.c.l.b16 %v1651
    %v2028 = vunpack.c.h.b16 %v1651
    %v2029 = vunpack.c.l.b16 %v1652
    %v2030 = vunpack.c.h.b16 %v1652
    %v2031 = vunpack.c.l.b16 %v1653
    %v2032 = vunpack.c.h.b16 %v1653
    %v2033 = vunpack.c.l.b16 %v1654
    %v2034 = vunpack.c.h.b16 %v1654
    %v2035 = vunpack.c.l.b16 %v1655
    %v2036 = vunpack.c.h.b16 %v1655
    %v2037 = vunpack.c.l.b16 %v1656
    %v2038 = vunpack.c.h.b16 %v1656
    %v2039 = vunpack.c.l.b16 %v1657
    %v2040 = vunpack.c.h.b16 %v1657
    %v2041 = vunpack.c.l.b16 %v1658
    %v2042 = vunpack.c.h.b16 %v1658
    %v2043 = vpack.c.b16 %v1795, %v1787
    %v2044 = vpack.c.b16 %v1796, %v1788
    %v2045 = vpack.c.b16 %v1797, %v1789
    %v2046 = vpack.c.b16 %v1798, %v1790
    %v2047 = vpack.c.b16 %v1799, %v1791
    %v2048 = vpack.c.b16 %v1800, %v1792
    %v2049 = vpack.c.b16 %v1801, %v1793
    %v2050 = vpack.c.b16 %v1802, %v1794
    %v2051 = vpack.c.b16 %v1811, %v1803
    %v2052 = vpack.c.b16 %v1812, %v1804
    %v2053 = vpack.c.b16 %v1813, %v1805
    %v2054 = vpack.c.b16 %v1814, %v1806
    %v2055 = vpack.c.b16 %v1815, %v1807
    %v2056 = vpack.c.b16 %v1816, %v1808
    %v2057 = vpack.c.b16 %v1817, %v1809
    %v2058 = vpack.c.b16 %v1818, %v1810
    %v2059 = vpack.c.b16 %v1827, %v1819
    %v2060 = vpack.c.b16 %v1828, %v1820
    %v2061 = vpack.c.b16 %v1829, %v1821
    %v2062 = vpack.c.b16 %v1830, %v1822
    %v2063 = vpack.c.b16 %v1831, %v1823
    %v2064 = vpack.c.b16 %v1832, %v1824
    %v2065 = vpack.c.b16 %v1833, %v1825
    %v2066 = vpack.c.b16 %v1834, %v1826
    %v2067 = vpack.c.b16 %v1843, %v1835
    %v2068 = vpack.c.b16 %v1844, %v1836
    %v2069 = vpack.c.b16 %v1845, %v1837
    %v2070 = vpack.c.b16 %v1846, %v1838
    %v2071 = vpack.c.b16 %v1847, %v1839
    %v2072 = vpack.c.b16 %v1848, %v1840
    %v2073 = vpack.c.b16 %v1849, %v1841
    %v2074 = vpack.c.b16 %v1850, %v1842
    %v2075 = vpack.c.b16 %v1859, %v1851
    %v2076 = vpack.c.b16 %v1860, %v1852
    %v2077 = vpack.c.b16 %v1861, %v1853
    %v2078 = vpack.c.b16 %v1862, %v1854
    %v2079 = vpack.c.b16 %v1863, %v1855
    %v2080 = vpack.c.b16 %v1864, %v1856
    %v2081 = vpack.c.b16 %v1865, %v1857
    %v2082 = vpack.c.b16 %v1866, %v1858
    %v2083 = vpack.c.b16 %v1875, %v1867
    %v2084 = vpack.c.b16 %v1876, %v1868
    %v2085 = vpack.c.b16 %v1877, %v1869
    %v2086 = vpack.c.b16 %v1878, %v1870
    %v2087 = vpack.c.b16 %v1879, %v1871
    %v2088 = vpack.c.b16 %v1880, %v1872
    %v2089 = vpack.c.b16 %v1881, %v1873
    %v2090 = vpack.c.b16 %v1882, %v1874
    %v2091 = vpack.c.b16 %v1891, %v1883
    %v2092 = vpack.c.b16 %v1892, %v1884
    %v2093 = vpack.c.b16 %v1893, %v1885
    %v2094 = vpack.c.b16 %v1894, %v1886
    %v2095 = vpack.c.b16 %v1895, %v1887
    %v2096 = vpack.c.b16 %v1896, %v1888
    %v2097 = vpack.c.b16 %v1897, %v1889
    %v2098 = vpack.c.b16 %v1898, %v1890
    %v2099 = vpack.c.b16 %v1907, %v1899
    %v2100 = vpack.c.b16 %v1908, %v1900
    %v2101 = vpack.c.b16 %v1909, %v1901
    %v2102 = vpack.c.b16 %v1910, %v1902
    %v2103 = vpack.c.b16 %v1911, %v1903
    %v2104 = vpack.c.b16 %v1912, %v1904
    %v2105 = vpack.c.b16 %v1913, %v1905
    %v2106 = vpack.c.b16 %v1914, %v1906
    %v2107 = vpack.c.b16 %v1923, %v1915
    %v2108 = vpack.c.b16 %v1924, %v1916
    %v2109 = vpack.c.b16 %v1925, %v1917
    %v2110 = vpack.c.b16 %v1926, %v1918
    %v2111 = vpack.c.b16 %v1927, %v1919
    %v2112 = vpack.c.b16 %v1928, %v1920
    %v2113 = vpack.c.b16 %v1929, %v1921
    %v2114 = vpack.c.b16 %v1930, %v1922
    %v2115 = vpack.c.b16 %v1939, %v1931
    %v2116 = vpack.c.b16 %v1940, %v1932
    %v2117 = vpack.c.b16 %v1941, %v1933
    %v2118 = vpack.c.b16 %v1942, %v1934
    %v2119 = vpack.c.b16 %v1943, %v1935
    %v2120 = vpack.c.b16 %v1944, %v1936
    %v2121 = vpack.c.b16 %v1945, %v1937
    %v2122 = vpack.c.b16 %v1946, %v1938
    %v2123 = vpack.c.b16 %v1955, %v1947
    %v2124 = vpack.c.b16 %v1956, %v1948
    %v2125 = vpack.c.b16 %v1957, %v1949
    %v2126 = vpack.c.b16 %v1958, %v1950
    %v2127 = vpack.c.b16 %v1959, %v1951
    %v2128 = vpack.c.b16 %v1960, %v1952
    %v2129 = vpack.c.b16 %v1961, %v1953
    %v2130 = vpack.c.b16 %v1962, %v1954
    %v2131 = vpack.c.b16 %v1971, %v1963
    %v2132 = vpack.c.b16 %v1972, %v1964
    %v2133 = vpack.c.b16 %v1973, %v1965
    %v2134 = vpack.c.b16 %v1974, %v1966
    %v2135 = vpack.c.b16 %v1975, %v1967
    %v2136 = vpack.c.b16 %v1976, %v1968
    %v2137 = vpack.c.b16 %v1977, %v1969
    %v2138 = vpack.c.b16 %v1978, %v1970
    %v2139 = vpack.c.b16 %v1987, %v1979
    %v2140 = vpack.c.b16 %v1988, %v1980
    %v2141 = vpack.c.b16 %v1989, %v1981
    %v2142 = vpack.c.b16 %v1990, %v1982
    %v2143 = vpack.c.b16 %v1991, %v1983
    %v2144 = vpack.c.b16 %v1992, %v1984
    %v2145 = vpack.c.b16 %v1993, %v1985
    %v2146 = vpack.c.b16 %v1994, %v1986
    %v2147 = vpack.c.b16 %v2003, %v1995
    %v2148 = vpack.c.b16 %v2004, %v1996
    %v2149 = vpack.c.b16 %v2005, %v1997
    %v2150 = vpack.c.b16 %v2006, %v1998
    %v2151 = vpack.c.b16 %v2007, %v1999
    %v2152 = vpack.c.b16 %v2008, %v2000
    %v2153 = vpack.c.b16 %v2009, %v2001
    %v2154 = vpack.c.b16 %v2010, %v2002
    %v2155 = vpack.c.b16 %v2019, %v2011
    %v2156 = vpack.c.b16 %v2020, %v2012
    %v2157 = vpack.c.b16 %v2021, %v2013
    %v2158 = vpack.c.b16 %v2022, %v2014
    %v2159 = vpack.c.b16 %v2023, %v2015
    %v2160 = vpack.c.b16 %v2024, %v2016
    %v2161 = vpack.c.b16 %v2025, %v2017
    %v2162 = vpack.c.b16 %v2026, %v2018
    %v2163 = vpack.c.b16 %v2035, %v2027
    %v2164 = vpack.c.b16 %v2036, %v2028
    %v2165 = vpack.c.b16 %v2037, %v2029
    %v2166 = vpack.c.b16 %v2038, %v2030
    %v2167 = vpack.c.b16 %v2039, %v2031
    %v2168 = vpack.c.b16 %v2040, %v2032
    %v2169 = vpack.c.b16 %v2041, %v2033
    %v2170 = vpack.c.b16 %v2042, %v2034
    %2299 = vmatprep.subr.bf16.mxu0 %v2044
    %2300 = vmatpush1.bf16.msra.mxu0 %v2043
    %2301 = vmatprep.subr.bf16.mxu0 %v2052
    %2302 = vmatpush1.bf16.msra.mxu0 %v2051
    %2303 = vmatprep.subr.bf16.mxu0 %v2060
    %2304 = vmatpush1.bf16.msra.mxu0 %v2059
    %2305 = vmatprep.subr.bf16.mxu0 %v2068
    %2306 = vmatpush1.bf16.msra.mxu0 %v2067
    %2307 = vmatprep.subr.bf16.mxu0 %v2076
    %2308 = vmatpush1.bf16.msra.mxu0 %v2075
    %2309 = vmatprep.subr.bf16.mxu0 %v2084
    %2310 = vmatpush1.bf16.msra.mxu0 %v2083
    %2311 = vmatprep.subr.bf16.mxu0 %v2092
    %2312 = vmatpush1.bf16.msra.mxu0 %v2091
    %2313 = vmatprep.subr.bf16.mxu0 %v2100
    %2314 = vmatpush1.bf16.msra.mxu0 %v2099
    %2315 = vmatprep.subr.bf16.mxu0 %v2108
    %2316 = vmatpush1.bf16.msra.mxu0 %v2107
    %2317 = vmatprep.subr.bf16.mxu0 %v2116
    %2318 = vmatpush1.bf16.msra.mxu0 %v2115
    %2319 = vmatprep.subr.bf16.mxu0 %v2124
    %2320 = vmatpush1.bf16.msra.mxu0 %v2123
    %2321 = vmatprep.subr.bf16.mxu0 %v2132
    %2322 = vmatpush1.bf16.msra.mxu0 %v2131
    %2323 = vmatprep.subr.bf16.mxu0 %v2140
    %2324 = vmatpush1.bf16.msra.mxu0 %v2139
    %2325 = vmatprep.subr.bf16.mxu0 %v2148
    %2326 = vmatpush1.bf16.msra.mxu0 %v2147
    %2327 = vmatprep.subr.bf16.mxu0 %v2156
    %2328 = vmatpush1.bf16.msra.mxu0 %v2155
    %2329 = vmatprep.subr.bf16.mxu0 %v2164
    %2330 = vmatpush1.bf16.msra.mxu0 %v2163
    %2331 = vmatprep.mubr.bf16.mxu0 %v1528
    %2332 = vmatmul.mubr.bf16.gmra.mrb[0].mxu0 %v1527
    %v2333 = vpop.f32.mrb[0].mxu0
    %v2334 = vadd.f32 0.0, %v2333
    %v2335 = vpop.f32.mrb[0].mxu0
    %v2336 = vadd.f32 0.0, %v2335
    %v2337 = vpop.f32.mrb[0].mxu0
    %v2338 = vadd.f32 0.0, %v2337
    %v2339 = vpop.f32.mrb[0].mxu0
    %v2340 = vadd.f32 0.0, %v2339
    %2341 = vmatprep.mubr.bf16.mxu0 %v1530
    %2342 = vmatmul.mubr.bf16.gmra.mrb[0].mxu0 %v1529
    %v2343 = vpop.f32.mrb[0].mxu0
    %v2344 = vadd.f32 0.0, %v2343
    %v2345 = vpop.f32.mrb[0].mxu0
    %v2346 = vadd.f32 0.0, %v2345
    %v2347 = vpop.f32.mrb[0].mxu0
    %v2348 = vadd.f32 0.0, %v2347
    %v2349 = vpop.f32.mrb[0].mxu0
    %v2350 = vadd.f32 0.0, %v2349
    %2351 = vdwg.mxu0
    %2352 = vmatprep.subr.bf16.mxu0 %v2046
    %2353 = vmatpush1.bf16.msra.mxu0 %v2045
    %2354 = vmatprep.subr.bf16.mxu0 %v2054
    %2355 = vmatpush1.bf16.msra.mxu0 %v2053
    %2356 = vmatprep.subr.bf16.mxu0 %v2062
    %2357 = vmatpush1.bf16.msra.mxu0 %v2061
    %2358 = vmatprep.subr.bf16.mxu0 %v2070
    %2359 = vmatpush1.bf16.msra.mxu0 %v2069
    %2360 = vmatprep.subr.bf16.mxu0 %v2078
    %2361 = vmatpush1.bf16.msra.mxu0 %v2077
    %2362 = vmatprep.subr.bf16.mxu0 %v2086
    %2363 = vmatpush1.bf16.msra.mxu0 %v2085
    %2364 = vmatprep.subr.bf16.mxu0 %v2094
    %2365 = vmatpush1.bf16.msra.mxu0 %v2093
    %2366 = vmatprep.subr.bf16.mxu0 %v2102
    %2367 = vmatpush1.bf16.msra.mxu0 %v2101
    %2368 = vmatprep.subr.bf16.mxu0 %v2110
    %2369 = vmatpush1.bf16.msra.mxu0 %v2109
    %2370 = vmatprep.subr.bf16.mxu0 %v2118
    %2371 = vmatpush1.bf16.msra.mxu0 %v2117
    %2372 = vmatprep.subr.bf16.mxu0 %v2126
    %2373 = vmatpush1.bf16.msra.mxu0 %v2125
    %2374 = vmatprep.subr.bf16.mxu0 %v2134
    %2375 = vmatpush1.bf16.msra.mxu0 %v2133
    %2376 = vmatprep.subr.bf16.mxu0 %v2142
    %2377 = vmatpush1.bf16.msra.mxu0 %v2141
    %2378 = vmatprep.subr.bf16.mxu0 %v2150
    %2379 = vmatpush1.bf16.msra.mxu0 %v2149
    %2380 = vmatprep.subr.bf16.mxu0 %v2158
    %2381 = vmatpush1.bf16.msra.mxu0 %v2157
    %2382 = vmatprep.subr.bf16.mxu0 %v2166
    %2383 = vmatpush1.bf16.msra.mxu0 %v2165
    %2384 = vmatprep.mubr.bf16.mxu0 %v1528
    %2385 = vmatmul.mubr.bf16.gmra.mrb[0].mxu0 %v1527
    %v2386 = vpop.f32.mrb[0].mxu0
    %v2387 = vadd.f32 0.0, %v2386
    %v2388 = vpop.f32.mrb[0].mxu0
    %v2389 = vadd.f32 0.0, %v2388
    %v2390 = vpop.f32.mrb[0].mxu0
    %v2391 = vadd.f32 0.0, %v2390
    %v2392 = vpop.f32.mrb[0].mxu0
    %v2393 = vadd.f32 0.0, %v2392
    %2394 = vmatprep.mubr.bf16.mxu0 %v1530
    %2395 = vmatmul.mubr.bf16.gmra.mrb[0].mxu0 %v1529
    %v2396 = vpop.f32.mrb[0].mxu0
    %v2397 = vadd.f32 0.0, %v2396
    %v2398 = vpop.f32.mrb[0].mxu0
    %v2399 = vadd.f32 0.0, %v2398
    %v2400 = vpop.f32.mrb[0].mxu0
    %v2401 = vadd.f32 0.0, %v2400
    %v2402 = vpop.f32.mrb[0].mxu0
    %v2403 = vadd.f32 0.0, %v2402
    %2404 = vdwg.mxu0
    %2405 = vmatprep.subr.bf16.mxu0 %v2048
    %2406 = vmatpush1.bf16.msra.mxu0 %v2047
    %2407 = vmatprep.subr.bf16.mxu0 %v2056
    %2408 = vmatpush1.bf16.msra.mxu0 %v2055
    %2409 = vmatprep.subr.bf16.mxu0 %v2064
    %2410 = vmatpush1.bf16.msra.mxu0 %v2063
    %2411 = vmatprep.subr.bf16.mxu0 %v2072
    %2412 = vmatpush1.bf16.msra.mxu0 %v2071
    %2413 = vmatprep.subr.bf16.mxu0 %v2080
    %2414 = vmatpush1.bf16.msra.mxu0 %v2079
    %2415 = vmatprep.subr.bf16.mxu0 %v2088
    %2416 = vmatpush1.bf16.msra.mxu0 %v2087
    %2417 = vmatprep.subr.bf16.mxu0 %v2096
    %2418 = vmatpush1.bf16.msra.mxu0 %v2095
    %2419 = vmatprep.subr.bf16.mxu0 %v2104
    %2420 = vmatpush1.bf16.msra.mxu0 %v2103
    %2421 = vmatprep.subr.bf16.mxu0 %v2112
    %2422 = vmatpush1.bf16.msra.mxu0 %v2111
    %2423 = vmatprep.subr.bf16.mxu0 %v2120
    %2424 = vmatpush1.bf16.msra.mxu0 %v2119
    %2425 = vmatprep.subr.bf16.mxu0 %v2128
    %2426 = vmatpush1.bf16.msra.mxu0 %v2127
    %2427 = vmatprep.subr.bf16.mxu0 %v2136
    %2428 = vmatpush1.bf16.msra.mxu0 %v2135
    %2429 = vmatprep.subr.bf16.mxu0 %v2144
    %2430 = vmatpush1.bf16.msra.mxu0 %v2143
    %2431 = vmatprep.subr.bf16.mxu0 %v2152
    %2432 = vmatpush1.bf16.msra.mxu0 %v2151
    %2433 = vmatprep.subr.bf16.mxu0 %v2160
    %2434 = vmatpush1.bf16.msra.mxu0 %v2159
    %2435 = vmatprep.subr.bf16.mxu0 %v2168
    %2436 = vmatpush1.bf16.msra.mxu0 %v2167
    %2437 = vmatprep.mubr.bf16.mxu0 %v1528
    %2438 = vmatmul.mubr.bf16.gmra.mrb[0].mxu0 %v1527
    %v2439 = vpop.f32.mrb[0].mxu0
    %v2440 = vadd.f32 0.0, %v2439
    %v2441 = vpop.f32.mrb[0].mxu0
    %v2442 = vadd.f32 0.0, %v2441
    %v2443 = vpop.f32.mrb[0].mxu0
    %v2444 = vadd.f32 0.0, %v2443
    %v2445 = vpop.f32.mrb[0].mxu0
    %v2446 = vadd.f32 0.0, %v2445
    %2447 = vmatprep.mubr.bf16.mxu0 %v1530
    %2448 = vmatmul.mubr.bf16.gmra.mrb[0].mxu0 %v1529
    %v2449 = vpop.f32.mrb[0].mxu0
    %v2450 = vadd.f32 0.0, %v2449
    %v2451 = vpop.f32.mrb[0].mxu0
    %v2452 = vadd.f32 0.0, %v2451
    %v2453 = vpop.f32.mrb[0].mxu0
    %v2454 = vadd.f32 0.0, %v2453
    %v2455 = vpop.f32.mrb[0].mxu0
    %v2456 = vadd.f32 0.0, %v2455
    %2457 = vdwg.mxu0
    %2458 = vmatprep.subr.bf16.mxu0 %v2050
    %2459 = vmatpush1.bf16.msra.mxu0 %v2049
    %2460 = vmatprep.subr.bf16.mxu0 %v2058
    %2461 = vmatpush1.bf16.msra.mxu0 %v2057
    %2462 = vmatprep.subr.bf16.mxu0 %v2066
    %2463 = vmatpush1.bf16.msra.mxu0 %v2065
    %2464 = vmatprep.subr.bf16.mxu0 %v2074
    %2465 = vmatpush1.bf16.msra.mxu0 %v2073
    %2466 = vmatprep.subr.bf16.mxu0 %v2082
    %2467 = vmatpush1.bf16.msra.mxu0 %v2081
    %2468 = vmatprep.subr.bf16.mxu0 %v2090
    %2469 = vmatpush1.bf16.msra.mxu0 %v2089
    %2470 = vmatprep.subr.bf16.mxu0 %v2098
    %2471 = vmatpush1.bf16.msra.mxu0 %v2097
    %2472 = vmatprep.subr.bf16.mxu0 %v2106
    %2473 = vmatpush1.bf16.msra.mxu0 %v2105
    %2474 = vmatprep.subr.bf16.mxu0 %v2114
    %2475 = vmatpush1.bf16.msra.mxu0 %v2113
    %2476 = vmatprep.subr.bf16.mxu0 %v2122
    %2477 = vmatpush1.bf16.msra.mxu0 %v2121
    %2478 = vmatprep.subr.bf16.mxu0 %v2130
    %2479 = vmatpush1.bf16.msra.mxu0 %v2129
    %2480 = vmatprep.subr.bf16.mxu0 %v2138
    %2481 = vmatpush1.bf16.msra.mxu0 %v2137
    %2482 = vmatprep.subr.bf16.mxu0 %v2146
    %2483 = vmatpush1.bf16.msra.mxu0 %v2145
    %2484 = vmatprep.subr.bf16.mxu0 %v2154
    %2485 = vmatpush1.bf16.msra.mxu0 %v2153
    %2486 = vmatprep.subr.bf16.mxu0 %v2162
    %2487 = vmatpush1.bf16.msra.mxu0 %v2161
    %2488 = vmatprep.subr.bf16.mxu0 %v2170
    %2489 = vmatpush1.bf16.msra.mxu0 %v2169
    %2490 = vmatprep.mubr.bf16.mxu0 %v1528
    %2491 = vmatmul.mubr.bf16.gmra.mrb[0].mxu0 %v1527
    %v2492 = vpop.f32.mrb[0].mxu0
    %v2493 = vadd.f32 0.0, %v2492
    %v2494 = vpop.f32.mrb[0].mxu0
    %v2495 = vadd.f32 0.0, %v2494
    %v2496 = vpop.f32.mrb[0].mxu0
    %v2497 = vadd.f32 0.0, %v2496
    %v2498 = vpop.f32.mrb[0].mxu0
    %v2499 = vadd.f32 0.0, %v2498
    %2500 = vmatprep.mubr.bf16.mxu0 %v1530
    %2501 = vmatmul.mubr.bf16.gmra.mrb[0].mxu0 %v1529
    %v2502 = vpop.f32.mrb[0].mxu0
    %v2503 = vadd.f32 0.0, %v2502
    %v2504 = vpop.f32.mrb[0].mxu0
    %v2505 = vadd.f32 0.0, %v2504
    %v2506 = vpop.f32.mrb[0].mxu0
    %v2507 = vadd.f32 0.0, %v2506
    %v2508 = vpop.f32.mrb[0].mxu0
    %v2509 = vadd.f32 0.0, %v2508
    %2510 = vdwg.mxu0
    %v2511 = vadd.f32 %v1487, %v2334
    %v2512 = vadd.f32 %v1488, %v2336
    %v2513 = vadd.f32 %v1489, %v2387
    %v2514 = vadd.f32 %v1490, %v2389
    %v2515 = vadd.f32 %v1491, %v2440
    %v2516 = vadd.f32 %v1492, %v2442
    %v2517 = vadd.f32 %v1493, %v2493
    %v2518 = vadd.f32 %v1494, %v2495
    %v2519 = vadd.f32 %v1495, %v2338
    %v2520 = vadd.f32 %v1496, %v2340
    %v2521 = vadd.f32 %v1497, %v2391
    %v2522 = vadd.f32 %v1498, %v2393
    %v2523 = vadd.f32 %v1499, %v2444
    %v2524 = vadd.f32 %v1500, %v2446
    %v2525 = vadd.f32 %v1501, %v2497
    %v2526 = vadd.f32 %v1502, %v2499
    %v2527 = vadd.f32 %v1503, %v2344
    %v2528 = vadd.f32 %v1504, %v2346
    %v2529 = vadd.f32 %v1505, %v2397
    %v2530 = vadd.f32 %v1506, %v2399
    %v2531 = vadd.f32 %v1507, %v2450
    %v2532 = vadd.f32 %v1508, %v2452
    %v2533 = vadd.f32 %v1509, %v2503
    %v2534 = vadd.f32 %v1510, %v2505
    %v2535 = vadd.f32 %v1511, %v2348
    %v2536 = vadd.f32 %v1512, %v2350
    %v2537 = vadd.f32 %v1513, %v2401
    %v2538 = vadd.f32 %v1514, %v2403
    %v2539 = vadd.f32 %v1515, %v2454
    %v2540 = vadd.f32 %v1516, %v2456
    %v2541 = vadd.f32 %v1517, %v2507
    %v2542 = vadd.f32 %v1518, %v2509
    %v2543 = vld [vmem:[%s8] sm:$0xff]
    %v2545 = vlaneseq
    %v2546 = vshrl.u32 %v2545, 7
    %v2547 = vsub.s32 0, %v2546
    %v2548 = vrot.slane %v2543, %v2547
    %v2549 = vlaneseq
    %v2550 = vshrl.u32 %v2549, 7
    %v2551 = vsub.s32 1, %v2550
    %v2552 = vrot.slane %v2543, %v2551
    %v2553 = vlaneseq
    %v2554 = vshrl.u32 %v2553, 7
    %v2555 = vsub.s32 2, %v2554
    %v2556 = vrot.slane %v2543, %v2555
    %v2557 = vlaneseq
    %v2558 = vshrl.u32 %v2557, 7
    %v2559 = vsub.s32 3, %v2558
    %v2560 = vrot.slane %v2543, %v2559
    %v2561 = vlaneseq
    %v2562 = vshrl.u32 %v2561, 7
    %v2563 = vsub.s32 4, %v2562
    %v2564 = vrot.slane %v2543, %v2563
    %v2565 = vlaneseq
    %v2566 = vshrl.u32 %v2565, 7
    %v2567 = vsub.s32 5, %v2566
    %v2568 = vrot.slane %v2543, %v2567
    %v2569 = vlaneseq
    %v2570 = vshrl.u32 %v2569, 7
    %v2571 = vsub.s32 6, %v2570
    %v2572 = vrot.slane %v2543, %v2571
    %v2573 = vlaneseq
    %v2574 = vshrl.u32 %v2573, 7
    %v2575 = vsub.s32 7, %v2574
    %v2576 = vrot.slane %v2543, %v2575
    %v2585 = vmul.f32 %v2511, %v2548
    %v2586 = vmul.f32 %v2512, %v2552
    %v2587 = vmul.f32 %v2513, %v2556
    %v2588 = vmul.f32 %v2514, %v2560
    %v2589 = vmul.f32 %v2515, %v2564
    %v2590 = vmul.f32 %v2516, %v2568
    %v2591 = vmul.f32 %v2517, %v2572
    %v2592 = vmul.f32 %v2518, %v2576
    %v2593 = vmul.f32 %v2519, %v2548
    %v2594 = vmul.f32 %v2520, %v2552
    %v2595 = vmul.f32 %v2521, %v2556
    %v2596 = vmul.f32 %v2522, %v2560
    %v2597 = vmul.f32 %v2523, %v2564
    %v2598 = vmul.f32 %v2524, %v2568
    %v2599 = vmul.f32 %v2525, %v2572
    %v2600 = vmul.f32 %v2526, %v2576
    %v2601 = vmul.f32 %v2527, %v2548
    %v2602 = vmul.f32 %v2528, %v2552
    %v2603 = vmul.f32 %v2529, %v2556
    %v2604 = vmul.f32 %v2530, %v2560
    %v2605 = vmul.f32 %v2531, %v2564
    %v2606 = vmul.f32 %v2532, %v2568
    %v2607 = vmul.f32 %v2533, %v2572
    %v2608 = vmul.f32 %v2534, %v2576
    %v2609 = vmul.f32 %v2535, %v2548
    %v2610 = vmul.f32 %v2536, %v2552
    %v2611 = vmul.f32 %v2537, %v2556
    %v2612 = vmul.f32 %v2538, %v2560
    %v2613 = vmul.f32 %v2539, %v2564
    %v2614 = vmul.f32 %v2540, %v2568
    %v2615 = vmul.f32 %v2541, %v2572
    %v2616 = vmul.f32 %v2542, %v2576
    %v2617 = vld [vmem:[%s9] sm:$0xff]
    %v2619 = vlaneseq
    %v2620 = vshrl.u32 %v2619, 7
    %v2621 = vsub.s32 0, %v2620
    %v2622 = vrot.slane %v2617, %v2621
    %v2623 = vlaneseq
    %v2624 = vshrl.u32 %v2623, 7
    %v2625 = vsub.s32 1, %v2624
    %v2626 = vrot.slane %v2617, %v2625
    %v2627 = vlaneseq
    %v2628 = vshrl.u32 %v2627, 7
    %v2629 = vsub.s32 2, %v2628
    %v2630 = vrot.slane %v2617, %v2629
    %v2631 = vlaneseq
    %v2632 = vshrl.u32 %v2631, 7
    %v2633 = vsub.s32 3, %v2632
    %v2634 = vrot.slane %v2617, %v2633
    %v2635 = vlaneseq
    %v2636 = vshrl.u32 %v2635, 7
    %v2637 = vsub.s32 4, %v2636
    %v2638 = vrot.slane %v2617, %v2637
    %v2639 = vlaneseq
    %v2640 = vshrl.u32 %v2639, 7
    %v2641 = vsub.s32 5, %v2640
    %v2642 = vrot.slane %v2617, %v2641
    %v2643 = vlaneseq
    %v2644 = vshrl.u32 %v2643, 7
    %v2645 = vsub.s32 6, %v2644
    %v2646 = vrot.slane %v2617, %v2645
    %v2647 = vlaneseq
    %v2648 = vshrl.u32 %v2647, 7
    %v2649 = vsub.s32 7, %v2648
    %v2650 = vrot.slane %v2617, %v2649
    %v2659 = vadd.f32 %v2585, %v2622
    %v2660 = vadd.f32 %v2586, %v2626
    %v2661 = vadd.f32 %v2587, %v2630
    %v2662 = vadd.f32 %v2588, %v2634
    %v2663 = vadd.f32 %v2589, %v2638
    %v2664 = vadd.f32 %v2590, %v2642
    %v2665 = vadd.f32 %v2591, %v2646
    %v2666 = vadd.f32 %v2592, %v2650
    %v2667 = vadd.f32 %v2593, %v2622
    %v2668 = vadd.f32 %v2594, %v2626
    %v2669 = vadd.f32 %v2595, %v2630
    %v2670 = vadd.f32 %v2596, %v2634
    %v2671 = vadd.f32 %v2597, %v2638
    %v2672 = vadd.f32 %v2598, %v2642
    %v2673 = vadd.f32 %v2599, %v2646
    %v2674 = vadd.f32 %v2600, %v2650
    %v2675 = vadd.f32 %v2601, %v2622
    %v2676 = vadd.f32 %v2602, %v2626
    %v2677 = vadd.f32 %v2603, %v2630
    %v2678 = vadd.f32 %v2604, %v2634
    %v2679 = vadd.f32 %v2605, %v2638
    %v2680 = vadd.f32 %v2606, %v2642
    %v2681 = vadd.f32 %v2607, %v2646
    %v2682 = vadd.f32 %v2608, %v2650
    %v2683 = vadd.f32 %v2609, %v2622
    %v2684 = vadd.f32 %v2610, %v2626
    %v2685 = vadd.f32 %v2611, %v2630
    %v2686 = vadd.f32 %v2612, %v2634
    %v2687 = vadd.f32 %v2613, %v2638
    %v2688 = vadd.f32 %v2614, %v2642
    %v2689 = vadd.f32 %v2615, %v2646
    %v2690 = vadd.f32 %v2616, %v2650
    %vm2691 = vcmp.ge.f32.partialorder %v2659, 0.0
    %vm2692 = vcmp.ge.f32.partialorder %v2660, 0.0
    %vm2693 = vcmp.ge.f32.partialorder %v2661, 0.0
    %vm2694 = vcmp.ge.f32.partialorder %v2662, 0.0
    %vm2695 = vcmp.ge.f32.partialorder %v2663, 0.0
    %vm2696 = vcmp.ge.f32.partialorder %v2664, 0.0
    %vm2697 = vcmp.ge.f32.partialorder %v2665, 0.0
    %vm2698 = vcmp.ge.f32.partialorder %v2666, 0.0
    %vm2699 = vcmp.ge.f32.partialorder %v2667, 0.0
    %vm2700 = vcmp.ge.f32.partialorder %v2668, 0.0
    %vm2701 = vcmp.ge.f32.partialorder %v2669, 0.0
    %vm2702 = vcmp.ge.f32.partialorder %v2670, 0.0
    %vm2703 = vcmp.ge.f32.partialorder %v2671, 0.0
    %vm2704 = vcmp.ge.f32.partialorder %v2672, 0.0
    %vm2705 = vcmp.ge.f32.partialorder %v2673, 0.0
    %vm2706 = vcmp.ge.f32.partialorder %v2674, 0.0
    %vm2707 = vcmp.ge.f32.partialorder %v2675, 0.0
    %vm2708 = vcmp.ge.f32.partialorder %v2676, 0.0
    %vm2709 = vcmp.ge.f32.partialorder %v2677, 0.0
    %vm2710 = vcmp.ge.f32.partialorder %v2678, 0.0
    %vm2711 = vcmp.ge.f32.partialorder %v2679, 0.0
    %vm2712 = vcmp.ge.f32.partialorder %v2680, 0.0
    %vm2713 = vcmp.ge.f32.partialorder %v2681, 0.0
    %vm2714 = vcmp.ge.f32.partialorder %v2682, 0.0
    %vm2715 = vcmp.ge.f32.partialorder %v2683, 0.0
    %vm2716 = vcmp.ge.f32.partialorder %v2684, 0.0
    %vm2717 = vcmp.ge.f32.partialorder %v2685, 0.0
    %vm2718 = vcmp.ge.f32.partialorder %v2686, 0.0
    %vm2719 = vcmp.ge.f32.partialorder %v2687, 0.0
    %vm2720 = vcmp.ge.f32.partialorder %v2688, 0.0
    %vm2721 = vcmp.ge.f32.partialorder %v2689, 0.0
    %vm2722 = vcmp.ge.f32.partialorder %v2690, 0.0
    %v2723 = vmul.f32 %v2659, 0.2
    %v2724 = vmul.f32 %v2660, 0.2
    %v2725 = vmul.f32 %v2661, 0.2
    %v2726 = vmul.f32 %v2662, 0.2
    %v2727 = vmul.f32 %v2663, 0.2
    %v2728 = vmul.f32 %v2664, 0.2
    %v2729 = vmul.f32 %v2665, 0.2
    %v2730 = vmul.f32 %v2666, 0.2
    %v2731 = vmul.f32 %v2667, 0.2
    %v2732 = vmul.f32 %v2668, 0.2
    %v2733 = vmul.f32 %v2669, 0.2
    %v2734 = vmul.f32 %v2670, 0.2
    %v2735 = vmul.f32 %v2671, 0.2
    %v2736 = vmul.f32 %v2672, 0.2
    %v2737 = vmul.f32 %v2673, 0.2
    %v2738 = vmul.f32 %v2674, 0.2
    %v2739 = vmul.f32 %v2675, 0.2
    %v2740 = vmul.f32 %v2676, 0.2
    %v2741 = vmul.f32 %v2677, 0.2
    %v2742 = vmul.f32 %v2678, 0.2
    %v2743 = vmul.f32 %v2679, 0.2
    %v2744 = vmul.f32 %v2680, 0.2
    %v2745 = vmul.f32 %v2681, 0.2
    %v2746 = vmul.f32 %v2682, 0.2
    %v2747 = vmul.f32 %v2683, 0.2
    %v2748 = vmul.f32 %v2684, 0.2
    %v2749 = vmul.f32 %v2685, 0.2
    %v2750 = vmul.f32 %v2686, 0.2
    %v2751 = vmul.f32 %v2687, 0.2
    %v2752 = vmul.f32 %v2688, 0.2
    %v2753 = vmul.f32 %v2689, 0.2
    %v2754 = vmul.f32 %v2690, 0.2
    %v2755 = vsel %vm2691, %v2659, %v2723
    %v2756 = vsel %vm2692, %v2660, %v2724
    %v2757 = vsel %vm2693, %v2661, %v2725
    %v2758 = vsel %vm2694, %v2662, %v2726
    %v2759 = vsel %vm2695, %v2663, %v2727
    %v2760 = vsel %vm2696, %v2664, %v2728
    %v2761 = vsel %vm2697, %v2665, %v2729
    %v2762 = vsel %vm2698, %v2666, %v2730
    %v2763 = vsel %vm2699, %v2667, %v2731
    %v2764 = vsel %vm2700, %v2668, %v2732
    %v2765 = vsel %vm2701, %v2669, %v2733
    %v2766 = vsel %vm2702, %v2670, %v2734
    %v2767 = vsel %vm2703, %v2671, %v2735
    %v2768 = vsel %vm2704, %v2672, %v2736
    %v2769 = vsel %vm2705, %v2673, %v2737
    %v2770 = vsel %vm2706, %v2674, %v2738
    %v2771 = vsel %vm2707, %v2675, %v2739
    %v2772 = vsel %vm2708, %v2676, %v2740
    %v2773 = vsel %vm2709, %v2677, %v2741
    %v2774 = vsel %vm2710, %v2678, %v2742
    %v2775 = vsel %vm2711, %v2679, %v2743
    %v2776 = vsel %vm2712, %v2680, %v2744
    %v2777 = vsel %vm2713, %v2681, %v2745
    %v2778 = vsel %vm2714, %v2682, %v2746
    %v2779 = vsel %vm2715, %v2683, %v2747
    %v2780 = vsel %vm2716, %v2684, %v2748
    %v2781 = vsel %vm2717, %v2685, %v2749
    %v2782 = vsel %vm2718, %v2686, %v2750
    %v2783 = vsel %vm2719, %v2687, %v2751
    %v2784 = vsel %vm2720, %v2688, %v2752
    %v2785 = vsel %vm2721, %v2689, %v2753
    %v2786 = vsel %vm2722, %v2690, %v2754
    %v2787 = vpack.c.bf16 %v2763, %v2755
    %v2788 = vpack.c.bf16 %v2764, %v2756
    %v2789 = vpack.c.bf16 %v2765, %v2757
    %v2790 = vpack.c.bf16 %v2766, %v2758
    %v2791 = vpack.c.bf16 %v2767, %v2759
    %v2792 = vpack.c.bf16 %v2768, %v2760
    %v2793 = vpack.c.bf16 %v2769, %v2761
    %v2794 = vpack.c.bf16 %v2770, %v2762
    %v2795 = vpack.c.bf16 %v2779, %v2771
    %v2796 = vpack.c.bf16 %v2780, %v2772
    %v2797 = vpack.c.bf16 %v2781, %v2773
    %v2798 = vpack.c.bf16 %v2782, %v2774
    %v2799 = vpack.c.bf16 %v2783, %v2775
    %v2800 = vpack.c.bf16 %v2784, %v2776
    %v2801 = vpack.c.bf16 %v2785, %v2777
    %v2802 = vpack.c.bf16 %v2786, %v2778
    %v2803 = vld [vmem:[%s10] sm:$0xff]
    %v2804 = vld [vmem:[%s10 + $0x8] sm:$0xff]
    %v2805 = vld [vmem:[%s10 + $0x10] sm:$0xff]
    %v2806 = vld [vmem:[%s10 + $0x18] sm:$0xff]
    %v2807 = vld [vmem:[%s10 + $0x20] sm:$0xff]
    %v2808 = vld [vmem:[%s10 + $0x28] sm:$0xff]
    %v2809 = vld [vmem:[%s10 + $0x30] sm:$0xff]
    %v2810 = vld [vmem:[%s10 + $0x38] sm:$0xff]
    %v2811 = vld [vmem:[%s10 + $0x40] sm:$0xff]
    %v2812 = vld [vmem:[%s10 + $0x48] sm:$0xff]
    %v2813 = vld [vmem:[%s10 + $0x50] sm:$0xff]
    %v2814 = vld [vmem:[%s10 + $0x58] sm:$0xff]
    %v2815 = vld [vmem:[%s10 + $0x60] sm:$0xff]
    %v2816 = vld [vmem:[%s10 + $0x68] sm:$0xff]
    %v2817 = vld [vmem:[%s10 + $0x70] sm:$0xff]
    %v2818 = vld [vmem:[%s10 + $0x78] sm:$0xff]
    %v2819 = vld [vmem:[%s10 + $0x80] sm:$0xff]
    %v2820 = vld [vmem:[%s10 + $0x88] sm:$0xff]
    %v2821 = vld [vmem:[%s10 + $0x90] sm:$0xff]
    %v2822 = vld [vmem:[%s10 + $0x98] sm:$0xff]
    %v2823 = vld [vmem:[%s10 + $0xa0] sm:$0xff]
    %v2824 = vld [vmem:[%s10 + $0xa8] sm:$0xff]
    %v2825 = vld [vmem:[%s10 + $0xb0] sm:$0xff]
    %v2826 = vld [vmem:[%s10 + $0xb8] sm:$0xff]
    %v2827 = vld [vmem:[%s10 + $0xc0] sm:$0xff]
    %v2828 = vld [vmem:[%s10 + $0xc8] sm:$0xff]
    %v2829 = vld [vmem:[%s10 + $0xd0] sm:$0xff]
    %v2830 = vld [vmem:[%s10 + $0xd8] sm:$0xff]
    %v2831 = vld [vmem:[%s10 + $0xe0] sm:$0xff]
    %v2832 = vld [vmem:[%s10 + $0xe8] sm:$0xff]
    %v2833 = vld [vmem:[%s10 + $0xf0] sm:$0xff]
    %v2834 = vld [vmem:[%s10 + $0xf8] sm:$0xff]
    %v2835 = vld [vmem:[%s10 + $0x100] sm:$0xff]
    %v2836 = vld [vmem:[%s10 + $0x108] sm:$0xff]
    %v2837 = vld [vmem:[%s10 + $0x110] sm:$0xff]
    %v2838 = vld [vmem:[%s10 + $0x118] sm:$0xff]
    %v2839 = vld [vmem:[%s10 + $0x120] sm:$0xff]
    %v2840 = vld [vmem:[%s10 + $0x128] sm:$0xff]
    %v2841 = vld [vmem:[%s10 + $0x130] sm:$0xff]
    %v2842 = vld [vmem:[%s10 + $0x138] sm:$0xff]
    %v2843 = vld [vmem:[%s10 + $0x140] sm:$0xff]
    %v2844 = vld [vmem:[%s10 + $0x148] sm:$0xff]
    %v2845 = vld [vmem:[%s10 + $0x150] sm:$0xff]
    %v2846 = vld [vmem:[%s10 + $0x158] sm:$0xff]
    %v2847 = vld [vmem:[%s10 + $0x160] sm:$0xff]
    %v2848 = vld [vmem:[%s10 + $0x168] sm:$0xff]
    %v2849 = vld [vmem:[%s10 + $0x170] sm:$0xff]
    %v2850 = vld [vmem:[%s10 + $0x178] sm:$0xff]
    %v2851 = vld [vmem:[%s10 + $0x180] sm:$0xff]
    %v2852 = vld [vmem:[%s10 + $0x188] sm:$0xff]
    %v2853 = vld [vmem:[%s10 + $0x190] sm:$0xff]
    %v2854 = vld [vmem:[%s10 + $0x198] sm:$0xff]
    %v2855 = vld [vmem:[%s10 + $0x1a0] sm:$0xff]
    %v2856 = vld [vmem:[%s10 + $0x1a8] sm:$0xff]
    %v2857 = vld [vmem:[%s10 + $0x1b0] sm:$0xff]
    %v2858 = vld [vmem:[%s10 + $0x1b8] sm:$0xff]
    %v2859 = vld [vmem:[%s10 + $0x1c0] sm:$0xff]
    %v2860 = vld [vmem:[%s10 + $0x1c8] sm:$0xff]
    %v2861 = vld [vmem:[%s10 + $0x1d0] sm:$0xff]
    %v2862 = vld [vmem:[%s10 + $0x1d8] sm:$0xff]
    %v2863 = vld [vmem:[%s10 + $0x1e0] sm:$0xff]
    %v2864 = vld [vmem:[%s10 + $0x1e8] sm:$0xff]
    %v2865 = vld [vmem:[%s10 + $0x1f0] sm:$0xff]
    %v2866 = vld [vmem:[%s10 + $0x1f8] sm:$0xff]
    %v2867 = vld [vmem:[%s10 + $0x200] sm:$0xff]
    %v2868 = vld [vmem:[%s10 + $0x208] sm:$0xff]
    %v2869 = vld [vmem:[%s10 + $0x210] sm:$0xff]
    %v2870 = vld [vmem:[%s10 + $0x218] sm:$0xff]
    %v2871 = vld [vmem:[%s10 + $0x220] sm:$0xff]
    %v2872 = vld [vmem:[%s10 + $0x228] sm:$0xff]
    %v2873 = vld [vmem:[%s10 + $0x230] sm:$0xff]
    %v2874 = vld [vmem:[%s10 + $0x238] sm:$0xff]
    %v2875 = vld [vmem:[%s10 + $0x240] sm:$0xff]
    %v2876 = vld [vmem:[%s10 + $0x248] sm:$0xff]
    %v2877 = vld [vmem:[%s10 + $0x250] sm:$0xff]
    %v2878 = vld [vmem:[%s10 + $0x258] sm:$0xff]
    %v2879 = vld [vmem:[%s10 + $0x260] sm:$0xff]
    %v2880 = vld [vmem:[%s10 + $0x268] sm:$0xff]
    %v2881 = vld [vmem:[%s10 + $0x270] sm:$0xff]
    %v2882 = vld [vmem:[%s10 + $0x278] sm:$0xff]
    %v2883 = vld [vmem:[%s10 + $0x280] sm:$0xff]
    %v2884 = vld [vmem:[%s10 + $0x288] sm:$0xff]
    %v2885 = vld [vmem:[%s10 + $0x290] sm:$0xff]
    %v2886 = vld [vmem:[%s10 + $0x298] sm:$0xff]
    %v2887 = vld [vmem:[%s10 + $0x2a0] sm:$0xff]
    %v2888 = vld [vmem:[%s10 + $0x2a8] sm:$0xff]
    %v2889 = vld [vmem:[%s10 + $0x2b0] sm:$0xff]
    %v2890 = vld [vmem:[%s10 + $0x2b8] sm:$0xff]
    %v2891 = vld [vmem:[%s10 + $0x2c0] sm:$0xff]
    %v2892 = vld [vmem:[%s10 + $0x2c8] sm:$0xff]
    %v2893 = vld [vmem:[%s10 + $0x2d0] sm:$0xff]
    %v2894 = vld [vmem:[%s10 + $0x2d8] sm:$0xff]
    %v2895 = vld [vmem:[%s10 + $0x2e0] sm:$0xff]
    %v2896 = vld [vmem:[%s10 + $0x2e8] sm:$0xff]
    %v2897 = vld [vmem:[%s10 + $0x2f0] sm:$0xff]
    %v2898 = vld [vmem:[%s10 + $0x2f8] sm:$0xff]
    %v2899 = vld [vmem:[%s10 + $0x300] sm:$0xff]
    %v2900 = vld [vmem:[%s10 + $0x308] sm:$0xff]
    %v2901 = vld [vmem:[%s10 + $0x310] sm:$0xff]
    %v2902 = vld [vmem:[%s10 + $0x318] sm:$0xff]
    %v2903 = vld [vmem:[%s10 + $0x320] sm:$0xff]
    %v2904 = vld [vmem:[%s10 + $0x328] sm:$0xff]
    %v2905 = vld [vmem:[%s10 + $0x330] sm:$0xff]
    %v2906 = vld [vmem:[%s10 + $0x338] sm:$0xff]
    %v2907 = vld [vmem:[%s10 + $0x340] sm:$0xff]
    %v2908 = vld [vmem:[%s10 + $0x348] sm:$0xff]
    %v2909 = vld [vmem:[%s10 + $0x350] sm:$0xff]
    %v2910 = vld [vmem:[%s10 + $0x358] sm:$0xff]
    %v2911 = vld [vmem:[%s10 + $0x360] sm:$0xff]
    %v2912 = vld [vmem:[%s10 + $0x368] sm:$0xff]
    %v2913 = vld [vmem:[%s10 + $0x370] sm:$0xff]
    %v2914 = vld [vmem:[%s10 + $0x378] sm:$0xff]
    %v2915 = vld [vmem:[%s10 + $0x380] sm:$0xff]
    %v2916 = vld [vmem:[%s10 + $0x388] sm:$0xff]
    %v2917 = vld [vmem:[%s10 + $0x390] sm:$0xff]
    %v2918 = vld [vmem:[%s10 + $0x398] sm:$0xff]
    %v2919 = vld [vmem:[%s10 + $0x3a0] sm:$0xff]
    %v2920 = vld [vmem:[%s10 + $0x3a8] sm:$0xff]
    %v2921 = vld [vmem:[%s10 + $0x3b0] sm:$0xff]
    %v2922 = vld [vmem:[%s10 + $0x3b8] sm:$0xff]
    %v2923 = vld [vmem:[%s10 + $0x3c0] sm:$0xff]
    %v2924 = vld [vmem:[%s10 + $0x3c8] sm:$0xff]
    %v2925 = vld [vmem:[%s10 + $0x3d0] sm:$0xff]
    %v2926 = vld [vmem:[%s10 + $0x3d8] sm:$0xff]
    %v2927 = vld [vmem:[%s10 + $0x3e0] sm:$0xff]
    %v2928 = vld [vmem:[%s10 + $0x3e8] sm:$0xff]
    %v2929 = vld [vmem:[%s10 + $0x3f0] sm:$0xff]
    %v2930 = vld [vmem:[%s10 + $0x3f8] sm:$0xff]
    %v2931 = vld [vmem:[%s10 + $0x400] sm:$0xff]
    %v2932 = vld [vmem:[%s10 + $0x408] sm:$0xff]
    %v2933 = vld [vmem:[%s10 + $0x410] sm:$0xff]
    %v2934 = vld [vmem:[%s10 + $0x418] sm:$0xff]
    %v2935 = vld [vmem:[%s10 + $0x420] sm:$0xff]
    %v2936 = vld [vmem:[%s10 + $0x428] sm:$0xff]
    %v2937 = vld [vmem:[%s10 + $0x430] sm:$0xff]
    %v2938 = vld [vmem:[%s10 + $0x438] sm:$0xff]
    %v2939 = vld [vmem:[%s10 + $0x440] sm:$0xff]
    %v2940 = vld [vmem:[%s10 + $0x448] sm:$0xff]
    %v2941 = vld [vmem:[%s10 + $0x450] sm:$0xff]
    %v2942 = vld [vmem:[%s10 + $0x458] sm:$0xff]
    %v2943 = vld [vmem:[%s10 + $0x460] sm:$0xff]
    %v2944 = vld [vmem:[%s10 + $0x468] sm:$0xff]
    %v2945 = vld [vmem:[%s10 + $0x470] sm:$0xff]
    %v2946 = vld [vmem:[%s10 + $0x478] sm:$0xff]
    %v2947 = vld [vmem:[%s10 + $0x480] sm:$0xff]
    %v2948 = vld [vmem:[%s10 + $0x488] sm:$0xff]
    %v2949 = vld [vmem:[%s10 + $0x490] sm:$0xff]
    %v2950 = vld [vmem:[%s10 + $0x498] sm:$0xff]
    %v2951 = vld [vmem:[%s10 + $0x4a0] sm:$0xff]
    %v2952 = vld [vmem:[%s10 + $0x4a8] sm:$0xff]
    %v2953 = vld [vmem:[%s10 + $0x4b0] sm:$0xff]
    %v2954 = vld [vmem:[%s10 + $0x4b8] sm:$0xff]
    %v2955 = vld [vmem:[%s10 + $0x4c0] sm:$0xff]
    %v2956 = vld [vmem:[%s10 + $0x4c8] sm:$0xff]
    %v2957 = vld [vmem:[%s10 + $0x4d0] sm:$0xff]
    %v2958 = vld [vmem:[%s10 + $0x4d8] sm:$0xff]
    %v2959 = vld [vmem:[%s10 + $0x4e0] sm:$0xff]
    %v2960 = vld [vmem:[%s10 + $0x4e8] sm:$0xff]
    %v2961 = vld [vmem:[%s10 + $0x4f0] sm:$0xff]
    %v2962 = vld [vmem:[%s10 + $0x4f8] sm:$0xff]
    %v2963 = vld [vmem:[%s10 + $0x500] sm:$0xff]
    %v2964 = vld [vmem:[%s10 + $0x508] sm:$0xff]
    %v2965 = vld [vmem:[%s10 + $0x510] sm:$0xff]
    %v2966 = vld [vmem:[%s10 + $0x518] sm:$0xff]
    %v2967 = vld [vmem:[%s10 + $0x520] sm:$0xff]
    %v2968 = vld [vmem:[%s10 + $0x528] sm:$0xff]
    %v2969 = vld [vmem:[%s10 + $0x530] sm:$0xff]
    %v2970 = vld [vmem:[%s10 + $0x538] sm:$0xff]
    %v2971 = vld [vmem:[%s10 + $0x540] sm:$0xff]
    %v2972 = vld [vmem:[%s10 + $0x548] sm:$0xff]
    %v2973 = vld [vmem:[%s10 + $0x550] sm:$0xff]
    %v2974 = vld [vmem:[%s10 + $0x558] sm:$0xff]
    %v2975 = vld [vmem:[%s10 + $0x560] sm:$0xff]
    %v2976 = vld [vmem:[%s10 + $0x568] sm:$0xff]
    %v2977 = vld [vmem:[%s10 + $0x570] sm:$0xff]
    %v2978 = vld [vmem:[%s10 + $0x578] sm:$0xff]
    %v2979 = vld [vmem:[%s10 + $0x580] sm:$0xff]
    %v2980 = vld [vmem:[%s10 + $0x588] sm:$0xff]
    %v2981 = vld [vmem:[%s10 + $0x590] sm:$0xff]
    %v2982 = vld [vmem:[%s10 + $0x598] sm:$0xff]
    %v2983 = vld [vmem:[%s10 + $0x5a0] sm:$0xff]
    %v2984 = vld [vmem:[%s10 + $0x5a8] sm:$0xff]
    %v2985 = vld [vmem:[%s10 + $0x5b0] sm:$0xff]
    %v2986 = vld [vmem:[%s10 + $0x5b8] sm:$0xff]
    %v2987 = vld [vmem:[%s10 + $0x5c0] sm:$0xff]
    %v2988 = vld [vmem:[%s10 + $0x5c8] sm:$0xff]
    %v2989 = vld [vmem:[%s10 + $0x5d0] sm:$0xff]
    %v2990 = vld [vmem:[%s10 + $0x5d8] sm:$0xff]
    %v2991 = vld [vmem:[%s10 + $0x5e0] sm:$0xff]
    %v2992 = vld [vmem:[%s10 + $0x5e8] sm:$0xff]
    %v2993 = vld [vmem:[%s10 + $0x5f0] sm:$0xff]
    %v2994 = vld [vmem:[%s10 + $0x5f8] sm:$0xff]
    %v2995 = vld [vmem:[%s10 + $0x600] sm:$0xff]
    %v2996 = vld [vmem:[%s10 + $0x608] sm:$0xff]
    %v2997 = vld [vmem:[%s10 + $0x610] sm:$0xff]
    %v2998 = vld [vmem:[%s10 + $0x618] sm:$0xff]
    %v2999 = vld [vmem:[%s10 + $0x620] sm:$0xff]
    %v3000 = vld [vmem:[%s10 + $0x628] sm:$0xff]
    %v3001 = vld [vmem:[%s10 + $0x630] sm:$0xff]
    %v3002 = vld [vmem:[%s10 + $0x638] sm:$0xff]
    %v3003 = vld [vmem:[%s10 + $0x640] sm:$0xff]
    %v3004 = vld [vmem:[%s10 + $0x648] sm:$0xff]
    %v3005 = vld [vmem:[%s10 + $0x650] sm:$0xff]
    %v3006 = vld [vmem:[%s10 + $0x658] sm:$0xff]
    %v3007 = vld [vmem:[%s10 + $0x660] sm:$0xff]
    %v3008 = vld [vmem:[%s10 + $0x668] sm:$0xff]
    %v3009 = vld [vmem:[%s10 + $0x670] sm:$0xff]
    %v3010 = vld [vmem:[%s10 + $0x678] sm:$0xff]
    %v3011 = vld [vmem:[%s10 + $0x680] sm:$0xff]
    %v3012 = vld [vmem:[%s10 + $0x688] sm:$0xff]
    %v3013 = vld [vmem:[%s10 + $0x690] sm:$0xff]
    %v3014 = vld [vmem:[%s10 + $0x698] sm:$0xff]
    %v3015 = vld [vmem:[%s10 + $0x6a0] sm:$0xff]
    %v3016 = vld [vmem:[%s10 + $0x6a8] sm:$0xff]
    %v3017 = vld [vmem:[%s10 + $0x6b0] sm:$0xff]
    %v3018 = vld [vmem:[%s10 + $0x6b8] sm:$0xff]
    %v3019 = vld [vmem:[%s10 + $0x6c0] sm:$0xff]
    %v3020 = vld [vmem:[%s10 + $0x6c8] sm:$0xff]
    %v3021 = vld [vmem:[%s10 + $0x6d0] sm:$0xff]
    %v3022 = vld [vmem:[%s10 + $0x6d8] sm:$0xff]
    %v3023 = vld [vmem:[%s10 + $0x6e0] sm:$0xff]
    %v3024 = vld [vmem:[%s10 + $0x6e8] sm:$0xff]
    %v3025 = vld [vmem:[%s10 + $0x6f0] sm:$0xff]
    %v3026 = vld [vmem:[%s10 + $0x6f8] sm:$0xff]
    %v3027 = vld [vmem:[%s10 + $0x700] sm:$0xff]
    %v3028 = vld [vmem:[%s10 + $0x708] sm:$0xff]
    %v3029 = vld [vmem:[%s10 + $0x710] sm:$0xff]
    %v3030 = vld [vmem:[%s10 + $0x718] sm:$0xff]
    %v3031 = vld [vmem:[%s10 + $0x720] sm:$0xff]
    %v3032 = vld [vmem:[%s10 + $0x728] sm:$0xff]
    %v3033 = vld [vmem:[%s10 + $0x730] sm:$0xff]
    %v3034 = vld [vmem:[%s10 + $0x738] sm:$0xff]
    %v3035 = vld [vmem:[%s10 + $0x740] sm:$0xff]
    %v3036 = vld [vmem:[%s10 + $0x748] sm:$0xff]
    %v3037 = vld [vmem:[%s10 + $0x750] sm:$0xff]
    %v3038 = vld [vmem:[%s10 + $0x758] sm:$0xff]
    %v3039 = vld [vmem:[%s10 + $0x760] sm:$0xff]
    %v3040 = vld [vmem:[%s10 + $0x768] sm:$0xff]
    %v3041 = vld [vmem:[%s10 + $0x770] sm:$0xff]
    %v3042 = vld [vmem:[%s10 + $0x778] sm:$0xff]
    %v3043 = vld [vmem:[%s10 + $0x780] sm:$0xff]
    %v3044 = vld [vmem:[%s10 + $0x788] sm:$0xff]
    %v3045 = vld [vmem:[%s10 + $0x790] sm:$0xff]
    %v3046 = vld [vmem:[%s10 + $0x798] sm:$0xff]
    %v3047 = vld [vmem:[%s10 + $0x7a0] sm:$0xff]
    %v3048 = vld [vmem:[%s10 + $0x7a8] sm:$0xff]
    %v3049 = vld [vmem:[%s10 + $0x7b0] sm:$0xff]
    %v3050 = vld [vmem:[%s10 + $0x7b8] sm:$0xff]
    %v3051 = vld [vmem:[%s10 + $0x7c0] sm:$0xff]
    %v3052 = vld [vmem:[%s10 + $0x7c8] sm:$0xff]
    %v3053 = vld [vmem:[%s10 + $0x7d0] sm:$0xff]
    %v3054 = vld [vmem:[%s10 + $0x7d8] sm:$0xff]
    %v3055 = vld [vmem:[%s10 + $0x7e0] sm:$0xff]
    %v3056 = vld [vmem:[%s10 + $0x7e8] sm:$0xff]
    %v3057 = vld [vmem:[%s10 + $0x7f0] sm:$0xff]
    %v3058 = vld [vmem:[%s10 + $0x7f8] sm:$0xff]
    %v3315 = vunpack.c.l.b16 %v2803
    %v3316 = vunpack.c.h.b16 %v2803
    %v3317 = vunpack.c.l.b16 %v2804
    %v3318 = vunpack.c.h.b16 %v2804
    %v3319 = vunpack.c.l.b16 %v2805
    %v3320 = vunpack.c.h.b16 %v2805
    %v3321 = vunpack.c.l.b16 %v2806
    %v3322 = vunpack.c.h.b16 %v2806
    %v3323 = vunpack.c.l.b16 %v2807
    %v3324 = vunpack.c.h.b16 %v2807
    %v3325 = vunpack.c.l.b16 %v2808
    %v3326 = vunpack.c.h.b16 %v2808
    %v3327 = vunpack.c.l.b16 %v2809
    %v3328 = vunpack.c.h.b16 %v2809
    %v3329 = vunpack.c.l.b16 %v2810
    %v3330 = vunpack.c.h.b16 %v2810
    %v3331 = vunpack.c.l.b16 %v2811
    %v3332 = vunpack.c.h.b16 %v2811
    %v3333 = vunpack.c.l.b16 %v2812
    %v3334 = vunpack.c.h.b16 %v2812
    %v3335 = vunpack.c.l.b16 %v2813
    %v3336 = vunpack.c.h.b16 %v2813
    %v3337 = vunpack.c.l.b16 %v2814
    %v3338 = vunpack.c.h.b16 %v2814
    %v3339 = vunpack.c.l.b16 %v2815
    %v3340 = vunpack.c.h.b16 %v2815
    %v3341 = vunpack.c.l.b16 %v2816
    %v3342 = vunpack.c.h.b16 %v2816
    %v3343 = vunpack.c.l.b16 %v2817
    %v3344 = vunpack.c.h.b16 %v2817
    %v3345 = vunpack.c.l.b16 %v2818
    %v3346 = vunpack.c.h.b16 %v2818
    %v3347 = vunpack.c.l.b16 %v2819
    %v3348 = vunpack.c.h.b16 %v2819
    %v3349 = vunpack.c.l.b16 %v2820
    %v3350 = vunpack.c.h.b16 %v2820
    %v3351 = vunpack.c.l.b16 %v2821
    %v3352 = vunpack.c.h.b16 %v2821
    %v3353 = vunpack.c.l.b16 %v2822
    %v3354 = vunpack.c.h.b16 %v2822
    %v3355 = vunpack.c.l.b16 %v2823
    %v3356 = vunpack.c.h.b16 %v2823
    %v3357 = vunpack.c.l.b16 %v2824
    %v3358 = vunpack.c.h.b16 %v2824
    %v3359 = vunpack.c.l.b16 %v2825
    %v3360 = vunpack.c.h.b16 %v2825
    %v3361 = vunpack.c.l.b16 %v2826
    %v3362 = vunpack.c.h.b16 %v2826
    %v3363 = vunpack.c.l.b16 %v2827
    %v3364 = vunpack.c.h.b16 %v2827
    %v3365 = vunpack.c.l.b16 %v2828
    %v3366 = vunpack.c.h.b16 %v2828
    %v3367 = vunpack.c.l.b16 %v2829
    %v3368 = vunpack.c.h.b16 %v2829
    %v3369 = vunpack.c.l.b16 %v2830
    %v3370 = vunpack.c.h.b16 %v2830
    %v3371 = vunpack.c.l.b16 %v2831
    %v3372 = vunpack.c.h.b16 %v2831
    %v3373 = vunpack.c.l.b16 %v2832
    %v3374 = vunpack.c.h.b16 %v2832
    %v3375 = vunpack.c.l.b16 %v2833
    %v3376 = vunpack.c.h.b16 %v2833
    %v3377 = vunpack.c.l.b16 %v2834
    %v3378 = vunpack.c.h.b16 %v2834
    %v3379 = vunpack.c.l.b16 %v2835
    %v3380 = vunpack.c.h.b16 %v2835
    %v3381 = vunpack.c.l.b16 %v2836
    %v3382 = vunpack.c.h.b16 %v2836
    %v3383 = vunpack.c.l.b16 %v2837
    %v3384 = vunpack.c.h.b16 %v2837
    %v3385 = vunpack.c.l.b16 %v2838
    %v3386 = vunpack.c.h.b16 %v2838
    %v3387 = vunpack.c.l.b16 %v2839
    %v3388 = vunpack.c.h.b16 %v2839
    %v3389 = vunpack.c.l.b16 %v2840
    %v3390 = vunpack.c.h.b16 %v2840
    %v3391 = vunpack.c.l.b16 %v2841
    %v3392 = vunpack.c.h.b16 %v2841
    %v3393 = vunpack.c.l.b16 %v2842
    %v3394 = vunpack.c.h.b16 %v2842
    %v3395 = vunpack.c.l.b16 %v2843
    %v3396 = vunpack.c.h.b16 %v2843
    %v3397 = vunpack.c.l.b16 %v2844
    %v3398 = vunpack.c.h.b16 %v2844
    %v3399 = vunpack.c.l.b16 %v2845
    %v3400 = vunpack.c.h.b16 %v2845
    %v3401 = vunpack.c.l.b16 %v2846
    %v3402 = vunpack.c.h.b16 %v2846
    %v3403 = vunpack.c.l.b16 %v2847
    %v3404 = vunpack.c.h.b16 %v2847
    %v3405 = vunpack.c.l.b16 %v2848
    %v3406 = vunpack.c.h.b16 %v2848
    %v3407 = vunpack.c.l.b16 %v2849
    %v3408 = vunpack.c.h.b16 %v2849
    %v3409 = vunpack.c.l.b16 %v2850
    %v3410 = vunpack.c.h.b16 %v2850
    %v3411 = vunpack.c.l.b16 %v2851
    %v3412 = vunpack.c.h.b16 %v2851
    %v3413 = vunpack.c.l.b16 %v2852
    %v3414 = vunpack.c.h.b16 %v2852
    %v3415 = vunpack.c.l.b16 %v2853
    %v3416 = vunpack.c.h.b16 %v2853
    %v3417 = vunpack.c.l.b16 %v2854
    %v3418 = vunpack.c.h.b16 %v2854
    %v3419 = vunpack.c.l.b16 %v2855
    %v3420 = vunpack.c.h.b16 %v2855
    %v3421 = vunpack.c.l.b16 %v2856
    %v3422 = vunpack.c.h.b16 %v2856
    %v3423 = vunpack.c.l.b16 %v2857
    %v3424 = vunpack.c.h.b16 %v2857
    %v3425 = vunpack.c.l.b16 %v2858
    %v3426 = vunpack.c.h.b16 %v2858
    %v3427 = vunpack.c.l.b16 %v2859
    %v3428 = vunpack.c.h.b16 %v2859
    %v3429 = vunpack.c.l.b16 %v2860
    %v3430 = vunpack.c.h.b16 %v2860
    %v3431 = vunpack.c.l.b16 %v2861
    %v3432 = vunpack.c.h.b16 %v2861
    %v3433 = vunpack.c.l.b16 %v2862
    %v3434 = vunpack.c.h.b16 %v2862
    %v3435 = vunpack.c.l.b16 %v2863
    %v3436 = vunpack.c.h.b16 %v2863
    %v3437 = vunpack.c.l.b16 %v2864
    %v3438 = vunpack.c.h.b16 %v2864
    %v3439 = vunpack.c.l.b16 %v2865
    %v3440 = vunpack.c.h.b16 %v2865
    %v3441 = vunpack.c.l.b16 %v2866
    %v3442 = vunpack.c.h.b16 %v2866
    %v3443 = vunpack.c.l.b16 %v2867
    %v3444 = vunpack.c.h.b16 %v2867
    %v3445 = vunpack.c.l.b16 %v2868
    %v3446 = vunpack.c.h.b16 %v2868
    %v3447 = vunpack.c.l.b16 %v2869
    %v3448 = vunpack.c.h.b16 %v2869
    %v3449 = vunpack.c.l.b16 %v2870
    %v3450 = vunpack.c.h.b16 %v2870
    %v3451 = vunpack.c.l.b16 %v2871
    %v3452 = vunpack.c.h.b16 %v2871
    %v3453 = vunpack.c.l.b16 %v2872
    %v3454 = vunpack.c.h.b16 %v2872
    %v3455 = vunpack.c.l.b16 %v2873
    %v3456 = vunpack.c.h.b16 %v2873
    %v3457 = vunpack.c.l.b16 %v2874
    %v3458 = vunpack.c.h.b16 %v2874
    %v3459 = vunpack.c.l.b16 %v2875
    %v3460 = vunpack.c.h.b16 %v2875
    %v3461 = vunpack.c.l.b16 %v2876
    %v3462 = vunpack.c.h.b16 %v2876
    %v3463 = vunpack.c.l.b16 %v2877
    %v3464 = vunpack.c.h.b16 %v2877
    %v3465 = vunpack.c.l.b16 %v2878
    %v3466 = vunpack.c.h.b16 %v2878
    %v3467 = vunpack.c.l.b16 %v2879
    %v3468 = vunpack.c.h.b16 %v2879
    %v3469 = vunpack.c.l.b16 %v2880
    %v3470 = vunpack.c.h.b16 %v2880
    %v3471 = vunpack.c.l.b16 %v2881
    %v3472 = vunpack.c.h.b16 %v2881
    %v3473 = vunpack.c.l.b16 %v2882
    %v3474 = vunpack.c.h.b16 %v2882
    %v3475 = vunpack.c.l.b16 %v2883
    %v3476 = vunpack.c.h.b16 %v2883
    %v3477 = vunpack.c.l.b16 %v2884
    %v3478 = vunpack.c.h.b16 %v2884
    %v3479 = vunpack.c.l.b16 %v2885
    %v3480 = vunpack.c.h.b16 %v2885
    %v3481 = vunpack.c.l.b16 %v2886
    %v3482 = vunpack.c.h.b16 %v2886
    %v3483 = vunpack.c.l.b16 %v2887
    %v3484 = vunpack.c.h.b16 %v2887
    %v3485 = vunpack.c.l.b16 %v2888
    %v3486 = vunpack.c.h.b16 %v2888
    %v3487 = vunpack.c.l.b16 %v2889
    %v3488 = vunpack.c.h.b16 %v2889
    %v3489 = vunpack.c.l.b16 %v2890
    %v3490 = vunpack.c.h.b16 %v2890
    %v3491 = vunpack.c.l.b16 %v2891
    %v3492 = vunpack.c.h.b16 %v2891
    %v3493 = vunpack.c.l.b16 %v2892
    %v3494 = vunpack.c.h.b16 %v2892
    %v3495 = vunpack.c.l.b16 %v2893
    %v3496 = vunpack.c.h.b16 %v2893
    %v3497 = vunpack.c.l.b16 %v2894
    %v3498 = vunpack.c.h.b16 %v2894
    %v3499 = vunpack.c.l.b16 %v2895
    %v3500 = vunpack.c.h.b16 %v2895
    %v3501 = vunpack.c.l.b16 %v2896
    %v3502 = vunpack.c.h.b16 %v2896
    %v3503 = vunpack.c.l.b16 %v2897
    %v3504 = vunpack.c.h.b16 %v2897
    %v3505 = vunpack.c.l.b16 %v2898
    %v3506 = vunpack.c.h.b16 %v2898
    %v3507 = vunpack.c.l.b16 %v2899
    %v3508 = vunpack.c.h.b16 %v2899
    %v3509 = vunpack.c.l.b16 %v2900
    %v3510 = vunpack.c.h.b16 %v2900
    %v3511 = vunpack.c.l.b16 %v2901
    %v3512 = vunpack.c.h.b16 %v2901
    %v3513 = vunpack.c.l.b16 %v2902
    %v3514 = vunpack.c.h.b16 %v2902
    %v3515 = vunpack.c.l.b16 %v2903
    %v3516 = vunpack.c.h.b16 %v2903
    %v3517 = vunpack.c.l.b16 %v2904
    %v3518 = vunpack.c.h.b16 %v2904
    %v3519 = vunpack.c.l.b16 %v2905
    %v3520 = vunpack.c.h.b16 %v2905
    %v3521 = vunpack.c.l.b16 %v2906
    %v3522 = vunpack.c.h.b16 %v2906
    %v3523 = vunpack.c.l.b16 %v2907
    %v3524 = vunpack.c.h.b16 %v2907
    %v3525 = vunpack.c.l.b16 %v2908
    %v3526 = vunpack.c.h.b16 %v2908
    %v3527 = vunpack.c.l.b16 %v2909
    %v3528 = vunpack.c.h.b16 %v2909
    %v3529 = vunpack.c.l.b16 %v2910
    %v3530 = vunpack.c.h.b16 %v2910
    %v3531 = vunpack.c.l.b16 %v2911
    %v3532 = vunpack.c.h.b16 %v2911
    %v3533 = vunpack.c.l.b16 %v2912
    %v3534 = vunpack.c.h.b16 %v2912
    %v3535 = vunpack.c.l.b16 %v2913
    %v3536 = vunpack.c.h.b16 %v2913
    %v3537 = vunpack.c.l.b16 %v2914
    %v3538 = vunpack.c.h.b16 %v2914
    %v3539 = vunpack.c.l.b16 %v2915
    %v3540 = vunpack.c.h.b16 %v2915
    %v3541 = vunpack.c.l.b16 %v2916
    %v3542 = vunpack.c.h.b16 %v2916
    %v3543 = vunpack.c.l.b16 %v2917
    %v3544 = vunpack.c.h.b16 %v2917
    %v3545 = vunpack.c.l.b16 %v2918
    %v3546 = vunpack.c.h.b16 %v2918
    %v3547 = vunpack.c.l.b16 %v2919
    %v3548 = vunpack.c.h.b16 %v2919
    %v3549 = vunpack.c.l.b16 %v2920
    %v3550 = vunpack.c.h.b16 %v2920
    %v3551 = vunpack.c.l.b16 %v2921
    %v3552 = vunpack.c.h.b16 %v2921
    %v3553 = vunpack.c.l.b16 %v2922
    %v3554 = vunpack.c.h.b16 %v2922
    %v3555 = vunpack.c.l.b16 %v2923
    %v3556 = vunpack.c.h.b16 %v2923
    %v3557 = vunpack.c.l.b16 %v2924
    %v3558 = vunpack.c.h.b16 %v2924
    %v3559 = vunpack.c.l.b16 %v2925
    %v3560 = vunpack.c.h.b16 %v2925
    %v3561 = vunpack.c.l.b16 %v2926
    %v3562 = vunpack.c.h.b16 %v2926
    %v3563 = vunpack.c.l.b16 %v2927
    %v3564 = vunpack.c.h.b16 %v2927
    %v3565 = vunpack.c.l.b16 %v2928
    %v3566 = vunpack.c.h.b16 %v2928
    %v3567 = vunpack.c.l.b16 %v2929
    %v3568 = vunpack.c.h.b16 %v2929
    %v3569 = vunpack.c.l.b16 %v2930
    %v3570 = vunpack.c.h.b16 %v2930
    %v3571 = vunpack.c.l.b16 %v2931
    %v3572 = vunpack.c.h.b16 %v2931
    %v3573 = vunpack.c.l.b16 %v2932
    %v3574 = vunpack.c.h.b16 %v2932
    %v3575 = vunpack.c.l.b16 %v2933
    %v3576 = vunpack.c.h.b16 %v2933
    %v3577 = vunpack.c.l.b16 %v2934
    %v3578 = vunpack.c.h.b16 %v2934
    %v3579 = vunpack.c.l.b16 %v2935
    %v3580 = vunpack.c.h.b16 %v2935
    %v3581 = vunpack.c.l.b16 %v2936
    %v3582 = vunpack.c.h.b16 %v2936
    %v3583 = vunpack.c.l.b16 %v2937
    %v3584 = vunpack.c.h.b16 %v2937
    %v3585 = vunpack.c.l.b16 %v2938
    %v3586 = vunpack.c.h.b16 %v2938
    %v3587 = vunpack.c.l.b16 %v2939
    %v3588 = vunpack.c.h.b16 %v2939
    %v3589 = vunpack.c.l.b16 %v2940
    %v3590 = vunpack.c.h.b16 %v2940
    %v3591 = vunpack.c.l.b16 %v2941
    %v3592 = vunpack.c.h.b16 %v2941
    %v3593 = vunpack.c.l.b16 %v2942
    %v3594 = vunpack.c.h.b16 %v2942
    %v3595 = vunpack.c.l.b16 %v2943
    %v3596 = vunpack.c.h.b16 %v2943
    %v3597 = vunpack.c.l.b16 %v2944
    %v3598 = vunpack.c.h.b16 %v2944
    %v3599 = vunpack.c.l.b16 %v2945
    %v3600 = vunpack.c.h.b16 %v2945
    %v3601 = vunpack.c.l.b16 %v2946
    %v3602 = vunpack.c.h.b16 %v2946
    %v3603 = vunpack.c.l.b16 %v2947
    %v3604 = vunpack.c.h.b16 %v2947
    %v3605 = vunpack.c.l.b16 %v2948
    %v3606 = vunpack.c.h.b16 %v2948
    %v3607 = vunpack.c.l.b16 %v2949
    %v3608 = vunpack.c.h.b16 %v2949
    %v3609 = vunpack.c.l.b16 %v2950
    %v3610 = vunpack.c.h.b16 %v2950
    %v3611 = vunpack.c.l.b16 %v2951
    %v3612 = vunpack.c.h.b16 %v2951
    %v3613 = vunpack.c.l.b16 %v2952
    %v3614 = vunpack.c.h.b16 %v2952
    %v3615 = vunpack.c.l.b16 %v2953
    %v3616 = vunpack.c.h.b16 %v2953
    %v3617 = vunpack.c.l.b16 %v2954
    %v3618 = vunpack.c.h.b16 %v2954
    %v3619 = vunpack.c.l.b16 %v2955
    %v3620 = vunpack.c.h.b16 %v2955
    %v3621 = vunpack.c.l.b16 %v2956
    %v3622 = vunpack.c.h.b16 %v2956
    %v3623 = vunpack.c.l.b16 %v2957
    %v3624 = vunpack.c.h.b16 %v2957
    %v3625 = vunpack.c.l.b16 %v2958
    %v3626 = vunpack.c.h.b16 %v2958
    %v3627 = vunpack.c.l.b16 %v2959
    %v3628 = vunpack.c.h.b16 %v2959
    %v3629 = vunpack.c.l.b16 %v2960
    %v3630 = vunpack.c.h.b16 %v2960
    %v3631 = vunpack.c.l.b16 %v2961
    %v3632 = vunpack.c.h.b16 %v2961
    %v3633 = vunpack.c.l.b16 %v2962
    %v3634 = vunpack.c.h.b16 %v2962
    %v3635 = vunpack.c.l.b16 %v2963
    %v3636 = vunpack.c.h.b16 %v2963
    %v3637 = vunpack.c.l.b16 %v2964
    %v3638 = vunpack.c.h.b16 %v2964
    %v3639 = vunpack.c.l.b16 %v2965
    %v3640 = vunpack.c.h.b16 %v2965
    %v3641 = vunpack.c.l.b16 %v2966
    %v3642 = vunpack.c.h.b16 %v2966
    %v3643 = vunpack.c.l.b16 %v2967
    %v3644 = vunpack.c.h.b16 %v2967
    %v3645 = vunpack.c.l.b16 %v2968
    %v3646 = vunpack.c.h.b16 %v2968
    %v3647 = vunpack.c.l.b16 %v2969
    %v3648 = vunpack.c.h.b16 %v2969
    %v3649 = vunpack.c.l.b16 %v2970
    %v3650 = vunpack.c.h.b16 %v2970
    %v3651 = vunpack.c.l.b16 %v2971
    %v3652 = vunpack.c.h.b16 %v2971
    %v3653 = vunpack.c.l.b16 %v2972
    %v3654 = vunpack.c.h.b16 %v2972
    %v3655 = vunpack.c.l.b16 %v2973
    %v3656 = vunpack.c.h.b16 %v2973
    %v3657 = vunpack.c.l.b16 %v2974
    %v3658 = vunpack.c.h.b16 %v2974
    %v3659 = vunpack.c.l.b16 %v2975
    %v3660 = vunpack.c.h.b16 %v2975
    %v3661 = vunpack.c.l.b16 %v2976
    %v3662 = vunpack.c.h.b16 %v2976
    %v3663 = vunpack.c.l.b16 %v2977
    %v3664 = vunpack.c.h.b16 %v2977
    %v3665 = vunpack.c.l.b16 %v2978
    %v3666 = vunpack.c.h.b16 %v2978
    %v3667 = vunpack.c.l.b16 %v2979
    %v3668 = vunpack.c.h.b16 %v2979
    %v3669 = vunpack.c.l.b16 %v2980
    %v3670 = vunpack.c.h.b16 %v2980
    %v3671 = vunpack.c.l.b16 %v2981
    %v3672 = vunpack.c.h.b16 %v2981
    %v3673 = vunpack.c.l.b16 %v2982
    %v3674 = vunpack.c.h.b16 %v2982
    %v3675 = vunpack.c.l.b16 %v2983
    %v3676 = vunpack.c.h.b16 %v2983
    %v3677 = vunpack.c.l.b16 %v2984
    %v3678 = vunpack.c.h.b16 %v2984
    %v3679 = vunpack.c.l.b16 %v2985
    %v3680 = vunpack.c.h.b16 %v2985
    %v3681 = vunpack.c.l.b16 %v2986
    %v3682 = vunpack.c.h.b16 %v2986
    %v3683 = vunpack.c.l.b16 %v2987
    %v3684 = vunpack.c.h.b16 %v2987
    %v3685 = vunpack.c.l.b16 %v2988
    %v3686 = vunpack.c.h.b16 %v2988
    %v3687 = vunpack.c.l.b16 %v2989
    %v3688 = vunpack.c.h.b16 %v2989
    %v3689 = vunpack.c.l.b16 %v2990
    %v3690 = vunpack.c.h.b16 %v2990
    %v3691 = vunpack.c.l.b16 %v2991
    %v3692 = vunpack.c.h.b16 %v2991
    %v3693 = vunpack.c.l.b16 %v2992
    %v3694 = vunpack.c.h.b16 %v2992
    %v3695 = vunpack.c.l.b16 %v2993
    %v3696 = vunpack.c.h.b16 %v2993
    %v3697 = vunpack.c.l.b16 %v2994
    %v3698 = vunpack.c.h.b16 %v2994
    %v3699 = vunpack.c.l.b16 %v2995
    %v3700 = vunpack.c.h.b16 %v2995
    %v3701 = vunpack.c.l.b16 %v2996
    %v3702 = vunpack.c.h.b16 %v2996
    %v3703 = vunpack.c.l.b16 %v2997
    %v3704 = vunpack.c.h.b16 %v2997
    %v3705 = vunpack.c.l.b16 %v2998
    %v3706 = vunpack.c.h.b16 %v2998
    %v3707 = vunpack.c.l.b16 %v2999
    %v3708 = vunpack.c.h.b16 %v2999
    %v3709 = vunpack.c.l.b16 %v3000
    %v3710 = vunpack.c.h.b16 %v3000
    %v3711 = vunpack.c.l.b16 %v3001
    %v3712 = vunpack.c.h.b16 %v3001
    %v3713 = vunpack.c.l.b16 %v3002
    %v3714 = vunpack.c.h.b16 %v3002
    %v3715 = vunpack.c.l.b16 %v3003
    %v3716 = vunpack.c.h.b16 %v3003
    %v3717 = vunpack.c.l.b16 %v3004
    %v3718 = vunpack.c.h.b16 %v3004
    %v3719 = vunpack.c.l.b16 %v3005
    %v3720 = vunpack.c.h.b16 %v3005
    %v3721 = vunpack.c.l.b16 %v3006
    %v3722 = vunpack.c.h.b16 %v3006
    %v3723 = vunpack.c.l.b16 %v3007
    %v3724 = vunpack.c.h.b16 %v3007
    %v3725 = vunpack.c.l.b16 %v3008
    %v3726 = vunpack.c.h.b16 %v3008
    %v3727 = vunpack.c.l.b16 %v3009
    %v3728 = vunpack.c.h.b16 %v3009
    %v3729 = vunpack.c.l.b16 %v3010
    %v3730 = vunpack.c.h.b16 %v3010
    %v3731 = vunpack.c.l.b16 %v3011
    %v3732 = vunpack.c.h.b16 %v3011
    %v3733 = vunpack.c.l.b16 %v3012
    %v3734 = vunpack.c.h.b16 %v3012
    %v3735 = vunpack.c.l.b16 %v3013
    %v3736 = vunpack.c.h.b16 %v3013
    %v3737 = vunpack.c.l.b16 %v3014
    %v3738 = vunpack.c.h.b16 %v3014
    %v3739 = vunpack.c.l.b16 %v3015
    %v3740 = vunpack.c.h.b16 %v3015
    %v3741 = vunpack.c.l.b16 %v3016
    %v3742 = vunpack.c.h.b16 %v3016
    %v3743 = vunpack.c.l.b16 %v3017
    %v3744 = vunpack.c.h.b16 %v3017
    %v3745 = vunpack.c.l.b16 %v3018
    %v3746 = vunpack.c.h.b16 %v3018
    %v3747 = vunpack.c.l.b16 %v3019
    %v3748 = vunpack.c.h.b16 %v3019
    %v3749 = vunpack.c.l.b16 %v3020
    %v3750 = vunpack.c.h.b16 %v3020
    %v3751 = vunpack.c.l.b16 %v3021
    %v3752 = vunpack.c.h.b16 %v3021
    %v3753 = vunpack.c.l.b16 %v3022
    %v3754 = vunpack.c.h.b16 %v3022
    %v3755 = vunpack.c.l.b16 %v3023
    %v3756 = vunpack.c.h.b16 %v3023
    %v3757 = vunpack.c.l.b16 %v3024
    %v3758 = vunpack.c.h.b16 %v3024
    %v3759 = vunpack.c.l.b16 %v3025
    %v3760 = vunpack.c.h.b16 %v3025
    %v3761 = vunpack.c.l.b16 %v3026
    %v3762 = vunpack.c.h.b16 %v3026
    %v3763 = vunpack.c.l.b16 %v3027
    %v3764 = vunpack.c.h.b16 %v3027
    %v3765 = vunpack.c.l.b16 %v3028
    %v3766 = vunpack.c.h.b16 %v3028
    %v3767 = vunpack.c.l.b16 %v3029
    %v3768 = vunpack.c.h.b16 %v3029
    %v3769 = vunpack.c.l.b16 %v3030
    %v3770 = vunpack.c.h.b16 %v3030
    %v3771 = vunpack.c.l.b16 %v3031
    %v3772 = vunpack.c.h.b16 %v3031
    %v3773 = vunpack.c.l.b16 %v3032
    %v3774 = vunpack.c.h.b16 %v3032
    %v3775 = vunpack.c.l.b16 %v3033
    %v3776 = vunpack.c.h.b16 %v3033
    %v3777 = vunpack.c.l.b16 %v3034
    %v3778 = vunpack.c.h.b16 %v3034
    %v3779 = vunpack.c.l.b16 %v3035
    %v3780 = vunpack.c.h.b16 %v3035
    %v3781 = vunpack.c.l.b16 %v3036
    %v3782 = vunpack.c.h.b16 %v3036
    %v3783 = vunpack.c.l.b16 %v3037
    %v3784 = vunpack.c.h.b16 %v3037
    %v3785 = vunpack.c.l.b16 %v3038
    %v3786 = vunpack.c.h.b16 %v3038
    %v3787 = vunpack.c.l.b16 %v3039
    %v3788 = vunpack.c.h.b16 %v3039
    %v3789 = vunpack.c.l.b16 %v3040
    %v3790 = vunpack.c.h.b16 %v3040
    %v3791 = vunpack.c.l.b16 %v3041
    %v3792 = vunpack.c.h.b16 %v3041
    %v3793 = vunpack.c.l.b16 %v3042
    %v3794 = vunpack.c.h.b16 %v3042
    %v3795 = vunpack.c.l.b16 %v3043
    %v3796 = vunpack.c.h.b16 %v3043
    %v3797 = vunpack.c.l.b16 %v3044
    %v3798 = vunpack.c.h.b16 %v3044
    %v3799 = vunpack.c.l.b16 %v3045
    %v3800 = vunpack.c.h.b16 %v3045
    %v3801 = vunpack.c.l.b16 %v3046
    %v3802 = vunpack.c.h.b16 %v3046
    %v3803 = vunpack.c.l.b16 %v3047
    %v3804 = vunpack.c.h.b16 %v3047
    %v3805 = vunpack.c.l.b16 %v3048
    %v3806 = vunpack.c.h.b16 %v3048
    %v3807 = vunpack.c.l.b16 %v3049
    %v3808 = vunpack.c.h.b16 %v3049
    %v3809 = vunpack.c.l.b16 %v3050
    %v3810 = vunpack.c.h.b16 %v3050
    %v3811 = vunpack.c.l.b16 %v3051
    %v3812 = vunpack.c.h.b16 %v3051
    %v3813 = vunpack.c.l.b16 %v3052
    %v3814 = vunpack.c.h.b16 %v3052
    %v3815 = vunpack.c.l.b16 %v3053
    %v3816 = vunpack.c.h.b16 %v3053
    %v3817 = vunpack.c.l.b16 %v3054
    %v3818 = vunpack.c.h.b16 %v3054
    %v3819 = vunpack.c.l.b16 %v3055
    %v3820 = vunpack.c.h.b16 %v3055
    %v3821 = vunpack.c.l.b16 %v3056
    %v3822 = vunpack.c.h.b16 %v3056
    %v3823 = vunpack.c.l.b16 %v3057
    %v3824 = vunpack.c.h.b16 %v3057
    %v3825 = vunpack.c.l.b16 %v3058
    %v3826 = vunpack.c.h.b16 %v3058
    %v3827 = vpack.c.b16 %v3319, %v3315
    %v3828 = vpack.c.b16 %v3320, %v3316
    %v3829 = vpack.c.b16 %v3321, %v3317
    %v3830 = vpack.c.b16 %v3322, %v3318
    %v3831 = vpack.c.b16 %v3327, %v3323
    %v3832 = vpack.c.b16 %v3328, %v3324
    %v3833 = vpack.c.b16 %v3329, %v3325
    %v3834 = vpack.c.b16 %v3330, %v3326
    %v3835 = vpack.c.b16 %v3335, %v3331
    %v3836 = vpack.c.b16 %v3336, %v3332
    %v3837 = vpack.c.b16 %v3337, %v3333
    %v3838 = vpack.c.b16 %v3338, %v3334
    %v3839 = vpack.c.b16 %v3343, %v3339
    %v3840 = vpack.c.b16 %v3344, %v3340
    %v3841 = vpack.c.b16 %v3345, %v3341
    %v3842 = vpack.c.b16 %v3346, %v3342
    %v3843 = vpack.c.b16 %v3351, %v3347
    %v3844 = vpack.c.b16 %v3352, %v3348
    %v3845 = vpack.c.b16 %v3353, %v3349
    %v3846 = vpack.c.b16 %v3354, %v3350
    %v3847 = vpack.c.b16 %v3359, %v3355
    %v3848 = vpack.c.b16 %v3360, %v3356
    %v3849 = vpack.c.b16 %v3361, %v3357
    %v3850 = vpack.c.b16 %v3362, %v3358
    %v3851 = vpack.c.b16 %v3367, %v3363
    %v3852 = vpack.c.b16 %v3368, %v3364
    %v3853 = vpack.c.b16 %v3369, %v3365
    %v3854 = vpack.c.b16 %v3370, %v3366
    %v3855 = vpack.c.b16 %v3375, %v3371
    %v3856 = vpack.c.b16 %v3376, %v3372
    %v3857 = vpack.c.b16 %v3377, %v3373
    %v3858 = vpack.c.b16 %v3378, %v3374
    %v3859 = vpack.c.b16 %v3383, %v3379
    %v3860 = vpack.c.b16 %v3384, %v3380
    %v3861 = vpack.c.b16 %v3385, %v3381
    %v3862 = vpack.c.b16 %v3386, %v3382
    %v3863 = vpack.c.b16 %v3391, %v3387
    %v3864 = vpack.c.b16 %v3392, %v3388
    %v3865 = vpack.c.b16 %v3393, %v3389
    %v3866 = vpack.c.b16 %v3394, %v3390
    %v3867 = vpack.c.b16 %v3399, %v3395
    %v3868 = vpack.c.b16 %v3400, %v3396
    %v3869 = vpack.c.b16 %v3401, %v3397
    %v3870 = vpack.c.b16 %v3402, %v3398
    %v3871 = vpack.c.b16 %v3407, %v3403
    %v3872 = vpack.c.b16 %v3408, %v3404
    %v3873 = vpack.c.b16 %v3409, %v3405
    %v3874 = vpack.c.b16 %v3410, %v3406
    %v3875 = vpack.c.b16 %v3415, %v3411
    %v3876 = vpack.c.b16 %v3416, %v3412
    %v3877 = vpack.c.b16 %v3417, %v3413
    %v3878 = vpack.c.b16 %v3418, %v3414
    %v3879 = vpack.c.b16 %v3423, %v3419
    %v3880 = vpack.c.b16 %v3424, %v3420
    %v3881 = vpack.c.b16 %v3425, %v3421
    %v3882 = vpack.c.b16 %v3426, %v3422
    %v3883 = vpack.c.b16 %v3431, %v3427
    %v3884 = vpack.c.b16 %v3432, %v3428
    %v3885 = vpack.c.b16 %v3433, %v3429
    %v3886 = vpack.c.b16 %v3434, %v3430
    %v3887 = vpack.c.b16 %v3439, %v3435
    %v3888 = vpack.c.b16 %v3440, %v3436
    %v3889 = vpack.c.b16 %v3441, %v3437
    %v3890 = vpack.c.b16 %v3442, %v3438
    %v3891 = vpack.c.b16 %v3447, %v3443
    %v3892 = vpack.c.b16 %v3448, %v3444
    %v3893 = vpack.c.b16 %v3449, %v3445
    %v3894 = vpack.c.b16 %v3450, %v3446
    %v3895 = vpack.c.b16 %v3455, %v3451
    %v3896 = vpack.c.b16 %v3456, %v3452
    %v3897 = vpack.c.b16 %v3457, %v3453
    %v3898 = vpack.c.b16 %v3458, %v3454
    %v3899 = vpack.c.b16 %v3463, %v3459
    %v3900 = vpack.c.b16 %v3464, %v3460
    %v3901 = vpack.c.b16 %v3465, %v3461
    %v3902 = vpack.c.b16 %v3466, %v3462
    %v3903 = vpack.c.b16 %v3471, %v3467
    %v3904 = vpack.c.b16 %v3472, %v3468
    %v3905 = vpack.c.b16 %v3473, %v3469
    %v3906 = vpack.c.b16 %v3474, %v3470
    %v3907 = vpack.c.b16 %v3479, %v3475
    %v3908 = vpack.c.b16 %v3480, %v3476
    %v3909 = vpack.c.b16 %v3481, %v3477
    %v3910 = vpack.c.b16 %v3482, %v3478
    %v3911 = vpack.c.b16 %v3487, %v3483
    %v3912 = vpack.c.b16 %v3488, %v3484
    %v3913 = vpack.c.b16 %v3489, %v3485
    %v3914 = vpack.c.b16 %v3490, %v3486
    %v3915 = vpack.c.b16 %v3495, %v3491
    %v3916 = vpack.c.b16 %v3496, %v3492
    %v3917 = vpack.c.b16 %v3497, %v3493
    %v3918 = vpack.c.b16 %v3498, %v3494
    %v3919 = vpack.c.b16 %v3503, %v3499
    %v3920 = vpack.c.b16 %v3504, %v3500
    %v3921 = vpack.c.b16 %v3505, %v3501
    %v3922 = vpack.c.b16 %v3506, %v3502
    %v3923 = vpack.c.b16 %v3511, %v3507
    %v3924 = vpack.c.b16 %v3512, %v3508
    %v3925 = vpack.c.b16 %v3513, %v3509
    %v3926 = vpack.c.b16 %v3514, %v3510
    %v3927 = vpack.c.b16 %v3519, %v3515
    %v3928 = vpack.c.b16 %v3520, %v3516
    %v3929 = vpack.c.b16 %v3521, %v3517
    %v3930 = vpack.c.b16 %v3522, %v3518
    %v3931 = vpack.c.b16 %v3527, %v3523
    %v3932 = vpack.c.b16 %v3528, %v3524
    %v3933 = vpack.c.b16 %v3529, %v3525
    %v3934 = vpack.c.b16 %v3530, %v3526
    %v3935 = vpack.c.b16 %v3535, %v3531
    %v3936 = vpack.c.b16 %v3536, %v3532
    %v3937 = vpack.c.b16 %v3537, %v3533
    %v3938 = vpack.c.b16 %v3538, %v3534
    %v3939 = vpack.c.b16 %v3543, %v3539
    %v3940 = vpack.c.b16 %v3544, %v3540
    %v3941 = vpack.c.b16 %v3545, %v3541
    %v3942 = vpack.c.b16 %v3546, %v3542
    %v3943 = vpack.c.b16 %v3551, %v3547
    %v3944 = vpack.c.b16 %v3552, %v3548
    %v3945 = vpack.c.b16 %v3553, %v3549
    %v3946 = vpack.c.b16 %v3554, %v3550
    %v3947 = vpack.c.b16 %v3559, %v3555
    %v3948 = vpack.c.b16 %v3560, %v3556
    %v3949 = vpack.c.b16 %v3561, %v3557
    %v3950 = vpack.c.b16 %v3562, %v3558
    %v3951 = vpack.c.b16 %v3567, %v3563
    %v3952 = vpack.c.b16 %v3568, %v3564
    %v3953 = vpack.c.b16 %v3569, %v3565
    %v3954 = vpack.c.b16 %v3570, %v3566
    %v3955 = vpack.c.b16 %v3575, %v3571
    %v3956 = vpack.c.b16 %v3576, %v3572
    %v3957 = vpack.c.b16 %v3577, %v3573
    %v3958 = vpack.c.b16 %v3578, %v3574
    %v3959 = vpack.c.b16 %v3583, %v3579
    %v3960 = vpack.c.b16 %v3584, %v3580
    %v3961 = vpack.c.b16 %v3585, %v3581
    %v3962 = vpack.c.b16 %v3586, %v3582
    %v3963 = vpack.c.b16 %v3591, %v3587
    %v3964 = vpack.c.b16 %v3592, %v3588
    %v3965 = vpack.c.b16 %v3593, %v3589
    %v3966 = vpack.c.b16 %v3594, %v3590
    %v3967 = vpack.c.b16 %v3599, %v3595
    %v3968 = vpack.c.b16 %v3600, %v3596
    %v3969 = vpack.c.b16 %v3601, %v3597
    %v3970 = vpack.c.b16 %v3602, %v3598
    %v3971 = vpack.c.b16 %v3607, %v3603
    %v3972 = vpack.c.b16 %v3608, %v3604
    %v3973 = vpack.c.b16 %v3609, %v3605
    %v3974 = vpack.c.b16 %v3610, %v3606
    %v3975 = vpack.c.b16 %v3615, %v3611
    %v3976 = vpack.c.b16 %v3616, %v3612
    %v3977 = vpack.c.b16 %v3617, %v3613
    %v3978 = vpack.c.b16 %v3618, %v3614
    %v3979 = vpack.c.b16 %v3623, %v3619
    %v3980 = vpack.c.b16 %v3624, %v3620
    %v3981 = vpack.c.b16 %v3625, %v3621
    %v3982 = vpack.c.b16 %v3626, %v3622
    %v3983 = vpack.c.b16 %v3631, %v3627
    %v3984 = vpack.c.b16 %v3632, %v3628
    %v3985 = vpack.c.b16 %v3633, %v3629
    %v3986 = vpack.c.b16 %v3634, %v3630
    %v3987 = vpack.c.b16 %v3639, %v3635
    %v3988 = vpack.c.b16 %v3640, %v3636
    %v3989 = vpack.c.b16 %v3641, %v3637
    %v3990 = vpack.c.b16 %v3642, %v3638
    %v3991 = vpack.c.b16 %v3647, %v3643
    %v3992 = vpack.c.b16 %v3648, %v3644
    %v3993 = vpack.c.b16 %v3649, %v3645
    %v3994 = vpack.c.b16 %v3650, %v3646
    %v3995 = vpack.c.b16 %v3655, %v3651
    %v3996 = vpack.c.b16 %v3656, %v3652
    %v3997 = vpack.c.b16 %v3657, %v3653
    %v3998 = vpack.c.b16 %v3658, %v3654
    %v3999 = vpack.c.b16 %v3663, %v3659
    %v4000 = vpack.c.b16 %v3664, %v3660
    %v4001 = vpack.c.b16 %v3665, %v3661
    %v4002 = vpack.c.b16 %v3666, %v3662
    %v4003 = vpack.c.b16 %v3671, %v3667
    %v4004 = vpack.c.b16 %v3672, %v3668
    %v4005 = vpack.c.b16 %v3673, %v3669
    %v4006 = vpack.c.b16 %v3674, %v3670
    %v4007 = vpack.c.b16 %v3679, %v3675
    %v4008 = vpack.c.b16 %v3680, %v3676
    %v4009 = vpack.c.b16 %v3681, %v3677
    %v4010 = vpack.c.b16 %v3682, %v3678
    %v4011 = vpack.c.b16 %v3687, %v3683
    %v4012 = vpack.c.b16 %v3688, %v3684
    %v4013 = vpack.c.b16 %v3689, %v3685
    %v4014 = vpack.c.b16 %v3690, %v3686
    %v4015 = vpack.c.b16 %v3695, %v3691
    %v4016 = vpack.c.b16 %v3696, %v3692
    %v4017 = vpack.c.b16 %v3697, %v3693
    %v4018 = vpack.c.b16 %v3698, %v3694
    %v4019 = vpack.c.b16 %v3703, %v3699
    %v4020 = vpack.c.b16 %v3704, %v3700
    %v4021 = vpack.c.b16 %v3705, %v3701
    %v4022 = vpack.c.b16 %v3706, %v3702
    %v4023 = vpack.c.b16 %v3711, %v3707
    %v4024 = vpack.c.b16 %v3712, %v3708
    %v4025 = vpack.c.b16 %v3713, %v3709
    %v4026 = vpack.c.b16 %v3714, %v3710
    %v4027 = vpack.c.b16 %v3719, %v3715
    %v4028 = vpack.c.b16 %v3720, %v3716
    %v4029 = vpack.c.b16 %v3721, %v3717
    %v4030 = vpack.c.b16 %v3722, %v3718
    %v4031 = vpack.c.b16 %v3727, %v3723
    %v4032 = vpack.c.b16 %v3728, %v3724
    %v4033 = vpack.c.b16 %v3729, %v3725
    %v4034 = vpack.c.b16 %v3730, %v3726
    %v4035 = vpack.c.b16 %v3735, %v3731
    %v4036 = vpack.c.b16 %v3736, %v3732
    %v4037 = vpack.c.b16 %v3737, %v3733
    %v4038 = vpack.c.b16 %v3738, %v3734
    %v4039 = vpack.c.b16 %v3743, %v3739
    %v4040 = vpack.c.b16 %v3744, %v3740
    %v4041 = vpack.c.b16 %v3745, %v3741
    %v4042 = vpack.c.b16 %v3746, %v3742
    %v4043 = vpack.c.b16 %v3751, %v3747
    %v4044 = vpack.c.b16 %v3752, %v3748
    %v4045 = vpack.c.b16 %v3753, %v3749
    %v4046 = vpack.c.b16 %v3754, %v3750
    %v4047 = vpack.c.b16 %v3759, %v3755
    %v4048 = vpack.c.b16 %v3760, %v3756
    %v4049 = vpack.c.b16 %v3761, %v3757
    %v4050 = vpack.c.b16 %v3762, %v3758
    %v4051 = vpack.c.b16 %v3767, %v3763
    %v4052 = vpack.c.b16 %v3768, %v3764
    %v4053 = vpack.c.b16 %v3769, %v3765
    %v4054 = vpack.c.b16 %v3770, %v3766
    %v4055 = vpack.c.b16 %v3775, %v3771
    %v4056 = vpack.c.b16 %v3776, %v3772
    %v4057 = vpack.c.b16 %v3777, %v3773
    %v4058 = vpack.c.b16 %v3778, %v3774
    %v4059 = vpack.c.b16 %v3783, %v3779
    %v4060 = vpack.c.b16 %v3784, %v3780
    %v4061 = vpack.c.b16 %v3785, %v3781
    %v4062 = vpack.c.b16 %v3786, %v3782
    %v4063 = vpack.c.b16 %v3791, %v3787
    %v4064 = vpack.c.b16 %v3792, %v3788
    %v4065 = vpack.c.b16 %v3793, %v3789
    %v4066 = vpack.c.b16 %v3794, %v3790
    %v4067 = vpack.c.b16 %v3799, %v3795
    %v4068 = vpack.c.b16 %v3800, %v3796
    %v4069 = vpack.c.b16 %v3801, %v3797
    %v4070 = vpack.c.b16 %v3802, %v3798
    %v4071 = vpack.c.b16 %v3807, %v3803
    %v4072 = vpack.c.b16 %v3808, %v3804
    %v4073 = vpack.c.b16 %v3809, %v3805
    %v4074 = vpack.c.b16 %v3810, %v3806
    %v4075 = vpack.c.b16 %v3815, %v3811
    %v4076 = vpack.c.b16 %v3816, %v3812
    %v4077 = vpack.c.b16 %v3817, %v3813
    %v4078 = vpack.c.b16 %v3818, %v3814
    %v4079 = vpack.c.b16 %v3823, %v3819
    %v4080 = vpack.c.b16 %v3824, %v3820
    %v4081 = vpack.c.b16 %v3825, %v3821
    %v4082 = vpack.c.b16 %v3826, %v3822
    %4339 = vmatprep.subr.bf16.mxu0 %v3828
    %4340 = vmatpush1.bf16.msra.mxu0 %v3827
    %4341 = vmatprep.subr.bf16.mxu0 %v3832
    %4342 = vmatpush1.bf16.msra.mxu0 %v3831
    %4343 = vmatprep.subr.bf16.mxu0 %v3836
    %4344 = vmatpush1.bf16.msra.mxu0 %v3835
    %4345 = vmatprep.subr.bf16.mxu0 %v3840
    %4346 = vmatpush1.bf16.msra.mxu0 %v3839
    %4347 = vmatprep.subr.bf16.mxu0 %v3844
    %4348 = vmatpush1.bf16.msra.mxu0 %v3843
    %4349 = vmatprep.subr.bf16.mxu0 %v3848
    %4350 = vmatpush1.bf16.msra.mxu0 %v3847
    %4351 = vmatprep.subr.bf16.mxu0 %v3852
    %4352 = vmatpush1.bf16.msra.mxu0 %v3851
    %4353 = vmatprep.subr.bf16.mxu0 %v3856
    %4354 = vmatpush1.bf16.msra.mxu0 %v3855
    %4355 = vmatprep.subr.bf16.mxu0 %v3860
    %4356 = vmatpush1.bf16.msra.mxu0 %v3859
    %4357 = vmatprep.subr.bf16.mxu0 %v3864
    %4358 = vmatpush1.bf16.msra.mxu0 %v3863
    %4359 = vmatprep.subr.bf16.mxu0 %v3868
    %4360 = vmatpush1.bf16.msra.mxu0 %v3867
    %4361 = vmatprep.subr.bf16.mxu0 %v3872
    %4362 = vmatpush1.bf16.msra.mxu0 %v3871
    %4363 = vmatprep.subr.bf16.mxu0 %v3876
    %4364 = vmatpush1.bf16.msra.mxu0 %v3875
    %4365 = vmatprep.subr.bf16.mxu0 %v3880
    %4366 = vmatpush1.bf16.msra.mxu0 %v3879
    %4367 = vmatprep.subr.bf16.mxu0 %v3884
    %4368 = vmatpush1.bf16.msra.mxu0 %v3883
    %4369 = vmatprep.subr.bf16.mxu0 %v3888
    %4370 = vmatpush1.bf16.msra.mxu0 %v3887
    %4371 = vmatprep.mubr.bf16.mxu0 %v2788
    %4372 = vmatmul.mubr.bf16.gmra.mrb[0].mxu0 %v2787
    %v4373 = vpop.f32.mrb[0].mxu0
    %v4374 = vadd.f32 0.0, %v4373
    %v4375 = vpop.f32.mrb[0].mxu0
    %v4376 = vadd.f32 0.0, %v4375
    %v4377 = vpop.f32.mrb[0].mxu0
    %v4378 = vadd.f32 0.0, %v4377
    %v4379 = vpop.f32.mrb[0].mxu0
    %v4380 = vadd.f32 0.0, %v4379
    %4381 = vmatprep.mubr.bf16.mxu0 %v2796
    %4382 = vmatmul.mubr.bf16.gmra.mrb[0].mxu0 %v2795
    %v4383 = vpop.f32.mrb[0].mxu0
    %v4384 = vadd.f32 0.0, %v4383
    %v4385 = vpop.f32.mrb[0].mxu0
    %v4386 = vadd.f32 0.0, %v4385
    %v4387 = vpop.f32.mrb[0].mxu0
    %v4388 = vadd.f32 0.0, %v4387
    %v4389 = vpop.f32.mrb[0].mxu0
    %v4390 = vadd.f32 0.0, %v4389
    %4391 = vdwg.mxu0
    %4392 = vmatprep.subr.bf16.mxu0 %v3892
    %4393 = vmatpush1.bf16.msra.mxu0 %v3891
    %4394 = vmatprep.subr.bf16.mxu0 %v3896
    %4395 = vmatpush1.bf16.msra.mxu0 %v3895
    %4396 = vmatprep.subr.bf16.mxu0 %v3900
    %4397 = vmatpush1.bf16.msra.mxu0 %v3899
    %4398 = vmatprep.subr.bf16.mxu0 %v3904
    %4399 = vmatpush1.bf16.msra.mxu0 %v3903
    %4400 = vmatprep.subr.bf16.mxu0 %v3908
    %4401 = vmatpush1.bf16.msra.mxu0 %v3907
    %4402 = vmatprep.subr.bf16.mxu0 %v3912
    %4403 = vmatpush1.bf16.msra.mxu0 %v3911
    %4404 = vmatprep.subr.bf16.mxu0 %v3916
    %4405 = vmatpush1.bf16.msra.mxu0 %v3915
    %4406 = vmatprep.subr.bf16.mxu0 %v3920
    %4407 = vmatpush1.bf16.msra.mxu0 %v3919
    %4408 = vmatprep.subr.bf16.mxu0 %v3924
    %4409 = vmatpush1.bf16.msra.mxu0 %v3923
    %4410 = vmatprep.subr.bf16.mxu0 %v3928
    %4411 = vmatpush1.bf16.msra.mxu0 %v3927
    %4412 = vmatprep.subr.bf16.mxu0 %v3932
    %4413 = vmatpush1.bf16.msra.mxu0 %v3931
    %4414 = vmatprep.subr.bf16.mxu0 %v3936
    %4415 = vmatpush1.bf16.msra.mxu0 %v3935
    %4416 = vmatprep.subr.bf16.mxu0 %v3940
    %4417 = vmatpush1.bf16.msra.mxu0 %v3939
    %4418 = vmatprep.subr.bf16.mxu0 %v3944
    %4419 = vmatpush1.bf16.msra.mxu0 %v3943
    %4420 = vmatprep.subr.bf16.mxu0 %v3948
    %4421 = vmatpush1.bf16.msra.mxu0 %v3947
    %4422 = vmatprep.subr.bf16.mxu0 %v3952
    %4423 = vmatpush1.bf16.msra.mxu0 %v3951
    %4424 = vmatprep.mubr.bf16.mxu0 %v2790
    %4425 = vmatmul.mubr.bf16.gmra.mrb[0].mxu0 %v2789
    %v4426 = vpop.f32.mrb[0].mxu0
    %v4427 = vadd.f32 %v4374, %v4426
    %v4428 = vpop.f32.mrb[0].mxu0
    %v4429 = vadd.f32 %v4376, %v4428
    %v4430 = vpop.f32.mrb[0].mxu0
    %v4431 = vadd.f32 %v4378, %v4430
    %v4432 = vpop.f32.mrb[0].mxu0
    %v4433 = vadd.f32 %v4380, %v4432
    %4434 = vmatprep.mubr.bf16.mxu0 %v2798
    %4435 = vmatmul.mubr.bf16.gmra.mrb[0].mxu0 %v2797
    %v4436 = vpop.f32.mrb[0].mxu0
    %v4437 = vadd.f32 %v4384, %v4436
    %v4438 = vpop.f32.mrb[0].mxu0
    %v4439 = vadd.f32 %v4386, %v4438
    %v4440 = vpop.f32.mrb[0].mxu0
    %v4441 = vadd.f32 %v4388, %v4440
    %v4442 = vpop.f32.mrb[0].mxu0
    %v4443 = vadd.f32 %v4390, %v4442
    %4444 = vdwg.mxu0
    %4445 = vmatprep.subr.bf16.mxu0 %v3956
    %4446 = vmatpush1.bf16.msra.mxu0 %v3955
    %4447 = vmatprep.subr.bf16.mxu0 %v3960
    %4448 = vmatpush1.bf16.msra.mxu0 %v3959
    %4449 = vmatprep.subr.bf16.mxu0 %v3964
    %4450 = vmatpush1.bf16.msra.mxu0 %v3963
    %4451 = vmatprep.subr.bf16.mxu0 %v3968
    %4452 = vmatpush1.bf16.msra.mxu0 %v3967
    %4453 = vmatprep.subr.bf16.mxu0 %v3972
    %4454 = vmatpush1.bf16.msra.mxu0 %v3971
    %4455 = vmatprep.subr.bf16.mxu0 %v3976
    %4456 = vmatpush1.bf16.msra.mxu0 %v3975
    %4457 = vmatprep.subr.bf16.mxu0 %v3980
    %4458 = vmatpush1.bf16.msra.mxu0 %v3979
    %4459 = vmatprep.subr.bf16.mxu0 %v3984
    %4460 = vmatpush1.bf16.msra.mxu0 %v3983
    %4461 = vmatprep.subr.bf16.mxu0 %v3988
    %4462 = vmatpush1.bf16.msra.mxu0 %v3987
    %4463 = vmatprep.subr.bf16.mxu0 %v3992
    %4464 = vmatpush1.bf16.msra.mxu0 %v3991
    %4465 = vmatprep.subr.bf16.mxu0 %v3996
    %4466 = vmatpush1.bf16.msra.mxu0 %v3995
    %4467 = vmatprep.subr.bf16.mxu0 %v4000
    %4468 = vmatpush1.bf16.msra.mxu0 %v3999
    %4469 = vmatprep.subr.bf16.mxu0 %v4004
    %4470 = vmatpush1.bf16.msra.mxu0 %v4003
    %4471 = vmatprep.subr.bf16.mxu0 %v4008
    %4472 = vmatpush1.bf16.msra.mxu0 %v4007
    %4473 = vmatprep.subr.bf16.mxu0 %v4012
    %4474 = vmatpush1.bf16.msra.mxu0 %v4011
    %4475 = vmatprep.subr.bf16.mxu0 %v4016
    %4476 = vmatpush1.bf16.msra.mxu0 %v4015
    %4477 = vmatprep.mubr.bf16.mxu0 %v2792
    %4478 = vmatmul.mubr.bf16.gmra.mrb[0].mxu0 %v2791
    %v4479 = vpop.f32.mrb[0].mxu0
    %v4480 = vadd.f32 %v4427, %v4479
    %v4481 = vpop.f32.mrb[0].mxu0
    %v4482 = vadd.f32 %v4429, %v4481
    %v4483 = vpop.f32.mrb[0].mxu0
    %v4484 = vadd.f32 %v4431, %v4483
    %v4485 = vpop.f32.mrb[0].mxu0
    %v4486 = vadd.f32 %v4433, %v4485
    %4487 = vmatprep.mubr.bf16.mxu0 %v2800
    %4488 = vmatmul.mubr.bf16.gmra.mrb[0].mxu0 %v2799
    %v4489 = vpop.f32.mrb[0].mxu0
    %v4490 = vadd.f32 %v4437, %v4489
    %v4491 = vpop.f32.mrb[0].mxu0
    %v4492 = vadd.f32 %v4439, %v4491
    %v4493 = vpop.f32.mrb[0].mxu0
    %v4494 = vadd.f32 %v4441, %v4493
    %v4495 = vpop.f32.mrb[0].mxu0
    %v4496 = vadd.f32 %v4443, %v4495
    %4497 = vdwg.mxu0
    %4498 = vmatprep.subr.bf16.mxu0 %v4020
    %4499 = vmatpush1.bf16.msra.mxu0 %v4019
    %4500 = vmatprep.subr.bf16.mxu0 %v4024
    %4501 = vmatpush1.bf16.msra.mxu0 %v4023
    %4502 = vmatprep.subr.bf16.mxu0 %v4028
    %4503 = vmatpush1.bf16.msra.mxu0 %v4027
    %4504 = vmatprep.subr.bf16.mxu0 %v4032
    %4505 = vmatpush1.bf16.msra.mxu0 %v4031
    %4506 = vmatprep.subr.bf16.mxu0 %v4036
    %4507 = vmatpush1.bf16.msra.mxu0 %v4035
    %4508 = vmatprep.subr.bf16.mxu0 %v4040
    %4509 = vmatpush1.bf16.msra.mxu0 %v4039
    %4510 = vmatprep.subr.bf16.mxu0 %v4044
    %4511 = vmatpush1.bf16.msra.mxu0 %v4043
    %4512 = vmatprep.subr.bf16.mxu0 %v4048
    %4513 = vmatpush1.bf16.msra.mxu0 %v4047
    %4514 = vmatprep.subr.bf16.mxu0 %v4052
    %4515 = vmatpush1.bf16.msra.mxu0 %v4051
    %4516 = vmatprep.subr.bf16.mxu0 %v4056
    %4517 = vmatpush1.bf16.msra.mxu0 %v4055
    %4518 = vmatprep.subr.bf16.mxu0 %v4060
    %4519 = vmatpush1.bf16.msra.mxu0 %v4059
    %4520 = vmatprep.subr.bf16.mxu0 %v4064
    %4521 = vmatpush1.bf16.msra.mxu0 %v4063
    %4522 = vmatprep.subr.bf16.mxu0 %v4068
    %4523 = vmatpush1.bf16.msra.mxu0 %v4067
    %4524 = vmatprep.subr.bf16.mxu0 %v4072
    %4525 = vmatpush1.bf16.msra.mxu0 %v4071
    %4526 = vmatprep.subr.bf16.mxu0 %v4076
    %4527 = vmatpush1.bf16.msra.mxu0 %v4075
    %4528 = vmatprep.subr.bf16.mxu0 %v4080
    %4529 = vmatpush1.bf16.msra.mxu0 %v4079
    %4530 = vmatprep.mubr.bf16.mxu0 %v2794
    %4531 = vmatmul.mubr.bf16.gmra.mrb[0].mxu0 %v2793
    %v4532 = vpop.f32.mrb[0].mxu0
    %v4533 = vadd.f32 %v4480, %v4532
    %v4534 = vpop.f32.mrb[0].mxu0
    %v4535 = vadd.f32 %v4482, %v4534
    %v4536 = vpop.f32.mrb[0].mxu0
    %v4537 = vadd.f32 %v4484, %v4536
    %v4538 = vpop.f32.mrb[0].mxu0
    %v4539 = vadd.f32 %v4486, %v4538
    %4540 = vmatprep.mubr.bf16.mxu0 %v2802
    %4541 = vmatmul.mubr.bf16.gmra.mrb[0].mxu0 %v2801
    %v4542 = vpop.f32.mrb[0].mxu0
    %v4543 = vadd.f32 %v4490, %v4542
    %v4544 = vpop.f32.mrb[0].mxu0
    %v4545 = vadd.f32 %v4492, %v4544
    %v4546 = vpop.f32.mrb[0].mxu0
    %v4547 = vadd.f32 %v4494, %v4546
    %v4548 = vpop.f32.mrb[0].mxu0
    %v4549 = vadd.f32 %v4496, %v4548
    %4550 = vdwg.mxu0
    %4551 = vmatprep.subr.bf16.mxu0 %v3830
    %4552 = vmatpush1.bf16.msra.mxu0 %v3829
    %4553 = vmatprep.subr.bf16.mxu0 %v3834
    %4554 = vmatpush1.bf16.msra.mxu0 %v3833
    %4555 = vmatprep.subr.bf16.mxu0 %v3838
    %4556 = vmatpush1.bf16.msra.mxu0 %v3837
    %4557 = vmatprep.subr.bf16.mxu0 %v3842
    %4558 = vmatpush1.bf16.msra.mxu0 %v3841
    %4559 = vmatprep.subr.bf16.mxu0 %v3846
    %4560 = vmatpush1.bf16.msra.mxu0 %v3845
    %4561 = vmatprep.subr.bf16.mxu0 %v3850
    %4562 = vmatpush1.bf16.msra.mxu0 %v3849
    %4563 = vmatprep.subr.bf16.mxu0 %v3854
    %4564 = vmatpush1.bf16.msra.mxu0 %v3853
    %4565 = vmatprep.subr.bf16.mxu0 %v3858
    %4566 = vmatpush1.bf16.msra.mxu0 %v3857
    %4567 = vmatprep.subr.bf16.mxu0 %v3862
    %4568 = vmatpush1.bf16.msra.mxu0 %v3861
    %4569 = vmatprep.subr.bf16.mxu0 %v3866
    %4570 = vmatpush1.bf16.msra.mxu0 %v3865
    %4571 = vmatprep.subr.bf16.mxu0 %v3870
    %4572 = vmatpush1.bf16.msra.mxu0 %v3869
    %4573 = vmatprep.subr.bf16.mxu0 %v3874
    %4574 = vmatpush1.bf16.msra.mxu0 %v3873
    %4575 = vmatprep.subr.bf16.mxu0 %v3878
    %4576 = vmatpush1.bf16.msra.mxu0 %v3877
    %4577 = vmatprep.subr.bf16.mxu0 %v3882
    %4578 = vmatpush1.bf16.msra.mxu0 %v3881
    %4579 = vmatprep.subr.bf16.mxu0 %v3886
    %4580 = vmatpush1.bf16.msra.mxu0 %v3885
    %4581 = vmatprep.subr.bf16.mxu0 %v3890
    %4582 = vmatpush1.bf16.msra.mxu0 %v3889
    %4583 = vmatprep.mubr.bf16.mxu0 %v2788
    %4584 = vmatmul.mubr.bf16.gmra.mrb[0].mxu0 %v2787
    %v4585 = vpop.f32.mrb[0].mxu0
    %v4586 = vadd.f32 0.0, %v4585
    %v4587 = vpop.f32.mrb[0].mxu0
    %v4588 = vadd.f32 0.0, %v4587
    %v4589 = vpop.f32.mrb[0].mxu0
    %v4590 = vadd.f32 0.0, %v4589
    %v4591 = vpop.f32.mrb[0].mxu0
    %v4592 = vadd.f32 0.0, %v4591
    %4593 = vmatprep.mubr.bf16.mxu0 %v2796
    %4594 = vmatmul.mubr.bf16.gmra.mrb[0].mxu0 %v2795
    %v4595 = vpop.f32.mrb[0].mxu0
    %v4596 = vadd.f32 0.0, %v4595
    %v4597 = vpop.f32.mrb[0].mxu0
    %v4598 = vadd.f32 0.0, %v4597
    %v4599 = vpop.f32.mrb[0].mxu0
    %v4600 = vadd.f32 0.0, %v4599
    %v4601 = vpop.f32.mrb[0].mxu0
    %v4602 = vadd.f32 0.0, %v4601
    %4603 = vdwg.mxu0
    %4604 = vmatprep.subr.bf16.mxu0 %v3894
    %4605 = vmatpush1.bf16.msra.mxu0 %v3893
    %4606 = vmatprep.subr.bf16.mxu0 %v3898
    %4607 = vmatpush1.bf16.msra.mxu0 %v3897
    %4608 = vmatprep.subr.bf16.mxu0 %v3902
    %4609 = vmatpush1.bf16.msra.mxu0 %v3901
    %4610 = vmatprep.subr.bf16.mxu0 %v3906
    %4611 = vmatpush1.bf16.msra.mxu0 %v3905
    %4612 = vmatprep.subr.bf16.mxu0 %v3910
    %4613 = vmatpush1.bf16.msra.mxu0 %v3909
    %4614 = vmatprep.subr.bf16.mxu0 %v3914
    %4615 = vmatpush1.bf16.msra.mxu0 %v3913
    %4616 = vmatprep.subr.bf16.mxu0 %v3918
    %4617 = vmatpush1.bf16.msra.mxu0 %v3917
    %4618 = vmatprep.subr.bf16.mxu0 %v3922
    %4619 = vmatpush1.bf16.msra.mxu0 %v3921
    %4620 = vmatprep.subr.bf16.mxu0 %v3926
    %4621 = vmatpush1.bf16.msra.mxu0 %v3925
    %4622 = vmatprep.subr.bf16.mxu0 %v3930
    %4623 = vmatpush1.bf16.msra.mxu0 %v3929
    %4624 = vmatprep.subr.bf16.mxu0 %v3934
    %4625 = vmatpush1.bf16.msra.mxu0 %v3933
    %4626 = vmatprep.subr.bf16.mxu0 %v3938
    %4627 = vmatpush1.bf16.msra.mxu0 %v3937
    %4628 = vmatprep.subr.bf16.mxu0 %v3942
    %4629 = vmatpush1.bf16.msra.mxu0 %v3941
    %4630 = vmatprep.subr.bf16.mxu0 %v3946
    %4631 = vmatpush1.bf16.msra.mxu0 %v3945
    %4632 = vmatprep.subr.bf16.mxu0 %v3950
    %4633 = vmatpush1.bf16.msra.mxu0 %v3949
    %4634 = vmatprep.subr.bf16.mxu0 %v3954
    %4635 = vmatpush1.bf16.msra.mxu0 %v3953
    %4636 = vmatprep.mubr.bf16.mxu0 %v2790
    %4637 = vmatmul.mubr.bf16.gmra.mrb[0].mxu0 %v2789
    %v4638 = vpop.f32.mrb[0].mxu0
    %v4639 = vadd.f32 %v4586, %v4638
    %v4640 = vpop.f32.mrb[0].mxu0
    %v4641 = vadd.f32 %v4588, %v4640
    %v4642 = vpop.f32.mrb[0].mxu0
    %v4643 = vadd.f32 %v4590, %v4642
    %v4644 = vpop.f32.mrb[0].mxu0
    %v4645 = vadd.f32 %v4592, %v4644
    %4646 = vmatprep.mubr.bf16.mxu0 %v2798
    %4647 = vmatmul.mubr.bf16.gmra.mrb[0].mxu0 %v2797
    %v4648 = vpop.f32.mrb[0].mxu0
    %v4649 = vadd.f32 %v4596, %v4648
    %v4650 = vpop.f32.mrb[0].mxu0
    %v4651 = vadd.f32 %v4598, %v4650
    %v4652 = vpop.f32.mrb[0].mxu0
    %v4653 = vadd.f32 %v4600, %v4652
    %v4654 = vpop.f32.mrb[0].mxu0
    %v4655 = vadd.f32 %v4602, %v4654
    %4656 = vdwg.mxu0
    %4657 = vmatprep.subr.bf16.mxu0 %v3958
    %4658 = vmatpush1.bf16.msra.mxu0 %v3957
    %4659 = vmatprep.subr.bf16.mxu0 %v3962
    %4660 = vmatpush1.bf16.msra.mxu0 %v3961
    %4661 = vmatprep.subr.bf16.mxu0 %v3966
    %4662 = vmatpush1.bf16.msra.mxu0 %v3965
    %4663 = vmatprep.subr.bf16.mxu0 %v3970
    %4664 = vmatpush1.bf16.msra.mxu0 %v3969
    %4665 = vmatprep.subr.bf16.mxu0 %v3974
    %4666 = vmatpush1.bf16.msra.mxu0 %v3973
    %4667 = vmatprep.subr.bf16.mxu0 %v3978
    %4668 = vmatpush1.bf16.msra.mxu0 %v3977
    %4669 = vmatprep.subr.bf16.mxu0 %v3982
    %4670 = vmatpush1.bf16.msra.mxu0 %v3981
    %4671 = vmatprep.subr.bf16.mxu0 %v3986
    %4672 = vmatpush1.bf16.msra.mxu0 %v3985
    %4673 = vmatprep.subr.bf16.mxu0 %v3990
    %4674 = vmatpush1.bf16.msra.mxu0 %v3989
    %4675 = vmatprep.subr.bf16.mxu0 %v3994
    %4676 = vmatpush1.bf16.msra.mxu0 %v3993
    %4677 = vmatprep.subr.bf16.mxu0 %v3998
    %4678 = vmatpush1.bf16.msra.mxu0 %v3997
    %4679 = vmatprep.subr.bf16.mxu0 %v4002
    %4680 = vmatpush1.bf16.msra.mxu0 %v4001
    %4681 = vmatprep.subr.bf16.mxu0 %v4006
    %4682 = vmatpush1.bf16.msra.mxu0 %v4005
    %4683 = vmatprep.subr.bf16.mxu0 %v4010
    %4684 = vmatpush1.bf16.msra.mxu0 %v4009
    %4685 = vmatprep.subr.bf16.mxu0 %v4014
    %4686 = vmatpush1.bf16.msra.mxu0 %v4013
    %4687 = vmatprep.subr.bf16.mxu0 %v4018
    %4688 = vmatpush1.bf16.msra.mxu0 %v4017
    %4689 = vmatprep.mubr.bf16.mxu0 %v2792
    %4690 = vmatmul.mubr.bf16.gmra.mrb[0].mxu0 %v2791
    %v4691 = vpop.f32.mrb[0].mxu0
    %v4692 = vadd.f32 %v4639, %v4691
    %v4693 = vpop.f32.mrb[0].mxu0
    %v4694 = vadd.f32 %v4641, %v4693
    %v4695 = vpop.f32.mrb[0].mxu0
    %v4696 = vadd.f32 %v4643, %v4695
    %v4697 = vpop.f32.mrb[0].mxu0
    %v4698 = vadd.f32 %v4645, %v4697
    %4699 = vmatprep.mubr.bf16.mxu0 %v2800
    %4700 = vmatmul.mubr.bf16.gmra.mrb[0].mxu0 %v2799
    %v4701 = vpop.f32.mrb[0].mxu0
    %v4702 = vadd.f32 %v4649, %v4701
    %v4703 = vpop.f32.mrb[0].mxu0
    %v4704 = vadd.f32 %v4651, %v4703
    %v4705 = vpop.f32.mrb[0].mxu0
    %v4706 = vadd.f32 %v4653, %v4705
    %v4707 = vpop.f32.mrb[0].mxu0
    %v4708 = vadd.f32 %v4655, %v4707
    %4709 = vdwg.mxu0
    %4710 = vmatprep.subr.bf16.mxu0 %v4022
    %4711 = vmatpush1.bf16.msra.mxu0 %v4021
    %4712 = vmatprep.subr.bf16.mxu0 %v4026
    %4713 = vmatpush1.bf16.msra.mxu0 %v4025
    %4714 = vmatprep.subr.bf16.mxu0 %v4030
    %4715 = vmatpush1.bf16.msra.mxu0 %v4029
    %4716 = vmatprep.subr.bf16.mxu0 %v4034
    %4717 = vmatpush1.bf16.msra.mxu0 %v4033
    %4718 = vmatprep.subr.bf16.mxu0 %v4038
    %4719 = vmatpush1.bf16.msra.mxu0 %v4037
    %4720 = vmatprep.subr.bf16.mxu0 %v4042
    %4721 = vmatpush1.bf16.msra.mxu0 %v4041
    %4722 = vmatprep.subr.bf16.mxu0 %v4046
    %4723 = vmatpush1.bf16.msra.mxu0 %v4045
    %4724 = vmatprep.subr.bf16.mxu0 %v4050
    %4725 = vmatpush1.bf16.msra.mxu0 %v4049
    %4726 = vmatprep.subr.bf16.mxu0 %v4054
    %4727 = vmatpush1.bf16.msra.mxu0 %v4053
    %4728 = vmatprep.subr.bf16.mxu0 %v4058
    %4729 = vmatpush1.bf16.msra.mxu0 %v4057
    %4730 = vmatprep.subr.bf16.mxu0 %v4062
    %4731 = vmatpush1.bf16.msra.mxu0 %v4061
    %4732 = vmatprep.subr.bf16.mxu0 %v4066
    %4733 = vmatpush1.bf16.msra.mxu0 %v4065
    %4734 = vmatprep.subr.bf16.mxu0 %v4070
    %4735 = vmatpush1.bf16.msra.mxu0 %v4069
    %4736 = vmatprep.subr.bf16.mxu0 %v4074
    %4737 = vmatpush1.bf16.msra.mxu0 %v4073
    %4738 = vmatprep.subr.bf16.mxu0 %v4078
    %4739 = vmatpush1.bf16.msra.mxu0 %v4077
    %4740 = vmatprep.subr.bf16.mxu0 %v4082
    %4741 = vmatpush1.bf16.msra.mxu0 %v4081
    %4742 = vmatprep.mubr.bf16.mxu0 %v2794
    %4743 = vmatmul.mubr.bf16.gmra.mrb[0].mxu0 %v2793
    %v4744 = vpop.f32.mrb[0].mxu0
    %v4745 = vadd.f32 %v4692, %v4744
    %v4746 = vpop.f32.mrb[0].mxu0
    %v4747 = vadd.f32 %v4694, %v4746
    %v4748 = vpop.f32.mrb[0].mxu0
    %v4749 = vadd.f32 %v4696, %v4748
    %v4750 = vpop.f32.mrb[0].mxu0
    %v4751 = vadd.f32 %v4698, %v4750
    %4752 = vmatprep.mubr.bf16.mxu0 %v2802
    %4753 = vmatmul.mubr.bf16.gmra.mrb[0].mxu0 %v2801
    %v4754 = vpop.f32.mrb[0].mxu0
    %v4755 = vadd.f32 %v4702, %v4754
    %v4756 = vpop.f32.mrb[0].mxu0
    %v4757 = vadd.f32 %v4704, %v4756
    %v4758 = vpop.f32.mrb[0].mxu0
    %v4759 = vadd.f32 %v4706, %v4758
    %v4760 = vpop.f32.mrb[0].mxu0
    %v4761 = vadd.f32 %v4708, %v4760
    %4762 = vdwg.mxu0
    %v4763 = vld [vmem:[%s11] sm:$0xf]
    %v4765 = vlaneseq
    %v4766 = vshrl.u32 %v4765, 7
    %v4767 = vsub.s32 0, %v4766
    %v4768 = vrot.slane %v4763, %v4767
    %v4769 = vlaneseq
    %v4770 = vshrl.u32 %v4769, 7
    %v4771 = vsub.s32 1, %v4770
    %v4772 = vrot.slane %v4763, %v4771
    %v4773 = vlaneseq
    %v4774 = vshrl.u32 %v4773, 7
    %v4775 = vsub.s32 2, %v4774
    %v4776 = vrot.slane %v4763, %v4775
    %v4777 = vlaneseq
    %v4778 = vshrl.u32 %v4777, 7
    %v4779 = vsub.s32 3, %v4778
    %v4780 = vrot.slane %v4763, %v4779
    %v4785 = vmul.f32 %v4533, %v4768
    %v4786 = vmul.f32 %v4535, %v4772
    %v4787 = vmul.f32 %v4745, %v4776
    %v4788 = vmul.f32 %v4747, %v4780
    %v4789 = vmul.f32 %v4537, %v4768
    %v4790 = vmul.f32 %v4539, %v4772
    %v4791 = vmul.f32 %v4749, %v4776
    %v4792 = vmul.f32 %v4751, %v4780
    %v4793 = vmul.f32 %v4543, %v4768
    %v4794 = vmul.f32 %v4545, %v4772
    %v4795 = vmul.f32 %v4755, %v4776
    %v4796 = vmul.f32 %v4757, %v4780
    %v4797 = vmul.f32 %v4547, %v4768
    %v4798 = vmul.f32 %v4549, %v4772
    %v4799 = vmul.f32 %v4759, %v4776
    %v4800 = vmul.f32 %v4761, %v4780
    %v4801 = vld [vmem:[%s12] sm:$0xf]
    %v4803 = vlaneseq
    %v4804 = vshrl.u32 %v4803, 7
    %v4805 = vsub.s32 0, %v4804
    %v4806 = vrot.slane %v4801, %v4805
    %v4807 = vlaneseq
    %v4808 = vshrl.u32 %v4807, 7
    %v4809 = vsub.s32 1, %v4808
    %v4810 = vrot.slane %v4801, %v4809
    %v4811 = vlaneseq
    %v4812 = vshrl.u32 %v4811, 7
    %v4813 = vsub.s32 2, %v4812
    %v4814 = vrot.slane %v4801, %v4813
    %v4815 = vlaneseq
    %v4816 = vshrl.u32 %v4815, 7
    %v4817 = vsub.s32 3, %v4816
    %v4818 = vrot.slane %v4801, %v4817
    %v4823 = vadd.f32 %v4785, %v4806
    %v4824 = vadd.f32 %v4786, %v4810
    %v4825 = vadd.f32 %v4787, %v4814
    %v4826 = vadd.f32 %v4788, %v4818
    %v4827 = vadd.f32 %v4789, %v4806
    %v4828 = vadd.f32 %v4790, %v4810
    %v4829 = vadd.f32 %v4791, %v4814
    %v4830 = vadd.f32 %v4792, %v4818
    %v4831 = vadd.f32 %v4793, %v4806
    %v4832 = vadd.f32 %v4794, %v4810
    %v4833 = vadd.f32 %v4795, %v4814
    %v4834 = vadd.f32 %v4796, %v4818
    %v4835 = vadd.f32 %v4797, %v4806
    %v4836 = vadd.f32 %v4798, %v4810
    %v4837 = vadd.f32 %v4799, %v4814
    %v4838 = vadd.f32 %v4800, %v4818
    %v4839 = vmax.f32 %v4823, 0.0
    %v4840 = vmax.f32 %v4824, 0.0
    %v4841 = vmax.f32 %v4825, 0.0
    %v4842 = vmax.f32 %v4826, 0.0
    %v4843 = vmax.f32 %v4827, 0.0
    %v4844 = vmax.f32 %v4828, 0.0
    %v4845 = vmax.f32 %v4829, 0.0
    %v4846 = vmax.f32 %v4830, 0.0
    %v4847 = vmax.f32 %v4831, 0.0
    %v4848 = vmax.f32 %v4832, 0.0
    %v4849 = vmax.f32 %v4833, 0.0
    %v4850 = vmax.f32 %v4834, 0.0
    %v4851 = vmax.f32 %v4835, 0.0
    %v4852 = vmax.f32 %v4836, 0.0
    %v4853 = vmax.f32 %v4837, 0.0
    %v4854 = vmax.f32 %v4838, 0.0
    %v4855 = vpack.c.bf16 %v4843, %v4839
    %v4856 = vpack.c.bf16 %v4844, %v4840
    %v4857 = vpack.c.bf16 %v4845, %v4841
    %v4858 = vpack.c.bf16 %v4846, %v4842
    %v4859 = vpack.c.bf16 %v4851, %v4847
    %v4860 = vpack.c.bf16 %v4852, %v4848
    %v4861 = vpack.c.bf16 %v4853, %v4849
    %v4862 = vpack.c.bf16 %v4854, %v4850
    %v4863 = vld [vmem:[%s13] sm:$0xf]
    %v4864 = vld [vmem:[%s13 + $0x4] sm:$0xf]
    %v4865 = vld [vmem:[%s13 + $0x8] sm:$0xf]
    %v4866 = vld [vmem:[%s13 + $0xc] sm:$0xf]
    %v4867 = vld [vmem:[%s13 + $0x10] sm:$0xf]
    %v4868 = vld [vmem:[%s13 + $0x14] sm:$0xf]
    %v4869 = vld [vmem:[%s13 + $0x18] sm:$0xf]
    %v4870 = vld [vmem:[%s13 + $0x1c] sm:$0xf]
    %v4871 = vld [vmem:[%s13 + $0x20] sm:$0xf]
    %v4872 = vld [vmem:[%s13 + $0x24] sm:$0xf]
    %v4873 = vld [vmem:[%s13 + $0x28] sm:$0xf]
    %v4874 = vld [vmem:[%s13 + $0x2c] sm:$0xf]
    %v4875 = vld [vmem:[%s13 + $0x30] sm:$0xf]
    %v4876 = vld [vmem:[%s13 + $0x34] sm:$0xf]
    %v4877 = vld [vmem:[%s13 + $0x38] sm:$0xf]
    %v4878 = vld [vmem:[%s13 + $0x3c] sm:$0xf]
    %v4879 = vld [vmem:[%s13 + $0x40] sm:$0xf]
    %v4880 = vld [vmem:[%s13 + $0x44] sm:$0xf]
    %v4881 = vld [vmem:[%s13 + $0x48] sm:$0xf]
    %v4882 = vld [vmem:[%s13 + $0x4c] sm:$0xf]
    %v4883 = vld [vmem:[%s13 + $0x50] sm:$0xf]
    %v4884 = vld [vmem:[%s13 + $0x54] sm:$0xf]
    %v4885 = vld [vmem:[%s13 + $0x58] sm:$0xf]
    %v4886 = vld [vmem:[%s13 + $0x5c] sm:$0xf]
    %v4887 = vld [vmem:[%s13 + $0x60] sm:$0xf]
    %v4888 = vld [vmem:[%s13 + $0x64] sm:$0xf]
    %v4889 = vld [vmem:[%s13 + $0x68] sm:$0xf]
    %v4890 = vld [vmem:[%s13 + $0x6c] sm:$0xf]
    %v4891 = vld [vmem:[%s13 + $0x70] sm:$0xf]
    %v4892 = vld [vmem:[%s13 + $0x74] sm:$0xf]
    %v4893 = vld [vmem:[%s13 + $0x78] sm:$0xf]
    %v4894 = vld [vmem:[%s13 + $0x7c] sm:$0xf]
    %v4895 = vld [vmem:[%s13 + $0x80] sm:$0xf]
    %v4896 = vld [vmem:[%s13 + $0x84] sm:$0xf]
    %v4897 = vld [vmem:[%s13 + $0x88] sm:$0xf]
    %v4898 = vld [vmem:[%s13 + $0x8c] sm:$0xf]
    %v4899 = vld [vmem:[%s13 + $0x90] sm:$0xf]
    %v4900 = vld [vmem:[%s13 + $0x94] sm:$0xf]
    %v4901 = vld [vmem:[%s13 + $0x98] sm:$0xf]
    %v4902 = vld [vmem:[%s13 + $0x9c] sm:$0xf]
    %v4903 = vld [vmem:[%s13 + $0xa0] sm:$0xf]
    %v4904 = vld [vmem:[%s13 + $0xa4] sm:$0xf]
    %v4905 = vld [vmem:[%s13 + $0xa8] sm:$0xf]
    %v4906 = vld [vmem:[%s13 + $0xac] sm:$0xf]
    %v4907 = vld [vmem:[%s13 + $0xb0] sm:$0xf]
    %v4908 = vld [vmem:[%s13 + $0xb4] sm:$0xf]
    %v4909 = vld [vmem:[%s13 + $0xb8] sm:$0xf]
    %v4910 = vld [vmem:[%s13 + $0xbc] sm:$0xf]
    %v4911 = vld [vmem:[%s13 + $0xc0] sm:$0xf]
    %v4912 = vld [vmem:[%s13 + $0xc4] sm:$0xf]
    %v4913 = vld [vmem:[%s13 + $0xc8] sm:$0xf]
    %v4914 = vld [vmem:[%s13 + $0xcc] sm:$0xf]
    %v4915 = vld [vmem:[%s13 + $0xd0] sm:$0xf]
    %v4916 = vld [vmem:[%s13 + $0xd4] sm:$0xf]
    %v4917 = vld [vmem:[%s13 + $0xd8] sm:$0xf]
    %v4918 = vld [vmem:[%s13 + $0xdc] sm:$0xf]
    %v4919 = vld [vmem:[%s13 + $0xe0] sm:$0xf]
    %v4920 = vld [vmem:[%s13 + $0xe4] sm:$0xf]
    %v4921 = vld [vmem:[%s13 + $0xe8] sm:$0xf]
    %v4922 = vld [vmem:[%s13 + $0xec] sm:$0xf]
    %v4923 = vld [vmem:[%s13 + $0xf0] sm:$0xf]
    %v4924 = vld [vmem:[%s13 + $0xf4] sm:$0xf]
    %v4925 = vld [vmem:[%s13 + $0xf8] sm:$0xf]
    %v4926 = vld [vmem:[%s13 + $0xfc] sm:$0xf]
    %v4927 = vld [vmem:[%s14] sm:$0x1]
    %v4929 = vlaneseq
    %v4930 = vshrl.u32 %v4929, 7
    %v4931 = vsub.s32 0, %v4930
    %v4932 = vrot.slane %v4927, %v4931
    %v4998 = vunpack.c.l.b16 %v4863
    %v4999 = vunpack.c.l.b16 %v4864
    %v5000 = vunpack.c.l.b16 %v4865
    %v5001 = vunpack.c.l.b16 %v4866
    %v5002 = vunpack.c.l.b16 %v4867
    %v5003 = vunpack.c.l.b16 %v4868
    %v5004 = vunpack.c.l.b16 %v4869
    %v5005 = vunpack.c.l.b16 %v4870
    %v5006 = vunpack.c.l.b16 %v4871
    %v5007 = vunpack.c.l.b16 %v4872
    %v5008 = vunpack.c.l.b16 %v4873
    %v5009 = vunpack.c.l.b16 %v4874
    %v5010 = vunpack.c.l.b16 %v4875
    %v5011 = vunpack.c.l.b16 %v4876
    %v5012 = vunpack.c.l.b16 %v4877
    %v5013 = vunpack.c.l.b16 %v4878
    %v5014 = vunpack.c.l.b16 %v4879
    %v5015 = vunpack.c.l.b16 %v4880
    %v5016 = vunpack.c.l.b16 %v4881
    %v5017 = vunpack.c.l.b16 %v4882
    %v5018 = vunpack.c.l.b16 %v4883
    %v5019 = vunpack.c.l.b16 %v4884
    %v5020 = vunpack.c.l.b16 %v4885
    %v5021 = vunpack.c.l.b16 %v4886
    %v5022 = vunpack.c.l.b16 %v4887
    %v5023 = vunpack.c.l.b16 %v4888
    %v5024 = vunpack.c.l.b16 %v4889
    %v5025 = vunpack.c.l.b16 %v4890
    %v5026 = vunpack.c.l.b16 %v4891
    %v5027 = vunpack.c.l.b16 %v4892
    %v5028 = vunpack.c.l.b16 %v4893
    %v5029 = vunpack.c.l.b16 %v4894
    %v5030 = vunpack.c.l.b16 %v4895
    %v5031 = vunpack.c.l.b16 %v4896
    %v5032 = vunpack.c.l.b16 %v4897
    %v5033 = vunpack.c.l.b16 %v4898
    %v5034 = vunpack.c.l.b16 %v4899
    %v5035 = vunpack.c.l.b16 %v4900
    %v5036 = vunpack.c.l.b16 %v4901
    %v5037 = vunpack.c.l.b16 %v4902
    %v5038 = vunpack.c.l.b16 %v4903
    %v5039 = vunpack.c.l.b16 %v4904
    %v5040 = vunpack.c.l.b16 %v4905
    %v5041 = vunpack.c.l.b16 %v4906
    %v5042 = vunpack.c.l.b16 %v4907
    %v5043 = vunpack.c.l.b16 %v4908
    %v5044 = vunpack.c.l.b16 %v4909
    %v5045 = vunpack.c.l.b16 %v4910
    %v5046 = vunpack.c.l.b16 %v4911
    %v5047 = vunpack.c.l.b16 %v4912
    %v5048 = vunpack.c.l.b16 %v4913
    %v5049 = vunpack.c.l.b16 %v4914
    %v5050 = vunpack.c.l.b16 %v4915
    %v5051 = vunpack.c.l.b16 %v4916
    %v5052 = vunpack.c.l.b16 %v4917
    %v5053 = vunpack.c.l.b16 %v4918
    %v5054 = vunpack.c.l.b16 %v4919
    %v5055 = vunpack.c.l.b16 %v4920
    %v5056 = vunpack.c.l.b16 %v4921
    %v5057 = vunpack.c.l.b16 %v4922
    %v5058 = vunpack.c.l.b16 %v4923
    %v5059 = vunpack.c.l.b16 %v4924
    %v5060 = vunpack.c.l.b16 %v4925
    %v5061 = vunpack.c.l.b16 %v4926
    %v5062 = vpack.c.b16 %v4999, %v4998
    %v5063 = vpack.c.b16 %v5001, %v5000
    %v5064 = vpack.c.b16 %v5003, %v5002
    %v5065 = vpack.c.b16 %v5005, %v5004
    %v5066 = vpack.c.b16 %v5007, %v5006
    %v5067 = vpack.c.b16 %v5009, %v5008
    %v5068 = vpack.c.b16 %v5011, %v5010
    %v5069 = vpack.c.b16 %v5013, %v5012
    %v5070 = vpack.c.b16 %v5015, %v5014
    %v5071 = vpack.c.b16 %v5017, %v5016
    %v5072 = vpack.c.b16 %v5019, %v5018
    %v5073 = vpack.c.b16 %v5021, %v5020
    %v5074 = vpack.c.b16 %v5023, %v5022
    %v5075 = vpack.c.b16 %v5025, %v5024
    %v5076 = vpack.c.b16 %v5027, %v5026
    %v5077 = vpack.c.b16 %v5029, %v5028
    %v5078 = vpack.c.b16 %v5031, %v5030
    %v5079 = vpack.c.b16 %v5033, %v5032
    %v5080 = vpack.c.b16 %v5035, %v5034
    %v5081 = vpack.c.b16 %v5037, %v5036
    %v5082 = vpack.c.b16 %v5039, %v5038
    %v5083 = vpack.c.b16 %v5041, %v5040
    %v5084 = vpack.c.b16 %v5043, %v5042
    %v5085 = vpack.c.b16 %v5045, %v5044
    %v5086 = vpack.c.b16 %v5047, %v5046
    %v5087 = vpack.c.b16 %v5049, %v5048
    %v5088 = vpack.c.b16 %v5051, %v5050
    %v5089 = vpack.c.b16 %v5053, %v5052
    %v5090 = vpack.c.b16 %v5055, %v5054
    %v5091 = vpack.c.b16 %v5057, %v5056
    %v5092 = vpack.c.b16 %v5059, %v5058
    %v5093 = vpack.c.b16 %v5061, %v5060
    %5126 = vmatprep.subr.bf16.mxu0 0
    %5127 = vmatpush1.bf16.msra.mxu0 %v5062
    %5128 = vmatprep.subr.bf16.mxu0 0
    %5129 = vmatpush1.bf16.msra.mxu0 %v5063
    %5130 = vmatprep.subr.bf16.mxu0 0
    %5131 = vmatpush1.bf16.msra.mxu0 %v5064
    %5132 = vmatprep.subr.bf16.mxu0 0
    %5133 = vmatpush1.bf16.msra.mxu0 %v5065
    %5134 = vmatprep.subr.bf16.mxu0 0
    %5135 = vmatpush1.bf16.msra.mxu0 %v5066
    %5136 = vmatprep.subr.bf16.mxu0 0
    %5137 = vmatpush1.bf16.msra.mxu0 %v5067
    %5138 = vmatprep.subr.bf16.mxu0 0
    %5139 = vmatpush1.bf16.msra.mxu0 %v5068
    %5140 = vmatprep.subr.bf16.mxu0 0
    %5141 = vmatpush1.bf16.msra.mxu0 %v5069
    %5142 = vmatprep.subr.bf16.mxu0 0
    %5143 = vmatpush1.bf16.msra.mxu0 %v5070
    %5144 = vmatprep.subr.bf16.mxu0 0
    %5145 = vmatpush1.bf16.msra.mxu0 %v5071
    %5146 = vmatprep.subr.bf16.mxu0 0
    %5147 = vmatpush1.bf16.msra.mxu0 %v5072
    %5148 = vmatprep.subr.bf16.mxu0 0
    %5149 = vmatpush1.bf16.msra.mxu0 %v5073
    %5150 = vmatprep.subr.bf16.mxu0 0
    %5151 = vmatpush1.bf16.msra.mxu0 %v5074
    %5152 = vmatprep.subr.bf16.mxu0 0
    %5153 = vmatpush1.bf16.msra.mxu0 %v5075
    %5154 = vmatprep.subr.bf16.mxu0 0
    %5155 = vmatpush1.bf16.msra.mxu0 %v5076
    %5156 = vmatprep.subr.bf16.mxu0 0
    %5157 = vmatpush1.bf16.msra.mxu0 %v5077
    %5158 = vmatprep.mubr.bf16.mxu0 %v4856
    %5159 = vmatmul.mubr.bf16.gmra.mrb[0].mxu0 %v4855
    %v5160 = vpop.f32.mrb[0].mxu0
    %v5161 = vadd.f32 %v4932, %v5160
    %v5162 = vpop.f32.mrb[0].mxu0
    %v5163 = vpop.f32.mrb[0].mxu0
    %v5164 = vadd.f32 %v4932, %v5163
    %v5165 = vpop.f32.mrb[0].mxu0
    %5166 = vmatprep.mubr.bf16.mxu0 %v4860
    %5167 = vmatmul.mubr.bf16.gmra.mrb[0].mxu0 %v4859
    %v5168 = vpop.f32.mrb[0].mxu0
    %v5169 = vadd.f32 %v4932, %v5168
    %v5170 = vpop.f32.mrb[0].mxu0
    %v5171 = vpop.f32.mrb[0].mxu0
    %v5172 = vadd.f32 %v4932, %v5171
    %v5173 = vpop.f32.mrb[0].mxu0
    %5174 = vdwg.mxu0
    %5175 = vmatprep.subr.bf16.mxu0 0
    %5176 = vmatpush1.bf16.msra.mxu0 %v5078
    %5177 = vmatprep.subr.bf16.mxu0 0
    %5178 = vmatpush1.bf16.msra.mxu0 %v5079
    %5179 = vmatprep.subr.bf16.mxu0 0
    %5180 = vmatpush1.bf16.msra.mxu0 %v5080
    %5181 = vmatprep.subr.bf16.mxu0 0
    %5182 = vmatpush1.bf16.msra.mxu0 %v5081
    %5183 = vmatprep.subr.bf16.mxu0 0
    %5184 = vmatpush1.bf16.msra.mxu0 %v5082
    %5185 = vmatprep.subr.bf16.mxu0 0
    %5186 = vmatpush1.bf16.msra.mxu0 %v5083
    %5187 = vmatprep.subr.bf16.mxu0 0
    %5188 = vmatpush1.bf16.msra.mxu0 %v5084
    %5189 = vmatprep.subr.bf16.mxu0 0
    %5190 = vmatpush1.bf16.msra.mxu0 %v5085
    %5191 = vmatprep.subr.bf16.mxu0 0
    %5192 = vmatpush1.bf16.msra.mxu0 %v5086
    %5193 = vmatprep.subr.bf16.mxu0 0
    %5194 = vmatpush1.bf16.msra.mxu0 %v5087
    %5195 = vmatprep.subr.bf16.mxu0 0
    %5196 = vmatpush1.bf16.msra.mxu0 %v5088
    %5197 = vmatprep.subr.bf16.mxu0 0
    %5198 = vmatpush1.bf16.msra.mxu0 %v5089
    %5199 = vmatprep.subr.bf16.mxu0 0
    %5200 = vmatpush1.bf16.msra.mxu0 %v5090
    %5201 = vmatprep.subr.bf16.mxu0 0
    %5202 = vmatpush1.bf16.msra.mxu0 %v5091
    %5203 = vmatprep.subr.bf16.mxu0 0
    %5204 = vmatpush1.bf16.msra.mxu0 %v5092
    %5205 = vmatprep.subr.bf16.mxu0 0
    %5206 = vmatpush1.bf16.msra.mxu0 %v5093
    %5207 = vmatprep.mubr.bf16.mxu0 %v4858
    %5208 = vmatmul.mubr.bf16.gmra.mrb[0].mxu0 %v4857
    %v5209 = vpop.f32.mrb[0].mxu0
    %v5210 = vadd.f32 %v5161, %v5209
    %v5211 = vpop.f32.mrb[0].mxu0
    %v5212 = vpop.f32.mrb[0].mxu0
    %v5213 = vadd.f32 %v5164, %v5212
    %v5214 = vpop.f32.mrb[0].mxu0
    %5215 = vmatprep.mubr.bf16.mxu0 %v4862
    %5216 = vmatmul.mubr.bf16.gmra.mrb[0].mxu0 %v4861
    %v5217 = vpop.f32.mrb[0].mxu0
    %v5218 = vadd.f32 %v5169, %v5217
    %v5219 = vpop.f32.mrb[0].mxu0
    %v5220 = vpop.f32.mrb[0].mxu0
    %v5221 = vadd.f32 %v5172, %v5220
    %v5222 = vpop.f32.mrb[0].mxu0
    %5223 = vdwg.mxu0
    %vm5224 = vcmask 261120
    %5225 = vst.msk [vmem:[#allocation2] sm:$0xff] %vm5224, %v5210
    %5226 = vst.msk [vmem:[#allocation2 + $0x8] sm:$0xff] %vm5224, %v5213
    %5227 = vst.msk [vmem:[#allocation2 + $0x10] sm:$0xff] %vm5224, %v5218
    %5228 = vst.msk [vmem:[#allocation2 + $0x18] sm:$0xff] %vm5224, %v5221
    // Predicated region
    $region62: #{dgcnn_point_forward.17} parent=1 // pred_check
      _
    $region63: #{dgcnn_point_forward.17} parent=1 // pred_check_branch
      %5230 = sbr.rel (0) target = $region65
    $region64: #{dgcnn_point_forward.17} parent=1 // pred_region
      %s5232 = ssub.s32 512, 512
      %5233 = vsyncadd [#allocation3], %s5232
      %s5234 = sshll.u32 [#allocation2], 4
      %s5235 = int_to_ptr.vmem [resolvable:$true] %s5234
      %5240 = dma.vmem_to_hbm [thread:$0]  %s5235, 512, %s15, [#allocation3], 128, 128, 8
    $region65: #{dgcnn_point_forward.17} parent=1 // pred_fallthru
      _
    // Predicated region
    $region66: #{dgcnn_point_forward.17} parent=1 // pred_check
      _
    $region67: #{dgcnn_point_forward.17} parent=1 // pred_check_branch
      %5242 = sbr.rel (0) target = $region69
    $region68: #{dgcnn_point_forward.17} parent=1 // pred_region
      %5243 = dma.done [#allocation3], 512
    $region69: #{dgcnn_point_forward.17} parent=1 // pred_fallthru
      _
    %5244 = vsyncpa [#allocation3], 1

</llo_original>
